<compile_context>
chip_gen: v5e
topology: v5e:2x2
jax: 0.10.0
libtpu: 0.0.40
codegen_flags: <defaults>
</compile_context>

<pallas_src>
import functools

import jax
import jax.numpy as jnp
from jax.experimental import pallas as pl
from jax.experimental.pallas import tpu as pltpu

# ----------------------------- small ViT config ------------------------------
IMG = 32            # image size (384 in the real model)
PATCH = 16          # patch size (as in vit_base_patch16_384)
IN_CHANS = 3
EMBED = 256         # embed dim (768 in vit_base) — multiple of 128 (lane-dense)
HEADS = 2           # num heads (12 in vit_base)
DH = EMBED // HEADS # 128 — exactly one lane tile per head
DEPTH = 2           # transformer depth (12 in vit_base)
MLP_HIDDEN = 4 * EMBED
NUM_CLASSES = 1
HEAD_PAD = 128      # classifier output columns padded to one lane tile
LN_EPS = 1e-6
GELU_TANH_APPROX = False   # timm uses exact erf GELU; set True for EUP tanh approx

WEIGHT_DTYPE = jnp.bfloat16
ACT_DTYPE = jnp.bfloat16
LANES = 128
NEG_INF = -1e30


def _tpu_config():
    """Generation-aware tile preference and VMEM limit."""
    try:
        kind = jax.devices()[0].device_kind.lower()
    except Exception:
        kind = ""
    if "v5" in kind:   # 4x128x128 MXU, 128 MiB VMEM
        return {"tm": 128, "vmem": 64 * 1024 * 1024}
    if "v6" in kind:   # 2x256x256 MXU, 128 MiB VMEM
        return {"tm": 256, "vmem": 64 * 1024 * 1024}
    # v7x (64 MiB VMEM) or unknown: conservative limit, 256-row MXU tiles.
    return {"tm": 256, "vmem": 32 * 1024 * 1024}


_CFG = _tpu_config()


def _round_up(x, m):
    return ((x + m - 1) // m) * m


def _tile(dim, pref):
    """Largest clean tile: `pref` if it divides dim, else the full dim."""
    return pref if (dim % pref == 0) else dim


def _gelu(x):
    if GELU_TANH_APPROX:
        return 0.5 * x * (1.0 + jnp.tanh(0.7978845608028654
                                         * (x + 0.044715 * x * x * x)))
    return 0.5 * x * (1.0 + jax.lax.erf(x * 0.7071067811865476))   # exact GELU


# --------------------- fused (LN) + matmul + bias (+act) (+res) ---------------
def _fused_matmul_kernel(*refs, ln, activation, has_residual, eps):
    it = iter(refs)
    x_ref = next(it)
    g_ref = next(it) if ln else None
    be_ref = next(it) if ln else None
    w_ref = next(it)
    bias_ref = next(it)
    res_ref = next(it) if has_residual else None
    o_ref = next(it)
    acc_ref = next(it)
    xn_ref = next(it) if ln else None           # cached LN(x), bf16, (tm, K)

    j_idx = pl.program_id(1)
    k_idx = pl.program_id(2)

    @pl.when(k_idx == 0)
    def _():
        acc_ref[...] = jnp.zeros_like(acc_ref)

    if ln:
        # LayerNorm over the full K row, computed ONCE per row block (j == 0)
        # and cached in VMEM; every other output-column tile reuses it.
        @pl.when(jnp.logical_and(j_idx == 0, k_idx == 0))
        def _():
            xf = x_ref[...].astype(jnp.float32)
            mu = jnp.mean(xf, axis=-1, keepdims=True)
            var = jnp.mean(jnp.square(xf - mu), axis=-1, keepdims=True)
            xn = (xf - mu) * jax.lax.rsqrt(var + eps)
            xn = xn * g_ref[...].astype(jnp.float32) + be_ref[...].astype(jnp.float32)
            xn_ref[...] = xn.astype(xn_ref.dtype)
        x = xn_ref[...]
    else:
        x = x_ref[...].astype(w_ref.dtype)

    acc_ref[...] += jnp.dot(x, w_ref[...], preferred_element_type=jnp.float32)

    @pl.when(k_idx == pl.num_programs(2) - 1)
    def _():
        y = acc_ref[...] + bias_ref[...].astype(jnp.float32)
        if activation == "gelu":
            y = _gelu(y)
        elif activation == "sigmoid":
            y = jax.nn.sigmoid(y)
        if has_residual:
            y = y + res_ref[...].astype(jnp.float32)
        o_ref[...] = y.astype(o_ref.dtype)


def fused_linear(x, w, b, *, gamma=None, beta=None, residual=None,
                 activation="none", out_dtype=None):
    """out = act(LN?(x) @ w + b) + residual?   x:(M,K) w:(K,N) b:(N,)."""
    M, K = x.shape
    Kw, N = w.shape
    assert K == Kw
    ln = gamma is not None
    out_dtype = out_dtype or x.dtype

    tm = _tile(M, _CFG["tm"])
    tn = _tile(N, 256)
    tk = K if ln else _tile(K, 256)   # LN needs the full feature row
    grid = (M // tm, N // tn, K // tk)

    in_specs = [pl.BlockSpec((tm, tk), lambda i, j, k: (i, k))]
    args = [x]
    if ln:
        in_specs += [pl.BlockSpec((1, K), lambda i, j, k: (0, 0)),
                     pl.BlockSpec((1, K), lambda i, j, k: (0, 0))]
        args += [gamma.reshape(1, K), beta.reshape(1, K)]
    in_specs += [pl.BlockSpec((tk, tn), lambda i, j, k: (k, j)),
                 pl.BlockSpec((1, tn), lambda i, j, k: (0, j))]
    args += [w, b.reshape(1, N)]
    if residual is not None:
        in_specs.append(pl.BlockSpec((tm, tn), lambda i, j, k: (i, j)))
        args.append(residual)

    scratch = [pltpu.VMEM((tm, tn), jnp.float32)]
    if ln:
        scratch.append(pltpu.VMEM((tm, K), ACT_DTYPE))

    # The cached-LN scratch is reused across the j axis, so j must stay on one
    # core ("arbitrary"); without LN both i and j can be megacore-parallel.
    dims = (("parallel", "arbitrary", "arbitrary") if ln
            else ("parallel", "parallel", "arbitrary"))

    kern = functools.partial(_fused_matmul_kernel, ln=ln, activation=activation,
                             has_residual=residual is not None, eps=LN_EPS)
    return pl.pallas_call(
        kern,
        out_shape=jax.ShapeDtypeStruct((M, N), out_dtype),
        grid=grid,
        in_specs=in_specs,
        out_specs=pl.BlockSpec((tm, tn), lambda i, j, k: (i, j)),
        scratch_shapes=scratch,
        compiler_params=pltpu.CompilerParams(
            dimension_semantics=dims,
            vmem_limit_bytes=_CFG["vmem"]),
    )(*args)


# ---------------- fused MLP block: LN2 + fc1 + GELU + fc2 + residual ----------
def _mlp_kernel(x_ref, g_ref, b_ref, w1_ref, b1_ref, w2_ref, b2_ref, o_ref,
                xn_ref, acc_ref, *, eps):
    hh = pl.program_id(1)

    @pl.when(hh == 0)
    def _():
        xf = x_ref[...].astype(jnp.float32)
        mu = jnp.mean(xf, axis=-1, keepdims=True)
        var = jnp.mean(jnp.square(xf - mu), axis=-1, keepdims=True)
        xn = (xf - mu) * jax.lax.rsqrt(var + eps)
        xn = xn * g_ref[...].astype(jnp.float32) + b_ref[...].astype(jnp.float32)
        xn_ref[...] = xn.astype(xn_ref.dtype)
        acc_ref[...] = jnp.zeros_like(acc_ref)

    h = jnp.dot(xn_ref[...], w1_ref[...], preferred_element_type=jnp.float32)
    h = h + b1_ref[...].astype(jnp.float32)
    h = _gelu(h)
    acc_ref[...] += jnp.dot(h.astype(w2_ref.dtype), w2_ref[...],
                            preferred_element_type=jnp.float32)

    @pl.when(hh == pl.num_programs(1) - 1)
    def _():
        y = acc_ref[...] + b2_ref[...].astype(jnp.float32) \
            + x_ref[...].astype(jnp.float32)                       # residual
        o_ref[...] = y.astype(o_ref.dtype)


def mlp_block(x, blk, eps=LN_EPS):
    """x:(M,E) -> x + fc2(gelu(fc1(LN(x)))), hidden dim tiled on a grid axis."""
    M, E = x.shape
    Hd = blk["fc1_w"].shape[1]
    tm = _tile(M, _CFG["tm"])
    th = _tile(Hd, 256)   # 256 keeps the f32 bias+GELU epilogue inside the vreg file
    grid = (M // tm, Hd // th)
    # TODO(synk): at tiny M, M//tm == 1 leaves one v7x TensorCore idle; at full
    # size M is large enough to shard across both cores.
    return pl.pallas_call(
        functools.partial(_mlp_kernel, eps=eps),
        out_shape=jax.ShapeDtypeStruct((M, E), x.dtype),
        grid=grid,
        in_specs=[
            pl.BlockSpec((tm, E), lambda i, hh: (i, 0)),
            pl.BlockSpec((1, E), lambda i, hh: (0, 0)),
            pl.BlockSpec((1, E), lambda i, hh: (0, 0)),
            pl.BlockSpec((E, th), lambda i, hh: (0, hh)),
            pl.BlockSpec((1, th), lambda i, hh: (0, hh)),
            pl.BlockSpec((th, E), lambda i, hh: (hh, 0)),
            pl.BlockSpec((1, E), lambda i, hh: (0, 0)),
        ],
        out_specs=pl.BlockSpec((tm, E), lambda i, hh: (i, 0)),
        scratch_shapes=[pltpu.VMEM((tm, E), ACT_DTYPE),
                        pltpu.VMEM((tm, E), jnp.float32)],
        compiler_params=pltpu.CompilerParams(
            dimension_semantics=("parallel", "arbitrary"),
            vmem_limit_bytes=_CFG["vmem"]),
    )(x, blk["ln2_g"].reshape(1, E), blk["ln2_b"].reshape(1, E),
      blk["fc1_w"], blk["fc1_b"].reshape(1, Hd),
      blk["fc2_w"], blk["fc2_b"].reshape(1, E))


# ------------ fused flash-style MHA + output projection + residual ------------
def _attn_proj_kernel(q_ref, k_ref, v_ref, pw_ref, pb_ref, res_ref, o_ref,
                      m_ref, l_ref, acc_ref, *,
                      scale, heads, dh, kv_t, n_valid, n_pad):
    kv = pl.program_id(1)

    @pl.when(kv == 0)
    def _():
        m_ref[...] = jnp.full_like(m_ref, NEG_INF)
        l_ref[...] = jnp.zeros_like(l_ref)
        acc_ref[...] = jnp.zeros_like(acc_ref)

    q_all = q_ref[0]                                   # (n_pad, E)
    k_all = k_ref[0]                                   # (kv_t, E)
    v_all = v_ref[0]

    need_mask = n_valid < n_pad                        # static
    if need_mask:
        col = kv * kv_t + jax.lax.broadcasted_iota(jnp.int32, (1, kv_t), 1)
        kv_mask = col < n_valid                        # (1, kv_t)

    for h in range(heads):                             # static unroll over heads
        sl = slice(h * dh, (h + 1) * dh)
        q = q_all[:, sl]
        kh = k_all[:, sl]
        vh = v_all[:, sl]
        s = jax.lax.dot_general(q, kh, (((1,), (1,)), ((), ())),
                                preferred_element_type=jnp.float32) * scale
        if need_mask:
            s = jnp.where(kv_mask, s, NEG_INF)         # mask padded KV tokens
        m_prev = jnp.max(m_ref[h], axis=-1, keepdims=True)     # lanes are equal
        l_prev = jnp.max(l_ref[h], axis=-1, keepdims=True)
        m_new = jnp.maximum(m_prev, jnp.max(s, axis=-1, keepdims=True))
        alpha = jnp.exp(m_prev - m_new)
        p = jnp.exp(s - m_new)
        l_new = alpha * l_prev + jnp.sum(p, axis=-1, keepdims=True)
        pv = jnp.dot(p.astype(vh.dtype), vh, preferred_element_type=jnp.float32)
        acc_ref[:, sl] = alpha * acc_ref[:, sl] + pv
        m_ref[h] = jnp.broadcast_to(m_new, (n_pad, LANES))      # lane-dense store
        l_ref[h] = jnp.broadcast_to(l_new, (n_pad, LANES))

    @pl.when(kv == pl.num_programs(1) - 1)
    def _():
        chunks = []
        for h in range(heads):
            inv_l = pl.reciprocal(jnp.max(l_ref[h], axis=-1, keepdims=True),
                                  approx=True)
            chunks.append(acc_ref[:, h * dh:(h + 1) * dh] * inv_l)
        attn = jnp.concatenate(chunks, axis=-1).astype(pw_ref.dtype)  # (n_pad, E)
        y = jnp.dot(attn, pw_ref[...], preferred_element_type=jnp.float32)
        y = y + pb_ref[...].astype(jnp.float32) + res_ref[0].astype(jnp.float32)
        o_ref[0] = y.astype(o_ref.dtype)


def attention_proj(qkv, x_res, proj_w, proj_b, *, num_heads, n_valid):
    """qkv:(B, Npad, 3E) lane-dense slab -> x_res + proj(MHA(qkv)) : (B, Npad, E)."""
    B, n_pad, three_e = qkv.shape
    E = three_e // 3
    dh = E // num_heads
    kv_t = 128 if n_pad % 128 == 0 else n_pad          # n_pad <= 128 falls in one tile
    num_kv = n_pad // kv_t
    scale = dh ** -0.5
    kern = functools.partial(_attn_proj_kernel, scale=scale, heads=num_heads,
                             dh=dh, kv_t=kv_t, n_valid=n_valid, n_pad=n_pad)
    return pl.pallas_call(
        kern,
        out_shape=jax.ShapeDtypeStruct((B, n_pad, E), x_res.dtype),
        grid=(B, num_kv),
        in_specs=[
            pl.BlockSpec((1, n_pad, E), lambda b, kv: (b, 0, 0)),   # q  (all heads)
            pl.BlockSpec((1, kv_t, E), lambda b, kv: (b, kv, 1)),   # k tile
            pl.BlockSpec((1, kv_t, E), lambda b, kv: (b, kv, 2)),   # v tile
            pl.BlockSpec((E, E), lambda b, kv: (0, 0)),             # proj_w
            pl.BlockSpec((1, E), lambda b, kv: (0, 0)),             # proj_b
            pl.BlockSpec((1, n_pad, E), lambda b, kv: (b, 0, 0)),   # residual
        ],
        out_specs=pl.BlockSpec((1, n_pad, E), lambda b, kv: (b, 0, 0)),
        scratch_shapes=[pltpu.VMEM((num_heads, n_pad, LANES), jnp.float32),  # m
                        pltpu.VMEM((num_heads, n_pad, LANES), jnp.float32),  # l
                        pltpu.VMEM((n_pad, E), jnp.float32)],                # acc
        compiler_params=pltpu.CompilerParams(
            dimension_semantics=("parallel", "arbitrary"),
            vmem_limit_bytes=_CFG["vmem"]),
    )(qkv, qkv, qkv, proj_w, proj_b.reshape(1, E), x_res)


# ------------------------------ parameter setup -------------------------------
def init_params(key):
    # TODO(synk): pretrained timm weights cannot be loaded here; random init.
    def nrm(k, shape, scale=0.02, dtype=WEIGHT_DTYPE):
        return (scale * jax.random.normal(k, shape, dtype=jnp.float32)).astype(dtype)

    keys = jax.random.split(key, 8 + DEPTH)
    n_tokens = (IMG // PATCH) ** 2 + 1
    head_w = jnp.zeros((EMBED, HEAD_PAD), WEIGHT_DTYPE)
    head_w = head_w.at[:, :NUM_CLASSES].set(nrm(keys[3], (EMBED, NUM_CLASSES)))
    params = {
        # Conv2d(C, E, k=16, s=16) expressed as a (C*p*p, E) matmul
        "patch_w": nrm(keys[0], (IN_CHANS * PATCH * PATCH, EMBED)),
        "patch_b": jnp.zeros((EMBED,), jnp.float32),
        "cls_token": nrm(keys[1], (1, 1, EMBED), dtype=jnp.float32),
        "pos_embed": nrm(keys[2], (1, n_tokens, EMBED), dtype=jnp.float32),
        "norm_g": jnp.ones((EMBED,), jnp.float32),
        "norm_b": jnp.zeros((EMBED,), jnp.float32),
        # classifier head zero-padded to 128 lane-dense output columns;
        # only columns [:NUM_CLASSES] are real, the rest is sliced away.
        "head_w": head_w,
        "head_b": jnp.zeros((HEAD_PAD,), jnp.float32),
        "blocks": [],
    }
    for d in range(DEPTH):
        bk = jax.random.split(keys[8 + d], 4)
        params["blocks"].append({
            "ln1_g": jnp.ones((EMBED,), jnp.float32),
            "ln1_b": jnp.zeros((EMBED,), jnp.float32),
            "qkv_w": nrm(bk[0], (EMBED, 3 * EMBED)),
            "qkv_b": jnp.zeros((3 * EMBED,), jnp.float32),
            "proj_w": nrm(bk[1], (EMBED, EMBED)),
            "proj_b": jnp.zeros((EMBED,), jnp.float32),
            "ln2_g": jnp.ones((EMBED,), jnp.float32),
            "ln2_b": jnp.zeros((EMBED,), jnp.float32),
            "fc1_w": nrm(bk[2], (EMBED, MLP_HIDDEN)),
            "fc1_b": jnp.zeros((MLP_HIDDEN,), jnp.float32),
            "fc2_w": nrm(bk[3], (MLP_HIDDEN, EMBED)),
            "fc2_b": jnp.zeros((EMBED,), jnp.float32),
        })
    return params


# ------------------------------- forward pass ---------------------------------
def vit_binary_classifier_forward(x, params):
    """x: (B, C, H, W) float32 (NCHW, like PyTorch). Returns (B, NUM_CLASSES)."""
    B, C, H, W = x.shape
    gh, gw = H // PATCH, W // PATCH
    P = gh * gw
    N = P + 1
    # Pad the token count so the row/KV dim is sublane/lane friendly everywhere.
    n_pad = _round_up(N, 128) if N > 128 else _round_up(N, 8)

    # --- patch embedding (Conv2d k=16 s=16 == per-patch linear), with the ------
    #     patch-token positional embedding (bf16) fused into the matmul epilogue.
    patches = (x.reshape(B, C, gh, PATCH, gw, PATCH)
                .transpose(0, 2, 4, 1, 3, 5)
                .reshape(B * P, C * PATCH * PATCH)).astype(ACT_DTYPE)
    pos_patch = jnp.broadcast_to(
        params["pos_embed"][:, 1:].astype(ACT_DTYPE), (B, P, EMBED)
    ).reshape(B * P, EMBED)
    tok_p = fused_linear(patches, params["patch_w"], params["patch_b"],
                         residual=pos_patch, out_dtype=ACT_DTYPE).reshape(B, P, EMBED)

    # --- prepend cls token (+ its positional embedding); zero-pad to n_pad -----
    cls = (params["cls_token"] + params["pos_embed"][:, :1]).astype(ACT_DTYPE)
    tok = jnp.concatenate([jnp.broadcast_to(cls, (B, 1, EMBED)), tok_p], axis=1)
    if n_pad > N:
        tok = jnp.pad(tok, ((0, 0), (0, n_pad - N), (0, 0)))   # pad rows stay inert

    # --- transformer blocks (pre-LN), 3 fused kernels each ----------------------
    for blk in params["blocks"]:
        x2 = tok.reshape(B * n_pad, EMBED)
        # LN1 + qkv projection (lane-dense (B, Npad, 3E) slab); LN cached in VMEM
        qkv = fused_linear(x2, blk["qkv_w"], blk["qkv_b"],
                           gamma=blk["ln1_g"], beta=blk["ln1_b"]
                           ).reshape(B, n_pad, 3 * EMBED)
        # flash-style MHA (+ padded-KV masking) + output proj + residual, fused
        tok = attention_proj(qkv, tok, blk["proj_w"], blk["proj_b"],
                             num_heads=HEADS, n_valid=N)
        # LN2 + fc1 + GELU + fc2 + residual, hidden kept in VMEM
        tok = mlp_block(tok.reshape(B * n_pad, EMBED), blk).reshape(B, n_pad, EMBED)

    # --- final norm + classifier head + sigmoid, fused, CLS rows only -----------
    cls_out = tok[:, 0]                                    # (B, EMBED), real rows
    mh = max(8, _round_up(B, 8))
    if mh > B:
        cls_out = jnp.pad(cls_out, ((0, mh - B), (0, 0)))  # sublane-clean rows
    probs = fused_linear(cls_out, params["head_w"], params["head_b"],
                         gamma=params["norm_g"], beta=params["norm_b"],
                         activation="sigmoid", out_dtype=jnp.float32)
    return probs[:B, :NUM_CLASSES]                         # (B, NUM_CLASSES)


# ----------------------------------- main --------------------------------------
if __name__ == "__main__":
    key = jax.random.PRNGKey(0)
    kx, kp = jax.random.split(key)
    x = jax.random.normal(kx, (2, IN_CHANS, IMG, IMG), dtype=jnp.float32)  # NCHW
    params = init_params(kp)

    fwd = jax.jit(vit_binary_classifier_forward)
    out = jax.block_until_ready(fwd(x, params))

    assert out.shape == (2, NUM_CLASSES)
    assert bool(jnp.all(jnp.isfinite(out)))
    assert bool(jnp.all((out >= 0.0) & (out <= 1.0)))
    print("KERNEL_OK")
</pallas_src>

<mosaic_0001>
module attributes {stable_mosaic.version = 11 : i64} {
  func.func @_fused_matmul_kernel(%arg0: i32, %arg1: i32, %arg2: i32, %arg3: memref<8x256xbf16, #tpu.memory_space<vmem>>, %arg4: memref<256x256xbf16, #tpu.memory_space<vmem>>, %arg5: memref<1x256xf32, #tpu.memory_space<vmem>>, %arg6: memref<8x256xbf16, #tpu.memory_space<vmem>>, %arg7: memref<8x256xbf16, #tpu.memory_space<vmem>>, %arg8: memref<8x256xf32, #tpu.memory_space<vmem>>) attributes {dimension_semantics = [#tpu.dimension_semantics<parallel>, #tpu.dimension_semantics<parallel>, #tpu.dimension_semantics<arbitrary>], iteration_bounds = array<i64: 1, 1, 3>, scalar_prefetch = 0 : i64, scratch_operands = 1 : i64, tpu.core_type = #tpu.core_type<tc>, window_params = [{transform_indices = @transform_0, window_bounds = array<i64: 8, 256>}, {transform_indices = @transform_1, window_bounds = array<i64: 256, 256>}, {transform_indices = @transform_2, window_bounds = array<i64: 1, 256>}, {transform_indices = @transform_3, window_bounds = array<i64: 8, 256>}, {transform_indices = @transform_4, window_bounds = array<i64: 8, 256>}]} {
    %c0_i32 = arith.constant 0 : i32
    %0 = arith.cmpi eq, %arg2, %c0_i32 : i32
    %1 = arith.extui %0 : i1 to i32
    %c0_i32_0 = arith.constant 0 : i32
    %2 = arith.cmpi ne, %1, %c0_i32_0 : i32
    scf.if %2 {
      %cst_9 = arith.constant 0.000000e+00 : f32
      %12 = vector.broadcast %cst_9 : f32 to vector<8x256xf32>
      %c0_10 = arith.constant 0 : index
      %c0_11 = arith.constant 0 : index
      %13 = vector.load %arg8[%c0_10, %c0_11] : memref<8x256xf32, #tpu.memory_space<vmem>>, vector<8x256xf32>
      tpu.vector_store %arg8[%c0_10, %c0_11], %12 {strides = array<i32>} : memref<8x256xf32, #tpu.memory_space<vmem>>, vector<8x256xf32>,
    } else {
    }
    %c0 = arith.constant 0 : index
    %c0_1 = arith.constant 0 : index
    %3 = vector.load %arg3[%c0, %c0_1] : memref<8x256xbf16, #tpu.memory_space<vmem>>, vector<8x256xbf16>
    %c0_2 = arith.constant 0 : index
    %c0_3 = arith.constant 0 : index
    %4 = vector.load %arg8[%c0_2, %c0_3] : memref<8x256xf32, #tpu.memory_space<vmem>>, vector<8x256xf32>
    %c0_4 = arith.constant 0 : index
    %c0_5 = arith.constant 0 : index
    %5 = vector.load %arg4[%c0_4, %c0_5] : memref<256x256xbf16, #tpu.memory_space<vmem>>, vector<256x256xbf16>
    %cst = arith.constant dense<0.000000e+00> : vector<8x256xf32>
    %6 = tpu.matmul %3, %5, %cst {dimension_numbers = #tpu.dot_dimension_numbers<[1], [0], [0], [1], [0, 0, 1, 1], [], []>} : vector<8x256xbf16>, vector<256x256xbf16>, vector<8x256xf32> -> vector<8x256xf32>
    %7 = arith.addf %4, %6 : vector<8x256xf32>
    %c0_6 = arith.constant 0 : index
    %c0_7 = arith.constant 0 : index
    %8 = vector.load %arg8[%c0_6, %c0_7] : memref<8x256xf32, #tpu.memory_space<vmem>>, vector<8x256xf32>
    tpu.vector_store %arg8[%c0_6, %c0_7], %7 {strides = array<i32>} : memref<8x256xf32, #tpu.memory_space<vmem>>, vector<8x256xf32>,
    %c2_i32 = arith.constant 2 : i32
    %9 = arith.cmpi eq, %arg2, %c2_i32 : i32
    %10 = arith.extui %9 : i1 to i32
    %c0_i32_8 = arith.constant 0 : i32
    %11 = arith.cmpi ne, %10, %c0_i32_8 : i32
    scf.if %11 {
      %c0_9 = arith.constant 0 : index
      %c0_10 = arith.constant 0 : index
      %12 = vector.load %arg8[%c0_9, %c0_10] : memref<8x256xf32, #tpu.memory_space<vmem>>, vector<8x256xf32>
      %c0_11 = arith.constant 0 : index
      %c0_12 = arith.constant 0 : index
      %13 = vector.load %arg5[%c0_11, %c0_12] : memref<1x256xf32, #tpu.memory_space<vmem>>, vector<1x256xf32>
      %14 = vector.broadcast %13 : vector<1x256xf32> to vector<8x256xf32>
      %15 = arith.addf %12, %14 : vector<8x256xf32>
      %c0_13 = arith.constant 0 : index
      %c0_14 = arith.constant 0 : index
      %16 = vector.load %arg6[%c0_13, %c0_14] : memref<8x256xbf16, #tpu.memory_space<vmem>>, vector<8x256xbf16>
      %17 = arith.extf %16 : vector<8x256xbf16> to vector<8x256xf32>
      %18 = arith.addf %15, %17 : vector<8x256xf32>
      %19 = arith.truncf %18 : vector<8x256xf32> to vector<8x256xbf16>
      %c0_15 = arith.constant 0 : index
      %c0_16 = arith.constant 0 : index
      %20 = vector.load %arg7[%c0_15, %c0_16] : memref<8x256xbf16, #tpu.memory_space<vmem>>, vector<8x256xbf16>
      tpu.vector_store %arg7[%c0_15, %c0_16], %19 {strides = array<i32>} : memref<8x256xbf16, #tpu.memory_space<vmem>>, vector<8x256xbf16>,
    } else {
    }
    return
  }
  func.func @transform_0(%arg0: i32, %arg1: i32, %arg2: i32) -> (i32, i32) {
    %c0_i32 = arith.constant 0 : i32
    return %arg0, %arg2 : i32, i32
  }
  func.func @transform_1(%arg0: i32, %arg1: i32, %arg2: i32) -> (i32, i32) {
    %c0_i32 = arith.constant 0 : i32
    return %arg2, %arg1 : i32, i32
  }
  func.func @transform_2(%arg0: i32, %arg1: i32, %arg2: i32) -> (i32, i32) {
    %c0_i32 = arith.constant 0 : i32
    %c0_i32_0 = arith.constant 0 : i32
    return %c0_i32, %arg1 : i32, i32
  }
  func.func @transform_3(%arg0: i32, %arg1: i32, %arg2: i32) -> (i32, i32) {
    %c0_i32 = arith.constant 0 : i32
    return %arg0, %arg1 : i32, i32
  }
  func.func @transform_4(%arg0: i32, %arg1: i32, %arg2: i32) -> (i32, i32) {
    %c0_i32 = arith.constant 0 : i32
    return %arg0, %arg1 : i32, i32
  }
}

module attributes {stable_mosaic.version = 11 : i64} {
  func.func @_attn_proj_kernel(%arg0: i32, %arg1: i32, %arg2: memref<1x8x256xbf16, #tpu.memory_space<vmem>>, %arg3: memref<1x8x256xbf16, #tpu.memory_space<vmem>>, %arg4: memref<1x8x256xbf16, #tpu.memory_space<vmem>>, %arg5: memref<256x256xbf16, #tpu.memory_space<vmem>>, %arg6: memref<1x256xf32, #tpu.memory_space<vmem>>, %arg7: memref<1x8x256xbf16, #tpu.memory_space<vmem>>, %arg8: memref<1x8x256xbf16, #tpu.memory_space<vmem>>, %arg9: memref<2x8x128xf32, #tpu.memory_space<vmem>>, %arg10: memref<2x8x128xf32, #tpu.memory_space<vmem>>, %arg11: memref<8x256xf32, #tpu.memory_space<vmem>>) attributes {dimension_semantics = [#tpu.dimension_semantics<parallel>, #tpu.dimension_semantics<arbitrary>], iteration_bounds = array<i64: 2, 1>, scalar_prefetch = 0 : i64, scratch_operands = 3 : i64, tpu.core_type = #tpu.core_type<tc>, window_params = [{transform_indices = @transform_0, window_bounds = array<i64: 1, 8, 256>}, {transform_indices = @transform_1, window_bounds = array<i64: 1, 8, 256>}, {transform_indices = @transform_2, window_bounds = array<i64: 1, 8, 256>}, {pipeline_mode = #tpu.pipeline_mode<synchronous>, transform_indices = @transform_3, window_bounds = array<i64: 256, 256>}, {pipeline_mode = #tpu.pipeline_mode<synchronous>, transform_indices = @transform_4, window_bounds = array<i64: 1, 256>}, {transform_indices = @transform_5, window_bounds = array<i64: 1, 8, 256>}, {transform_indices = @transform_6, window_bounds = array<i64: 1, 8, 256>}]} {
    %c0_i32 = arith.constant 0 : i32
    %0 = arith.cmpi eq, %arg1, %c0_i32 : i32
    %1 = arith.extui %0 : i1 to i32
    %c0_i32_0 = arith.constant 0 : i32
    %2 = arith.cmpi ne, %1, %c0_i32_0 : i32
    scf.if %2 {
      %cst_56 = arith.constant -1.000000e+30 : f32
      %112 = vector.broadcast %cst_56 : f32 to vector<2x8x128xf32>
      %c0_57 = arith.constant 0 : index
      %c0_58 = arith.constant 0 : index
      %c0_59 = arith.constant 0 : index
      %113 = vector.load %arg9[%c0_57, %c0_58, %c0_59] : memref<2x8x128xf32, #tpu.memory_space<vmem>>, vector<2x8x128xf32>
      tpu.vector_store %arg9[%c0_57, %c0_58, %c0_59], %112 {strides = array<i32>} : memref<2x8x128xf32, #tpu.memory_space<vmem>>, vector<2x8x128xf32>,
      %cst_60 = arith.constant 0.000000e+00 : f32
      %114 = vector.broadcast %cst_60 : f32 to vector<2x8x128xf32>
      %c0_61 = arith.constant 0 : index
      %c0_62 = arith.constant 0 : index
      %c0_63 = arith.constant 0 : index
      %115 = vector.load %arg10[%c0_61, %c0_62, %c0_63] : memref<2x8x128xf32, #tpu.memory_space<vmem>>, vector<2x8x128xf32>
      tpu.vector_store %arg10[%c0_61, %c0_62, %c0_63], %114 {strides = array<i32>} : memref<2x8x128xf32, #tpu.memory_space<vmem>>, vector<2x8x128xf32>,
      %cst_64 = arith.constant 0.000000e+00 : f32
      %116 = vector.broadcast %cst_64 : f32 to vector<8x256xf32>
      %c0_65 = arith.constant 0 : index
      %c0_66 = arith.constant 0 : index
      %117 = vector.load %arg11[%c0_65, %c0_66] : memref<8x256xf32, #tpu.memory_space<vmem>>, vector<8x256xf32>
      tpu.vector_store %arg11[%c0_65, %c0_66], %116 {strides = array<i32>} : memref<8x256xf32, #tpu.memory_space<vmem>>, vector<8x256xf32>,
    } else {
    }
    %c0 = arith.constant 0 : index
    %c0_1 = arith.constant 0 : index
    %c0_2 = arith.constant 0 : index
    %3 = vector.load %arg2[%c0, %c0_1, %c0_2] : memref<1x8x256xbf16, #tpu.memory_space<vmem>>, vector<1x8x256xbf16>
    %4 = vector.shape_cast %3 : vector<1x8x256xbf16> to vector<8x256xbf16>
    %c0_3 = arith.constant 0 : index
    %c0_4 = arith.constant 0 : index
    %c0_5 = arith.constant 0 : index
    %5 = vector.load %arg3[%c0_3, %c0_4, %c0_5] : memref<1x8x256xbf16, #tpu.memory_space<vmem>>, vector<1x8x256xbf16>
    %6 = vector.shape_cast %5 : vector<1x8x256xbf16> to vector<8x256xbf16>
    %c0_6 = arith.constant 0 : index
    %c0_7 = arith.constant 0 : index
    %c0_8 = arith.constant 0 : index
    %7 = vector.load %arg4[%c0_6, %c0_7, %c0_8] : memref<1x8x256xbf16, #tpu.memory_space<vmem>>, vector<1x8x256xbf16>
    %8 = vector.shape_cast %7 : vector<1x8x256xbf16> to vector<8x256xbf16>
    %c8_i32 = arith.constant 8 : i32
    %9 = arith.muli %arg1, %c8_i32 : i32
    %10 = tpu.iota {dimensions = array<i32: 1>} : vector<1x8xi32>
    %11 = vector.broadcast %9 : i32 to vector<1x8xi32>
    %12 = arith.addi %11, %10 : vector<1x8xi32>
    %c5_i32 = arith.constant 5 : i32
    %13 = vector.broadcast %c5_i32 : i32 to vector<1x8xi32>
    %14 = arith.cmpi slt, %12, %13 : vector<1x8xi32>
    %15 = vector.extract_strided_slice %4 {offsets = [0, 0], sizes = [8, 128], strides = [1, 1]} : vector<8x256xbf16> to vector<8x128xbf16>
    %16 = vector.extract_strided_slice %6 {offsets = [0, 0], sizes = [8, 128], strides = [1, 1]} : vector<8x256xbf16> to vector<8x128xbf16>
    %17 = vector.extract_strided_slice %8 {offsets = [0, 0], sizes = [8, 128], strides = [1, 1]} : vector<8x256xbf16> to vector<8x128xbf16>
    %cst = arith.constant dense<0.000000e+00> : vector<8x8xf32>
    %18 = tpu.matmul %15, %16, %cst {dimension_numbers = #tpu.dot_dimension_numbers<[1], [1], [0], [0], [0, 0, 1, 0], [], []>} : vector<8x128xbf16>, vector<8x128xbf16>, vector<8x8xf32> -> vector<8x8xf32>
    %cst_9 = arith.constant 0.0883883461 : f32
    %19 = vector.broadcast %cst_9 : f32 to vector<8x8xf32>
    %20 = arith.mulf %18, %19 : vector<8x8xf32>
    %cst_10 = arith.constant -1.000000e+30 : f32
    %21 = vector.shape_cast %14 : vector<1x8xi1> to vector<1x8xi1>
    %22 = vector.broadcast %21 : vector<1x8xi1> to vector<8x8xi1>
    %23 = vector.broadcast %cst_10 : f32 to vector<8x8xf32>
    %24 = arith.select %22, %20, %23 : vector<8x8xi1>, vector<8x8xf32>
    %c0_11 = arith.constant 0 : index
    %c0_12 = arith.constant 0 : index
    %c0_13 = arith.constant 0 : index
    %25 = vector.load %arg9[%c0_11, %c0_12, %c0_13] : memref<2x8x128xf32, #tpu.memory_space<vmem>>, vector<1x8x128xf32>
    %26 = vector.shape_cast %25 : vector<1x8x128xf32> to vector<8x128xf32>
    %cst_14 = arith.constant dense<0xFF800000> : vector<8xf32>
    %27 = vector.multi_reduction <maximumf>, %26, %cst_14 [1] : vector<8x128xf32> to vector<8xf32>
    %28 = vector.shape_cast %27 : vector<8xf32> to vector<8x1xf32>
    %c0_15 = arith.constant 0 : index
    %c0_16 = arith.constant 0 : index
    %c0_17 = arith.constant 0 : index
    %29 = vector.load %arg10[%c0_15, %c0_16, %c0_17] : memref<2x8x128xf32, #tpu.memory_space<vmem>>, vector<1x8x128xf32>
    %30 = vector.shape_cast %29 : vector<1x8x128xf32> to vector<8x128xf32>
    %cst_18 = arith.constant dense<0xFF800000> : vector<8xf32>
    %31 = vector.multi_reduction <maximumf>, %30, %cst_18 [1] : vector<8x128xf32> to vector<8xf32>
    %32 = vector.shape_cast %31 : vector<8xf32> to vector<8x1xf32>
    %cst_19 = arith.constant dense<0xFF800000> : vector<8xf32>
    %33 = vector.multi_reduction <maximumf>, %24, %cst_19 [1] : vector<8x8xf32> to vector<8xf32>
    %34 = vector.shape_cast %33 : vector<8xf32> to vector<8x1xf32>
    %35 = arith.maximumf %28, %34 : vector<8x1xf32>
    %36 = arith.subf %28, %35 : vector<8x1xf32>
    %37 = math.exp %36 : vector<8x1xf32>
    %38 = vector.broadcast %35 : vector<8x1xf32> to vector<8x8xf32>
    %39 = arith.subf %24, %38 : vector<8x8xf32>
    %40 = math.exp %39 : vector<8x8xf32>
    %41 = arith.mulf %37, %32 : vector<8x1xf32>
    %cst_20 = arith.constant dense<0.000000e+00> : vector<8xf32>
    %42 = vector.multi_reduction <add>, %40, %cst_20 [1] : vector<8x8xf32> to vector<8xf32>
    %43 = vector.shape_cast %42 : vector<8xf32> to vector<8x1xf32>
    %44 = arith.addf %41, %43 : vector<8x1xf32>
    %45 = arith.truncf %40 : vector<8x8xf32> to vector<8x8xbf16>
    %cst_21 = arith.constant dense<0.000000e+00> : vector<8x128xf32>
    %46 = tpu.matmul %45, %17, %cst_21 {dimension_numbers = #tpu.dot_dimension_numbers<[1], [0], [0], [1], [0, 0, 1, 1], [], []>} : vector<8x8xbf16>, vector<8x128xbf16>, vector<8x128xf32> -> vector<8x128xf32>
    %c0_22 = arith.constant 0 : index
    %c0_23 = arith.constant 0 : index
    %47 = vector.load %arg11[%c0_22, %c0_23] : memref<8x256xf32, #tpu.memory_space<vmem>>, vector<8x128xf32>
    %48 = vector.broadcast %37 : vector<8x1xf32> to vector<8x128xf32>
    %49 = arith.mulf %48, %47 : vector<8x128xf32>
    %50 = arith.addf %49, %46 : vector<8x128xf32>
    %c0_24 = arith.constant 0 : index
    %c0_25 = arith.constant 0 : index
    %51 = vector.load %arg11[%c0_24, %c0_25] : memref<8x256xf32, #tpu.memory_space<vmem>>, vector<8x128xf32>
    tpu.vector_store %arg11[%c0_24, %c0_25], %50 {strides = array<i32>} : memref<8x256xf32, #tpu.memory_space<vmem>>, vector<8x128xf32>,
    %52 = vector.shape_cast %35 : vector<8x1xf32> to vector<8x1xf32>
    %53 = vector.broadcast %52 : vector<8x1xf32> to vector<8x128xf32>
    %c0_26 = arith.constant 0 : index
    %c0_27 = arith.constant 0 : index
    %c0_28 = arith.constant 0 : index
    %54 = vector.load %arg9[%c0_26, %c0_27, %c0_28] : memref<2x8x128xf32, #tpu.memory_space<vmem>>, vector<1x8x128xf32>
    %55 = vector.shape_cast %54 : vector<1x8x128xf32> to vector<8x128xf32>
    %56 = vector.shape_cast %53 : vector<8x128xf32> to vector<1x8x128xf32>
    tpu.vector_store %arg9[%c0_26, %c0_27, %c0_28], %56 {strides = array<i32>} : memref<2x8x128xf32, #tpu.memory_space<vmem>>, vector<1x8x128xf32>,
    %57 = vector.shape_cast %44 : vector<8x1xf32> to vector<8x1xf32>
    %58 = vector.broadcast %57 : vector<8x1xf32> to vector<8x128xf32>
    %c0_29 = arith.constant 0 : index
    %c0_30 = arith.constant 0 : index
    %c0_31 = arith.constant 0 : index
    %59 = vector.load %arg10[%c0_29, %c0_30, %c0_31] : memref<2x8x128xf32, #tpu.memory_space<vmem>>, vector<1x8x128xf32>
    %60 = vector.shape_cast %59 : vector<1x8x128xf32> to vector<8x128xf32>
    %61 = vector.shape_cast %58 : vector<8x128xf32> to vector<1x8x128xf32>
    tpu.vector_store %arg10[%c0_29, %c0_30, %c0_31], %61 {strides = array<i32>} : memref<2x8x128xf32, #tpu.memory_space<vmem>>, vector<1x8x128xf32>,
    %62 = vector.extract_strided_slice %4 {offsets = [0, 128], sizes = [8, 128], strides = [1, 1]} : vector<8x256xbf16> to vector<8x128xbf16>
    %63 = vector.extract_strided_slice %6 {offsets = [0, 128], sizes = [8, 128], strides = [1, 1]} : vector<8x256xbf16> to vector<8x128xbf16>
    %64 = vector.extract_strided_slice %8 {offsets = [0, 128], sizes = [8, 128], strides = [1, 1]} : vector<8x256xbf16> to vector<8x128xbf16>
    %cst_32 = arith.constant dense<0.000000e+00> : vector<8x8xf32>
    %65 = tpu.matmul %62, %63, %cst_32 {dimension_numbers = #tpu.dot_dimension_numbers<[1], [1], [0], [0], [0, 0, 1, 0], [], []>} : vector<8x128xbf16>, vector<8x128xbf16>, vector<8x8xf32> -> vector<8x8xf32>
    %cst_33 = arith.constant 0.0883883461 : f32
    %66 = vector.broadcast %cst_33 : f32 to vector<8x8xf32>
    %67 = arith.mulf %65, %66 : vector<8x8xf32>
    %cst_34 = arith.constant -1.000000e+30 : f32
    %68 = vector.shape_cast %14 : vector<1x8xi1> to vector<1x8xi1>
    %69 = vector.broadcast %68 : vector<1x8xi1> to vector<8x8xi1>
    %70 = vector.broadcast %cst_34 : f32 to vector<8x8xf32>
    %71 = arith.select %69, %67, %70 : vector<8x8xi1>, vector<8x8xf32>
    %c1 = arith.constant 1 : index
    %c0_35 = arith.constant 0 : index
    %c0_36 = arith.constant 0 : index
    %72 = vector.load %arg9[%c1, %c0_35, %c0_36] : memref<2x8x128xf32, #tpu.memory_space<vmem>>, vector<1x8x128xf32>
    %73 = vector.shape_cast %72 : vector<1x8x128xf32> to vector<8x128xf32>
    %cst_37 = arith.constant dense<0xFF800000> : vector<8xf32>
    %74 = vector.multi_reduction <maximumf>, %73, %cst_37 [1] : vector<8x128xf32> to vector<8xf32>
    %75 = vector.shape_cast %74 : vector<8xf32> to vector<8x1xf32>
    %c1_38 = arith.constant 1 : index
    %c0_39 = arith.constant 0 : index
    %c0_40 = arith.constant 0 : index
    %76 = vector.load %arg10[%c1_38, %c0_39, %c0_40] : memref<2x8x128xf32, #tpu.memory_space<vmem>>, vector<1x8x128xf32>
    %77 = vector.shape_cast %76 : vector<1x8x128xf32> to vector<8x128xf32>
    %cst_41 = arith.constant dense<0xFF800000> : vector<8xf32>
    %78 = vector.multi_reduction <maximumf>, %77, %cst_41 [1] : vector<8x128xf32> to vector<8xf32>
    %79 = vector.shape_cast %78 : vector<8xf32> to vector<8x1xf32>
    %cst_42 = arith.constant dense<0xFF800000> : vector<8xf32>
    %80 = vector.multi_reduction <maximumf>, %71, %cst_42 [1] : vector<8x8xf32> to vector<8xf32>
    %81 = vector.shape_cast %80 : vector<8xf32> to vector<8x1xf32>
    %82 = arith.maximumf %75, %81 : vector<8x1xf32>
    %83 = arith.subf %75, %82 : vector<8x1xf32>
    %84 = math.exp %83 : vector<8x1xf32>
    %85 = vector.broadcast %82 : vector<8x1xf32> to vector<8x8xf32>
    %86 = arith.subf %71, %85 : vector<8x8xf32>
    %87 = math.exp %86 : vector<8x8xf32>
    %88 = arith.mulf %84, %79 : vector<8x1xf32>
    %cst_43 = arith.constant dense<0.000000e+00> : vector<8xf32>
    %89 = vector.multi_reduction <add>, %87, %cst_43 [1] : vector<8x8xf32> to vector<8xf32>
    %90 = vector.shape_cast %89 : vector<8xf32> to vector<8x1xf32>
    %91 = arith.addf %88, %90 : vector<8x1xf32>
    %92 = arith.truncf %87 : vector<8x8xf32> to vector<8x8xbf16>
    %cst_44 = arith.constant dense<0.000000e+00> : vector<8x128xf32>
    %93 = tpu.matmul %92, %64, %cst_44 {dimension_numbers = #tpu.dot_dimension_numbers<[1], [0], [0], [1], [0, 0, 1, 1], [], []>} : vector<8x8xbf16>, vector<8x128xbf16>, vector<8x128xf32> -> vector<8x128xf32>
    %c0_45 = arith.constant 0 : index
    %c128 = arith.constant 128 : index
    %94 = vector.load %arg11[%c0_45, %c128] : memref<8x256xf32, #tpu.memory_space<vmem>>, vector<8x128xf32>
    %95 = vector.broadcast %84 : vector<8x1xf32> to vector<8x128xf32>
    %96 = arith.mulf %95, %94 : vector<8x128xf32>
    %97 = arith.addf %96, %93 : vector<8x128xf32>
    %c0_46 = arith.constant 0 : index
    %c128_47 = arith.constant 128 : index
    %98 = vector.load %arg11[%c0_46, %c128_47] : memref<8x256xf32, #tpu.memory_space<vmem>>, vector<8x128xf32>
    tpu.vector_store %arg11[%c0_46, %c128_47], %97 {strides = array<i32>} : memref<8x256xf32, #tpu.memory_space<vmem>>, vector<8x128xf32>,
    %99 = vector.shape_cast %82 : vector<8x1xf32> to vector<8x1xf32>
    %100 = vector.broadcast %99 : vector<8x1xf32> to vector<8x128xf32>
    %c1_48 = arith.constant 1 : index
    %c0_49 = arith.constant 0 : index
    %c0_50 = arith.constant 0 : index
    %101 = vector.load %arg9[%c1_48, %c0_49, %c0_50] : memref<2x8x128xf32, #tpu.memory_space<vmem>>, vector<1x8x128xf32>
    %102 = vector.shape_cast %101 : vector<1x8x128xf32> to vector<8x128xf32>
    %103 = vector.shape_cast %100 : vector<8x128xf32> to vector<1x8x128xf32>
    tpu.vector_store %arg9[%c1_48, %c0_49, %c0_50], %103 {strides = array<i32>} : memref<2x8x128xf32, #tpu.memory_space<vmem>>, vector<1x8x128xf32>,
    %104 = vector.shape_cast %91 : vector<8x1xf32> to vector<8x1xf32>
    %105 = vector.broadcast %104 : vector<8x1xf32> to vector<8x128xf32>
    %c1_51 = arith.constant 1 : index
    %c0_52 = arith.constant 0 : index
    %c0_53 = arith.constant 0 : index
    %106 = vector.load %arg10[%c1_51, %c0_52, %c0_53] : memref<2x8x128xf32, #tpu.memory_space<vmem>>, vector<1x8x128xf32>
    %107 = vector.shape_cast %106 : vector<1x8x128xf32> to vector<8x128xf32>
    %108 = vector.shape_cast %105 : vector<8x128xf32> to vector<1x8x128xf32>
    tpu.vector_store %arg10[%c1_51, %c0_52, %c0_53], %108 {strides = array<i32>} : memref<2x8x128xf32, #tpu.memory_space<vmem>>, vector<1x8x128xf32>,
    %c0_i32_54 = arith.constant 0 : i32
    %109 = arith.cmpi eq, %arg1, %c0_i32_54 : i32
    %110 = arith.extui %109 : i1 to i32
    %c0_i32_55 = arith.constant 0 : i32
    %111 = arith.cmpi ne, %110, %c0_i32_55 : i32
    scf.if %111 {
      %c0_56 = arith.constant 0 : index
      %c0_57 = arith.constant 0 : index
      %c0_58 = arith.constant 0 : index
      %112 = vector.load %arg10[%c0_56, %c0_57, %c0_58] : memref<2x8x128xf32, #tpu.memory_space<vmem>>, vector<1x8x128xf32>
      %113 = vector.shape_cast %112 : vector<1x8x128xf32> to vector<8x128xf32>
      %cst_59 = arith.constant dense<0xFF800000> : vector<8xf32>
      %114 = vector.multi_reduction <maximumf>, %113, %cst_59 [1] : vector<8x128xf32> to vector<8xf32>
      %115 = vector.shape_cast %114 : vector<8xf32> to vector<8x1xf32>
      %116 = tpu.reciprocal %115 {approx = true} : vector<8x1xf32> -> vector<8x1xf32>
      %c0_60 = arith.constant 0 : index
      %c0_61 = arith.constant 0 : index
      %117 = vector.load %arg11[%c0_60, %c0_61] : memref<8x256xf32, #tpu.memory_space<vmem>>, vector<8x128xf32>
      %118 = vector.broadcast %116 : vector<8x1xf32> to vector<8x128xf32>
      %119 = arith.mulf %117, %118 : vector<8x128xf32>
      %c1_62 = arith.constant 1 : index
      %c0_63 = arith.constant 0 : index
      %c0_64 = arith.constant 0 : index
      %120 = vector.load %arg10[%c1_62, %c0_63, %c0_64] : memref<2x8x128xf32, #tpu.memory_space<vmem>>, vector<1x8x128xf32>
      %121 = vector.shape_cast %120 : vector<1x8x128xf32> to vector<8x128xf32>
      %cst_65 = arith.constant dense<0xFF800000> : vector<8xf32>
      %122 = vector.multi_reduction <maximumf>, %121, %cst_65 [1] : vector<8x128xf32> to vector<8xf32>
      %123 = vector.shape_cast %122 : vector<8xf32> to vector<8x1xf32>
      %124 = tpu.reciprocal %123 {approx = true} : vector<8x1xf32> -> vector<8x1xf32>
      %c0_66 = arith.constant 0 : index
      %c128_67 = arith.constant 128 : index
      %125 = vector.load %arg11[%c0_66, %c128_67] : memref<8x256xf32, #tpu.memory_space<vmem>>, vector<8x128xf32>
      %126 = vector.broadcast %124 : vector<8x1xf32> to vector<8x128xf32>
      %127 = arith.mulf %125, %126 : vector<8x128xf32>
      %128 = tpu.concatenate %119, %127 in 1 : vector<8x128xf32>, vector<8x128xf32> -> vector<8x256xf32>
      %129 = arith.truncf %128 : vector<8x256xf32> to vector<8x256xbf16>
      %c0_68 = arith.constant 0 : index
      %c0_69 = arith.constant 0 : index
      %130 = vector.load %arg5[%c0_68, %c0_69] : memref<256x256xbf16, #tpu.memory_space<vmem>>, vector<256x256xbf16>
      %cst_70 = arith.constant dense<0.000000e+00> : vector<8x256xf32>
      %131 = tpu.matmul %129, %130, %cst_70 {dimension_numbers = #tpu.dot_dimension_numbers<[1], [0], [0], [1], [0, 0, 1, 1], [], []>} : vector<8x256xbf16>, vector<256x256xbf16>, vector<8x256xf32> -> vector<8x256xf32>
      %c0_71 = arith.constant 0 : index
      %c0_72 = arith.constant 0 : index
      %132 = vector.load %arg6[%c0_71, %c0_72] : memref<1x256xf32, #tpu.memory_space<vmem>>, vector<1x256xf32>
      %133 = vector.broadcast %132 : vector<1x256xf32> to vector<8x256xf32>
      %134 = arith.addf %131, %133 : vector<8x256xf32>
      %c0_73 = arith.constant 0 : index
      %c0_74 = arith.constant 0 : index
      %c0_75 = arith.constant 0 : index
      %135 = vector.load %arg7[%c0_73, %c0_74, %c0_75] : memref<1x8x256xbf16, #tpu.memory_space<vmem>>, vector<1x8x256xbf16>
      %136 = vector.shape_cast %135 : vector<1x8x256xbf16> to vector<8x256xbf16>
      %137 = arith.extf %136 : vector<8x256xbf16> to vector<8x256xf32>
      %138 = arith.addf %134, %137 : vector<8x256xf32>
      %139 = arith.truncf %138 : vector<8x256xf32> to vector<8x256xbf16>
      %c0_76 = arith.constant 0 : index
      %c0_77 = arith.constant 0 : index
      %c0_78 = arith.constant 0 : index
      %140 = vector.load %arg8[%c0_76, %c0_77, %c0_78] : memref<1x8x256xbf16, #tpu.memory_space<vmem>>, vector<1x8x256xbf16>
      %141 = vector.shape_cast %140 : vector<1x8x256xbf16> to vector<8x256xbf16>
      %142 = vector.shape_cast %139 : vector<8x256xbf16> to vector<1x8x256xbf16>
      tpu.vector_store %arg8[%c0_76, %c0_77, %c0_78], %142 {strides = array<i32>} : memref<1x8x256xbf16, #tpu.memory_space<vmem>>, vector<1x8x256xbf16>,
    } else {
    }
    return
  }
  func.func @transform_0(%arg0: i32, %arg1: i32) -> (i32, i32, i32) {
    %c0_i32 = arith.constant 0 : i32
    %c0_i32_0 = arith.constant 0 : i32
    %c0_i32_1 = arith.constant 0 : i32
    return %arg0, %c0_i32, %c0_i32_0 : i32, i32, i32
  }
  func.func @transform_1(%arg0: i32, %arg1: i32) -> (i32, i32, i32) {
    %c1_i32 = arith.constant 1 : i32
    %c0_i32 = arith.constant 0 : i32
    return %arg0, %arg1, %c1_i32 : i32, i32, i32
  }
  func.func @transform_2(%arg0: i32, %arg1: i32) -> (i32, i32, i32) {
    %c2_i32 = arith.constant 2 : i32
    %c0_i32 = arith.constant 0 : i32
    return %arg0, %arg1, %c2_i32 : i32, i32, i32
  }
  func.func @transform_3(%arg0: i32, %arg1: i32) -> (i32, i32) {
    %c0_i32 = arith.constant 0 : i32
    %c0_i32_0 = arith.constant 0 : i32
    %c0_i32_1 = arith.constant 0 : i32
    return %c0_i32, %c0_i32_0 : i32, i32
  }
  func.func @transform_4(%arg0: i32, %arg1: i32) -> (i32, i32) {
    %c0_i32 = arith.constant 0 : i32
    %c0_i32_0 = arith.constant 0 : i32
    %c0_i32_1 = arith.constant 0 : i32
    return %c0_i32, %c0_i32_0 : i32, i32
  }
  func.func @transform_5(%arg0: i32, %arg1: i32) -> (i32, i32, i32) {
    %c0_i32 = arith.constant 0 : i32
    %c0_i32_0 = arith.constant 0 : i32
    %c0_i32_1 = arith.constant 0 : i32
    return %arg0, %c0_i32, %c0_i32_0 : i32, i32, i32
  }
  func.func @transform_6(%arg0: i32, %arg1: i32) -> (i32, i32, i32) {
    %c0_i32 = arith.constant 0 : i32
    %c0_i32_0 = arith.constant 0 : i32
    %c0_i32_1 = arith.constant 0 : i32
    return %arg0, %c0_i32, %c0_i32_0 : i32, i32, i32
  }
}

module attributes {stable_mosaic.version = 11 : i64} {
  func.func @_mlp_kernel(%arg0: i32, %arg1: i32, %arg2: memref<16x256xbf16, #tpu.memory_space<vmem>>, %arg3: memref<1x256xf32, #tpu.memory_space<vmem>>, %arg4: memref<1x256xf32, #tpu.memory_space<vmem>>, %arg5: memref<256x256xbf16, #tpu.memory_space<vmem>>, %arg6: memref<1x256xf32, #tpu.memory_space<vmem>>, %arg7: memref<256x256xbf16, #tpu.memory_space<vmem>>, %arg8: memref<1x256xf32, #tpu.memory_space<vmem>>, %arg9: memref<16x256xbf16, #tpu.memory_space<vmem>>, %arg10: memref<16x256xbf16, #tpu.memory_space<vmem>>, %arg11: memref<16x256xf32, #tpu.memory_space<vmem>>) attributes {dimension_semantics = [#tpu.dimension_semantics<parallel>, #tpu.dimension_semantics<arbitrary>], iteration_bounds = array<i64: 1, 4>, scalar_prefetch = 0 : i64, scratch_operands = 2 : i64, tpu.core_type = #tpu.core_type<tc>, window_params = [{transform_indices = @transform_0, window_bounds = array<i64: 16, 256>}, {pipeline_mode = #tpu.pipeline_mode<synchronous>, transform_indices = @transform_1, window_bounds = array<i64: 1, 256>}, {pipeline_mode = #tpu.pipeline_mode<synchronous>, transform_indices = @transform_2, window_bounds = array<i64: 1, 256>}, {transform_indices = @transform_3, window_bounds = array<i64: 256, 256>}, {transform_indices = @transform_4, window_bounds = array<i64: 1, 256>}, {transform_indices = @transform_5, window_bounds = array<i64: 256, 256>}, {pipeline_mode = #tpu.pipeline_mode<synchronous>, transform_indices = @transform_6, window_bounds = array<i64: 1, 256>}, {transform_indices = @transform_7, window_bounds = array<i64: 16, 256>}]} {
    %c0_i32 = arith.constant 0 : i32
    %0 = arith.cmpi eq, %arg1, %c0_i32 : i32
    %1 = arith.extui %0 : i1 to i32
    %c0_i32_0 = arith.constant 0 : i32
    %2 = arith.cmpi ne, %1, %c0_i32_0 : i32
    scf.if %2 {
      %c0_17 = arith.constant 0 : index
      %c0_18 = arith.constant 0 : index
      %26 = vector.load %arg2[%c0_17, %c0_18] : memref<16x256xbf16, #tpu.memory_space<vmem>>, vector<16x256xbf16>
      %27 = arith.extf %26 : vector<16x256xbf16> to vector<16x256xf32>
      %cst_19 = arith.constant dense<0.000000e+00> : vector<16xf32>
      %28 = vector.multi_reduction <add>, %27, %cst_19 [1] : vector<16x256xf32> to vector<16xf32>
      %29 = vector.shape_cast %28 : vector<16xf32> to vector<16x1xf32>
      %cst_20 = arith.constant 2.560000e+02 : f32
      %30 = vector.broadcast %cst_20 : f32 to vector<16x1xf32>
      %31 = arith.divf %29, %30 : vector<16x1xf32>
      %32 = vector.broadcast %31 : vector<16x1xf32> to vector<16x256xf32>
      %33 = arith.subf %27, %32 : vector<16x256xf32>
      %34 = arith.mulf %33, %33 : vector<16x256xf32>
      %cst_21 = arith.constant dense<0.000000e+00> : vector<16xf32>
      %35 = vector.multi_reduction <add>, %34, %cst_21 [1] : vector<16x256xf32> to vector<16xf32>
      %36 = vector.shape_cast %35 : vector<16xf32> to vector<16x1xf32>
      %cst_22 = arith.constant 2.560000e+02 : f32
      %37 = vector.broadcast %cst_22 : f32 to vector<16x1xf32>
      %38 = arith.divf %36, %37 : vector<16x1xf32>
      %39 = vector.broadcast %31 : vector<16x1xf32> to vector<16x256xf32>
      %40 = arith.subf %27, %39 : vector<16x256xf32>
      %cst_23 = arith.constant 9.99999997E-7 : f32
      %41 = vector.broadcast %cst_23 : f32 to vector<16x1xf32>
      %42 = arith.addf %38, %41 : vector<16x1xf32>
      %43 = math.rsqrt %42 : vector<16x1xf32>
      %44 = vector.broadcast %43 : vector<16x1xf32> to vector<16x256xf32>
      %45 = arith.mulf %40, %44 : vector<16x256xf32>
      %c0_24 = arith.constant 0 : index
      %c0_25 = arith.constant 0 : index
      %46 = vector.load %arg3[%c0_24, %c0_25] : memref<1x256xf32, #tpu.memory_space<vmem>>, vector<1x256xf32>
      %47 = vector.broadcast %46 : vector<1x256xf32> to vector<16x256xf32>
      %48 = arith.mulf %45, %47 : vector<16x256xf32>
      %c0_26 = arith.constant 0 : index
      %c0_27 = arith.constant 0 : index
      %49 = vector.load %arg4[%c0_26, %c0_27] : memref<1x256xf32, #tpu.memory_space<vmem>>, vector<1x256xf32>
      %50 = vector.broadcast %49 : vector<1x256xf32> to vector<16x256xf32>
      %51 = arith.addf %48, %50 : vector<16x256xf32>
      %52 = arith.truncf %51 : vector<16x256xf32> to vector<16x256xbf16>
      %c0_28 = arith.constant 0 : index
      %c0_29 = arith.constant 0 : index
      %53 = vector.load %arg10[%c0_28, %c0_29] : memref<16x256xbf16, #tpu.memory_space<vmem>>, vector<16x256xbf16>
      tpu.vector_store %arg10[%c0_28, %c0_29], %52 {strides = array<i32>} : memref<16x256xbf16, #tpu.memory_space<vmem>>, vector<16x256xbf16>,
      %cst_30 = arith.constant 0.000000e+00 : f32
      %54 = vector.broadcast %cst_30 : f32 to vector<16x256xf32>
      %c0_31 = arith.constant 0 : index
      %c0_32 = arith.constant 0 : index
      %55 = vector.load %arg11[%c0_31, %c0_32] : memref<16x256xf32, #tpu.memory_space<vmem>>, vector<16x256xf32>
      tpu.vector_store %arg11[%c0_31, %c0_32], %54 {strides = array<i32>} : memref<16x256xf32, #tpu.memory_space<vmem>>, vector<16x256xf32>,
    } else {
    }
    %c0 = arith.constant 0 : index
    %c0_1 = arith.constant 0 : index
    %3 = vector.load %arg10[%c0, %c0_1] : memref<16x256xbf16, #tpu.memory_space<vmem>>, vector<16x256xbf16>
    %c0_2 = arith.constant 0 : index
    %c0_3 = arith.constant 0 : index
    %4 = vector.load %arg5[%c0_2, %c0_3] : memref<256x256xbf16, #tpu.memory_space<vmem>>, vector<256x256xbf16>
    %cst = arith.constant dense<0.000000e+00> : vector<16x256xf32>
    %5 = tpu.matmul %3, %4, %cst {dimension_numbers = #tpu.dot_dimension_numbers<[1], [0], [0], [1], [0, 0, 1, 1], [], []>} : vector<16x256xbf16>, vector<256x256xbf16>, vector<16x256xf32> -> vector<16x256xf32>
    %c0_4 = arith.constant 0 : index
    %c0_5 = arith.constant 0 : index
    %6 = vector.load %arg6[%c0_4, %c0_5] : memref<1x256xf32, #tpu.memory_space<vmem>>, vector<1x256xf32>
    %7 = vector.broadcast %6 : vector<1x256xf32> to vector<16x256xf32>
    %8 = arith.addf %5, %7 : vector<16x256xf32>
    %cst_6 = arith.constant 5.000000e-01 : f32
    %9 = vector.broadcast %cst_6 : f32 to vector<16x256xf32>
    %10 = arith.mulf %9, %8 : vector<16x256xf32>
    %cst_7 = arith.constant 0.707106769 : f32
    %11 = vector.broadcast %cst_7 : f32 to vector<16x256xf32>
    %12 = arith.mulf %8, %11 : vector<16x256xf32>
    %13 = math.erf %12 : vector<16x256xf32>
    %cst_8 = arith.constant 1.000000e+00 : f32
    %14 = vector.broadcast %cst_8 : f32 to vector<16x256xf32>
    %15 = arith.addf %14, %13 : vector<16x256xf32>
    %16 = arith.mulf %10, %15 : vector<16x256xf32>
    %c0_9 = arith.constant 0 : index
    %c0_10 = arith.constant 0 : index
    %17 = vector.load %arg11[%c0_9, %c0_10] : memref<16x256xf32, #tpu.memory_space<vmem>>, vector<16x256xf32>
    %18 = arith.truncf %16 : vector<16x256xf32> to vector<16x256xbf16>
    %c0_11 = arith.constant 0 : index
    %c0_12 = arith.constant 0 : index
    %19 = vector.load %arg7[%c0_11, %c0_12] : memref<256x256xbf16, #tpu.memory_space<vmem>>, vector<256x256xbf16>
    %cst_13 = arith.constant dense<0.000000e+00> : vector<16x256xf32>
    %20 = tpu.matmul %18, %19, %cst_13 {dimension_numbers = #tpu.dot_dimension_numbers<[1], [0], [0], [1], [0, 0, 1, 1], [], []>} : vector<16x256xbf16>, vector<256x256xbf16>, vector<16x256xf32> -> vector<16x256xf32>
    %21 = arith.addf %17, %20 : vector<16x256xf32>
    %c0_14 = arith.constant 0 : index
    %c0_15 = arith.constant 0 : index
    %22 = vector.load %arg11[%c0_14, %c0_15] : memref<16x256xf32, #tpu.memory_space<vmem>>, vector<16x256xf32>
    tpu.vector_store %arg11[%c0_14, %c0_15], %21 {strides = array<i32>} : memref<16x256xf32, #tpu.memory_space<vmem>>, vector<16x256xf32>,
    %c3_i32 = arith.constant 3 : i32
    %23 = arith.cmpi eq, %arg1, %c3_i32 : i32
    %24 = arith.extui %23 : i1 to i32
    %c0_i32_16 = arith.constant 0 : i32
    %25 = arith.cmpi ne, %24, %c0_i32_16 : i32
    scf.if %25 {
      %c0_17 = arith.constant 0 : index
      %c0_18 = arith.constant 0 : index
      %26 = vector.load %arg11[%c0_17, %c0_18] : memref<16x256xf32, #tpu.memory_space<vmem>>, vector<16x256xf32>
      %c0_19 = arith.constant 0 : index
      %c0_20 = arith.constant 0 : index
      %27 = vector.load %arg8[%c0_19, %c0_20] : memref<1x256xf32, #tpu.memory_space<vmem>>, vector<1x256xf32>
      %28 = vector.broadcast %27 : vector<1x256xf32> to vector<16x256xf32>
      %29 = arith.addf %26, %28 : vector<16x256xf32>
      %c0_21 = arith.constant 0 : index
      %c0_22 = arith.constant 0 : index
      %30 = vector.load %arg2[%c0_21, %c0_22] : memref<16x256xbf16, #tpu.memory_space<vmem>>, vector<16x256xbf16>
      %31 = arith.extf %30 : vector<16x256xbf16> to vector<16x256xf32>
      %32 = arith.addf %29, %31 : vector<16x256xf32>
      %33 = arith.truncf %32 : vector<16x256xf32> to vector<16x256xbf16>
      %c0_23 = arith.constant 0 : index
      %c0_24 = arith.constant 0 : index
      %34 = vector.load %arg9[%c0_23, %c0_24] : memref<16x256xbf16, #tpu.memory_space<vmem>>, vector<16x256xbf16>
      tpu.vector_store %arg9[%c0_23, %c0_24], %33 {strides = array<i32>} : memref<16x256xbf16, #tpu.memory_space<vmem>>, vector<16x256xbf16>,
    } else {
    }
    return
  }
  func.func @transform_0(%arg0: i32, %arg1: i32) -> (i32, i32) {
    %c0_i32 = arith.constant 0 : i32
    %c0_i32_0 = arith.constant 0 : i32
    return %arg0, %c0_i32 : i32, i32
  }
  func.func @transform_1(%arg0: i32, %arg1: i32) -> (i32, i32) {
    %c0_i32 = arith.constant 0 : i32
    %c0_i32_0 = arith.constant 0 : i32
    %c0_i32_1 = arith.constant 0 : i32
    return %c0_i32, %c0_i32_0 : i32, i32
  }
  func.func @transform_2(%arg0: i32, %arg1: i32) -> (i32, i32) {
    %c0_i32 = arith.constant 0 : i32
    %c0_i32_0 = arith.constant 0 : i32
    %c0_i32_1 = arith.constant 0 : i32
    return %c0_i32, %c0_i32_0 : i32, i32
  }
  func.func @transform_3(%arg0: i32, %arg1: i32) -> (i32, i32) {
    %c0_i32 = arith.constant 0 : i32
    %c0_i32_0 = arith.constant 0 : i32
    return %c0_i32, %arg1 : i32, i32
  }
  func.func @transform_4(%arg0: i32, %arg1: i32) -> (i32, i32) {
    %c0_i32 = arith.constant 0 : i32
    %c0_i32_0 = arith.constant 0 : i32
    return %c0_i32, %arg1 : i32, i32
  }
  func.func @transform_5(%arg0: i32, %arg1: i32) -> (i32, i32) {
    %c0_i32 = arith.constant 0 : i32
    %c0_i32_0 = arith.constant 0 : i32
    return %arg1, %c0_i32 : i32, i32
  }
  func.func @transform_6(%arg0: i32, %arg1: i32) -> (i32, i32) {
    %c0_i32 = arith.constant 0 : i32
    %c0_i32_0 = arith.constant 0 : i32
    %c0_i32_1 = arith.constant 0 : i32
    return %c0_i32, %c0_i32_0 : i32, i32
  }
  func.func @transform_7(%arg0: i32, %arg1: i32) -> (i32, i32) {
    %c0_i32 = arith.constant 0 : i32
    %c0_i32_0 = arith.constant 0 : i32
    return %arg0, %c0_i32 : i32, i32
  }
}

module attributes {stable_mosaic.version = 11 : i64} {
  func.func @_fused_matmul_kernel(%arg0: i32, %arg1: i32, %arg2: i32, %arg3: memref<16x256xbf16, #tpu.memory_space<vmem>>, %arg4: memref<1x256xf32, #tpu.memory_space<vmem>>, %arg5: memref<1x256xf32, #tpu.memory_space<vmem>>, %arg6: memref<256x256xbf16, #tpu.memory_space<vmem>>, %arg7: memref<1x256xf32, #tpu.memory_space<vmem>>, %arg8: memref<16x256xbf16, #tpu.memory_space<vmem>>, %arg9: memref<16x256xf32, #tpu.memory_space<vmem>>, %arg10: memref<16x256xbf16, #tpu.memory_space<vmem>>) attributes {dimension_semantics = [#tpu.dimension_semantics<parallel>, #tpu.dimension_semantics<arbitrary>, #tpu.dimension_semantics<arbitrary>], iteration_bounds = array<i64: 1, 3, 1>, scalar_prefetch = 0 : i64, scratch_operands = 2 : i64, tpu.core_type = #tpu.core_type<tc>, window_params = [{transform_indices = @transform_0, window_bounds = array<i64: 16, 256>}, {pipeline_mode = #tpu.pipeline_mode<synchronous>, transform_indices = @transform_1, window_bounds = array<i64: 1, 256>}, {pipeline_mode = #tpu.pipeline_mode<synchronous>, transform_indices = @transform_2, window_bounds = array<i64: 1, 256>}, {transform_indices = @transform_3, window_bounds = array<i64: 256, 256>}, {transform_indices = @transform_4, window_bounds = array<i64: 1, 256>}, {transform_indices = @transform_5, window_bounds = array<i64: 16, 256>}]} {
    %c0_i32 = arith.constant 0 : i32
    %0 = arith.cmpi eq, %arg2, %c0_i32 : i32
    %1 = arith.extui %0 : i1 to i32
    %c0_i32_0 = arith.constant 0 : i32
    %2 = arith.cmpi ne, %1, %c0_i32_0 : i32
    scf.if %2 {
      %cst_13 = arith.constant 0.000000e+00 : f32
      %17 = vector.broadcast %cst_13 : f32 to vector<16x256xf32>
      %c0_14 = arith.constant 0 : index
      %c0_15 = arith.constant 0 : index
      %18 = vector.load %arg9[%c0_14, %c0_15] : memref<16x256xf32, #tpu.memory_space<vmem>>, vector<16x256xf32>
      tpu.vector_store %arg9[%c0_14, %c0_15], %17 {strides = array<i32>} : memref<16x256xf32, #tpu.memory_space<vmem>>, vector<16x256xf32>,
    } else {
    }
    %c0_i32_1 = arith.constant 0 : i32
    %3 = arith.cmpi eq, %arg1, %c0_i32_1 : i32
    %c0_i32_2 = arith.constant 0 : i32
    %4 = arith.cmpi eq, %arg2, %c0_i32_2 : i32
    %5 = arith.andi %3, %4 : i1
    %6 = arith.extui %5 : i1 to i32
    %c0_i32_3 = arith.constant 0 : i32
    %7 = arith.cmpi ne, %6, %c0_i32_3 : i32
    scf.if %7 {
      %c0_13 = arith.constant 0 : index
      %c0_14 = arith.constant 0 : index
      %17 = vector.load %arg3[%c0_13, %c0_14] : memref<16x256xbf16, #tpu.memory_space<vmem>>, vector<16x256xbf16>
      %18 = arith.extf %17 : vector<16x256xbf16> to vector<16x256xf32>
      %cst_15 = arith.constant dense<0.000000e+00> : vector<16xf32>
      %19 = vector.multi_reduction <add>, %18, %cst_15 [1] : vector<16x256xf32> to vector<16xf32>
      %20 = vector.shape_cast %19 : vector<16xf32> to vector<16x1xf32>
      %cst_16 = arith.constant 2.560000e+02 : f32
      %21 = vector.broadcast %cst_16 : f32 to vector<16x1xf32>
      %22 = arith.divf %20, %21 : vector<16x1xf32>
      %23 = vector.broadcast %22 : vector<16x1xf32> to vector<16x256xf32>
      %24 = arith.subf %18, %23 : vector<16x256xf32>
      %25 = arith.mulf %24, %24 : vector<16x256xf32>
      %cst_17 = arith.constant dense<0.000000e+00> : vector<16xf32>
      %26 = vector.multi_reduction <add>, %25, %cst_17 [1] : vector<16x256xf32> to vector<16xf32>
      %27 = vector.shape_cast %26 : vector<16xf32> to vector<16x1xf32>
      %cst_18 = arith.constant 2.560000e+02 : f32
      %28 = vector.broadcast %cst_18 : f32 to vector<16x1xf32>
      %29 = arith.divf %27, %28 : vector<16x1xf32>
      %30 = vector.broadcast %22 : vector<16x1xf32> to vector<16x256xf32>
      %31 = arith.subf %18, %30 : vector<16x256xf32>
      %cst_19 = arith.constant 9.99999997E-7 : f32
      %32 = vector.broadcast %cst_19 : f32 to vector<16x1xf32>
      %33 = arith.addf %29, %32 : vector<16x1xf32>
      %34 = math.rsqrt %33 : vector<16x1xf32>
      %35 = vector.broadcast %34 : vector<16x1xf32> to vector<16x256xf32>
      %36 = arith.mulf %31, %35 : vector<16x256xf32>
      %c0_20 = arith.constant 0 : index
      %c0_21 = arith.constant 0 : index
      %37 = vector.load %arg4[%c0_20, %c0_21] : memref<1x256xf32, #tpu.memory_space<vmem>>, vector<1x256xf32>
      %38 = vector.broadcast %37 : vector<1x256xf32> to vector<16x256xf32>
      %39 = arith.mulf %36, %38 : vector<16x256xf32>
      %c0_22 = arith.constant 0 : index
      %c0_23 = arith.constant 0 : index
      %40 = vector.load %arg5[%c0_22, %c0_23] : memref<1x256xf32, #tpu.memory_space<vmem>>, vector<1x256xf32>
      %41 = vector.broadcast %40 : vector<1x256xf32> to vector<16x256xf32>
      %42 = arith.addf %39, %41 : vector<16x256xf32>
      %43 = arith.truncf %42 : vector<16x256xf32> to vector<16x256xbf16>
      %c0_24 = arith.constant 0 : index
      %c0_25 = arith.constant 0 : index
      %44 = vector.load %arg10[%c0_24, %c0_25] : memref<16x256xbf16, #tpu.memory_space<vmem>>, vector<16x256xbf16>
      tpu.vector_store %arg10[%c0_24, %c0_25], %43 {strides = array<i32>} : memref<16x256xbf16, #tpu.memory_space<vmem>>, vector<16x256xbf16>,
    } else {
    }
    %c0 = arith.constant 0 : index
    %c0_4 = arith.constant 0 : index
    %8 = vector.load %arg10[%c0, %c0_4] : memref<16x256xbf16, #tpu.memory_space<vmem>>, vector<16x256xbf16>
    %c0_5 = arith.constant 0 : index
    %c0_6 = arith.constant 0 : index
    %9 = vector.load %arg9[%c0_5, %c0_6] : memref<16x256xf32, #tpu.memory_space<vmem>>, vector<16x256xf32>
    %c0_7 = arith.constant 0 : index
    %c0_8 = arith.constant 0 : index
    %10 = vector.load %arg6[%c0_7, %c0_8] : memref<256x256xbf16, #tpu.memory_space<vmem>>, vector<256x256xbf16>
    %cst = arith.constant dense<0.000000e+00> : vector<16x256xf32>
    %11 = tpu.matmul %8, %10, %cst {dimension_numbers = #tpu.dot_dimension_numbers<[1], [0], [0], [1], [0, 0, 1, 1], [], []>} : vector<16x256xbf16>, vector<256x256xbf16>, vector<16x256xf32> -> vector<16x256xf32>
    %12 = arith.addf %9, %11 : vector<16x256xf32>
    %c0_9 = arith.constant 0 : index
    %c0_10 = arith.constant 0 : index
    %13 = vector.load %arg9[%c0_9, %c0_10] : memref<16x256xf32, #tpu.memory_space<vmem>>, vector<16x256xf32>
    tpu.vector_store %arg9[%c0_9, %c0_10], %12 {strides = array<i32>} : memref<16x256xf32, #tpu.memory_space<vmem>>, vector<16x256xf32>,
    %c0_i32_11 = arith.constant 0 : i32
    %14 = arith.cmpi eq, %arg2, %c0_i32_11 : i32
    %15 = arith.extui %14 : i1 to i32
    %c0_i32_12 = arith.constant 0 : i32
    %16 = arith.cmpi ne, %15, %c0_i32_12 : i32
    scf.if %16 {
      %c0_13 = arith.constant 0 : index
      %c0_14 = arith.constant 0 : index
      %17 = vector.load %arg9[%c0_13, %c0_14] : memref<16x256xf32, #tpu.memory_space<vmem>>, vector<16x256xf32>
      %c0_15 = arith.constant 0 : index
      %c0_16 = arith.constant 0 : index
      %18 = vector.load %arg7[%c0_15, %c0_16] : memref<1x256xf32, #tpu.memory_space<vmem>>, vector<1x256xf32>
      %19 = vector.broadcast %18 : vector<1x256xf32> to vector<16x256xf32>
      %20 = arith.addf %17, %19 : vector<16x256xf32>
      %21 = arith.truncf %20 : vector<16x256xf32> to vector<16x256xbf16>
      %c0_17 = arith.constant 0 : index
      %c0_18 = arith.constant 0 : index
      %22 = vector.load %arg8[%c0_17, %c0_18] : memref<16x256xbf16, #tpu.memory_space<vmem>>, vector<16x256xbf16>
      tpu.vector_store %arg8[%c0_17, %c0_18], %21 {strides = array<i32>} : memref<16x256xbf16, #tpu.memory_space<vmem>>, vector<16x256xbf16>,
    } else {
    }
    return
  }
  func.func @transform_0(%arg0: i32, %arg1: i32, %arg2: i32) -> (i32, i32) {
    %c0_i32 = arith.constant 0 : i32
    return %arg0, %arg2 : i32, i32
  }
  func.func @transform_1(%arg0: i32, %arg1: i32, %arg2: i32) -> (i32, i32) {
    %c0_i32 = arith.constant 0 : i32
    %c0_i32_0 = arith.constant 0 : i32
    %c0_i32_1 = arith.constant 0 : i32
    return %c0_i32, %c0_i32_0 : i32, i32
  }
  func.func @transform_2(%arg0: i32, %arg1: i32, %arg2: i32) -> (i32, i32) {
    %c0_i32 = arith.constant 0 : i32
    %c0_i32_0 = arith.constant 0 : i32
    %c0_i32_1 = arith.constant 0 : i32
    return %c0_i32, %c0_i32_0 : i32, i32
  }
  func.func @transform_3(%arg0: i32, %arg1: i32, %arg2: i32) -> (i32, i32) {
    %c0_i32 = arith.constant 0 : i32
    return %arg2, %arg1 : i32, i32
  }
  func.func @transform_4(%arg0: i32, %arg1: i32, %arg2: i32) -> (i32, i32) {
    %c0_i32 = arith.constant 0 : i32
    %c0_i32_0 = arith.constant 0 : i32
    return %c0_i32, %arg1 : i32, i32
  }
  func.func @transform_5(%arg0: i32, %arg1: i32, %arg2: i32) -> (i32, i32) {
    %c0_i32 = arith.constant 0 : i32
    return %arg0, %arg1 : i32, i32
  }
}

module attributes {stable_mosaic.version = 11 : i64} {
  func.func @_mlp_kernel(%arg0: i32, %arg1: i32, %arg2: memref<16x256xbf16, #tpu.memory_space<vmem>>, %arg3: memref<1x256xf32, #tpu.memory_space<vmem>>, %arg4: memref<1x256xf32, #tpu.memory_space<vmem>>, %arg5: memref<256x256xbf16, #tpu.memory_space<vmem>>, %arg6: memref<1x256xf32, #tpu.memory_space<vmem>>, %arg7: memref<256x256xbf16, #tpu.memory_space<vmem>>, %arg8: memref<1x256xf32, #tpu.memory_space<vmem>>, %arg9: memref<16x256xbf16, #tpu.memory_space<vmem>>, %arg10: memref<16x256xbf16, #tpu.memory_space<vmem>>, %arg11: memref<16x256xf32, #tpu.memory_space<vmem>>) attributes {dimension_semantics = [#tpu.dimension_semantics<parallel>, #tpu.dimension_semantics<arbitrary>], iteration_bounds = array<i64: 1, 4>, scalar_prefetch = 0 : i64, scratch_operands = 2 : i64, tpu.core_type = #tpu.core_type<tc>, window_params = [{transform_indices = @transform_0, window_bounds = array<i64: 16, 256>}, {pipeline_mode = #tpu.pipeline_mode<synchronous>, transform_indices = @transform_1, window_bounds = array<i64: 1, 256>}, {pipeline_mode = #tpu.pipeline_mode<synchronous>, transform_indices = @transform_2, window_bounds = array<i64: 1, 256>}, {transform_indices = @transform_3, window_bounds = array<i64: 256, 256>}, {transform_indices = @transform_4, window_bounds = array<i64: 1, 256>}, {transform_indices = @transform_5, window_bounds = array<i64: 256, 256>}, {pipeline_mode = #tpu.pipeline_mode<synchronous>, transform_indices = @transform_6, window_bounds = array<i64: 1, 256>}, {transform_indices = @transform_7, window_bounds = array<i64: 16, 256>}]} {
    %c0_i32 = arith.constant 0 : i32
    %0 = arith.cmpi eq, %arg1, %c0_i32 : i32
    %1 = arith.extui %0 : i1 to i32
    %c0_i32_0 = arith.constant 0 : i32
    %2 = arith.cmpi ne, %1, %c0_i32_0 : i32
    scf.if %2 {
      %c0_17 = arith.constant 0 : index
      %c0_18 = arith.constant 0 : index
      %26 = vector.load %arg2[%c0_17, %c0_18] : memref<16x256xbf16, #tpu.memory_space<vmem>>, vector<16x256xbf16>
      %27 = arith.extf %26 : vector<16x256xbf16> to vector<16x256xf32>
      %cst_19 = arith.constant dense<0.000000e+00> : vector<16xf32>
      %28 = vector.multi_reduction <add>, %27, %cst_19 [1] : vector<16x256xf32> to vector<16xf32>
      %29 = vector.shape_cast %28 : vector<16xf32> to vector<16x1xf32>
      %cst_20 = arith.constant 2.560000e+02 : f32
      %30 = vector.broadcast %cst_20 : f32 to vector<16x1xf32>
      %31 = arith.divf %29, %30 : vector<16x1xf32>
      %32 = vector.broadcast %31 : vector<16x1xf32> to vector<16x256xf32>
      %33 = arith.subf %27, %32 : vector<16x256xf32>
      %34 = arith.mulf %33, %33 : vector<16x256xf32>
      %cst_21 = arith.constant dense<0.000000e+00> : vector<16xf32>
      %35 = vector.multi_reduction <add>, %34, %cst_21 [1] : vector<16x256xf32> to vector<16xf32>
      %36 = vector.shape_cast %35 : vector<16xf32> to vector<16x1xf32>
      %cst_22 = arith.constant 2.560000e+02 : f32
      %37 = vector.broadcast %cst_22 : f32 to vector<16x1xf32>
      %38 = arith.divf %36, %37 : vector<16x1xf32>
      %39 = vector.broadcast %31 : vector<16x1xf32> to vector<16x256xf32>
      %40 = arith.subf %27, %39 : vector<16x256xf32>
      %cst_23 = arith.constant 9.99999997E-7 : f32
      %41 = vector.broadcast %cst_23 : f32 to vector<16x1xf32>
      %42 = arith.addf %38, %41 : vector<16x1xf32>
      %43 = math.rsqrt %42 : vector<16x1xf32>
      %44 = vector.broadcast %43 : vector<16x1xf32> to vector<16x256xf32>
      %45 = arith.mulf %40, %44 : vector<16x256xf32>
      %c0_24 = arith.constant 0 : index
      %c0_25 = arith.constant 0 : index
      %46 = vector.load %arg3[%c0_24, %c0_25] : memref<1x256xf32, #tpu.memory_space<vmem>>, vector<1x256xf32>
      %47 = vector.broadcast %46 : vector<1x256xf32> to vector<16x256xf32>
      %48 = arith.mulf %45, %47 : vector<16x256xf32>
      %c0_26 = arith.constant 0 : index
      %c0_27 = arith.constant 0 : index
      %49 = vector.load %arg4[%c0_26, %c0_27] : memref<1x256xf32, #tpu.memory_space<vmem>>, vector<1x256xf32>
      %50 = vector.broadcast %49 : vector<1x256xf32> to vector<16x256xf32>
      %51 = arith.addf %48, %50 : vector<16x256xf32>
      %52 = arith.truncf %51 : vector<16x256xf32> to vector<16x256xbf16>
      %c0_28 = arith.constant 0 : index
      %c0_29 = arith.constant 0 : index
      %53 = vector.load %arg10[%c0_28, %c0_29] : memref<16x256xbf16, #tpu.memory_space<vmem>>, vector<16x256xbf16>
      tpu.vector_store %arg10[%c0_28, %c0_29], %52 {strides = array<i32>} : memref<16x256xbf16, #tpu.memory_space<vmem>>, vector<16x256xbf16>,
      %cst_30 = arith.constant 0.000000e+00 : f32
      %54 = vector.broadcast %cst_30 : f32 to vector<16x256xf32>
      %c0_31 = arith.constant 0 : index
      %c0_32 = arith.constant 0 : index
      %55 = vector.load %arg11[%c0_31, %c0_32] : memref<16x256xf32, #tpu.memory_space<vmem>>, vector<16x256xf32>
      tpu.vector_store %arg11[%c0_31, %c0_32], %54 {strides = array<i32>} : memref<16x256xf32, #tpu.memory_space<vmem>>, vector<16x256xf32>,
    } else {
    }
    %c0 = arith.constant 0 : index
    %c0_1 = arith.constant 0 : index
    %3 = vector.load %arg10[%c0, %c0_1] : memref<16x256xbf16, #tpu.memory_space<vmem>>, vector<16x256xbf16>
    %c0_2 = arith.constant 0 : index
    %c0_3 = arith.constant 0 : index
    %4 = vector.load %arg5[%c0_2, %c0_3] : memref<256x256xbf16, #tpu.memory_space<vmem>>, vector<256x256xbf16>
    %cst = arith.constant dense<0.000000e+00> : vector<16x256xf32>
    %5 = tpu.matmul %3, %4, %cst {dimension_numbers = #tpu.dot_dimension_numbers<[1], [0], [0], [1], [0, 0, 1, 1], [], []>} : vector<16x256xbf16>, vector<256x256xbf16>, vector<16x256xf32> -> vector<16x256xf32>
    %c0_4 = arith.constant 0 : index
    %c0_5 = arith.constant 0 : index
    %6 = vector.load %arg6[%c0_4, %c0_5] : memref<1x256xf32, #tpu.memory_space<vmem>>, vector<1x256xf32>
    %7 = vector.broadcast %6 : vector<1x256xf32> to vector<16x256xf32>
    %8 = arith.addf %5, %7 : vector<16x256xf32>
    %cst_6 = arith.constant 5.000000e-01 : f32
    %9 = vector.broadcast %cst_6 : f32 to vector<16x256xf32>
    %10 = arith.mulf %9, %8 : vector<16x256xf32>
    %cst_7 = arith.constant 0.707106769 : f32
    %11 = vector.broadcast %cst_7 : f32 to vector<16x256xf32>
    %12 = arith.mulf %8, %11 : vector<16x256xf32>
    %13 = math.erf %12 : vector<16x256xf32>
    %cst_8 = arith.constant 1.000000e+00 : f32
    %14 = vector.broadcast %cst_8 : f32 to vector<16x256xf32>
    %15 = arith.addf %14, %13 : vector<16x256xf32>
    %16 = arith.mulf %10, %15 : vector<16x256xf32>
    %c0_9 = arith.constant 0 : index
    %c0_10 = arith.constant 0 : index
    %17 = vector.load %arg11[%c0_9, %c0_10] : memref<16x256xf32, #tpu.memory_space<vmem>>, vector<16x256xf32>
    %18 = arith.truncf %16 : vector<16x256xf32> to vector<16x256xbf16>
    %c0_11 = arith.constant 0 : index
    %c0_12 = arith.constant 0 : index
    %19 = vector.load %arg7[%c0_11, %c0_12] : memref<256x256xbf16, #tpu.memory_space<vmem>>, vector<256x256xbf16>
    %cst_13 = arith.constant dense<0.000000e+00> : vector<16x256xf32>
    %20 = tpu.matmul %18, %19, %cst_13 {dimension_numbers = #tpu.dot_dimension_numbers<[1], [0], [0], [1], [0, 0, 1, 1], [], []>} : vector<16x256xbf16>, vector<256x256xbf16>, vector<16x256xf32> -> vector<16x256xf32>
    %21 = arith.addf %17, %20 : vector<16x256xf32>
    %c0_14 = arith.constant 0 : index
    %c0_15 = arith.constant 0 : index
    %22 = vector.load %arg11[%c0_14, %c0_15] : memref<16x256xf32, #tpu.memory_space<vmem>>, vector<16x256xf32>
    tpu.vector_store %arg11[%c0_14, %c0_15], %21 {strides = array<i32>} : memref<16x256xf32, #tpu.memory_space<vmem>>, vector<16x256xf32>,
    %c3_i32 = arith.constant 3 : i32
    %23 = arith.cmpi eq, %arg1, %c3_i32 : i32
    %24 = arith.extui %23 : i1 to i32
    %c0_i32_16 = arith.constant 0 : i32
    %25 = arith.cmpi ne, %24, %c0_i32_16 : i32
    scf.if %25 {
      %c0_17 = arith.constant 0 : index
      %c0_18 = arith.constant 0 : index
      %26 = vector.load %arg11[%c0_17, %c0_18] : memref<16x256xf32, #tpu.memory_space<vmem>>, vector<16x256xf32>
      %c0_19 = arith.constant 0 : index
      %c0_20 = arith.constant 0 : index
      %27 = vector.load %arg8[%c0_19, %c0_20] : memref<1x256xf32, #tpu.memory_space<vmem>>, vector<1x256xf32>
      %28 = vector.broadcast %27 : vector<1x256xf32> to vector<16x256xf32>
      %29 = arith.addf %26, %28 : vector<16x256xf32>
      %c0_21 = arith.constant 0 : index
      %c0_22 = arith.constant 0 : index
      %30 = vector.load %arg2[%c0_21, %c0_22] : memref<16x256xbf16, #tpu.memory_space<vmem>>, vector<16x256xbf16>
      %31 = arith.extf %30 : vector<16x256xbf16> to vector<16x256xf32>
      %32 = arith.addf %29, %31 : vector<16x256xf32>
      %33 = arith.truncf %32 : vector<16x256xf32> to vector<16x256xbf16>
      %c0_23 = arith.constant 0 : index
      %c0_24 = arith.constant 0 : index
      %34 = vector.load %arg9[%c0_23, %c0_24] : memref<16x256xbf16, #tpu.memory_space<vmem>>, vector<16x256xbf16>
      tpu.vector_store %arg9[%c0_23, %c0_24], %33 {strides = array<i32>} : memref<16x256xbf16, #tpu.memory_space<vmem>>, vector<16x256xbf16>,
    } else {
    }
    return
  }
  func.func @transform_0(%arg0: i32, %arg1: i32) -> (i32, i32) {
    %c0_i32 = arith.constant 0 : i32
    %c0_i32_0 = arith.constant 0 : i32
    return %arg0, %c0_i32 : i32, i32
  }
  func.func @transform_1(%arg0: i32, %arg1: i32) -> (i32, i32) {
    %c0_i32 = arith.constant 0 : i32
    %c0_i32_0 = arith.constant 0 : i32
    %c0_i32_1 = arith.constant 0 : i32
    return %c0_i32, %c0_i32_0 : i32, i32
  }
  func.func @transform_2(%arg0: i32, %arg1: i32) -> (i32, i32) {
    %c0_i32 = arith.constant 0 : i32
    %c0_i32_0 = arith.constant 0 : i32
    %c0_i32_1 = arith.constant 0 : i32
    return %c0_i32, %c0_i32_0 : i32, i32
  }
  func.func @transform_3(%arg0: i32, %arg1: i32) -> (i32, i32) {
    %c0_i32 = arith.constant 0 : i32
    %c0_i32_0 = arith.constant 0 : i32
    return %c0_i32, %arg1 : i32, i32
  }
  func.func @transform_4(%arg0: i32, %arg1: i32) -> (i32, i32) {
    %c0_i32 = arith.constant 0 : i32
    %c0_i32_0 = arith.constant 0 : i32
    return %c0_i32, %arg1 : i32, i32
  }
  func.func @transform_5(%arg0: i32, %arg1: i32) -> (i32, i32) {
    %c0_i32 = arith.constant 0 : i32
    %c0_i32_0 = arith.constant 0 : i32
    return %arg1, %c0_i32 : i32, i32
  }
  func.func @transform_6(%arg0: i32, %arg1: i32) -> (i32, i32) {
    %c0_i32 = arith.constant 0 : i32
    %c0_i32_0 = arith.constant 0 : i32
    %c0_i32_1 = arith.constant 0 : i32
    return %c0_i32, %c0_i32_0 : i32, i32
  }
  func.func @transform_7(%arg0: i32, %arg1: i32) -> (i32, i32) {
    %c0_i32 = arith.constant 0 : i32
    %c0_i32_0 = arith.constant 0 : i32
    return %arg0, %c0_i32 : i32, i32
  }
}

module attributes {stable_mosaic.version = 11 : i64} {
  func.func @_fused_matmul_kernel(%arg0: i32, %arg1: i32, %arg2: i32, %arg3: memref<8x256xbf16, #tpu.memory_space<vmem>>, %arg4: memref<1x256xf32, #tpu.memory_space<vmem>>, %arg5: memref<1x256xf32, #tpu.memory_space<vmem>>, %arg6: memref<256x128xbf16, #tpu.memory_space<vmem>>, %arg7: memref<1x128xf32, #tpu.memory_space<vmem>>, %arg8: memref<8x128xf32, #tpu.memory_space<vmem>>, %arg9: memref<8x128xf32, #tpu.memory_space<vmem>>, %arg10: memref<8x256xbf16, #tpu.memory_space<vmem>>) attributes {dimension_semantics = [#tpu.dimension_semantics<parallel>, #tpu.dimension_semantics<arbitrary>, #tpu.dimension_semantics<arbitrary>], iteration_bounds = array<i64: 1, 1, 1>, scalar_prefetch = 0 : i64, scratch_operands = 2 : i64, tpu.core_type = #tpu.core_type<tc>, window_params = [{transform_indices = @transform_0, window_bounds = array<i64: 8, 256>}, {pipeline_mode = #tpu.pipeline_mode<synchronous>, transform_indices = @transform_1, window_bounds = array<i64: 1, 256>}, {pipeline_mode = #tpu.pipeline_mode<synchronous>, transform_indices = @transform_2, window_bounds = array<i64: 1, 256>}, {transform_indices = @transform_3, window_bounds = array<i64: 256, 128>}, {transform_indices = @transform_4, window_bounds = array<i64: 1, 128>}, {transform_indices = @transform_5, window_bounds = array<i64: 8, 128>}]} {
    %c0_i32 = arith.constant 0 : i32
    %0 = arith.cmpi eq, %arg2, %c0_i32 : i32
    %1 = arith.extui %0 : i1 to i32
    %c0_i32_0 = arith.constant 0 : i32
    %2 = arith.cmpi ne, %1, %c0_i32_0 : i32
    scf.if %2 {
      %cst_13 = arith.constant 0.000000e+00 : f32
      %17 = vector.broadcast %cst_13 : f32 to vector<8x128xf32>
      %c0_14 = arith.constant 0 : index
      %c0_15 = arith.constant 0 : index
      %18 = vector.load %arg9[%c0_14, %c0_15] : memref<8x128xf32, #tpu.memory_space<vmem>>, vector<8x128xf32>
      tpu.vector_store %arg9[%c0_14, %c0_15], %17 {strides = array<i32>} : memref<8x128xf32, #tpu.memory_space<vmem>>, vector<8x128xf32>,
    } else {
    }
    %c0_i32_1 = arith.constant 0 : i32
    %3 = arith.cmpi eq, %arg1, %c0_i32_1 : i32
    %c0_i32_2 = arith.constant 0 : i32
    %4 = arith.cmpi eq, %arg2, %c0_i32_2 : i32
    %5 = arith.andi %3, %4 : i1
    %6 = arith.extui %5 : i1 to i32
    %c0_i32_3 = arith.constant 0 : i32
    %7 = arith.cmpi ne, %6, %c0_i32_3 : i32
    scf.if %7 {
      %c0_13 = arith.constant 0 : index
      %c0_14 = arith.constant 0 : index
      %17 = vector.load %arg3[%c0_13, %c0_14] : memref<8x256xbf16, #tpu.memory_space<vmem>>, vector<8x256xbf16>
      %18 = arith.extf %17 : vector<8x256xbf16> to vector<8x256xf32>
      %cst_15 = arith.constant dense<0.000000e+00> : vector<8xf32>
      %19 = vector.multi_reduction <add>, %18, %cst_15 [1] : vector<8x256xf32> to vector<8xf32>
      %20 = vector.shape_cast %19 : vector<8xf32> to vector<8x1xf32>
      %cst_16 = arith.constant 2.560000e+02 : f32
      %21 = vector.broadcast %cst_16 : f32 to vector<8x1xf32>
      %22 = arith.divf %20, %21 : vector<8x1xf32>
      %23 = vector.broadcast %22 : vector<8x1xf32> to vector<8x256xf32>
      %24 = arith.subf %18, %23 : vector<8x256xf32>
      %25 = arith.mulf %24, %24 : vector<8x256xf32>
      %cst_17 = arith.constant dense<0.000000e+00> : vector<8xf32>
      %26 = vector.multi_reduction <add>, %25, %cst_17 [1] : vector<8x256xf32> to vector<8xf32>
      %27 = vector.shape_cast %26 : vector<8xf32> to vector<8x1xf32>
      %cst_18 = arith.constant 2.560000e+02 : f32
      %28 = vector.broadcast %cst_18 : f32 to vector<8x1xf32>
      %29 = arith.divf %27, %28 : vector<8x1xf32>
      %30 = vector.broadcast %22 : vector<8x1xf32> to vector<8x256xf32>
      %31 = arith.subf %18, %30 : vector<8x256xf32>
      %cst_19 = arith.constant 9.99999997E-7 : f32
      %32 = vector.broadcast %cst_19 : f32 to vector<8x1xf32>
      %33 = arith.addf %29, %32 : vector<8x1xf32>
      %34 = math.rsqrt %33 : vector<8x1xf32>
      %35 = vector.broadcast %34 : vector<8x1xf32> to vector<8x256xf32>
      %36 = arith.mulf %31, %35 : vector<8x256xf32>
      %c0_20 = arith.constant 0 : index
      %c0_21 = arith.constant 0 : index
      %37 = vector.load %arg4[%c0_20, %c0_21] : memref<1x256xf32, #tpu.memory_space<vmem>>, vector<1x256xf32>
      %38 = vector.broadcast %37 : vector<1x256xf32> to vector<8x256xf32>
      %39 = arith.mulf %36, %38 : vector<8x256xf32>
      %c0_22 = arith.constant 0 : index
      %c0_23 = arith.constant 0 : index
      %40 = vector.load %arg5[%c0_22, %c0_23] : memref<1x256xf32, #tpu.memory_space<vmem>>, vector<1x256xf32>
      %41 = vector.broadcast %40 : vector<1x256xf32> to vector<8x256xf32>
      %42 = arith.addf %39, %41 : vector<8x256xf32>
      %43 = arith.truncf %42 : vector<8x256xf32> to vector<8x256xbf16>
      %c0_24 = arith.constant 0 : index
      %c0_25 = arith.constant 0 : index
      %44 = vector.load %arg10[%c0_24, %c0_25] : memref<8x256xbf16, #tpu.memory_space<vmem>>, vector<8x256xbf16>
      tpu.vector_store %arg10[%c0_24, %c0_25], %43 {strides = array<i32>} : memref<8x256xbf16, #tpu.memory_space<vmem>>, vector<8x256xbf16>,
    } else {
    }
    %c0 = arith.constant 0 : index
    %c0_4 = arith.constant 0 : index
    %8 = vector.load %arg10[%c0, %c0_4] : memref<8x256xbf16, #tpu.memory_space<vmem>>, vector<8x256xbf16>
    %c0_5 = arith.constant 0 : index
    %c0_6 = arith.constant 0 : index
    %9 = vector.load %arg9[%c0_5, %c0_6] : memref<8x128xf32, #tpu.memory_space<vmem>>, vector<8x128xf32>
    %c0_7 = arith.constant 0 : index
    %c0_8 = arith.constant 0 : index
    %10 = vector.load %arg6[%c0_7, %c0_8] : memref<256x128xbf16, #tpu.memory_space<vmem>>, vector<256x128xbf16>
    %cst = arith.constant dense<0.000000e+00> : vector<8x128xf32>
    %11 = tpu.matmul %8, %10, %cst {dimension_numbers = #tpu.dot_dimension_numbers<[1], [0], [0], [1], [0, 0, 1, 1], [], []>} : vector<8x256xbf16>, vector<256x128xbf16>, vector<8x128xf32> -> vector<8x128xf32>
    %12 = arith.addf %9, %11 : vector<8x128xf32>
    %c0_9 = arith.constant 0 : index
    %c0_10 = arith.constant 0 : index
    %13 = vector.load %arg9[%c0_9, %c0_10] : memref<8x128xf32, #tpu.memory_space<vmem>>, vector<8x128xf32>
    tpu.vector_store %arg9[%c0_9, %c0_10], %12 {strides = array<i32>} : memref<8x128xf32, #tpu.memory_space<vmem>>, vector<8x128xf32>,
    %c0_i32_11 = arith.constant 0 : i32
    %14 = arith.cmpi eq, %arg2, %c0_i32_11 : i32
    %15 = arith.extui %14 : i1 to i32
    %c0_i32_12 = arith.constant 0 : i32
    %16 = arith.cmpi ne, %15, %c0_i32_12 : i32
    scf.if %16 {
      %c0_13 = arith.constant 0 : index
      %c0_14 = arith.constant 0 : index
      %17 = vector.load %arg9[%c0_13, %c0_14] : memref<8x128xf32, #tpu.memory_space<vmem>>, vector<8x128xf32>
      %c0_15 = arith.constant 0 : index
      %c0_16 = arith.constant 0 : index
      %18 = vector.load %arg7[%c0_15, %c0_16] : memref<1x128xf32, #tpu.memory_space<vmem>>, vector<1x128xf32>
      %19 = vector.broadcast %18 : vector<1x128xf32> to vector<8x128xf32>
      %20 = arith.addf %17, %19 : vector<8x128xf32>
      %21 = arith.negf %20 : vector<8x128xf32>
      %22 = math.exp %21 : vector<8x128xf32>
      %cst_17 = arith.constant 1.000000e+00 : f32
      %23 = vector.broadcast %cst_17 : f32 to vector<8x128xf32>
      %24 = arith.addf %23, %22 : vector<8x128xf32>
      %25 = arith.divf %23, %24 : vector<8x128xf32>
      %c0_18 = arith.constant 0 : index
      %c0_19 = arith.constant 0 : index
      %26 = vector.load %arg8[%c0_18, %c0_19] : memref<8x128xf32, #tpu.memory_space<vmem>>, vector<8x128xf32>
      tpu.vector_store %arg8[%c0_18, %c0_19], %25 {strides = array<i32>} : memref<8x128xf32, #tpu.memory_space<vmem>>, vector<8x128xf32>,
    } else {
    }
    return
  }
  func.func @transform_0(%arg0: i32, %arg1: i32, %arg2: i32) -> (i32, i32) {
    %c0_i32 = arith.constant 0 : i32
    return %arg0, %arg2 : i32, i32
  }
  func.func @transform_1(%arg0: i32, %arg1: i32, %arg2: i32) -> (i32, i32) {
    %c0_i32 = arith.constant 0 : i32
    %c0_i32_0 = arith.constant 0 : i32
    %c0_i32_1 = arith.constant 0 : i32
    return %c0_i32, %c0_i32_0 : i32, i32
  }
  func.func @transform_2(%arg0: i32, %arg1: i32, %arg2: i32) -> (i32, i32) {
    %c0_i32 = arith.constant 0 : i32
    %c0_i32_0 = arith.constant 0 : i32
    %c0_i32_1 = arith.constant 0 : i32
    return %c0_i32, %c0_i32_0 : i32, i32
  }
  func.func @transform_3(%arg0: i32, %arg1: i32, %arg2: i32) -> (i32, i32) {
    %c0_i32 = arith.constant 0 : i32
    return %arg2, %arg1 : i32, i32
  }
  func.func @transform_4(%arg0: i32, %arg1: i32, %arg2: i32) -> (i32, i32) {
    %c0_i32 = arith.constant 0 : i32
    %c0_i32_0 = arith.constant 0 : i32
    return %c0_i32, %arg1 : i32, i32
  }
  func.func @transform_5(%arg0: i32, %arg1: i32, %arg2: i32) -> (i32, i32) {
    %c0_i32 = arith.constant 0 : i32
    return %arg0, %arg1 : i32, i32
  }
}

</mosaic_0001>

<llo_original>
// kernel: vit_binary_classifier_forward.8
$region0: #{vit_binary_classifier_forward.8}
  #allocation0 [shape = 'u32[]', space=smem, size = 0x4, offset = 0x4, fixed_abs, tag = 'smem constant byte address 0x4 - core index']
  #allocation1 [shape = 'u32[72,128]{1,0:T(1,128)}', space=vmem, size = 0x9000, scoped, tag = 'internal scratch']
  #allocation2 [shape = 'f32[8,256]{1,0:T(8,128)}', space=vmem, size = 0x2000, scoped, tag = 'scratch operand']
  %s0 = inlined_call_operand.vmem [shape: bf16[8,768], index: 0, kind: input, shape index: {}]
  %s1 = inlined_call_operand.hbm [shape: bf16[768,256], index: 1, kind: input, shape index: {}]
  %s2 = inlined_call_operand.vmem [shape: f32[1,256], index: 2, kind: input, shape index: {}]
  %s3 = inlined_call_operand.vmem [shape: bf16[8,256], index: 3, kind: input, shape index: {}]
  %s4 = inlined_call_operand.vmem [shape: bf16[8,256], index: 4, kind: output, shape index: {}]
  %s5 = sld [smem:[#allocation0]]
  $region61: #{vit_binary_classifier_forward.8} parent=0
    _
  %s7 = ssub.s32 1, %s5
  %s8 = scalar_select 0, %s7, %s5
  $region1: #{vit_binary_classifier_forward.8} parent=0
    #allocation3 [shape = 'u8[262144]{0}', space=vmem, size = 0x40000, scoped, tag = 'input window, operand 1']
    #allocation4 [shape = 's32[2]{0}', space=sflag, size = 0x8, scoped, tag = 'scoped memory for vit_binary_classifier_forward.8']
    %9 = vsyncpa [#allocation4], 0
    %s10 = scalar_lea.sflag [#allocation4], 1
    %11 = vsyncpa %s10, 0
    loop: start=0, step=1, limit=5
    $region2: #{vit_binary_classifier_forward.8} parent=1 // loop_pre_header
      _
    $region3: #{vit_binary_classifier_forward.8} parent=1 // loop_header
      %s13 = sphi 0, %s17
      %p14 = scmp.ge.s32.totalorder %s13, 5
      %s20 = sphi 0, %s39
      %s21 = sphi 0, %s35
      %s22 = sphi 0, %s31
      %s23 = sphi 0, %s20
      %s24 = sphi 0, %s21
      %s25 = sphi 0, %s22
      %s26 = sphi 0, %s23
      %s27 = sphi 0, %s24
      %s28 = sphi 0, %s25
      %s44 = sphi 0, %s46
      %s47 = sphi 0, %s44
      %s48 = sphi 0, %s47
      %s64 = sphi 0, %s48
      %s72 = sphi 0, %s74
      %s75 = sphi 0, %s72
      %s76 = sphi 0, %s75
      %s92 = sphi 0, %s76
      %s98 = sphi 0, %s100
      %s101 = sphi 0, %s98
      %s102 = sphi 0, %s101
      %s118 = sphi 0, %s102
      %s126 = sphi 0, %s128
      %s129 = sphi 0, %s126
      %s130 = sphi 0, %s129
      %s146 = sphi 0, %s130
      %s154 = sphi 0, %s156
      %s157 = sphi 0, %s154
      %s158 = sphi 0, %s157
      %s174 = sphi 0, %s158
    $region4: #{vit_binary_classifier_forward.8} parent=1 // loop_header_branch
      %16 = sbr.rel (%p14) target = $region8
    $region5: #{vit_binary_classifier_forward.8} parent=1 // loop_body
      %s18 = ssub.s32 %s13, 1
      %s19 = ssub.s32 %s13, 2
      %s29 = sadd.s32 1, %s22
      %p30 = scmp.ge.s32.totalorder %s29, 3
      %s31 = scalar_select %p30, 0, %s29
      %s32 = sadd.s32 1, %s21
      %s33 = scalar_select %p30, %s32, %s21
      %p34 = scmp.ge.s32.totalorder %s33, 1
      %s35 = scalar_select %p34, 0, %s33
      %s36 = sadd.s32 1, %s20
      %s37 = scalar_select %p34, %s36, %s20
      %p38 = scmp.ge.s32.totalorder %s37, 1
      %s39 = scalar_select %p38, 0, %s37
      %s40 = ssub.s32 %s20, %s39
      %s41 = ssub.s32 %s22, %s31
      %s42 = sor.u32 %s40, %s41
      %p43 = scmp.eq.s32.totalorder %s42, 0
      %s45 = sadd.s32 %s44, 1
      %s46 = scalar_select %p43, %s44, %s45
      %p49 = pneg %p43
      %p50 = scmp.eq.s32.totalorder %s13, 2
      %p51 = por %p49, %p50
      %p52 = scmp.ne.s32.totalorder %s44, %s47
      %p53 = scmp.eq.s32.totalorder %s13, 0
      %p54 = por %p52, %p53
      %p55 = scmp.ne.s32.totalorder %s44, %s47
      %p56 = scmp.eq.s32.totalorder %s18, 2
      %p57 = por %p55, %p56
      %p58 = scmp.ne.s32.totalorder %s47, %s48
      %p59 = scmp.eq.s32.totalorder %s18, 0
      %p60 = por %p58, %p59
      %p61 = scmp.ne.s32.totalorder %s47, %s48
      %p62 = scmp.eq.s32.totalorder %s19, 2
      %p63 = por %p61, %p62
      %p65 = scmp.ne.s32.totalorder %s48, %s64
      %p66 = scmp.eq.s32.totalorder %s19, 0
      %p67 = por %p65, %p66
      %s68 = ssub.s32 %s22, %s31
      %s69 = ssub.s32 %s21, %s35
      %s70 = sor.u32 %s68, %s69
      %p71 = scmp.eq.s32.totalorder %s70, 0
      %s73 = sadd.s32 %s72, 1
      %s74 = scalar_select %p71, %s72, %s73
      %p77 = pneg %p71
      %p78 = scmp.eq.s32.totalorder %s13, 2
      %p79 = por %p77, %p78
      %p80 = scmp.ne.s32.totalorder %s72, %s75
      %p81 = scmp.eq.s32.totalorder %s13, 0
      %p82 = por %p80, %p81
      %p83 = scmp.ne.s32.totalorder %s72, %s75
      %p84 = scmp.eq.s32.totalorder %s18, 2
      %p85 = por %p83, %p84
      %p86 = scmp.ne.s32.totalorder %s75, %s76
      %p87 = scmp.eq.s32.totalorder %s18, 0
      %p88 = por %p86, %p87
      %p89 = scmp.ne.s32.totalorder %s75, %s76
      %p90 = scmp.eq.s32.totalorder %s19, 2
      %p91 = por %p89, %p90
      %p93 = scmp.ne.s32.totalorder %s76, %s92
      %p94 = scmp.eq.s32.totalorder %s19, 0
      %p95 = por %p93, %p94
      %s96 = ssub.s32 %s21, %s35
      %p97 = scmp.eq.s32.totalorder %s96, 0
      %s99 = sadd.s32 %s98, 1
      %s100 = scalar_select %p97, %s98, %s99
      %p103 = pneg %p97
      %p104 = scmp.eq.s32.totalorder %s13, 2
      %p105 = por %p103, %p104
      %p106 = scmp.ne.s32.totalorder %s98, %s101
      %p107 = scmp.eq.s32.totalorder %s13, 0
      %p108 = por %p106, %p107
      %p109 = scmp.ne.s32.totalorder %s98, %s101
      %p110 = scmp.eq.s32.totalorder %s18, 2
      %p111 = por %p109, %p110
      %p112 = scmp.ne.s32.totalorder %s101, %s102
      %p113 = scmp.eq.s32.totalorder %s18, 0
      %p114 = por %p112, %p113
      %p115 = scmp.ne.s32.totalorder %s101, %s102
      %p116 = scmp.eq.s32.totalorder %s19, 2
      %p117 = por %p115, %p116
      %p119 = scmp.ne.s32.totalorder %s102, %s118
      %p120 = scmp.eq.s32.totalorder %s19, 0
      %p121 = por %p119, %p120
      %s122 = ssub.s32 %s20, %s39
      %s123 = ssub.s32 %s21, %s35
      %s124 = sor.u32 %s122, %s123
      %p125 = scmp.eq.s32.totalorder %s124, 0
      %s127 = sadd.s32 %s126, 1
      %s128 = scalar_select %p125, %s126, %s127
      %p131 = pneg %p125
      %p132 = scmp.eq.s32.totalorder %s13, 2
      %p133 = por %p131, %p132
      %p134 = scmp.ne.s32.totalorder %s126, %s129
      %p135 = scmp.eq.s32.totalorder %s13, 0
      %p136 = por %p134, %p135
      %p137 = scmp.ne.s32.totalorder %s126, %s129
      %p138 = scmp.eq.s32.totalorder %s18, 2
      %p139 = por %p137, %p138
      %p140 = scmp.ne.s32.totalorder %s129, %s130
      %p141 = scmp.eq.s32.totalorder %s18, 0
      %p142 = por %p140, %p141
      %p143 = scmp.ne.s32.totalorder %s129, %s130
      %p144 = scmp.eq.s32.totalorder %s19, 2
      %p145 = por %p143, %p144
      %p147 = scmp.ne.s32.totalorder %s130, %s146
      %p148 = scmp.eq.s32.totalorder %s19, 0
      %p149 = por %p147, %p148
      %s150 = ssub.s32 %s20, %s39
      %s151 = ssub.s32 %s21, %s35
      %s152 = sor.u32 %s150, %s151
      %p153 = scmp.eq.s32.totalorder %s152, 0
      %s155 = sadd.s32 %s154, 1
      %s156 = scalar_select %p153, %s154, %s155
      %p159 = pneg %p153
      %p160 = scmp.eq.s32.totalorder %s13, 2
      %p161 = por %p159, %p160
      %p162 = scmp.ne.s32.totalorder %s154, %s157
      %p163 = scmp.eq.s32.totalorder %s13, 0
      %p164 = por %p162, %p163
      %p165 = scmp.ne.s32.totalorder %s154, %s157
      %p166 = scmp.eq.s32.totalorder %s18, 2
      %p167 = por %p165, %p166
      %p168 = scmp.ne.s32.totalorder %s157, %s158
      %p169 = scmp.eq.s32.totalorder %s18, 0
      %p170 = por %p168, %p169
      %p171 = scmp.ne.s32.totalorder %s157, %s158
      %p172 = scmp.eq.s32.totalorder %s19, 2
      %p173 = por %p171, %p172
      %p175 = scmp.ne.s32.totalorder %s158, %s174
      %p176 = scmp.eq.s32.totalorder %s19, 0
      %p177 = por %p175, %p176
      %p178 = scmp.le.s32.totalorder 1, %s13
      %p179 = scmp.lt.s32.totalorder %s13, 4
      %p180 = pnand %p178, %p179
      %p181 = pneg %p180
      // Predicated region
      $region9: #{vit_binary_classifier_forward.8} parent=5 // pred_check
        _
      $region10: #{vit_binary_classifier_forward.8} parent=5 // pred_check_branch
        %183 = sbr.rel (%p180) target = $region12
      $region11: #{vit_binary_classifier_forward.8} parent=5 // pred_region
        %s184 = ssub.s32 %s13, 1
        // Predicated region
        $region13: #{vit_binary_classifier_forward.8} parent=11 // pred_check
          %p185 = pneg %p114
        $region14: #{vit_binary_classifier_forward.8} parent=11 // pred_check_branch
          %187 = sbr.rel (%p185) target = $region16
        $region15: #{vit_binary_classifier_forward.8} parent=11 // pred_region
          %s188 = smul.u32 2, %s24
          %p189 = scmp.lt.s32.totalorder %s188, 1
          %s190 = scalar_select %p189, %s188, 1
          %s191 = scalar_lea.vmem %s2, %s190
          %s192 = smul.u32 2, %s24
        $region16: #{vit_binary_classifier_forward.8} parent=11 // pred_fallthru
          _
        // Predicated region
        $region17: #{vit_binary_classifier_forward.8} parent=11 // pred_check
          %p193 = pneg %p142
        $region18: #{vit_binary_classifier_forward.8} parent=11 // pred_check_branch
          %195 = sbr.rel (%p193) target = $region20
        $region19: #{vit_binary_classifier_forward.8} parent=11 // pred_region
          %s196 = smul.u32 2, %s24
          %p197 = scmp.lt.s32.totalorder %s23, 0
          %s198 = scalar_select %p197, %s23, 0
          %p199 = scmp.lt.s32.totalorder %s196, 1
          %s200 = scalar_select %p199, %s196, 1
          %s201 = smul.addr %s198, 2
          %s202 = sadd.s32 %s200, %s201
          %s203 = smul.addr %s202, 4
          %s204 = scalar_lea.vmem %s3, %s203
          %s205 = smul.u32 2, %s24
        $region20: #{vit_binary_classifier_forward.8} parent=11 // pred_fallthru
          _
      $region12: #{vit_binary_classifier_forward.8} parent=5 // pred_fallthru
        _
      %p206 = scmp.lt.s32.totalorder %s13, 3
      // Predicated region
      $region21: #{vit_binary_classifier_forward.8} parent=5 // pred_check
        %p207 = pneg %p206
      $region22: #{vit_binary_classifier_forward.8} parent=5 // pred_check_branch
        %209 = sbr.rel (%p207) target = $region24
      $region23: #{vit_binary_classifier_forward.8} parent=5 // pred_region
        // Predicated region
        $region25: #{vit_binary_classifier_forward.8} parent=23 // pred_check
          %p210 = pneg %p54
        $region26: #{vit_binary_classifier_forward.8} parent=23 // pred_check_branch
          %212 = sbr.rel (%p210) target = $region28
        $region27: #{vit_binary_classifier_forward.8} parent=23 // pred_region
          %s213 = smul.u32 2, %s22
          %p214 = scmp.lt.s32.totalorder %s20, 0
          %s215 = scalar_select %p214, %s20, 0
          %p216 = scmp.lt.s32.totalorder %s213, 5
          %s217 = scalar_select %p216, %s213, 5
          %s218 = smul.addr %s215, 6
          %s219 = sadd.s32 %s217, %s218
          %s220 = smul.addr %s219, 4
          %s221 = scalar_lea.vmem %s0, %s220
          %s222 = smul.u32 2, %s22
        $region28: #{vit_binary_classifier_forward.8} parent=23 // pred_fallthru
          _
        // Predicated region
        $region29: #{vit_binary_classifier_forward.8} parent=23 // pred_check
          %p223 = pneg %p82
        $region30: #{vit_binary_classifier_forward.8} parent=23 // pred_check_branch
          %225 = sbr.rel (%p223) target = $region32
        $region31: #{vit_binary_classifier_forward.8} parent=23 // pred_region
          %s226 = sand.u32 %s72, 1
          %s227 = scalar_lea.sflag [#allocation4], %s226
          %s228 = sand.u32 %s72, 1
          %s229 = smul.addr %s228, 256
          %s230 = scalar_lea.vmem [#allocation3], %s229
          %s231 = smul.u32 32, %s22
          %s232 = smul.u32 2, %s21
          %234 = vsyncadd %s227, 0
          %s235 = smul.addr %s231, 2
          %s236 = sadd.s32 %s232, %s235
          %s237 = smul.addr %s236, 4
          %s238 = scalar_lea.hbm %s1, %s237
          %s239 = sshll.u32 %s238, 4
          %s240 = int_to_ptr.hbm [resolvable:$true] %s239
          %s241 = sshll.u32 %s230, 4
          %s242 = int_to_ptr.vmem [resolvable:$true] %s241
          %247 = dma.hbm_to_vmem [thread:$0]  %s240, 4096, %s242, %s227, 128, 128, 8
        $region32: #{vit_binary_classifier_forward.8} parent=23 // pred_fallthru
          _
      $region24: #{vit_binary_classifier_forward.8} parent=5 // pred_fallthru
        _
      %p248 = scmp.le.s32.totalorder 1, %s13
      %p249 = scmp.lt.s32.totalorder %s13, 4
      %p250 = pnand %p248, %p249
      %p251 = pneg %p250
      // Predicated region
      $region33: #{vit_binary_classifier_forward.8} parent=5 // pred_check
        _
      $region34: #{vit_binary_classifier_forward.8} parent=5 // pred_check_branch
        %253 = sbr.rel (%p250) target = $region36
      $region35: #{vit_binary_classifier_forward.8} parent=5 // pred_region
        %s254 = ssub.s32 %s13, 1
        %s255 = sand.u32 %s75, 1
        %s256 = scalar_lea.sflag [#allocation4], %s255
        %s257 = sand.u32 %s75, 1
        %s258 = smul.addr %s257, 256
        %s259 = scalar_lea.vmem [#allocation3], %s258
        // Predicated region
        $region37: #{vit_binary_classifier_forward.8} parent=35 // pred_check
          %p260 = pneg %p88
        $region38: #{vit_binary_classifier_forward.8} parent=35 // pred_check_branch
          %262 = sbr.rel (%p260) target = $region40
        $region39: #{vit_binary_classifier_forward.8} parent=35 // pred_region
          %264 = dma.done %s256, 4096
        $region40: #{vit_binary_classifier_forward.8} parent=35 // pred_fallthru
          _
        %s265 = smul.u32 2, %s25
        %p266 = scmp.lt.s32.totalorder %s23, 0
        %s267 = scalar_select %p266, %s23, 0
        %p268 = scmp.lt.s32.totalorder %s265, 5
        %s269 = scalar_select %p268, %s265, 5
        %s270 = smul.addr %s267, 6
        %s271 = sadd.s32 %s269, %s270
        %s272 = smul.addr %s271, 4
        %s273 = scalar_lea.vmem %s0, %s272
        %p274 = pneg %p60
        %p275 = pneg %p57
        %s276 = sand.u32 %s75, 1
        %s277 = scalar_lea.sflag [#allocation4], %s276
        %s278 = sand.u32 %s75, 1
        %s279 = smul.addr %s278, 256
        %s280 = scalar_lea.vmem [#allocation3], %s279
        %p281 = pneg %p88
        %p282 = pneg %p85
        %s283 = smul.u32 2, %s24
        %p284 = scmp.lt.s32.totalorder %s283, 1
        %s285 = scalar_select %p284, %s283, 1
        %s286 = scalar_lea.vmem %s2, %s285
        %p287 = pneg %p114
        %p288 = pneg %p111
        %s289 = smul.u32 2, %s24
        %p290 = scmp.lt.s32.totalorder %s23, 0
        %s291 = scalar_select %p290, %s23, 0
        %p292 = scmp.lt.s32.totalorder %s289, 1
        %s293 = scalar_select %p292, %s289, 1
        %s294 = smul.addr %s291, 2
        %s295 = sadd.s32 %s293, %s294
        %s296 = smul.addr %s295, 4
        %s297 = scalar_lea.vmem %s3, %s296
        %p298 = pneg %p142
        %p299 = pneg %p139
        %p300 = pneg %p170
        %p301 = pneg %p167
        %s302 = smul.u32 2, %s24
        %p303 = scmp.lt.s32.totalorder %s23, 0
        %s304 = scalar_select %p303, %s23, 0
        %p305 = scmp.lt.s32.totalorder %s302, 1
        %s306 = scalar_select %p305, %s302, 1
        %s307 = smul.addr %s304, 2
        %s308 = sadd.s32 %s306, %s307
        %s309 = smul.addr %s308, 4
        %s310 = scalar_lea.vmem %s4, %s309
        %s311 = smul.u32 2, %s25
        %p312 = scmp.lt.s32.totalorder %s23, 0
        %s313 = scalar_select %p312, %s23, 0
        %p314 = scmp.lt.s32.totalorder %s311, 5
        %s315 = scalar_select %p314, %s311, 5
        %s316 = smul.addr %s313, 6
        %s317 = sadd.s32 %s315, %s316
        %s318 = smul.addr %s317, 4
        %s319 = scalar_lea.vmem %s0, %s318
        %s320 = smul.u32 2, %s25
        %s321 = smul.u32 32, %s25
        %s322 = smul.u32 2, %s24
        %s323 = smul.u32 2, %s24
        %p324 = scmp.lt.s32.totalorder %s323, 1
        %s325 = scalar_select %p324, %s323, 1
        %s326 = scalar_lea.vmem %s2, %s325
        %s327 = smul.u32 2, %s24
        %s328 = smul.u32 2, %s24
        %p329 = scmp.lt.s32.totalorder %s23, 0
        %s330 = scalar_select %p329, %s23, 0
        %p331 = scmp.lt.s32.totalorder %s328, 1
        %s332 = scalar_select %p331, %s328, 1
        %s333 = smul.addr %s330, 2
        %s334 = sadd.s32 %s332, %s333
        %s335 = smul.addr %s334, 4
        %s336 = scalar_lea.vmem %s3, %s335
        %s337 = smul.u32 2, %s24
        %s338 = smul.u32 2, %s24
        %p339 = scmp.lt.s32.totalorder %s23, 0
        %s340 = scalar_select %p339, %s23, 0
        %p341 = scmp.lt.s32.totalorder %s338, 1
        %s342 = scalar_select %p341, %s338, 1
        %s343 = smul.addr %s340, 2
        %s344 = sadd.s32 %s342, %s343
        %s345 = smul.addr %s344, 4
        %s346 = scalar_lea.vmem %s4, %s345
        %s347 = smul.u32 2, %s24
        %p348 = scmp.eq.s32.totalorder %s25, 0
        // Predicated region
        $region41: #{vit_binary_classifier_forward.8} parent=35 // pred_check
          %p349 = pneg %p348
        $region42: #{vit_binary_classifier_forward.8} parent=35 // pred_check_branch
          %351 = sbr.rel (%p349) target = $region44
        $region43: #{vit_binary_classifier_forward.8} parent=35 // pred_region
          %352 = vst [vmem:[#allocation2] sm:$0xff] 0.0
          %353 = vst [vmem:[#allocation2 + $0x8] sm:$0xff] 0.0
        $region44: #{vit_binary_classifier_forward.8} parent=35 // pred_fallthru
          _
        %v354 = vld [vmem:[%s319] sm:$0xff]
        %v355 = vld [vmem:[#allocation2] sm:$0xff]
        %v356 = vld [vmem:[#allocation2 + $0x8] sm:$0xff]
        %v357 = vld [vmem:[%s259] sm:$0xff]
        %v358 = vld [vmem:[%s259 + $0x8] sm:$0xff]
        %v359 = vld [vmem:[%s259 + $0x10] sm:$0xff]
        %v360 = vld [vmem:[%s259 + $0x18] sm:$0xff]
        %v361 = vld [vmem:[%s259 + $0x20] sm:$0xff]
        %v362 = vld [vmem:[%s259 + $0x28] sm:$0xff]
        %v363 = vld [vmem:[%s259 + $0x30] sm:$0xff]
        %v364 = vld [vmem:[%s259 + $0x38] sm:$0xff]
        %v365 = vld [vmem:[%s259 + $0x40] sm:$0xff]
        %v366 = vld [vmem:[%s259 + $0x48] sm:$0xff]
        %v367 = vld [vmem:[%s259 + $0x50] sm:$0xff]
        %v368 = vld [vmem:[%s259 + $0x58] sm:$0xff]
        %v369 = vld [vmem:[%s259 + $0x60] sm:$0xff]
        %v370 = vld [vmem:[%s259 + $0x68] sm:$0xff]
        %v371 = vld [vmem:[%s259 + $0x70] sm:$0xff]
        %v372 = vld [vmem:[%s259 + $0x78] sm:$0xff]
        %v373 = vld [vmem:[%s259 + $0x80] sm:$0xff]
        %v374 = vld [vmem:[%s259 + $0x88] sm:$0xff]
        %v375 = vld [vmem:[%s259 + $0x90] sm:$0xff]
        %v376 = vld [vmem:[%s259 + $0x98] sm:$0xff]
        %v377 = vld [vmem:[%s259 + $0xa0] sm:$0xff]
        %v378 = vld [vmem:[%s259 + $0xa8] sm:$0xff]
        %v379 = vld [vmem:[%s259 + $0xb0] sm:$0xff]
        %v380 = vld [vmem:[%s259 + $0xb8] sm:$0xff]
        %v381 = vld [vmem:[%s259 + $0xc0] sm:$0xff]
        %v382 = vld [vmem:[%s259 + $0xc8] sm:$0xff]
        %v383 = vld [vmem:[%s259 + $0xd0] sm:$0xff]
        %v384 = vld [vmem:[%s259 + $0xd8] sm:$0xff]
        %v385 = vld [vmem:[%s259 + $0xe0] sm:$0xff]
        %v386 = vld [vmem:[%s259 + $0xe8] sm:$0xff]
        %v387 = vld [vmem:[%s259 + $0xf0] sm:$0xff]
        %v388 = vld [vmem:[%s259 + $0xf8] sm:$0xff]
        %v390 = vunpack.c.l.b16 %v354
        %v391 = vunpack.c.h.b16 %v354
        %v392 = vpack.c.b16 %v390, %v390
        %v393 = vpack.c.b16 %v391, %v391
        %v428 = vunpack.c.l.b16 %v357
        %v429 = vunpack.c.h.b16 %v357
        %v430 = vunpack.c.l.b16 %v358
        %v431 = vunpack.c.h.b16 %v358
        %v432 = vunpack.c.l.b16 %v359
        %v433 = vunpack.c.h.b16 %v359
        %v434 = vunpack.c.l.b16 %v360
        %v435 = vunpack.c.h.b16 %v360
        %v436 = vunpack.c.l.b16 %v361
        %v437 = vunpack.c.h.b16 %v361
        %v438 = vunpack.c.l.b16 %v362
        %v439 = vunpack.c.h.b16 %v362
        %v440 = vunpack.c.l.b16 %v363
        %v441 = vunpack.c.h.b16 %v363
        %v442 = vunpack.c.l.b16 %v364
        %v443 = vunpack.c.h.b16 %v364
        %v444 = vunpack.c.l.b16 %v365
        %v445 = vunpack.c.h.b16 %v365
        %v446 = vunpack.c.l.b16 %v366
        %v447 = vunpack.c.h.b16 %v366
        %v448 = vunpack.c.l.b16 %v367
        %v449 = vunpack.c.h.b16 %v367
        %v450 = vunpack.c.l.b16 %v368
        %v451 = vunpack.c.h.b16 %v368
        %v452 = vunpack.c.l.b16 %v369
        %v453 = vunpack.c.h.b16 %v369
        %v454 = vunpack.c.l.b16 %v370
        %v455 = vunpack.c.h.b16 %v370
        %v456 = vunpack.c.l.b16 %v371
        %v457 = vunpack.c.h.b16 %v371
        %v458 = vunpack.c.l.b16 %v372
        %v459 = vunpack.c.h.b16 %v372
        %v460 = vunpack.c.l.b16 %v373
        %v461 = vunpack.c.h.b16 %v373
        %v462 = vunpack.c.l.b16 %v374
        %v463 = vunpack.c.h.b16 %v374
        %v464 = vunpack.c.l.b16 %v375
        %v465 = vunpack.c.h.b16 %v375
        %v466 = vunpack.c.l.b16 %v376
        %v467 = vunpack.c.h.b16 %v376
        %v468 = vunpack.c.l.b16 %v377
        %v469 = vunpack.c.h.b16 %v377
        %v470 = vunpack.c.l.b16 %v378
        %v471 = vunpack.c.h.b16 %v378
        %v472 = vunpack.c.l.b16 %v379
        %v473 = vunpack.c.h.b16 %v379
        %v474 = vunpack.c.l.b16 %v380
        %v475 = vunpack.c.h.b16 %v380
        %v476 = vunpack.c.l.b16 %v381
        %v477 = vunpack.c.h.b16 %v381
        %v478 = vunpack.c.l.b16 %v382
        %v479 = vunpack.c.h.b16 %v382
        %v480 = vunpack.c.l.b16 %v383
        %v481 = vunpack.c.h.b16 %v383
        %v482 = vunpack.c.l.b16 %v384
        %v483 = vunpack.c.h.b16 %v384
        %v484 = vunpack.c.l.b16 %v385
        %v485 = vunpack.c.h.b16 %v385
        %v486 = vunpack.c.l.b16 %v386
        %v487 = vunpack.c.h.b16 %v386
        %v488 = vunpack.c.l.b16 %v387
        %v489 = vunpack.c.h.b16 %v387
        %v490 = vunpack.c.l.b16 %v388
        %v491 = vunpack.c.h.b16 %v388
        %v492 = vpack.c.b16 %v430, %v428
        %v493 = vpack.c.b16 %v431, %v429
        %v494 = vpack.c.b16 %v434, %v432
        %v495 = vpack.c.b16 %v435, %v433
        %v496 = vpack.c.b16 %v438, %v436
        %v497 = vpack.c.b16 %v439, %v437
        %v498 = vpack.c.b16 %v442, %v440
        %v499 = vpack.c.b16 %v443, %v441
        %v500 = vpack.c.b16 %v446, %v444
        %v501 = vpack.c.b16 %v447, %v445
        %v502 = vpack.c.b16 %v450, %v448
        %v503 = vpack.c.b16 %v451, %v449
        %v504 = vpack.c.b16 %v454, %v452
        %v505 = vpack.c.b16 %v455, %v453
        %v506 = vpack.c.b16 %v458, %v456
        %v507 = vpack.c.b16 %v459, %v457
        %v508 = vpack.c.b16 %v462, %v460
        %v509 = vpack.c.b16 %v463, %v461
        %v510 = vpack.c.b16 %v466, %v464
        %v511 = vpack.c.b16 %v467, %v465
        %v512 = vpack.c.b16 %v470, %v468
        %v513 = vpack.c.b16 %v471, %v469
        %v514 = vpack.c.b16 %v474, %v472
        %v515 = vpack.c.b16 %v475, %v473
        %v516 = vpack.c.b16 %v478, %v476
        %v517 = vpack.c.b16 %v479, %v477
        %v518 = vpack.c.b16 %v482, %v480
        %v519 = vpack.c.b16 %v483, %v481
        %v520 = vpack.c.b16 %v486, %v484
        %v521 = vpack.c.b16 %v487, %v485
        %v522 = vpack.c.b16 %v490, %v488
        %v523 = vpack.c.b16 %v491, %v489
        %556 = vmatpush.bf16.msra.mxu0 %v506
        %557 = vmatpush.bf16.msra.mxu0 %v504
        %558 = vmatpush.bf16.msra.mxu0 %v502
        %559 = vmatpush.bf16.msra.mxu0 %v500
        %560 = vmatpush.bf16.msra.mxu0 %v498
        %561 = vmatpush.bf16.msra.mxu0 %v496
        %562 = vmatpush.bf16.msra.mxu0 %v494
        %563 = vmatpush.bf16.msra.mxu0 %v492
        %564 = vmatmul.bf16.gmra.mxu0 %v392
        %v565 = vpop.f32.mrf.mxu0
        %v566 = vadd.f32 0.0, %v565
        %v567 = vpop.f32.mrf.mxu0
        %568 = vdwg.mxu0
        %569 = vmatpush.bf16.msra.mxu0 %v522
        %570 = vmatpush.bf16.msra.mxu0 %v520
        %571 = vmatpush.bf16.msra.mxu0 %v518
        %572 = vmatpush.bf16.msra.mxu0 %v516
        %573 = vmatpush.bf16.msra.mxu0 %v514
        %574 = vmatpush.bf16.msra.mxu0 %v512
        %575 = vmatpush.bf16.msra.mxu0 %v510
        %576 = vmatpush.bf16.msra.mxu0 %v508
        %577 = vmatmul.bf16.gmra.mxu0 %v393
        %v578 = vpop.f32.mrf.mxu0
        %v579 = vadd.f32 %v566, %v578
        %v580 = vpop.f32.mrf.mxu0
        %581 = vdwg.mxu0
        %582 = vmatpush.bf16.msra.mxu0 %v507
        %583 = vmatpush.bf16.msra.mxu0 %v505
        %584 = vmatpush.bf16.msra.mxu0 %v503
        %585 = vmatpush.bf16.msra.mxu0 %v501
        %586 = vmatpush.bf16.msra.mxu0 %v499
        %587 = vmatpush.bf16.msra.mxu0 %v497
        %588 = vmatpush.bf16.msra.mxu0 %v495
        %589 = vmatpush.bf16.msra.mxu0 %v493
        %590 = vmatmul.bf16.gmra.mxu0 %v392
        %v591 = vpop.f32.mrf.mxu0
        %v592 = vadd.f32 0.0, %v591
        %v593 = vpop.f32.mrf.mxu0
        %594 = vdwg.mxu0
        %595 = vmatpush.bf16.msra.mxu0 %v523
        %596 = vmatpush.bf16.msra.mxu0 %v521
        %597 = vmatpush.bf16.msra.mxu0 %v519
        %598 = vmatpush.bf16.msra.mxu0 %v517
        %599 = vmatpush.bf16.msra.mxu0 %v515
        %600 = vmatpush.bf16.msra.mxu0 %v513
        %601 = vmatpush.bf16.msra.mxu0 %v511
        %602 = vmatpush.bf16.msra.mxu0 %v509
        %603 = vmatmul.bf16.gmra.mxu0 %v393
        %v604 = vpop.f32.mrf.mxu0
        %v605 = vadd.f32 %v592, %v604
        %v606 = vpop.f32.mrf.mxu0
        %607 = vdwg.mxu0
        %v608 = vadd.f32 %v355, %v579
        %v609 = vadd.f32 %v356, %v605
        %610 = vst [vmem:[#allocation2] sm:$0xff] %v608
        %611 = vst [vmem:[#allocation2 + $0x8] sm:$0xff] %v609
        %p612 = scmp.eq.s32.totalorder %s25, 2
        // Predicated region
        $region45: #{vit_binary_classifier_forward.8} parent=35 // pred_check
          %p613 = pneg %p612
        $region46: #{vit_binary_classifier_forward.8} parent=35 // pred_check_branch
          %615 = sbr.rel (%p613) target = $region48
        $region47: #{vit_binary_classifier_forward.8} parent=35 // pred_region
          %v616 = vld [vmem:[#allocation2] sm:$0xff]
          %v617 = vld [vmem:[#allocation2 + $0x8] sm:$0xff]
          %v618 = vld [vmem:[%s326] sm:$0x3]
          %v620 = vperm.slane %v618, 0
          %v621 = vperm.slane %v618, 1
          %v624 = vadd.f32 %v616, %v620
          %v625 = vadd.f32 %v617, %v621
          %v626 = vld [vmem:[%s336] sm:$0xff]
          %v627 = vunpack.c.l.bf16 %v626
          %v628 = vunpack.c.h.bf16 %v626
          %v629 = vadd.f32 %v624, %v627
          %v630 = vadd.f32 %v625, %v628
          %v631 = vpack.c.bf16 %v630, %v629
          %632 = vst [vmem:[%s346] sm:$0xff] %v631
        $region48: #{vit_binary_classifier_forward.8} parent=35 // pred_fallthru
          _
        %s633 = smul.u32 2, %s24
        %p634 = scmp.lt.s32.totalorder %s23, 0
        %s635 = scalar_select %p634, %s23, 0
        %p636 = scmp.lt.s32.totalorder %s633, 1
        %s637 = scalar_select %p636, %s633, 1
        %s638 = smul.addr %s635, 2
        %s639 = sadd.s32 %s637, %s638
        %s640 = smul.addr %s639, 4
        %s641 = scalar_lea.vmem %s4, %s640
        // Predicated region
        $region49: #{vit_binary_classifier_forward.8} parent=35 // pred_check
          %p642 = pneg %p167
        $region50: #{vit_binary_classifier_forward.8} parent=35 // pred_check_branch
          %644 = sbr.rel (%p642) target = $region52
        $region51: #{vit_binary_classifier_forward.8} parent=35 // pred_region
          %s645 = smul.u32 2, %s24
        $region52: #{vit_binary_classifier_forward.8} parent=35 // pred_fallthru
          _
        // Predicated region
        $region53: #{vit_binary_classifier_forward.8} parent=35 // pred_check
          %p646 = pneg %p167
        $region54: #{vit_binary_classifier_forward.8} parent=35 // pred_check_branch
          %648 = sbr.rel (%p646) target = $region56
        $region55: #{vit_binary_classifier_forward.8} parent=35 // pred_region
          %s649 = smul.u32 2, %s24
          %p650 = scmp.lt.s32.totalorder %s23, 0
          %s651 = scalar_select %p650, %s23, 0
          %p652 = scmp.lt.s32.totalorder %s649, 1
          %s653 = scalar_select %p652, %s649, 1
          %s654 = smul.addr %s651, 2
          %s655 = sadd.s32 %s653, %s654
          %s656 = smul.addr %s655, 4
          %s657 = scalar_lea.vmem %s4, %s656
        $region56: #{vit_binary_classifier_forward.8} parent=35 // pred_fallthru
          _
      $region36: #{vit_binary_classifier_forward.8} parent=5 // pred_fallthru
        _
      %p658 = scmp.le.s32.totalorder 2, %s13
      // Predicated region
      $region57: #{vit_binary_classifier_forward.8} parent=5 // pred_check
        %p659 = pneg %p658
      $region58: #{vit_binary_classifier_forward.8} parent=5 // pred_check_branch
        %661 = sbr.rel (%p659) target = $region60
      $region59: #{vit_binary_classifier_forward.8} parent=5 // pred_region
        %s662 = ssub.s32 %s13, 2
      $region60: #{vit_binary_classifier_forward.8} parent=5 // pred_fallthru
        _
    $region6: #{vit_binary_classifier_forward.8} parent=1 // loop_footer
      %s17 = sadd.s32 1, %s13
    $region7: #{vit_binary_classifier_forward.8} parent=1 // loop_footer_branch
      %12 = sbr.rel target = $region3
    $region8: #{vit_binary_classifier_forward.8} parent=1 // loop_exit
      _
    %663 = vsyncpa [#allocation4], 1
    %s664 = scalar_lea.sflag [#allocation4], 1
    %665 = vsyncpa %s664, 1

// kernel: vit_binary_classifier_forward.10
$region0: #{vit_binary_classifier_forward.10}
  #allocation0 [shape = 'u32[]', space=smem, size = 0x4, offset = 0x4, fixed_abs, tag = 'smem constant byte address 0x4 - core index']
  #allocation1 [shape = 'u32[72,128]{1,0:T(1,128)}', space=vmem, size = 0x9000, scoped, tag = 'internal scratch']
  #allocation2 [shape = 'f32[2,8,128]{2,1,0:T(8,128)}', space=vmem, size = 0x2000, scoped, tag = 'scratch operand']
  #allocation3 [shape = 'f32[2,8,128]{2,1,0:T(8,128)}', space=vmem, size = 0x2000, scoped, tag = 'scratch operand']
  #allocation4 [shape = 'f32[8,256]{1,0:T(8,128)}', space=vmem, size = 0x2000, scoped, tag = 'scratch operand']
  %s0 = inlined_call_operand.vmem [shape: bf16[2,8,768], index: 0, kind: input, shape index: {}, may-alias: {0,1,2}]
  %s1 = inlined_call_operand.vmem [shape: bf16[2,8,768], index: 1, kind: input, shape index: {}, may-alias: {0,1,2}]
  %s2 = inlined_call_operand.vmem [shape: bf16[2,8,768], index: 2, kind: input, shape index: {}, may-alias: {0,1,2}]
  %s3 = inlined_call_operand.hbm [shape: bf16[256,256], index: 3, kind: input, shape index: {}]
  %s4 = inlined_call_operand.vmem [shape: f32[1,256], index: 4, kind: input, shape index: {}]
  %s5 = inlined_call_operand.vmem [shape: bf16[2,8,256], index: 5, kind: input, shape index: {}]
  %s6 = inlined_call_operand.vmem [shape: bf16[2,8,256], index: 6, kind: output, shape index: {}]
  %s7 = sld [smem:[#allocation0]]
  $region69: #{vit_binary_classifier_forward.10} parent=0
    _
  %s9 = ssub.s32 1, %s7
  %s10 = scalar_select 0, %s9, %s7
  $region1: #{vit_binary_classifier_forward.10} parent=0
    #allocation5 [shape = 'u8[131072]{0}', space=vmem, size = 0x20000, scoped, tag = 'input window, operand 3, single buffered']
    #allocation6 [shape = 's32[2]{0}', space=sflag, size = 0x8, scoped, tag = 'scoped memory for vit_binary_classifier_forward.10']
    %11 = vsyncpa [#allocation6], 0
    loop: start=0, step=1, limit=4
    $region2: #{vit_binary_classifier_forward.10} parent=1 // loop_pre_header
      _
    $region3: #{vit_binary_classifier_forward.10} parent=1 // loop_header
      %s13 = sphi 0, %s17
      %p14 = scmp.ge.s32.totalorder %s13, 4
      %s20 = sphi 0, %s32
      %s21 = sphi 0, %s28
      %s22 = sphi 0, %s20
      %s23 = sphi 0, %s21
      %s24 = sphi 0, %s22
      %s25 = sphi 0, %s23
      %s35 = sphi 0, %s37
      %s38 = sphi 0, %s35
      %s39 = sphi 0, %s38
      %s55 = sphi 0, %s39
      %s63 = sphi 0, %s65
      %s66 = sphi 0, %s63
      %s67 = sphi 0, %s66
      %s83 = sphi 0, %s67
      %s91 = sphi 0, %s93
      %s94 = sphi 0, %s91
      %s95 = sphi 0, %s94
      %s111 = sphi 0, %s95
      %s115 = sphi 0, %s115
      %s117 = sphi 0, %s115
      %s118 = sphi 0, %s117
      %s132 = sphi 0, %s118
      %s136 = sphi 0, %s136
      %s138 = sphi 0, %s136
      %s139 = sphi 0, %s138
      %s153 = sphi 0, %s139
      %s159 = sphi 0, %s161
      %s162 = sphi 0, %s159
      %s163 = sphi 0, %s162
      %s179 = sphi 0, %s163
      %s185 = sphi 0, %s187
      %s188 = sphi 0, %s185
      %s189 = sphi 0, %s188
      %s205 = sphi 0, %s189
    $region4: #{vit_binary_classifier_forward.10} parent=1 // loop_header_branch
      %16 = sbr.rel (%p14) target = $region8
    $region5: #{vit_binary_classifier_forward.10} parent=1 // loop_body
      %s18 = ssub.s32 %s13, 1
      %s19 = ssub.s32 %s13, 2
      %s26 = sadd.s32 1, %s21
      %p27 = scmp.ge.s32.totalorder %s26, 1
      %s28 = scalar_select %p27, 0, %s26
      %s29 = sadd.s32 1, %s20
      %s30 = scalar_select %p27, %s29, %s20
      %p31 = scmp.ge.s32.totalorder %s30, 2
      %s32 = scalar_select %p31, 0, %s30
      %s33 = ssub.s32 %s20, %s32
      %p34 = scmp.eq.s32.totalorder %s33, 0
      %s36 = sadd.s32 %s35, 1
      %s37 = scalar_select %p34, %s35, %s36
      %p40 = pneg %p34
      %p41 = scmp.eq.s32.totalorder %s13, 1
      %p42 = por %p40, %p41
      %p43 = scmp.ne.s32.totalorder %s35, %s38
      %p44 = scmp.eq.s32.totalorder %s13, 0
      %p45 = por %p43, %p44
      %p46 = scmp.ne.s32.totalorder %s35, %s38
      %p47 = scmp.eq.s32.totalorder %s18, 1
      %p48 = por %p46, %p47
      %p49 = scmp.ne.s32.totalorder %s38, %s39
      %p50 = scmp.eq.s32.totalorder %s18, 0
      %p51 = por %p49, %p50
      %p52 = scmp.ne.s32.totalorder %s38, %s39
      %p53 = scmp.eq.s32.totalorder %s19, 1
      %p54 = por %p52, %p53
      %p56 = scmp.ne.s32.totalorder %s39, %s55
      %p57 = scmp.eq.s32.totalorder %s19, 0
      %p58 = por %p56, %p57
      %s59 = ssub.s32 %s20, %s32
      %s60 = ssub.s32 %s21, %s28
      %s61 = sor.u32 %s59, %s60
      %p62 = scmp.eq.s32.totalorder %s61, 0
      %s64 = sadd.s32 %s63, 1
      %s65 = scalar_select %p62, %s63, %s64
      %p68 = pneg %p62
      %p69 = scmp.eq.s32.totalorder %s13, 1
      %p70 = por %p68, %p69
      %p71 = scmp.ne.s32.totalorder %s63, %s66
      %p72 = scmp.eq.s32.totalorder %s13, 0
      %p73 = por %p71, %p72
      %p74 = scmp.ne.s32.totalorder %s63, %s66
      %p75 = scmp.eq.s32.totalorder %s18, 1
      %p76 = por %p74, %p75
      %p77 = scmp.ne.s32.totalorder %s66, %s67
      %p78 = scmp.eq.s32.totalorder %s18, 0
      %p79 = por %p77, %p78
      %p80 = scmp.ne.s32.totalorder %s66, %s67
      %p81 = scmp.eq.s32.totalorder %s19, 1
      %p82 = por %p80, %p81
      %p84 = scmp.ne.s32.totalorder %s67, %s83
      %p85 = scmp.eq.s32.totalorder %s19, 0
      %p86 = por %p84, %p85
      %s87 = ssub.s32 %s20, %s32
      %s88 = ssub.s32 %s21, %s28
      %s89 = sor.u32 %s87, %s88
      %p90 = scmp.eq.s32.totalorder %s89, 0
      %s92 = sadd.s32 %s91, 1
      %s93 = scalar_select %p90, %s91, %s92
      %p96 = pneg %p90
      %p97 = scmp.eq.s32.totalorder %s13, 1
      %p98 = por %p96, %p97
      %p99 = scmp.ne.s32.totalorder %s91, %s94
      %p100 = scmp.eq.s32.totalorder %s13, 0
      %p101 = por %p99, %p100
      %p102 = scmp.ne.s32.totalorder %s91, %s94
      %p103 = scmp.eq.s32.totalorder %s18, 1
      %p104 = por %p102, %p103
      %p105 = scmp.ne.s32.totalorder %s94, %s95
      %p106 = scmp.eq.s32.totalorder %s18, 0
      %p107 = por %p105, %p106
      %p108 = scmp.ne.s32.totalorder %s94, %s95
      %p109 = scmp.eq.s32.totalorder %s19, 1
      %p110 = por %p108, %p109
      %p112 = scmp.ne.s32.totalorder %s95, %s111
      %p113 = scmp.eq.s32.totalorder %s19, 0
      %p114 = por %p112, %p113
      %s116 = sadd.s32 %s115, 1
      %p119 = scmp.eq.s32.totalorder %s13, 1
      %p120 = scmp.ne.s32.totalorder %s115, %s117
      %p121 = scmp.eq.s32.totalorder %s13, 0
      %p122 = por %p120, %p121
      %p123 = scmp.ne.s32.totalorder %s115, %s117
      %p124 = scmp.eq.s32.totalorder %s18, 1
      %p125 = por %p123, %p124
      %p126 = scmp.ne.s32.totalorder %s117, %s118
      %p127 = scmp.eq.s32.totalorder %s18, 0
      %p128 = por %p126, %p127
      %p129 = scmp.ne.s32.totalorder %s117, %s118
      %p130 = scmp.eq.s32.totalorder %s19, 1
      %p131 = por %p129, %p130
      %p133 = scmp.ne.s32.totalorder %s118, %s132
      %p134 = scmp.eq.s32.totalorder %s19, 0
      %p135 = por %p133, %p134
      %s137 = sadd.s32 %s136, 1
      %p140 = scmp.eq.s32.totalorder %s13, 1
      %p141 = scmp.ne.s32.totalorder %s136, %s138
      %p142 = scmp.eq.s32.totalorder %s13, 0
      %p143 = por %p141, %p142
      %p144 = scmp.ne.s32.totalorder %s136, %s138
      %p145 = scmp.eq.s32.totalorder %s18, 1
      %p146 = por %p144, %p145
      %p147 = scmp.ne.s32.totalorder %s138, %s139
      %p148 = scmp.eq.s32.totalorder %s18, 0
      %p149 = por %p147, %p148
      %p150 = scmp.ne.s32.totalorder %s138, %s139
      %p151 = scmp.eq.s32.totalorder %s19, 1
      %p152 = por %p150, %p151
      %p154 = scmp.ne.s32.totalorder %s139, %s153
      %p155 = scmp.eq.s32.totalorder %s19, 0
      %p156 = por %p154, %p155
      %s157 = ssub.s32 %s20, %s32
      %p158 = scmp.eq.s32.totalorder %s157, 0
      %s160 = sadd.s32 %s159, 1
      %s161 = scalar_select %p158, %s159, %s160
      %p164 = pneg %p158
      %p165 = scmp.eq.s32.totalorder %s13, 1
      %p166 = por %p164, %p165
      %p167 = scmp.ne.s32.totalorder %s159, %s162
      %p168 = scmp.eq.s32.totalorder %s13, 0
      %p169 = por %p167, %p168
      %p170 = scmp.ne.s32.totalorder %s159, %s162
      %p171 = scmp.eq.s32.totalorder %s18, 1
      %p172 = por %p170, %p171
      %p173 = scmp.ne.s32.totalorder %s162, %s163
      %p174 = scmp.eq.s32.totalorder %s18, 0
      %p175 = por %p173, %p174
      %p176 = scmp.ne.s32.totalorder %s162, %s163
      %p177 = scmp.eq.s32.totalorder %s19, 1
      %p178 = por %p176, %p177
      %p180 = scmp.ne.s32.totalorder %s163, %s179
      %p181 = scmp.eq.s32.totalorder %s19, 0
      %p182 = por %p180, %p181
      %s183 = ssub.s32 %s20, %s32
      %p184 = scmp.eq.s32.totalorder %s183, 0
      %s186 = sadd.s32 %s185, 1
      %s187 = scalar_select %p184, %s185, %s186
      %p190 = pneg %p184
      %p191 = scmp.eq.s32.totalorder %s13, 1
      %p192 = por %p190, %p191
      %p193 = scmp.ne.s32.totalorder %s185, %s188
      %p194 = scmp.eq.s32.totalorder %s13, 0
      %p195 = por %p193, %p194
      %p196 = scmp.ne.s32.totalorder %s185, %s188
      %p197 = scmp.eq.s32.totalorder %s18, 1
      %p198 = por %p196, %p197
      %p199 = scmp.ne.s32.totalorder %s188, %s189
      %p200 = scmp.eq.s32.totalorder %s18, 0
      %p201 = por %p199, %p200
      %p202 = scmp.ne.s32.totalorder %s188, %s189
      %p203 = scmp.eq.s32.totalorder %s19, 1
      %p204 = por %p202, %p203
      %p206 = scmp.ne.s32.totalorder %s189, %s205
      %p207 = scmp.eq.s32.totalorder %s19, 0
      %p208 = por %p206, %p207
      %p209 = scmp.le.s32.totalorder 1, %s13
      %p210 = scmp.lt.s32.totalorder %s13, 3
      %p211 = pnand %p209, %p210
      %p212 = pneg %p211
      // Predicated region
      $region9: #{vit_binary_classifier_forward.10} parent=5 // pred_check
        _
      $region10: #{vit_binary_classifier_forward.10} parent=5 // pred_check_branch
        %214 = sbr.rel (%p211) target = $region12
      $region11: #{vit_binary_classifier_forward.10} parent=5 // pred_region
        %s215 = ssub.s32 %s13, 1
        // Predicated region
        $region13: #{vit_binary_classifier_forward.10} parent=11 // pred_check
          %p216 = pneg %p128
        $region14: #{vit_binary_classifier_forward.10} parent=11 // pred_check_branch
          %218 = sbr.rel (%p216) target = $region16
        $region15: #{vit_binary_classifier_forward.10} parent=11 // pred_region
          %220 = vsyncadd [#allocation6], 0
          %s221 = sshll.u32 %s3, 4
          %s222 = int_to_ptr.hbm [resolvable:$true] %s221
          %s223 = sshll.u32 [#allocation5], 4
          %s224 = int_to_ptr.vmem [resolvable:$true] %s223
          %229 = dma.hbm_to_vmem [thread:$0]  %s222, 4096, %s224, [#allocation6], 128, 128, 8
        $region16: #{vit_binary_classifier_forward.10} parent=11 // pred_fallthru
          _
        // Predicated region
        $region17: #{vit_binary_classifier_forward.10} parent=11 // pred_check
          %p230 = pneg %p149
        $region18: #{vit_binary_classifier_forward.10} parent=11 // pred_check_branch
          %232 = sbr.rel (%p230) target = $region20
        $region19: #{vit_binary_classifier_forward.10} parent=11 // pred_region
          _
        $region20: #{vit_binary_classifier_forward.10} parent=11 // pred_fallthru
          _
      $region12: #{vit_binary_classifier_forward.10} parent=5 // pred_fallthru
        _
      %p233 = scmp.lt.s32.totalorder %s13, 2
      // Predicated region
      $region21: #{vit_binary_classifier_forward.10} parent=5 // pred_check
        %p234 = pneg %p233
      $region22: #{vit_binary_classifier_forward.10} parent=5 // pred_check_branch
        %236 = sbr.rel (%p234) target = $region24
      $region23: #{vit_binary_classifier_forward.10} parent=5 // pred_region
        // Predicated region
        $region25: #{vit_binary_classifier_forward.10} parent=23 // pred_check
          %p237 = pneg %p45
        $region26: #{vit_binary_classifier_forward.10} parent=23 // pred_check_branch
          %239 = sbr.rel (%p237) target = $region28
        $region27: #{vit_binary_classifier_forward.10} parent=23 // pred_region
          %p240 = scmp.lt.s32.totalorder %s20, 1
          %s241 = scalar_select %p240, %s20, 1
          %s242 = smul.addr %s241, 6
          %s243 = smul.addr %s242, 4
          %s244 = scalar_lea.vmem %s0, %s243
        $region28: #{vit_binary_classifier_forward.10} parent=23 // pred_fallthru
          _
        // Predicated region
        $region29: #{vit_binary_classifier_forward.10} parent=23 // pred_check
          %p245 = pneg %p73
        $region30: #{vit_binary_classifier_forward.10} parent=23 // pred_check_branch
          %247 = sbr.rel (%p245) target = $region32
        $region31: #{vit_binary_classifier_forward.10} parent=23 // pred_region
          %p248 = scmp.lt.s32.totalorder %s20, 1
          %s249 = scalar_select %p248, %s20, 1
          %p250 = scmp.lt.s32.totalorder %s21, 0
          %s251 = scalar_select %p250, %s21, 0
          %s252 = smul.addr %s251, 6
          %s253 = sadd.s32 2, %s252
          %s254 = smul.addr %s249, 6
          %s255 = sadd.s32 %s253, %s254
          %s256 = smul.addr %s255, 4
          %s257 = scalar_lea.vmem %s1, %s256
        $region32: #{vit_binary_classifier_forward.10} parent=23 // pred_fallthru
          _
        // Predicated region
        $region33: #{vit_binary_classifier_forward.10} parent=23 // pred_check
          %p258 = pneg %p101
        $region34: #{vit_binary_classifier_forward.10} parent=23 // pred_check_branch
          %260 = sbr.rel (%p258) target = $region36
        $region35: #{vit_binary_classifier_forward.10} parent=23 // pred_region
          %p261 = scmp.lt.s32.totalorder %s20, 1
          %s262 = scalar_select %p261, %s20, 1
          %p263 = scmp.lt.s32.totalorder %s21, 0
          %s264 = scalar_select %p263, %s21, 0
          %s265 = smul.addr %s264, 6
          %s266 = sadd.s32 4, %s265
          %s267 = smul.addr %s262, 6
          %s268 = sadd.s32 %s266, %s267
          %s269 = smul.addr %s268, 4
          %s270 = scalar_lea.vmem %s2, %s269
        $region36: #{vit_binary_classifier_forward.10} parent=23 // pred_fallthru
          _
        // Predicated region
        $region37: #{vit_binary_classifier_forward.10} parent=23 // pred_check
          %p271 = pneg %p169
        $region38: #{vit_binary_classifier_forward.10} parent=23 // pred_check_branch
          %273 = sbr.rel (%p271) target = $region40
        $region39: #{vit_binary_classifier_forward.10} parent=23 // pred_region
          %p274 = scmp.lt.s32.totalorder %s20, 1
          %s275 = scalar_select %p274, %s20, 1
          %s276 = smul.addr %s275, 2
          %s277 = smul.addr %s276, 4
          %s278 = scalar_lea.vmem %s5, %s277
        $region40: #{vit_binary_classifier_forward.10} parent=23 // pred_fallthru
          _
      $region24: #{vit_binary_classifier_forward.10} parent=5 // pred_fallthru
        _
      %p279 = scmp.le.s32.totalorder 1, %s13
      %p280 = scmp.lt.s32.totalorder %s13, 3
      %p281 = pnand %p279, %p280
      %p282 = pneg %p281
      // Predicated region
      $region41: #{vit_binary_classifier_forward.10} parent=5 // pred_check
        _
      $region42: #{vit_binary_classifier_forward.10} parent=5 // pred_check_branch
        %284 = sbr.rel (%p281) target = $region44
      $region43: #{vit_binary_classifier_forward.10} parent=5 // pred_region
        %s285 = ssub.s32 %s13, 1
        // Predicated region
        $region45: #{vit_binary_classifier_forward.10} parent=43 // pred_check
          %p286 = pneg %p128
        $region46: #{vit_binary_classifier_forward.10} parent=43 // pred_check_branch
          %288 = sbr.rel (%p286) target = $region48
        $region47: #{vit_binary_classifier_forward.10} parent=43 // pred_region
          %290 = dma.done [#allocation6], 4096
        $region48: #{vit_binary_classifier_forward.10} parent=43 // pred_fallthru
          _
        %p291 = scmp.lt.s32.totalorder %s22, 1
        %s292 = scalar_select %p291, %s22, 1
        %s293 = smul.addr %s292, 6
        %s294 = smul.addr %s293, 4
        %s295 = scalar_lea.vmem %s0, %s294
        %p296 = pneg %p51
        %p297 = pneg %p48
        %p298 = scmp.lt.s32.totalorder %s22, 1
        %s299 = scalar_select %p298, %s22, 1
        %p300 = scmp.lt.s32.totalorder %s23, 0
        %s301 = scalar_select %p300, %s23, 0
        %s302 = smul.addr %s301, 6
        %s303 = sadd.s32 2, %s302
        %s304 = smul.addr %s299, 6
        %s305 = sadd.s32 %s303, %s304
        %s306 = smul.addr %s305, 4
        %s307 = scalar_lea.vmem %s1, %s306
        %p308 = pneg %p79
        %p309 = pneg %p76
        %p310 = scmp.lt.s32.totalorder %s22, 1
        %s311 = scalar_select %p310, %s22, 1
        %p312 = scmp.lt.s32.totalorder %s23, 0
        %s313 = scalar_select %p312, %s23, 0
        %s314 = smul.addr %s313, 6
        %s315 = sadd.s32 4, %s314
        %s316 = smul.addr %s311, 6
        %s317 = sadd.s32 %s315, %s316
        %s318 = smul.addr %s317, 4
        %s319 = scalar_lea.vmem %s2, %s318
        %p320 = pneg %p107
        %p321 = pneg %p104
        %p322 = pneg %p128
        %p323 = pneg %p125
        %p324 = pneg %p149
        %p325 = pneg %p146
        %p326 = scmp.lt.s32.totalorder %s22, 1
        %s327 = scalar_select %p326, %s22, 1
        %s328 = smul.addr %s327, 2
        %s329 = smul.addr %s328, 4
        %s330 = scalar_lea.vmem %s5, %s329
        %p331 = pneg %p175
        %p332 = pneg %p172
        %p333 = pneg %p201
        %p334 = pneg %p198
        %p335 = scmp.lt.s32.totalorder %s22, 1
        %s336 = scalar_select %p335, %s22, 1
        %s337 = smul.addr %s336, 2
        %s338 = smul.addr %s337, 4
        %s339 = scalar_lea.vmem %s6, %s338
        %p340 = scmp.lt.s32.totalorder %s22, 1
        %s341 = scalar_select %p340, %s22, 1
        %s342 = smul.addr %s341, 6
        %s343 = smul.addr %s342, 4
        %s344 = scalar_lea.vmem %s0, %s343
        %p345 = scmp.lt.s32.totalorder %s22, 1
        %s346 = scalar_select %p345, %s22, 1
        %p347 = scmp.lt.s32.totalorder %s23, 0
        %s348 = scalar_select %p347, %s23, 0
        %s349 = smul.addr %s348, 6
        %s350 = sadd.s32 2, %s349
        %s351 = smul.addr %s346, 6
        %s352 = sadd.s32 %s350, %s351
        %s353 = smul.addr %s352, 4
        %s354 = scalar_lea.vmem %s1, %s353
        %p355 = scmp.lt.s32.totalorder %s22, 1
        %s356 = scalar_select %p355, %s22, 1
        %p357 = scmp.lt.s32.totalorder %s23, 0
        %s358 = scalar_select %p357, %s23, 0
        %s359 = smul.addr %s358, 6
        %s360 = sadd.s32 4, %s359
        %s361 = smul.addr %s356, 6
        %s362 = sadd.s32 %s360, %s361
        %s363 = smul.addr %s362, 4
        %s364 = scalar_lea.vmem %s2, %s363
        %p365 = scmp.lt.s32.totalorder %s22, 1
        %s366 = scalar_select %p365, %s22, 1
        %s367 = smul.addr %s366, 2
        %s368 = smul.addr %s367, 4
        %s369 = scalar_lea.vmem %s5, %s368
        %p370 = scmp.lt.s32.totalorder %s22, 1
        %s371 = scalar_select %p370, %s22, 1
        %s372 = smul.addr %s371, 2
        %s373 = smul.addr %s372, 4
        %s374 = scalar_lea.vmem %s6, %s373
        %p376 = scmp.eq.s32.totalorder %s23, 0
        // Predicated region
        $region49: #{vit_binary_classifier_forward.10} parent=43 // pred_check
          %p377 = pneg %p376
        $region50: #{vit_binary_classifier_forward.10} parent=43 // pred_check_branch
          %379 = sbr.rel (%p377) target = $region52
        $region51: #{vit_binary_classifier_forward.10} parent=43 // pred_region
          %380 = vst [vmem:[#allocation2] sm:$0xff] -1e+30
          %381 = vst [vmem:[#allocation2 + $0x8] sm:$0xff] -1e+30
          %382 = vst [vmem:[#allocation3] sm:$0xff] 0.0
          %383 = vst [vmem:[#allocation3 + $0x8] sm:$0xff] 0.0
          %384 = vst [vmem:[#allocation4] sm:$0xff] 0.0
          %385 = vst [vmem:[#allocation4 + $0x8] sm:$0xff] 0.0
        $region52: #{vit_binary_classifier_forward.10} parent=43 // pred_fallthru
          _
        %v386 = vld [vmem:[%s344] sm:$0xff]
        %v387 = vld [vmem:[%s354] sm:$0xff]
        %v388 = vld [vmem:[%s364] sm:$0xff]
        %s389 = smul.u32 %s23, 8
        %v390 = vlaneseq
        %v391 = vand.u32 %v390, 127
        %v392 = vstv %s389
        %v393 = vadd.s32 %v392, %v391
        %vm394 = vcmp.lt.s32.totalorder %v393, 5
        %395 = vmatpush.bf16.xpose.msra.mxu0 0
        %396 = vmatpush.bf16.xpose.msra.mxu0 0
        %397 = vmatpush.bf16.xpose.msra.mxu0 0
        %398 = vmatpush.bf16.xpose.msra.mxu0 0
        %399 = vmatpush.bf16.xpose.msra.mxu0 0
        %400 = vmatpush.bf16.xpose.msra.mxu0 0
        %401 = vmatpush.bf16.xpose.msra.mxu0 0
        %402 = vmatpush.bf16.xpose.msra.mxu0 %v387
        %403 = vmatmul.bf16.gmra.mxu0 %v386
        %v404 = vpop.f32.mrf.mxu0
        %v405 = vadd.f32 0.0, %v404
        %v406 = vpop.f32.mrf.mxu0
        %407 = vdwg.mxu0
        %v408 = vmul.f32 %v405, 0.088388346
        %v409 = vsel %vm394, 1, 0
        %vm410 = vcmp.eq.s32.totalorder %v409, 1
        %v411 = vsel %vm410, %v408, -1e+30
        %v412 = vld [vmem:[#allocation2] sm:$0xff]
        %413 = vmax.xlane.f32.xlu0 %v412
        %v414 = vpop.xlane.xlu0 %413
        %v415 = vld [vmem:[#allocation3] sm:$0xff]
        %416 = vmax.xlane.f32.xlu0 %v415
        %v417 = vpop.xlane.xlu0 %416
        %vm418 = vcmask 64512
        %v419 = vsel %vm418, %v411, -inf
        %420 = vmax.xlane.f32.xlu0 %v419
        %v421 = vpop.xlane.xlu0 %420
        %v422 = vmax.f32 %v414, %v421
        %v423 = vsub.f32 %v414, %v422
        %v424 = vmul.f32 %v423, 1.442695
        %v425 = vpow.pop %v424
        %v426 = vsub.f32 %v411, %v422
        %v427 = vmul.f32 %v426, 1.442695
        %v428 = vpow.pop %v427
        %v429 = vmul.f32 %v425, %v417
        %v430 = vsel %vm418, %v428, 0.0
        %431 = vadd.xlane.f32.xlu0 %v430
        %v432 = vpop.xlane.xlu0 %431
        %v433 = vadd.f32 %v429, %v432
        %v434 = vpack.c.bf16 %v428, %v428
        %v436 = vsel %vm418, %v434, 0
        %vm438 = vcmask 1043456
        %v440 = vsel %vm438, %v388, 0
        %442 = vmatpush.bf16.msra.mxu0 0
        %443 = vmatpush.bf16.msra.mxu0 0
        %444 = vmatpush.bf16.msra.mxu0 0
        %445 = vmatpush.bf16.msra.mxu0 0
        %446 = vmatpush.bf16.msra.mxu0 0
        %447 = vmatpush.bf16.msra.mxu0 0
        %448 = vmatpush.bf16.msra.mxu0 0
        %449 = vmatpush.bf16.msra.mxu0 %v440
        %450 = vmatmul.bf16.gmra.mxu0 %v436
        %v451 = vpop.f32.mrf.mxu0
        %v452 = vadd.f32 0.0, %v451
        %v453 = vpop.f32.mrf.mxu0
        %454 = vdwg.mxu0
        %v455 = vld [vmem:[#allocation4] sm:$0xff]
        %v456 = vmul.f32 %v425, %v455
        %v457 = vadd.f32 %v456, %v452
        %458 = vst [vmem:[#allocation4] sm:$0xff] %v457
        %459 = vst [vmem:[#allocation2] sm:$0xff] %v422
        %460 = vst [vmem:[#allocation3] sm:$0xff] %v433
        %v462 = vunpack.c.h.b16 %v386
        %v463 = vpack.c.b16 %v462, %v462
        %v466 = vunpack.c.h.b16 %v387
        %v467 = vpack.c.b16 %v466, %v466
        %469 = vmatpush.bf16.xpose.msra.mxu0 0
        %470 = vmatpush.bf16.xpose.msra.mxu0 0
        %471 = vmatpush.bf16.xpose.msra.mxu0 0
        %472 = vmatpush.bf16.xpose.msra.mxu0 0
        %473 = vmatpush.bf16.xpose.msra.mxu0 0
        %474 = vmatpush.bf16.xpose.msra.mxu0 0
        %475 = vmatpush.bf16.xpose.msra.mxu0 0
        %476 = vmatpush.bf16.xpose.msra.mxu0 %v467
        %477 = vmatmul.bf16.gmra.mxu0 %v463
        %v478 = vpop.f32.mrf.mxu0
        %v479 = vadd.f32 0.0, %v478
        %v480 = vpop.f32.mrf.mxu0
        %481 = vdwg.mxu0
        %v482 = vmul.f32 %v479, 0.088388346
        %v483 = vsel %vm410, %v482, -1e+30
        %s484 = scalar_lea.vmem [#allocation2], 8
        %v485 = vld [vmem:[%s484] sm:$0xff]
        %486 = vmax.xlane.f32.xlu0 %v485
        %v487 = vpop.xlane.xlu0 %486
        %s488 = scalar_lea.vmem [#allocation3], 8
        %v489 = vld [vmem:[%s488] sm:$0xff]
        %490 = vmax.xlane.f32.xlu0 %v489
        %v491 = vpop.xlane.xlu0 %490
        %v492 = vsel %vm418, %v483, -inf
        %493 = vmax.xlane.f32.xlu0 %v492
        %v494 = vpop.xlane.xlu0 %493
        %v495 = vmax.f32 %v487, %v494
        %v496 = vsub.f32 %v487, %v495
        %v497 = vmul.f32 %v496, 1.442695
        %v498 = vpow.pop %v497
        %v499 = vsub.f32 %v483, %v495
        %v500 = vmul.f32 %v499, 1.442695
        %v501 = vpow.pop %v500
        %v502 = vmul.f32 %v498, %v491
        %v503 = vsel %vm418, %v501, 0.0
        %504 = vadd.xlane.f32.xlu0 %v503
        %v505 = vpop.xlane.xlu0 %504
        %v506 = vadd.f32 %v502, %v505
        %v507 = vpack.c.bf16 %v501, %v501
        %v509 = vunpack.c.h.b16 %v388
        %v510 = vpack.c.b16 %v509, %v509
        %v512 = vsel %vm418, %v507, 0
        %v515 = vsel %vm438, %v510, 0
        %517 = vmatpush.bf16.msra.mxu0 0
        %518 = vmatpush.bf16.msra.mxu0 0
        %519 = vmatpush.bf16.msra.mxu0 0
        %520 = vmatpush.bf16.msra.mxu0 0
        %521 = vmatpush.bf16.msra.mxu0 0
        %522 = vmatpush.bf16.msra.mxu0 0
        %523 = vmatpush.bf16.msra.mxu0 0
        %524 = vmatpush.bf16.msra.mxu0 %v515
        %525 = vmatmul.bf16.gmra.mxu0 %v512
        %v526 = vpop.f32.mrf.mxu0
        %v527 = vadd.f32 0.0, %v526
        %v528 = vpop.f32.mrf.mxu0
        %529 = vdwg.mxu0
        %v530 = vld [vmem:[#allocation4 + $0x8] sm:$0xff]
        %v531 = vmul.f32 %v498, %v530
        %v532 = vadd.f32 %v531, %v527
        %533 = vst [vmem:[#allocation4 + $0x8] sm:$0xff] %v532
        %534 = vst [vmem:[%s484] sm:$0xff] %v495
        %535 = vst [vmem:[%s488] sm:$0xff] %v506
        // Predicated region
        $region53: #{vit_binary_classifier_forward.10} parent=43 // pred_check
          %p536 = pneg %p376
        $region54: #{vit_binary_classifier_forward.10} parent=43 // pred_check_branch
          %538 = sbr.rel (%p536) target = $region56
        $region55: #{vit_binary_classifier_forward.10} parent=43 // pred_region
          %v539 = vld [vmem:[#allocation3] sm:$0xff]
          %540 = vmax.xlane.f32.xlu0 %v539
          %v541 = vpop.xlane.xlu0 %540
          %v542 = vrcp.pop %v541
          %v543 = vld [vmem:[#allocation4] sm:$0xff]
          %v544 = vmul.f32 %v543, %v542
          %v545 = vld [vmem:[%s488] sm:$0xff]
          %546 = vmax.xlane.f32.xlu0 %v545
          %v547 = vpop.xlane.xlu0 %546
          %v548 = vrcp.pop %v547
          %v549 = vld [vmem:[#allocation4 + $0x8] sm:$0xff]
          %v550 = vmul.f32 %v549, %v548
          %v551 = vpack.c.bf16 %v544, %v544
          %v552 = vpack.c.bf16 %v550, %v550
          %v553 = vld [vmem:[#allocation5] sm:$0xff]
          %v554 = vld [vmem:[#allocation5 + $0x8] sm:$0xff]
          %v555 = vld [vmem:[#allocation5 + $0x10] sm:$0xff]
          %v556 = vld [vmem:[#allocation5 + $0x18] sm:$0xff]
          %v557 = vld [vmem:[#allocation5 + $0x20] sm:$0xff]
          %v558 = vld [vmem:[#allocation5 + $0x28] sm:$0xff]
          %v559 = vld [vmem:[#allocation5 + $0x30] sm:$0xff]
          %v560 = vld [vmem:[#allocation5 + $0x38] sm:$0xff]
          %v561 = vld [vmem:[#allocation5 + $0x40] sm:$0xff]
          %v562 = vld [vmem:[#allocation5 + $0x48] sm:$0xff]
          %v563 = vld [vmem:[#allocation5 + $0x50] sm:$0xff]
          %v564 = vld [vmem:[#allocation5 + $0x58] sm:$0xff]
          %v565 = vld [vmem:[#allocation5 + $0x60] sm:$0xff]
          %v566 = vld [vmem:[#allocation5 + $0x68] sm:$0xff]
          %v567 = vld [vmem:[#allocation5 + $0x70] sm:$0xff]
          %v568 = vld [vmem:[#allocation5 + $0x78] sm:$0xff]
          %v569 = vld [vmem:[#allocation5 + $0x80] sm:$0xff]
          %v570 = vld [vmem:[#allocation5 + $0x88] sm:$0xff]
          %v571 = vld [vmem:[#allocation5 + $0x90] sm:$0xff]
          %v572 = vld [vmem:[#allocation5 + $0x98] sm:$0xff]
          %v573 = vld [vmem:[#allocation5 + $0xa0] sm:$0xff]
          %v574 = vld [vmem:[#allocation5 + $0xa8] sm:$0xff]
          %v575 = vld [vmem:[#allocation5 + $0xb0] sm:$0xff]
          %v576 = vld [vmem:[#allocation5 + $0xb8] sm:$0xff]
          %v577 = vld [vmem:[#allocation5 + $0xc0] sm:$0xff]
          %v578 = vld [vmem:[#allocation5 + $0xc8] sm:$0xff]
          %v579 = vld [vmem:[#allocation5 + $0xd0] sm:$0xff]
          %v580 = vld [vmem:[#allocation5 + $0xd8] sm:$0xff]
          %v581 = vld [vmem:[#allocation5 + $0xe0] sm:$0xff]
          %v582 = vld [vmem:[#allocation5 + $0xe8] sm:$0xff]
          %v583 = vld [vmem:[#allocation5 + $0xf0] sm:$0xff]
          %v584 = vld [vmem:[#allocation5 + $0xf8] sm:$0xff]
          %v585 = vld [vmem:[%s4] sm:$0x3]
          %v587 = vperm.slane %v585, 0
          %v588 = vperm.slane %v585, 1
          %v623 = vunpack.c.l.b16 %v553
          %v624 = vunpack.c.h.b16 %v553
          %v625 = vunpack.c.l.b16 %v554
          %v626 = vunpack.c.h.b16 %v554
          %v627 = vunpack.c.l.b16 %v555
          %v628 = vunpack.c.h.b16 %v555
          %v629 = vunpack.c.l.b16 %v556
          %v630 = vunpack.c.h.b16 %v556
          %v631 = vunpack.c.l.b16 %v557
          %v632 = vunpack.c.h.b16 %v557
          %v633 = vunpack.c.l.b16 %v558
          %v634 = vunpack.c.h.b16 %v558
          %v635 = vunpack.c.l.b16 %v559
          %v636 = vunpack.c.h.b16 %v559
          %v637 = vunpack.c.l.b16 %v560
          %v638 = vunpack.c.h.b16 %v560
          %v639 = vunpack.c.l.b16 %v561
          %v640 = vunpack.c.h.b16 %v561
          %v641 = vunpack.c.l.b16 %v562
          %v642 = vunpack.c.h.b16 %v562
          %v643 = vunpack.c.l.b16 %v563
          %v644 = vunpack.c.h.b16 %v563
          %v645 = vunpack.c.l.b16 %v564
          %v646 = vunpack.c.h.b16 %v564
          %v647 = vunpack.c.l.b16 %v565
          %v648 = vunpack.c.h.b16 %v565
          %v649 = vunpack.c.l.b16 %v566
          %v650 = vunpack.c.h.b16 %v566
          %v651 = vunpack.c.l.b16 %v567
          %v652 = vunpack.c.h.b16 %v567
          %v653 = vunpack.c.l.b16 %v568
          %v654 = vunpack.c.h.b16 %v568
          %v655 = vunpack.c.l.b16 %v569
          %v656 = vunpack.c.h.b16 %v569
          %v657 = vunpack.c.l.b16 %v570
          %v658 = vunpack.c.h.b16 %v570
          %v659 = vunpack.c.l.b16 %v571
          %v660 = vunpack.c.h.b16 %v571
          %v661 = vunpack.c.l.b16 %v572
          %v662 = vunpack.c.h.b16 %v572
          %v663 = vunpack.c.l.b16 %v573
          %v664 = vunpack.c.h.b16 %v573
          %v665 = vunpack.c.l.b16 %v574
          %v666 = vunpack.c.h.b16 %v574
          %v667 = vunpack.c.l.b16 %v575
          %v668 = vunpack.c.h.b16 %v575
          %v669 = vunpack.c.l.b16 %v576
          %v670 = vunpack.c.h.b16 %v576
          %v671 = vunpack.c.l.b16 %v577
          %v672 = vunpack.c.h.b16 %v577
          %v673 = vunpack.c.l.b16 %v578
          %v674 = vunpack.c.h.b16 %v578
          %v675 = vunpack.c.l.b16 %v579
          %v676 = vunpack.c.h.b16 %v579
          %v677 = vunpack.c.l.b16 %v580
          %v678 = vunpack.c.h.b16 %v580
          %v679 = vunpack.c.l.b16 %v581
          %v680 = vunpack.c.h.b16 %v581
          %v681 = vunpack.c.l.b16 %v582
          %v682 = vunpack.c.h.b16 %v582
          %v683 = vunpack.c.l.b16 %v583
          %v684 = vunpack.c.h.b16 %v583
          %v685 = vunpack.c.l.b16 %v584
          %v686 = vunpack.c.h.b16 %v584
          %v687 = vpack.c.b16 %v625, %v623
          %v688 = vpack.c.b16 %v626, %v624
          %v689 = vpack.c.b16 %v629, %v627
          %v690 = vpack.c.b16 %v630, %v628
          %v691 = vpack.c.b16 %v633, %v631
          %v692 = vpack.c.b16 %v634, %v632
          %v693 = vpack.c.b16 %v637, %v635
          %v694 = vpack.c.b16 %v638, %v636
          %v695 = vpack.c.b16 %v641, %v639
          %v696 = vpack.c.b16 %v642, %v640
          %v697 = vpack.c.b16 %v645, %v643
          %v698 = vpack.c.b16 %v646, %v644
          %v699 = vpack.c.b16 %v649, %v647
          %v700 = vpack.c.b16 %v650, %v648
          %v701 = vpack.c.b16 %v653, %v651
          %v702 = vpack.c.b16 %v654, %v652
          %v703 = vpack.c.b16 %v657, %v655
          %v704 = vpack.c.b16 %v658, %v656
          %v705 = vpack.c.b16 %v661, %v659
          %v706 = vpack.c.b16 %v662, %v660
          %v707 = vpack.c.b16 %v665, %v663
          %v708 = vpack.c.b16 %v666, %v664
          %v709 = vpack.c.b16 %v669, %v667
          %v710 = vpack.c.b16 %v670, %v668
          %v711 = vpack.c.b16 %v673, %v671
          %v712 = vpack.c.b16 %v674, %v672
          %v713 = vpack.c.b16 %v677, %v675
          %v714 = vpack.c.b16 %v678, %v676
          %v715 = vpack.c.b16 %v681, %v679
          %v716 = vpack.c.b16 %v682, %v680
          %v717 = vpack.c.b16 %v685, %v683
          %v718 = vpack.c.b16 %v686, %v684
          %751 = vmatpush.bf16.msra.mxu0 %v701
          %752 = vmatpush.bf16.msra.mxu0 %v699
          %753 = vmatpush.bf16.msra.mxu0 %v697
          %754 = vmatpush.bf16.msra.mxu0 %v695
          %755 = vmatpush.bf16.msra.mxu0 %v693
          %756 = vmatpush.bf16.msra.mxu0 %v691
          %757 = vmatpush.bf16.msra.mxu0 %v689
          %758 = vmatpush.bf16.msra.mxu0 %v687
          %759 = vmatmul.bf16.gmra.mxu0 %v551
          %v760 = vpop.f32.mrf.mxu0
          %v761 = vadd.f32 %v587, %v760
          %v762 = vpop.f32.mrf.mxu0
          %763 = vdwg.mxu0
          %764 = vmatpush.bf16.msra.mxu0 %v717
          %765 = vmatpush.bf16.msra.mxu0 %v715
          %766 = vmatpush.bf16.msra.mxu0 %v713
          %767 = vmatpush.bf16.msra.mxu0 %v711
          %768 = vmatpush.bf16.msra.mxu0 %v709
          %769 = vmatpush.bf16.msra.mxu0 %v707
          %770 = vmatpush.bf16.msra.mxu0 %v705
          %771 = vmatpush.bf16.msra.mxu0 %v703
          %772 = vmatmul.bf16.gmra.mxu0 %v552
          %v773 = vpop.f32.mrf.mxu0
          %v774 = vadd.f32 %v761, %v773
          %v775 = vpop.f32.mrf.mxu0
          %776 = vdwg.mxu0
          %777 = vmatpush.bf16.msra.mxu0 %v702
          %778 = vmatpush.bf16.msra.mxu0 %v700
          %779 = vmatpush.bf16.msra.mxu0 %v698
          %780 = vmatpush.bf16.msra.mxu0 %v696
          %781 = vmatpush.bf16.msra.mxu0 %v694
          %782 = vmatpush.bf16.msra.mxu0 %v692
          %783 = vmatpush.bf16.msra.mxu0 %v690
          %784 = vmatpush.bf16.msra.mxu0 %v688
          %785 = vmatmul.bf16.gmra.mxu0 %v551
          %v786 = vpop.f32.mrf.mxu0
          %v787 = vadd.f32 %v588, %v786
          %v788 = vpop.f32.mrf.mxu0
          %789 = vdwg.mxu0
          %790 = vmatpush.bf16.msra.mxu0 %v718
          %791 = vmatpush.bf16.msra.mxu0 %v716
          %792 = vmatpush.bf16.msra.mxu0 %v714
          %793 = vmatpush.bf16.msra.mxu0 %v712
          %794 = vmatpush.bf16.msra.mxu0 %v710
          %795 = vmatpush.bf16.msra.mxu0 %v708
          %796 = vmatpush.bf16.msra.mxu0 %v706
          %797 = vmatpush.bf16.msra.mxu0 %v704
          %798 = vmatmul.bf16.gmra.mxu0 %v552
          %v799 = vpop.f32.mrf.mxu0
          %v800 = vadd.f32 %v787, %v799
          %v801 = vpop.f32.mrf.mxu0
          %802 = vdwg.mxu0
          %v803 = vld [vmem:[%s369] sm:$0xff]
          %v804 = vunpack.c.l.bf16 %v803
          %v805 = vunpack.c.h.bf16 %v803
          %v806 = vadd.f32 %v774, %v804
          %v807 = vadd.f32 %v800, %v805
          %v808 = vpack.c.bf16 %v807, %v806
          %809 = vst [vmem:[%s374] sm:$0xff] %v808
        $region56: #{vit_binary_classifier_forward.10} parent=43 // pred_fallthru
          _
        %p810 = scmp.lt.s32.totalorder %s22, 1
        %s811 = scalar_select %p810, %s22, 1
        %s812 = smul.addr %s811, 2
        %s813 = smul.addr %s812, 4
        %s814 = scalar_lea.vmem %s6, %s813
        // Predicated region
        $region57: #{vit_binary_classifier_forward.10} parent=43 // pred_check
          %p815 = pneg %p198
        $region58: #{vit_binary_classifier_forward.10} parent=43 // pred_check_branch
          %817 = sbr.rel (%p815) target = $region60
        $region59: #{vit_binary_classifier_forward.10} parent=43 // pred_region
          _
        $region60: #{vit_binary_classifier_forward.10} parent=43 // pred_fallthru
          _
      $region44: #{vit_binary_classifier_forward.10} parent=5 // pred_fallthru
        _
      %p818 = scmp.le.s32.totalorder 2, %s13
      // Predicated region
      $region61: #{vit_binary_classifier_forward.10} parent=5 // pred_check
        %p819 = pneg %p818
      $region62: #{vit_binary_classifier_forward.10} parent=5 // pred_check_branch
        %821 = sbr.rel (%p819) target = $region64
      $region63: #{vit_binary_classifier_forward.10} parent=5 // pred_region
        %s822 = ssub.s32 %s13, 2
        // Predicated region
        $region65: #{vit_binary_classifier_forward.10} parent=63 // pred_check
          %p823 = pneg %p204
        $region66: #{vit_binary_classifier_forward.10} parent=63 // pred_check_branch
          %825 = sbr.rel (%p823) target = $region68
        $region67: #{vit_binary_classifier_forward.10} parent=63 // pred_region
          %p826 = scmp.lt.s32.totalorder %s24, 1
          %s827 = scalar_select %p826, %s24, 1
          %s828 = smul.addr %s827, 2
          %s829 = smul.addr %s828, 4
          %s830 = scalar_lea.vmem %s6, %s829
        $region68: #{vit_binary_classifier_forward.10} parent=63 // pred_fallthru
          _
      $region64: #{vit_binary_classifier_forward.10} parent=5 // pred_fallthru
        _
    $region6: #{vit_binary_classifier_forward.10} parent=1 // loop_footer
      %s17 = sadd.s32 1, %s13
    $region7: #{vit_binary_classifier_forward.10} parent=1 // loop_footer_branch
      %12 = sbr.rel target = $region3
    $region8: #{vit_binary_classifier_forward.10} parent=1 // loop_exit
      _
    %831 = vsyncpa [#allocation6], 1
    %s832 = scalar_lea.sflag [#allocation6], 1
    %833 = vsyncpa %s832, 1

// kernel: vit_binary_classifier_forward.9
$region0: #{vit_binary_classifier_forward.9}
  #allocation0 [shape = 'u32[]', space=smem, size = 0x4, offset = 0x4, fixed_abs, tag = 'smem constant byte address 0x4 - core index']
  #allocation1 [shape = 'u32[72,128]{1,0:T(1,128)}', space=vmem, size = 0x9000, scoped, tag = 'internal scratch']
  #allocation2 [shape = 'f32[16,256]{1,0:T(8,128)}', space=vmem, size = 0x4000, scoped, tag = 'scratch operand']
  #allocation3 [shape = 'bf16[16,256]{1,0:T(8,128)(2,1)}', space=vmem, size = 0x2000, scoped, tag = 'scratch operand']
  %s0 = inlined_call_operand.vmem [shape: bf16[16,256], index: 0, kind: input, shape index: {}]
  %s1 = inlined_call_operand.vmem [shape: f32[1,256], index: 1, kind: input, shape index: {}]
  %s2 = inlined_call_operand.vmem [shape: f32[1,256], index: 2, kind: input, shape index: {}]
  %s3 = inlined_call_operand.hbm [shape: bf16[256,768], index: 3, kind: input, shape index: {}]
  %s4 = inlined_call_operand.vmem [shape: f32[1,768], index: 4, kind: input, shape index: {}]
  %s5 = inlined_call_operand.vmem [shape: bf16[16,768], index: 5, kind: output, shape index: {}]
  %s6 = sld [smem:[#allocation0]]
  $region103: #{vit_binary_classifier_forward.9} parent=0
    _
  %s8 = ssub.s32 1, %s6
  %s9 = scalar_select 0, %s8, %s6
  $region1: #{vit_binary_classifier_forward.9} parent=0
    #allocation4 [shape = 'u8[262144]{0}', space=vmem, size = 0x40000, scoped, tag = 'input window, operand 3']
    #allocation5 [shape = 's32[2]{0}', space=sflag, size = 0x8, scoped, tag = 'scoped memory for vit_binary_classifier_forward.9']
    #allocation6 [shape = 'u8[16384]{0}', space=vmem, size = 0x4000, scoped, tag = 'output window, operand 0']
    %10 = vsyncpa [#allocation5], 0
    %s11 = scalar_lea.sflag [#allocation5], 1
    %12 = vsyncpa %s11, 0
    loop: start=0, step=1, limit=5
    $region2: #{vit_binary_classifier_forward.9} parent=1 // loop_pre_header
      _
    $region3: #{vit_binary_classifier_forward.9} parent=1 // loop_header
      %s14 = sphi 0, %s18
      %p15 = scmp.ge.s32.totalorder %s14, 5
      %s21 = sphi 0, %s40
      %s22 = sphi 0, %s36
      %s23 = sphi 0, %s32
      %s24 = sphi 0, %s21
      %s25 = sphi 0, %s22
      %s26 = sphi 0, %s23
      %s27 = sphi 0, %s24
      %s28 = sphi 0, %s25
      %s29 = sphi 0, %s26
      %s45 = sphi 0, %s47
      %s48 = sphi 0, %s45
      %s49 = sphi 0, %s48
      %s65 = sphi 0, %s49
      %s69 = sphi 0, %s69
      %s71 = sphi 0, %s69
      %s72 = sphi 0, %s71
      %s86 = sphi 0, %s72
      %s90 = sphi 0, %s90
      %s92 = sphi 0, %s90
      %s93 = sphi 0, %s92
      %s107 = sphi 0, %s93
      %s115 = sphi 0, %s117
      %s118 = sphi 0, %s115
      %s119 = sphi 0, %s118
      %s135 = sphi 0, %s119
      %s141 = sphi 0, %s143
      %s144 = sphi 0, %s141
      %s145 = sphi 0, %s144
      %s161 = sphi 0, %s145
      %s169 = sphi 0, %s171
      %s172 = sphi 0, %s169
      %s173 = sphi 0, %s172
      %s189 = sphi 0, %s173
    $region4: #{vit_binary_classifier_forward.9} parent=1 // loop_header_branch
      %17 = sbr.rel (%p15) target = $region8
    $region5: #{vit_binary_classifier_forward.9} parent=1 // loop_body
      %s19 = ssub.s32 %s14, 1
      %s20 = ssub.s32 %s14, 2
      %s30 = sadd.s32 1, %s23
      %p31 = scmp.ge.s32.totalorder %s30, 1
      %s32 = scalar_select %p31, 0, %s30
      %s33 = sadd.s32 1, %s22
      %s34 = scalar_select %p31, %s33, %s22
      %p35 = scmp.ge.s32.totalorder %s34, 3
      %s36 = scalar_select %p35, 0, %s34
      %s37 = sadd.s32 1, %s21
      %s38 = scalar_select %p35, %s37, %s21
      %p39 = scmp.ge.s32.totalorder %s38, 1
      %s40 = scalar_select %p39, 0, %s38
      %s41 = ssub.s32 %s21, %s40
      %s42 = ssub.s32 %s23, %s32
      %s43 = sor.u32 %s41, %s42
      %p44 = scmp.eq.s32.totalorder %s43, 0
      %s46 = sadd.s32 %s45, 1
      %s47 = scalar_select %p44, %s45, %s46
      %p50 = pneg %p44
      %p51 = scmp.eq.s32.totalorder %s14, 2
      %p52 = por %p50, %p51
      %p53 = scmp.ne.s32.totalorder %s45, %s48
      %p54 = scmp.eq.s32.totalorder %s14, 0
      %p55 = por %p53, %p54
      %p56 = scmp.ne.s32.totalorder %s45, %s48
      %p57 = scmp.eq.s32.totalorder %s19, 2
      %p58 = por %p56, %p57
      %p59 = scmp.ne.s32.totalorder %s48, %s49
      %p60 = scmp.eq.s32.totalorder %s19, 0
      %p61 = por %p59, %p60
      %p62 = scmp.ne.s32.totalorder %s48, %s49
      %p63 = scmp.eq.s32.totalorder %s20, 2
      %p64 = por %p62, %p63
      %p66 = scmp.ne.s32.totalorder %s49, %s65
      %p67 = scmp.eq.s32.totalorder %s20, 0
      %p68 = por %p66, %p67
      %s70 = sadd.s32 %s69, 1
      %p73 = scmp.eq.s32.totalorder %s14, 2
      %p74 = scmp.ne.s32.totalorder %s69, %s71
      %p75 = scmp.eq.s32.totalorder %s14, 0
      %p76 = por %p74, %p75
      %p77 = scmp.ne.s32.totalorder %s69, %s71
      %p78 = scmp.eq.s32.totalorder %s19, 2
      %p79 = por %p77, %p78
      %p80 = scmp.ne.s32.totalorder %s71, %s72
      %p81 = scmp.eq.s32.totalorder %s19, 0
      %p82 = por %p80, %p81
      %p83 = scmp.ne.s32.totalorder %s71, %s72
      %p84 = scmp.eq.s32.totalorder %s20, 2
      %p85 = por %p83, %p84
      %p87 = scmp.ne.s32.totalorder %s72, %s86
      %p88 = scmp.eq.s32.totalorder %s20, 0
      %p89 = por %p87, %p88
      %s91 = sadd.s32 %s90, 1
      %p94 = scmp.eq.s32.totalorder %s14, 2
      %p95 = scmp.ne.s32.totalorder %s90, %s92
      %p96 = scmp.eq.s32.totalorder %s14, 0
      %p97 = por %p95, %p96
      %p98 = scmp.ne.s32.totalorder %s90, %s92
      %p99 = scmp.eq.s32.totalorder %s19, 2
      %p100 = por %p98, %p99
      %p101 = scmp.ne.s32.totalorder %s92, %s93
      %p102 = scmp.eq.s32.totalorder %s19, 0
      %p103 = por %p101, %p102
      %p104 = scmp.ne.s32.totalorder %s92, %s93
      %p105 = scmp.eq.s32.totalorder %s20, 2
      %p106 = por %p104, %p105
      %p108 = scmp.ne.s32.totalorder %s93, %s107
      %p109 = scmp.eq.s32.totalorder %s20, 0
      %p110 = por %p108, %p109
      %s111 = ssub.s32 %s23, %s32
      %s112 = ssub.s32 %s22, %s36
      %s113 = sor.u32 %s111, %s112
      %p114 = scmp.eq.s32.totalorder %s113, 0
      %s116 = sadd.s32 %s115, 1
      %s117 = scalar_select %p114, %s115, %s116
      %p120 = pneg %p114
      %p121 = scmp.eq.s32.totalorder %s14, 2
      %p122 = por %p120, %p121
      %p123 = scmp.ne.s32.totalorder %s115, %s118
      %p124 = scmp.eq.s32.totalorder %s14, 0
      %p125 = por %p123, %p124
      %p126 = scmp.ne.s32.totalorder %s115, %s118
      %p127 = scmp.eq.s32.totalorder %s19, 2
      %p128 = por %p126, %p127
      %p129 = scmp.ne.s32.totalorder %s118, %s119
      %p130 = scmp.eq.s32.totalorder %s19, 0
      %p131 = por %p129, %p130
      %p132 = scmp.ne.s32.totalorder %s118, %s119
      %p133 = scmp.eq.s32.totalorder %s20, 2
      %p134 = por %p132, %p133
      %p136 = scmp.ne.s32.totalorder %s119, %s135
      %p137 = scmp.eq.s32.totalorder %s20, 0
      %p138 = por %p136, %p137
      %s139 = ssub.s32 %s22, %s36
      %p140 = scmp.eq.s32.totalorder %s139, 0
      %s142 = sadd.s32 %s141, 1
      %s143 = scalar_select %p140, %s141, %s142
      %p146 = pneg %p140
      %p147 = scmp.eq.s32.totalorder %s14, 2
      %p148 = por %p146, %p147
      %p149 = scmp.ne.s32.totalorder %s141, %s144
      %p150 = scmp.eq.s32.totalorder %s14, 0
      %p151 = por %p149, %p150
      %p152 = scmp.ne.s32.totalorder %s141, %s144
      %p153 = scmp.eq.s32.totalorder %s19, 2
      %p154 = por %p152, %p153
      %p155 = scmp.ne.s32.totalorder %s144, %s145
      %p156 = scmp.eq.s32.totalorder %s19, 0
      %p157 = por %p155, %p156
      %p158 = scmp.ne.s32.totalorder %s144, %s145
      %p159 = scmp.eq.s32.totalorder %s20, 2
      %p160 = por %p158, %p159
      %p162 = scmp.ne.s32.totalorder %s145, %s161
      %p163 = scmp.eq.s32.totalorder %s20, 0
      %p164 = por %p162, %p163
      %s165 = ssub.s32 %s21, %s40
      %s166 = ssub.s32 %s22, %s36
      %s167 = sor.u32 %s165, %s166
      %p168 = scmp.eq.s32.totalorder %s167, 0
      %s170 = sadd.s32 %s169, 1
      %s171 = scalar_select %p168, %s169, %s170
      %p174 = pneg %p168
      %p175 = scmp.eq.s32.totalorder %s14, 2
      %p176 = por %p174, %p175
      %p177 = scmp.ne.s32.totalorder %s169, %s172
      %p178 = scmp.eq.s32.totalorder %s14, 0
      %p179 = por %p177, %p178
      %p180 = scmp.ne.s32.totalorder %s169, %s172
      %p181 = scmp.eq.s32.totalorder %s19, 2
      %p182 = por %p180, %p181
      %p183 = scmp.ne.s32.totalorder %s172, %s173
      %p184 = scmp.eq.s32.totalorder %s19, 0
      %p185 = por %p183, %p184
      %p186 = scmp.ne.s32.totalorder %s172, %s173
      %p187 = scmp.eq.s32.totalorder %s20, 2
      %p188 = por %p186, %p187
      %p190 = scmp.ne.s32.totalorder %s173, %s189
      %p191 = scmp.eq.s32.totalorder %s20, 0
      %p192 = por %p190, %p191
      %p193 = scmp.le.s32.totalorder 1, %s14
      %p194 = scmp.lt.s32.totalorder %s14, 4
      %p195 = pnand %p193, %p194
      %p196 = pneg %p195
      // Predicated region
      $region9: #{vit_binary_classifier_forward.9} parent=5 // pred_check
        _
      $region10: #{vit_binary_classifier_forward.9} parent=5 // pred_check_branch
        %198 = sbr.rel (%p195) target = $region12
      $region11: #{vit_binary_classifier_forward.9} parent=5 // pred_region
        %s199 = ssub.s32 %s14, 1
        // Predicated region
        $region13: #{vit_binary_classifier_forward.9} parent=11 // pred_check
          %p200 = pneg %p61
        $region14: #{vit_binary_classifier_forward.9} parent=11 // pred_check_branch
          %202 = sbr.rel (%p200) target = $region16
        $region15: #{vit_binary_classifier_forward.9} parent=11 // pred_region
          %s203 = smul.u32 2, %s24
          %s204 = smul.u32 2, %s26
          %p205 = scmp.lt.s32.totalorder %s203, 1
          %s206 = scalar_select %p205, %s203, 1
          %p207 = scmp.lt.s32.totalorder %s204, 1
          %s208 = scalar_select %p207, %s204, 1
          %s209 = smul.addr %s206, 2
          %s210 = sadd.s32 %s208, %s209
          %s211 = smul.addr %s210, 4
          %s212 = scalar_lea.vmem %s0, %s211
          %s213 = smul.u32 2, %s24
          %s214 = smul.u32 2, %s26
        $region16: #{vit_binary_classifier_forward.9} parent=11 // pred_fallthru
          _
        // Predicated region
        $region17: #{vit_binary_classifier_forward.9} parent=11 // pred_check
          %p215 = pneg %p82
        $region18: #{vit_binary_classifier_forward.9} parent=11 // pred_check_branch
          %217 = sbr.rel (%p215) target = $region20
        $region19: #{vit_binary_classifier_forward.9} parent=11 // pred_region
          _
        $region20: #{vit_binary_classifier_forward.9} parent=11 // pred_fallthru
          _
        // Predicated region
        $region21: #{vit_binary_classifier_forward.9} parent=11 // pred_check
          %p218 = pneg %p103
        $region22: #{vit_binary_classifier_forward.9} parent=11 // pred_check_branch
          %220 = sbr.rel (%p218) target = $region24
        $region23: #{vit_binary_classifier_forward.9} parent=11 // pred_region
          _
        $region24: #{vit_binary_classifier_forward.9} parent=11 // pred_fallthru
          _
      $region12: #{vit_binary_classifier_forward.9} parent=5 // pred_fallthru
        _
      %p221 = scmp.lt.s32.totalorder %s14, 3
      // Predicated region
      $region25: #{vit_binary_classifier_forward.9} parent=5 // pred_check
        %p222 = pneg %p221
      $region26: #{vit_binary_classifier_forward.9} parent=5 // pred_check_branch
        %224 = sbr.rel (%p222) target = $region28
      $region27: #{vit_binary_classifier_forward.9} parent=5 // pred_region
        // Predicated region
        $region29: #{vit_binary_classifier_forward.9} parent=27 // pred_check
          %p225 = pneg %p125
        $region30: #{vit_binary_classifier_forward.9} parent=27 // pred_check_branch
          %227 = sbr.rel (%p225) target = $region32
        $region31: #{vit_binary_classifier_forward.9} parent=27 // pred_region
          %s228 = sand.u32 %s115, 1
          %s229 = scalar_lea.sflag [#allocation5], %s228
          %s230 = sand.u32 %s115, 1
          %s231 = smul.addr %s230, 256
          %s232 = scalar_lea.vmem [#allocation4], %s231
          %s233 = smul.u32 32, %s23
          %s234 = smul.u32 2, %s22
          %236 = vsyncadd %s229, 0
          %s237 = smul.addr %s233, 6
          %s238 = sadd.s32 %s234, %s237
          %s239 = smul.addr %s238, 4
          %s240 = scalar_lea.hbm %s3, %s239
          %s241 = sshll.u32 %s240, 4
          %s242 = int_to_ptr.hbm [resolvable:$true] %s241
          %s243 = sshll.u32 %s232, 4
          %s244 = int_to_ptr.vmem [resolvable:$true] %s243
          %249 = dma.hbm_to_vmem [thread:$0]  %s242, 4096, %s244, %s229, 384, 128, 8
        $region32: #{vit_binary_classifier_forward.9} parent=27 // pred_fallthru
          _
        // Predicated region
        $region33: #{vit_binary_classifier_forward.9} parent=27 // pred_check
          %p250 = pneg %p151
        $region34: #{vit_binary_classifier_forward.9} parent=27 // pred_check_branch
          %252 = sbr.rel (%p250) target = $region36
        $region35: #{vit_binary_classifier_forward.9} parent=27 // pred_region
          %s253 = smul.u32 2, %s22
          %p254 = scmp.lt.s32.totalorder %s253, 5
          %s255 = scalar_select %p254, %s253, 5
          %s256 = scalar_lea.vmem %s4, %s255
          %s257 = smul.u32 2, %s22
        $region36: #{vit_binary_classifier_forward.9} parent=27 // pred_fallthru
          _
      $region28: #{vit_binary_classifier_forward.9} parent=5 // pred_fallthru
        _
      %p258 = scmp.le.s32.totalorder 1, %s14
      %p259 = scmp.lt.s32.totalorder %s14, 4
      %p260 = pnand %p258, %p259
      %p261 = pneg %p260
      // Predicated region
      $region37: #{vit_binary_classifier_forward.9} parent=5 // pred_check
        _
      $region38: #{vit_binary_classifier_forward.9} parent=5 // pred_check_branch
        %263 = sbr.rel (%p260) target = $region40
      $region39: #{vit_binary_classifier_forward.9} parent=5 // pred_region
        %s264 = ssub.s32 %s14, 1
        %s265 = sand.u32 %s118, 1
        %s266 = scalar_lea.sflag [#allocation5], %s265
        %s267 = sand.u32 %s118, 1
        %s268 = smul.addr %s267, 256
        %s269 = scalar_lea.vmem [#allocation4], %s268
        // Predicated region
        $region41: #{vit_binary_classifier_forward.9} parent=39 // pred_check
          %p270 = pneg %p131
        $region42: #{vit_binary_classifier_forward.9} parent=39 // pred_check_branch
          %272 = sbr.rel (%p270) target = $region44
        $region43: #{vit_binary_classifier_forward.9} parent=39 // pred_region
          %274 = dma.done %s266, 4096
        $region44: #{vit_binary_classifier_forward.9} parent=39 // pred_fallthru
          _
        %s275 = smul.u32 2, %s24
        %s276 = smul.u32 2, %s26
        %p277 = scmp.lt.s32.totalorder %s275, 1
        %s278 = scalar_select %p277, %s275, 1
        %p279 = scmp.lt.s32.totalorder %s276, 1
        %s280 = scalar_select %p279, %s276, 1
        %s281 = smul.addr %s278, 2
        %s282 = sadd.s32 %s280, %s281
        %s283 = smul.addr %s282, 4
        %s284 = scalar_lea.vmem %s0, %s283
        %p285 = pneg %p61
        %p286 = pneg %p58
        %p287 = pneg %p82
        %p288 = pneg %p79
        %p289 = pneg %p103
        %p290 = pneg %p100
        %s291 = sand.u32 %s118, 1
        %s292 = scalar_lea.sflag [#allocation5], %s291
        %s293 = sand.u32 %s118, 1
        %s294 = smul.addr %s293, 256
        %s295 = scalar_lea.vmem [#allocation4], %s294
        %p296 = pneg %p131
        %p297 = pneg %p128
        %s298 = smul.u32 2, %s25
        %p299 = scmp.lt.s32.totalorder %s298, 5
        %s300 = scalar_select %p299, %s298, 5
        %s301 = scalar_lea.vmem %s4, %s300
        %p302 = pneg %p157
        %p303 = pneg %p154
        %p304 = pneg %p185
        %p305 = pneg %p182
        %s306 = sand.u32 %s172, 1
        %s307 = sand.u32 %s172, 1
        %s308 = smul.addr %s307, 16
        %s309 = scalar_lea.vmem [#allocation6], %s308
        %s310 = smul.u32 2, %s24
        %s311 = smul.u32 2, %s26
        %p312 = scmp.lt.s32.totalorder %s310, 1
        %s313 = scalar_select %p312, %s310, 1
        %p314 = scmp.lt.s32.totalorder %s311, 1
        %s315 = scalar_select %p314, %s311, 1
        %s316 = smul.addr %s313, 2
        %s317 = sadd.s32 %s315, %s316
        %s318 = smul.addr %s317, 4
        %s319 = scalar_lea.vmem %s0, %s318
        %s320 = smul.u32 2, %s24
        %s321 = smul.u32 2, %s26
        %s322 = smul.u32 32, %s26
        %s323 = smul.u32 2, %s25
        %s324 = smul.u32 2, %s25
        %p325 = scmp.lt.s32.totalorder %s324, 5
        %s326 = scalar_select %p325, %s324, 5
        %s327 = scalar_lea.vmem %s4, %s326
        %s328 = smul.u32 2, %s25
        %s329 = smul.u32 2, %s24
        %s330 = smul.u32 2, %s25
        %p331 = scmp.eq.s32.totalorder %s26, 0
        // Predicated region
        $region45: #{vit_binary_classifier_forward.9} parent=39 // pred_check
          %p332 = pneg %p331
        $region46: #{vit_binary_classifier_forward.9} parent=39 // pred_check_branch
          %334 = sbr.rel (%p332) target = $region48
        $region47: #{vit_binary_classifier_forward.9} parent=39 // pred_region
          %335 = vst [vmem:[#allocation2] sm:$0xff] 0.0
          %336 = vst [vmem:[#allocation2 + $0x8] sm:$0xff] 0.0
          %337 = vst [vmem:[#allocation2 + $0x10] sm:$0xff] 0.0
          %338 = vst [vmem:[#allocation2 + $0x18] sm:$0xff] 0.0
        $region48: #{vit_binary_classifier_forward.9} parent=39 // pred_fallthru
          _
        %p339 = scmp.eq.s32.totalorder %s25, 0
        %p340 = pnand %p339, %p331
        %p341 = pneg %p340
        // Predicated region
        $region49: #{vit_binary_classifier_forward.9} parent=39 // pred_check
          _
        $region50: #{vit_binary_classifier_forward.9} parent=39 // pred_check_branch
          %343 = sbr.rel (%p340) target = $region52
        $region51: #{vit_binary_classifier_forward.9} parent=39 // pred_region
          %v344 = vld [vmem:[%s319] sm:$0xff]
          %v345 = vld [vmem:[%s319 + $0x8] sm:$0xff]
          %v346 = vunpack.c.l.bf16 %v344
          %v347 = vunpack.c.h.bf16 %v344
          %v348 = vunpack.c.l.bf16 %v345
          %v349 = vunpack.c.h.bf16 %v345
          %v350 = vadd.f32 %v346, %v347
          %351 = vadd.xlane.f32.xlu0 %v350
          %v352 = vpop.xlane.xlu0 %351
          %v353 = vadd.f32 %v348, %v349
          %354 = vadd.xlane.f32.xlu0 %v353
          %v355 = vpop.xlane.xlu0 %354
          %v356 = vrcp.pop 256.0
          %v357 = vmul.f32 256.0, %v356
          %v358 = vsub.f32 1.0, %v357
          %v359 = vmul.f32 %v356, %v358
          %v360 = vadd.f32 %v356, %v359
          %vm361 = vweird.f32 %v356
          %v362 = vsel %vm361, %v356, %v360
          %v363 = vmul.f32 %v352, %v362
          %v364 = vmul.f32 %v355, %v362
          %v365 = vsub.f32 %v346, %v363
          %v366 = vsub.f32 %v347, %v363
          %v367 = vsub.f32 %v348, %v364
          %v368 = vsub.f32 %v349, %v364
          %v369 = vmul.f32 %v365, %v365
          %v370 = vmul.f32 %v366, %v366
          %v371 = vmul.f32 %v367, %v367
          %v372 = vmul.f32 %v368, %v368
          %v373 = vadd.f32 %v369, %v370
          %374 = vadd.xlane.f32.xlu0 %v373
          %v375 = vpop.xlane.xlu0 %374
          %v376 = vadd.f32 %v371, %v372
          %377 = vadd.xlane.f32.xlu0 %v376
          %v378 = vpop.xlane.xlu0 %377
          %v379 = vmul.f32 %v375, %v362
          %v380 = vmul.f32 %v378, %v362
          %v381 = vadd.f32 %v379, 1e-06
          %v382 = vadd.f32 %v380, 1e-06
          %v383 = vrsqrt.pop %v381
          %v384 = vmul.f32 %v383, %v381
          %v385 = vmul.f32 %v384, %v383
          %v386 = vmul.f32 0.5, %v385
          %v387 = vsub.f32 1.5, %v386
          %v388 = vmul.f32 %v383, %v387
          %vm389 = vweird.f32 %v381
          %vm390 = vweird.f32 %v383
          %vm391 = vmor %vm389, %vm390
          %v392 = vsel %vm391, %v383, %v388
          %v393 = vrsqrt.pop %v382
          %v394 = vmul.f32 %v393, %v382
          %v395 = vmul.f32 %v394, %v393
          %v396 = vmul.f32 0.5, %v395
          %v397 = vsub.f32 1.5, %v396
          %v398 = vmul.f32 %v393, %v397
          %vm399 = vweird.f32 %v382
          %vm400 = vweird.f32 %v393
          %vm401 = vmor %vm399, %vm400
          %v402 = vsel %vm401, %v393, %v398
          %v403 = vmul.f32 %v365, %v392
          %v404 = vmul.f32 %v366, %v392
          %v405 = vmul.f32 %v367, %v402
          %v406 = vmul.f32 %v368, %v402
          %v407 = vld [vmem:[%s1] sm:$0x3]
          %v409 = vperm.slane %v407, 0
          %v410 = vperm.slane %v407, 1
          %v413 = vmul.f32 %v403, %v409
          %v414 = vmul.f32 %v404, %v410
          %v415 = vmul.f32 %v405, %v409
          %v416 = vmul.f32 %v406, %v410
          %v417 = vld [vmem:[%s2] sm:$0x3]
          %v419 = vperm.slane %v417, 0
          %v420 = vperm.slane %v417, 1
          %v423 = vadd.f32 %v413, %v419
          %v424 = vadd.f32 %v414, %v420
          %v425 = vadd.f32 %v415, %v419
          %v426 = vadd.f32 %v416, %v420
          %v427 = vpack.c.bf16 %v424, %v423
          %v428 = vpack.c.bf16 %v426, %v425
          %429 = vst [vmem:[#allocation3] sm:$0xff] %v427
          %430 = vst [vmem:[#allocation3 + $0x8] sm:$0xff] %v428
        $region52: #{vit_binary_classifier_forward.9} parent=39 // pred_fallthru
          _
        %v431 = vld [vmem:[#allocation3] sm:$0xff]
        %v432 = vld [vmem:[#allocation3 + $0x8] sm:$0xff]
        %v433 = vld [vmem:[#allocation2] sm:$0xff]
        %v434 = vld [vmem:[#allocation2 + $0x8] sm:$0xff]
        %v435 = vld [vmem:[#allocation2 + $0x10] sm:$0xff]
        %v436 = vld [vmem:[#allocation2 + $0x18] sm:$0xff]
        %v437 = vld [vmem:[%s269] sm:$0xff]
        %v438 = vld [vmem:[%s269 + $0x8] sm:$0xff]
        %v439 = vld [vmem:[%s269 + $0x10] sm:$0xff]
        %v440 = vld [vmem:[%s269 + $0x18] sm:$0xff]
        %v441 = vld [vmem:[%s269 + $0x20] sm:$0xff]
        %v442 = vld [vmem:[%s269 + $0x28] sm:$0xff]
        %v443 = vld [vmem:[%s269 + $0x30] sm:$0xff]
        %v444 = vld [vmem:[%s269 + $0x38] sm:$0xff]
        %v445 = vld [vmem:[%s269 + $0x40] sm:$0xff]
        %v446 = vld [vmem:[%s269 + $0x48] sm:$0xff]
        %v447 = vld [vmem:[%s269 + $0x50] sm:$0xff]
        %v448 = vld [vmem:[%s269 + $0x58] sm:$0xff]
        %v449 = vld [vmem:[%s269 + $0x60] sm:$0xff]
        %v450 = vld [vmem:[%s269 + $0x68] sm:$0xff]
        %v451 = vld [vmem:[%s269 + $0x70] sm:$0xff]
        %v452 = vld [vmem:[%s269 + $0x78] sm:$0xff]
        %v453 = vld [vmem:[%s269 + $0x80] sm:$0xff]
        %v454 = vld [vmem:[%s269 + $0x88] sm:$0xff]
        %v455 = vld [vmem:[%s269 + $0x90] sm:$0xff]
        %v456 = vld [vmem:[%s269 + $0x98] sm:$0xff]
        %v457 = vld [vmem:[%s269 + $0xa0] sm:$0xff]
        %v458 = vld [vmem:[%s269 + $0xa8] sm:$0xff]
        %v459 = vld [vmem:[%s269 + $0xb0] sm:$0xff]
        %v460 = vld [vmem:[%s269 + $0xb8] sm:$0xff]
        %v461 = vld [vmem:[%s269 + $0xc0] sm:$0xff]
        %v462 = vld [vmem:[%s269 + $0xc8] sm:$0xff]
        %v463 = vld [vmem:[%s269 + $0xd0] sm:$0xff]
        %v464 = vld [vmem:[%s269 + $0xd8] sm:$0xff]
        %v465 = vld [vmem:[%s269 + $0xe0] sm:$0xff]
        %v466 = vld [vmem:[%s269 + $0xe8] sm:$0xff]
        %v467 = vld [vmem:[%s269 + $0xf0] sm:$0xff]
        %v468 = vld [vmem:[%s269 + $0xf8] sm:$0xff]
        %v471 = vunpack.c.l.b16 %v431
        %v472 = vunpack.c.h.b16 %v431
        %v473 = vunpack.c.l.b16 %v432
        %v474 = vunpack.c.h.b16 %v432
        %v475 = vpack.c.b16 %v473, %v471
        %v476 = vpack.c.b16 %v474, %v472
        %v511 = vunpack.c.l.b16 %v437
        %v512 = vunpack.c.h.b16 %v437
        %v513 = vunpack.c.l.b16 %v438
        %v514 = vunpack.c.h.b16 %v438
        %v515 = vunpack.c.l.b16 %v439
        %v516 = vunpack.c.h.b16 %v439
        %v517 = vunpack.c.l.b16 %v440
        %v518 = vunpack.c.h.b16 %v440
        %v519 = vunpack.c.l.b16 %v441
        %v520 = vunpack.c.h.b16 %v441
        %v521 = vunpack.c.l.b16 %v442
        %v522 = vunpack.c.h.b16 %v442
        %v523 = vunpack.c.l.b16 %v443
        %v524 = vunpack.c.h.b16 %v443
        %v525 = vunpack.c.l.b16 %v444
        %v526 = vunpack.c.h.b16 %v444
        %v527 = vunpack.c.l.b16 %v445
        %v528 = vunpack.c.h.b16 %v445
        %v529 = vunpack.c.l.b16 %v446
        %v530 = vunpack.c.h.b16 %v446
        %v531 = vunpack.c.l.b16 %v447
        %v532 = vunpack.c.h.b16 %v447
        %v533 = vunpack.c.l.b16 %v448
        %v534 = vunpack.c.h.b16 %v448
        %v535 = vunpack.c.l.b16 %v449
        %v536 = vunpack.c.h.b16 %v449
        %v537 = vunpack.c.l.b16 %v450
        %v538 = vunpack.c.h.b16 %v450
        %v539 = vunpack.c.l.b16 %v451
        %v540 = vunpack.c.h.b16 %v451
        %v541 = vunpack.c.l.b16 %v452
        %v542 = vunpack.c.h.b16 %v452
        %v543 = vunpack.c.l.b16 %v453
        %v544 = vunpack.c.h.b16 %v453
        %v545 = vunpack.c.l.b16 %v454
        %v546 = vunpack.c.h.b16 %v454
        %v547 = vunpack.c.l.b16 %v455
        %v548 = vunpack.c.h.b16 %v455
        %v549 = vunpack.c.l.b16 %v456
        %v550 = vunpack.c.h.b16 %v456
        %v551 = vunpack.c.l.b16 %v457
        %v552 = vunpack.c.h.b16 %v457
        %v553 = vunpack.c.l.b16 %v458
        %v554 = vunpack.c.h.b16 %v458
        %v555 = vunpack.c.l.b16 %v459
        %v556 = vunpack.c.h.b16 %v459
        %v557 = vunpack.c.l.b16 %v460
        %v558 = vunpack.c.h.b16 %v460
        %v559 = vunpack.c.l.b16 %v461
        %v560 = vunpack.c.h.b16 %v461
        %v561 = vunpack.c.l.b16 %v462
        %v562 = vunpack.c.h.b16 %v462
        %v563 = vunpack.c.l.b16 %v463
        %v564 = vunpack.c.h.b16 %v463
        %v565 = vunpack.c.l.b16 %v464
        %v566 = vunpack.c.h.b16 %v464
        %v567 = vunpack.c.l.b16 %v465
        %v568 = vunpack.c.h.b16 %v465
        %v569 = vunpack.c.l.b16 %v466
        %v570 = vunpack.c.h.b16 %v466
        %v571 = vunpack.c.l.b16 %v467
        %v572 = vunpack.c.h.b16 %v467
        %v573 = vunpack.c.l.b16 %v468
        %v574 = vunpack.c.h.b16 %v468
        %v575 = vpack.c.b16 %v513, %v511
        %v576 = vpack.c.b16 %v514, %v512
        %v577 = vpack.c.b16 %v517, %v515
        %v578 = vpack.c.b16 %v518, %v516
        %v579 = vpack.c.b16 %v521, %v519
        %v580 = vpack.c.b16 %v522, %v520
        %v581 = vpack.c.b16 %v525, %v523
        %v582 = vpack.c.b16 %v526, %v524
        %v583 = vpack.c.b16 %v529, %v527
        %v584 = vpack.c.b16 %v530, %v528
        %v585 = vpack.c.b16 %v533, %v531
        %v586 = vpack.c.b16 %v534, %v532
        %v587 = vpack.c.b16 %v537, %v535
        %v588 = vpack.c.b16 %v538, %v536
        %v589 = vpack.c.b16 %v541, %v539
        %v590 = vpack.c.b16 %v542, %v540
        %v591 = vpack.c.b16 %v545, %v543
        %v592 = vpack.c.b16 %v546, %v544
        %v593 = vpack.c.b16 %v549, %v547
        %v594 = vpack.c.b16 %v550, %v548
        %v595 = vpack.c.b16 %v553, %v551
        %v596 = vpack.c.b16 %v554, %v552
        %v597 = vpack.c.b16 %v557, %v555
        %v598 = vpack.c.b16 %v558, %v556
        %v599 = vpack.c.b16 %v561, %v559
        %v600 = vpack.c.b16 %v562, %v560
        %v601 = vpack.c.b16 %v565, %v563
        %v602 = vpack.c.b16 %v566, %v564
        %v603 = vpack.c.b16 %v569, %v567
        %v604 = vpack.c.b16 %v570, %v568
        %v605 = vpack.c.b16 %v573, %v571
        %v606 = vpack.c.b16 %v574, %v572
        %639 = vmatpush.bf16.msra.mxu0 %v589
        %640 = vmatpush.bf16.msra.mxu0 %v587
        %641 = vmatpush.bf16.msra.mxu0 %v585
        %642 = vmatpush.bf16.msra.mxu0 %v583
        %643 = vmatpush.bf16.msra.mxu0 %v581
        %644 = vmatpush.bf16.msra.mxu0 %v579
        %645 = vmatpush.bf16.msra.mxu0 %v577
        %646 = vmatpush.bf16.msra.mxu0 %v575
        %647 = vmatmul.bf16.gmra.mxu0 %v475
        %v648 = vpop.f32.mrf.mxu0
        %v649 = vadd.f32 0.0, %v648
        %v650 = vpop.f32.mrf.mxu0
        %v651 = vadd.f32 0.0, %v650
        %652 = vdwg.mxu0
        %653 = vmatpush.bf16.msra.mxu0 %v605
        %654 = vmatpush.bf16.msra.mxu0 %v603
        %655 = vmatpush.bf16.msra.mxu0 %v601
        %656 = vmatpush.bf16.msra.mxu0 %v599
        %657 = vmatpush.bf16.msra.mxu0 %v597
        %658 = vmatpush.bf16.msra.mxu0 %v595
        %659 = vmatpush.bf16.msra.mxu0 %v593
        %660 = vmatpush.bf16.msra.mxu0 %v591
        %661 = vmatmul.bf16.gmra.mxu0 %v476
        %v662 = vpop.f32.mrf.mxu0
        %v663 = vadd.f32 %v649, %v662
        %v664 = vpop.f32.mrf.mxu0
        %v665 = vadd.f32 %v651, %v664
        %666 = vdwg.mxu0
        %667 = vmatpush.bf16.msra.mxu0 %v590
        %668 = vmatpush.bf16.msra.mxu0 %v588
        %669 = vmatpush.bf16.msra.mxu0 %v586
        %670 = vmatpush.bf16.msra.mxu0 %v584
        %671 = vmatpush.bf16.msra.mxu0 %v582
        %672 = vmatpush.bf16.msra.mxu0 %v580
        %673 = vmatpush.bf16.msra.mxu0 %v578
        %674 = vmatpush.bf16.msra.mxu0 %v576
        %675 = vmatmul.bf16.gmra.mxu0 %v475
        %v676 = vpop.f32.mrf.mxu0
        %v677 = vadd.f32 0.0, %v676
        %v678 = vpop.f32.mrf.mxu0
        %v679 = vadd.f32 0.0, %v678
        %680 = vdwg.mxu0
        %681 = vmatpush.bf16.msra.mxu0 %v606
        %682 = vmatpush.bf16.msra.mxu0 %v604
        %683 = vmatpush.bf16.msra.mxu0 %v602
        %684 = vmatpush.bf16.msra.mxu0 %v600
        %685 = vmatpush.bf16.msra.mxu0 %v598
        %686 = vmatpush.bf16.msra.mxu0 %v596
        %687 = vmatpush.bf16.msra.mxu0 %v594
        %688 = vmatpush.bf16.msra.mxu0 %v592
        %689 = vmatmul.bf16.gmra.mxu0 %v476
        %v690 = vpop.f32.mrf.mxu0
        %v691 = vadd.f32 %v677, %v690
        %v692 = vpop.f32.mrf.mxu0
        %v693 = vadd.f32 %v679, %v692
        %694 = vdwg.mxu0
        %v695 = vadd.f32 %v433, %v663
        %v696 = vadd.f32 %v434, %v691
        %v697 = vadd.f32 %v435, %v665
        %v698 = vadd.f32 %v436, %v693
        %699 = vst [vmem:[#allocation2] sm:$0xff] %v695
        %700 = vst [vmem:[#allocation2 + $0x8] sm:$0xff] %v696
        %701 = vst [vmem:[#allocation2 + $0x10] sm:$0xff] %v697
        %702 = vst [vmem:[#allocation2 + $0x18] sm:$0xff] %v698
        // Predicated region
        $region53: #{vit_binary_classifier_forward.9} parent=39 // pred_check
          %p703 = pneg %p331
        $region54: #{vit_binary_classifier_forward.9} parent=39 // pred_check_branch
          %705 = sbr.rel (%p703) target = $region56
        $region55: #{vit_binary_classifier_forward.9} parent=39 // pred_region
          %v706 = vld [vmem:[#allocation2] sm:$0xff]
          %v707 = vld [vmem:[#allocation2 + $0x8] sm:$0xff]
          %v708 = vld [vmem:[#allocation2 + $0x10] sm:$0xff]
          %v709 = vld [vmem:[#allocation2 + $0x18] sm:$0xff]
          %v710 = vld [vmem:[%s327] sm:$0x3]
          %v712 = vperm.slane %v710, 0
          %v713 = vperm.slane %v710, 1
          %v716 = vadd.f32 %v706, %v712
          %v717 = vadd.f32 %v707, %v713
          %v718 = vadd.f32 %v708, %v712
          %v719 = vadd.f32 %v709, %v713
          %v720 = vpack.c.bf16 %v717, %v716
          %v721 = vpack.c.bf16 %v719, %v718
          %722 = vst [vmem:[%s309] sm:$0xff] %v720
          %723 = vst [vmem:[%s309 + $0x8] sm:$0xff] %v721
        $region56: #{vit_binary_classifier_forward.9} parent=39 // pred_fallthru
          _
        %s724 = sand.u32 %s172, 1
        %s725 = sand.u32 %s172, 1
        %s726 = smul.addr %s725, 16
        %s727 = scalar_lea.vmem [#allocation6], %s726
        // Predicated region
        $region57: #{vit_binary_classifier_forward.9} parent=39 // pred_check
          %p728 = pneg %p182
        $region58: #{vit_binary_classifier_forward.9} parent=39 // pred_check_branch
          %730 = sbr.rel (%p728) target = $region60
        $region59: #{vit_binary_classifier_forward.9} parent=39 // pred_region
          %s731 = smul.u32 2, %s24
          %s732 = smul.u32 2, %s25
          %s733 = smul.addr %s731, 6
          %s734 = sadd.s32 %s732, %s733
          %s735 = smul.addr %s734, 4
          %s736 = scalar_lea.vmem %s5, %s735
          // Predicated region
          $region61: #{vit_binary_classifier_forward.9} parent=59 // pred_check
            _
          $region62: #{vit_binary_classifier_forward.9} parent=59 // pred_check_branch
            %738 = sbr.rel (0) target = $region64
          $region63: #{vit_binary_classifier_forward.9} parent=59 // pred_region
            // Predicated region
            $region65: #{vit_binary_classifier_forward.9} parent=63 // pred_check
              _
            $region66: #{vit_binary_classifier_forward.9} parent=63 // pred_check_branch
              %740 = sbr.rel (0) target = $region68
            $region67: #{vit_binary_classifier_forward.9} parent=63 // pred_region
              // Predicated region
              $region80: #{vit_binary_classifier_forward.9} parent=67 // pred_check
                _
              $region81: #{vit_binary_classifier_forward.9} parent=67 // pred_check_branch
                %758 = sbr.rel (0) target = $region83
              $region82: #{vit_binary_classifier_forward.9} parent=67 // pred_region
                loop: start=0, step=1, limit=1
                $region84: #{vit_binary_classifier_forward.9} parent=82 // loop_pre_header
                  _
                $region85: #{vit_binary_classifier_forward.9} parent=82 // loop_header
                  %s760 = sphi 0, %s764
                  %p761 = scmp.ge.s32.totalorder %s760, 1
                  %s765 = sphi %s727, %s727
                  %s766 = sphi %s736, %s736
                $region86: #{vit_binary_classifier_forward.9} parent=82 // loop_header_branch
                  %763 = sbr.rel (%p761) target = $region90
                $region87: #{vit_binary_classifier_forward.9} parent=82 // loop_body
                  %v767 = vld [vmem:[%s765] sm:$0xff]
                  %768 = vst [vmem:[%s766] sm:$0xff] %v767
                  %v769 = vld [vmem:[%s765 + $0x8] sm:$0xff]
                  %770 = vst [vmem:[%s766 + $0x18] sm:$0xff] %v769
                $region88: #{vit_binary_classifier_forward.9} parent=82 // loop_footer
                  %s764 = sadd.s32 1, %s760
                $region89: #{vit_binary_classifier_forward.9} parent=82 // loop_footer_branch
                  %759 = sbr.rel target = $region85
                $region90: #{vit_binary_classifier_forward.9} parent=82 // loop_exit
                  _
              $region83: #{vit_binary_classifier_forward.9} parent=67 // pred_fallthru
                _
              // Predicated region
              $region91: #{vit_binary_classifier_forward.9} parent=67 // pred_check
                _
              $region92: #{vit_binary_classifier_forward.9} parent=67 // pred_check_branch
                %772 = sbr.rel target = $region94
              $region93: #{vit_binary_classifier_forward.9} parent=67 // pred_region
                _
              $region94: #{vit_binary_classifier_forward.9} parent=67 // pred_fallthru
                _
            $region68: #{vit_binary_classifier_forward.9} parent=63 // pred_fallthru
              _
            // Predicated region
            $region69: #{vit_binary_classifier_forward.9} parent=63 // pred_check
              _
            $region70: #{vit_binary_classifier_forward.9} parent=63 // pred_check_branch
              %742 = sbr.rel target = $region72
            $region71: #{vit_binary_classifier_forward.9} parent=63 // pred_region
              %s744 = ssub.s32 256, 1
              loop: start=0, step=1, limit=1
              $region73: #{vit_binary_classifier_forward.9} parent=71 // loop_pre_header
                _
              $region74: #{vit_binary_classifier_forward.9} parent=71 // loop_header
                %s746 = sphi 0, %s750
                %p747 = scmp.ge.s32.totalorder %s746, 1
                %s751 = sphi %s727, %s727
                %s752 = sphi %s736, %s736
              $region75: #{vit_binary_classifier_forward.9} parent=71 // loop_header_branch
                %749 = sbr.rel (%p747) target = $region79
              $region76: #{vit_binary_classifier_forward.9} parent=71 // loop_body
                %v753 = vld [vmem:[%s751] sm:%s744]
                %754 = vst [vmem:[%s752] sm:%s744] %v753
                %v755 = vld [vmem:[%s751 + $0x8] sm:%s744]
                %756 = vst [vmem:[%s752 + $0x18] sm:%s744] %v755
              $region77: #{vit_binary_classifier_forward.9} parent=71 // loop_footer
                %s750 = sadd.s32 1, %s746
              $region78: #{vit_binary_classifier_forward.9} parent=71 // loop_footer_branch
                %745 = sbr.rel target = $region74
              $region79: #{vit_binary_classifier_forward.9} parent=71 // loop_exit
                _
            $region72: #{vit_binary_classifier_forward.9} parent=63 // pred_fallthru
              _
          $region64: #{vit_binary_classifier_forward.9} parent=59 // pred_fallthru
            _
          %773 = vnop
        $region60: #{vit_binary_classifier_forward.9} parent=39 // pred_fallthru
          _
      $region40: #{vit_binary_classifier_forward.9} parent=5 // pred_fallthru
        _
      %p774 = scmp.le.s32.totalorder 2, %s14
      // Predicated region
      $region95: #{vit_binary_classifier_forward.9} parent=5 // pred_check
        %p775 = pneg %p774
      $region96: #{vit_binary_classifier_forward.9} parent=5 // pred_check_branch
        %777 = sbr.rel (%p775) target = $region98
      $region97: #{vit_binary_classifier_forward.9} parent=5 // pred_region
        %s778 = ssub.s32 %s14, 2
        // Predicated region
        $region99: #{vit_binary_classifier_forward.9} parent=97 // pred_check
          %p779 = pneg %p188
        $region100: #{vit_binary_classifier_forward.9} parent=97 // pred_check_branch
          %781 = sbr.rel (%p779) target = $region102
        $region101: #{vit_binary_classifier_forward.9} parent=97 // pred_region
          %s782 = sand.u32 %s173, 1
          %s783 = sand.u32 %s173, 1
          %s784 = smul.addr %s783, 16
          %s785 = scalar_lea.vmem [#allocation6], %s784
        $region102: #{vit_binary_classifier_forward.9} parent=97 // pred_fallthru
          _
      $region98: #{vit_binary_classifier_forward.9} parent=5 // pred_fallthru
        _
    $region6: #{vit_binary_classifier_forward.9} parent=1 // loop_footer
      %s18 = sadd.s32 1, %s14
    $region7: #{vit_binary_classifier_forward.9} parent=1 // loop_footer_branch
      %13 = sbr.rel target = $region3
    $region8: #{vit_binary_classifier_forward.9} parent=1 // loop_exit
      _
    %786 = vsyncpa [#allocation5], 1
    %s787 = scalar_lea.sflag [#allocation5], 1
    %788 = vsyncpa %s787, 1

// kernel: vit_binary_classifier_forward.11
$region0: #{vit_binary_classifier_forward.11}
  #allocation0 [shape = 'u32[]', space=smem, size = 0x4, offset = 0x4, fixed_abs, tag = 'smem constant byte address 0x4 - core index']
  #allocation1 [shape = 'u32[72,128]{1,0:T(1,128)}', space=vmem, size = 0x9000, scoped, tag = 'internal scratch']
  #allocation2 [shape = 'bf16[16,256]{1,0:T(8,128)(2,1)}', space=vmem, size = 0x2000, scoped, tag = 'scratch operand']
  #allocation3 [shape = 'f32[16,256]{1,0:T(8,128)}', space=vmem, size = 0x4000, scoped, tag = 'scratch operand']
  %s0 = inlined_call_operand.vmem [shape: bf16[16,256], index: 0, kind: input, shape index: {}]
  %s1 = inlined_call_operand.vmem [shape: f32[1,256], index: 1, kind: input, shape index: {}]
  %s2 = inlined_call_operand.vmem [shape: f32[1,256], index: 2, kind: input, shape index: {}]
  %s3 = inlined_call_operand.vmem [shape: bf16[256,1024], index: 3, kind: input, shape index: {}]
  %s4 = inlined_call_operand.vmem [shape: f32[1,1024], index: 4, kind: input, shape index: {}]
  %s5 = inlined_call_operand.hbm [shape: bf16[1024,256], index: 5, kind: input, shape index: {}]
  %s6 = inlined_call_operand.vmem [shape: f32[1,256], index: 6, kind: input, shape index: {}]
  %s7 = inlined_call_operand.vmem [shape: bf16[16,256], index: 7, kind: output, shape index: {}]
  %s8 = sld [smem:[#allocation0]]
  $region111: #{vit_binary_classifier_forward.11} parent=0
    _
  %s10 = ssub.s32 1, %s8
  %s11 = scalar_select 0, %s10, %s8
  $region1: #{vit_binary_classifier_forward.11} parent=0
    #allocation4 [shape = 'u8[262144]{0}', space=vmem, size = 0x40000, scoped, tag = 'input window, operand 3']
    #allocation5 [shape = 'u8[262144]{0}', space=vmem, size = 0x40000, scoped, tag = 'input window, operand 5']
    #allocation6 [shape = 's32[2]{0}', space=sflag, size = 0x8, scoped, tag = 'scoped memory for vit_binary_classifier_forward.11']
    %12 = vsyncpa [#allocation6], 0
    %s13 = scalar_lea.sflag [#allocation6], 1
    %14 = vsyncpa %s13, 0
    loop: start=0, step=1, limit=6
    $region2: #{vit_binary_classifier_forward.11} parent=1 // loop_pre_header
      _
    $region3: #{vit_binary_classifier_forward.11} parent=1 // loop_header
      %s16 = sphi 0, %s20
      %p17 = scmp.ge.s32.totalorder %s16, 6
      %s23 = sphi 0, %s35
      %s24 = sphi 0, %s31
      %s25 = sphi 0, %s23
      %s26 = sphi 0, %s24
      %s27 = sphi 0, %s25
      %s28 = sphi 0, %s26
      %s38 = sphi 0, %s40
      %s41 = sphi 0, %s38
      %s42 = sphi 0, %s41
      %s58 = sphi 0, %s42
      %s62 = sphi 0, %s62
      %s64 = sphi 0, %s62
      %s65 = sphi 0, %s64
      %s79 = sphi 0, %s65
      %s83 = sphi 0, %s83
      %s85 = sphi 0, %s83
      %s86 = sphi 0, %s85
      %s100 = sphi 0, %s86
      %s106 = sphi 0, %s108
      %s109 = sphi 0, %s106
      %s110 = sphi 0, %s109
      %s126 = sphi 0, %s110
      %s132 = sphi 0, %s134
      %s135 = sphi 0, %s132
      %s136 = sphi 0, %s135
      %s152 = sphi 0, %s136
      %s158 = sphi 0, %s160
      %s161 = sphi 0, %s158
      %s162 = sphi 0, %s161
      %s178 = sphi 0, %s162
      %s182 = sphi 0, %s182
      %s184 = sphi 0, %s182
      %s185 = sphi 0, %s184
      %s199 = sphi 0, %s185
      %s205 = sphi 0, %s207
      %s208 = sphi 0, %s205
      %s209 = sphi 0, %s208
      %s225 = sphi 0, %s209
    $region4: #{vit_binary_classifier_forward.11} parent=1 // loop_header_branch
      %19 = sbr.rel (%p17) target = $region8
    $region5: #{vit_binary_classifier_forward.11} parent=1 // loop_body
      %s21 = ssub.s32 %s16, 1
      %s22 = ssub.s32 %s16, 2
      %s29 = sadd.s32 1, %s24
      %p30 = scmp.ge.s32.totalorder %s29, 4
      %s31 = scalar_select %p30, 0, %s29
      %s32 = sadd.s32 1, %s23
      %s33 = scalar_select %p30, %s32, %s23
      %p34 = scmp.ge.s32.totalorder %s33, 1
      %s35 = scalar_select %p34, 0, %s33
      %s36 = ssub.s32 %s23, %s35
      %p37 = scmp.eq.s32.totalorder %s36, 0
      %s39 = sadd.s32 %s38, 1
      %s40 = scalar_select %p37, %s38, %s39
      %p43 = pneg %p37
      %p44 = scmp.eq.s32.totalorder %s16, 3
      %p45 = por %p43, %p44
      %p46 = scmp.ne.s32.totalorder %s38, %s41
      %p47 = scmp.eq.s32.totalorder %s16, 0
      %p48 = por %p46, %p47
      %p49 = scmp.ne.s32.totalorder %s38, %s41
      %p50 = scmp.eq.s32.totalorder %s21, 3
      %p51 = por %p49, %p50
      %p52 = scmp.ne.s32.totalorder %s41, %s42
      %p53 = scmp.eq.s32.totalorder %s21, 0
      %p54 = por %p52, %p53
      %p55 = scmp.ne.s32.totalorder %s41, %s42
      %p56 = scmp.eq.s32.totalorder %s22, 3
      %p57 = por %p55, %p56
      %p59 = scmp.ne.s32.totalorder %s42, %s58
      %p60 = scmp.eq.s32.totalorder %s22, 0
      %p61 = por %p59, %p60
      %s63 = sadd.s32 %s62, 1
      %p66 = scmp.eq.s32.totalorder %s16, 3
      %p67 = scmp.ne.s32.totalorder %s62, %s64
      %p68 = scmp.eq.s32.totalorder %s16, 0
      %p69 = por %p67, %p68
      %p70 = scmp.ne.s32.totalorder %s62, %s64
      %p71 = scmp.eq.s32.totalorder %s21, 3
      %p72 = por %p70, %p71
      %p73 = scmp.ne.s32.totalorder %s64, %s65
      %p74 = scmp.eq.s32.totalorder %s21, 0
      %p75 = por %p73, %p74
      %p76 = scmp.ne.s32.totalorder %s64, %s65
      %p77 = scmp.eq.s32.totalorder %s22, 3
      %p78 = por %p76, %p77
      %p80 = scmp.ne.s32.totalorder %s65, %s79
      %p81 = scmp.eq.s32.totalorder %s22, 0
      %p82 = por %p80, %p81
      %s84 = sadd.s32 %s83, 1
      %p87 = scmp.eq.s32.totalorder %s16, 3
      %p88 = scmp.ne.s32.totalorder %s83, %s85
      %p89 = scmp.eq.s32.totalorder %s16, 0
      %p90 = por %p88, %p89
      %p91 = scmp.ne.s32.totalorder %s83, %s85
      %p92 = scmp.eq.s32.totalorder %s21, 3
      %p93 = por %p91, %p92
      %p94 = scmp.ne.s32.totalorder %s85, %s86
      %p95 = scmp.eq.s32.totalorder %s21, 0
      %p96 = por %p94, %p95
      %p97 = scmp.ne.s32.totalorder %s85, %s86
      %p98 = scmp.eq.s32.totalorder %s22, 3
      %p99 = por %p97, %p98
      %p101 = scmp.ne.s32.totalorder %s86, %s100
      %p102 = scmp.eq.s32.totalorder %s22, 0
      %p103 = por %p101, %p102
      %s104 = ssub.s32 %s24, %s31
      %p105 = scmp.eq.s32.totalorder %s104, 0
      %s107 = sadd.s32 %s106, 1
      %s108 = scalar_select %p105, %s106, %s107
      %p111 = pneg %p105
      %p112 = scmp.eq.s32.totalorder %s16, 3
      %p113 = por %p111, %p112
      %p114 = scmp.ne.s32.totalorder %s106, %s109
      %p115 = scmp.eq.s32.totalorder %s16, 0
      %p116 = por %p114, %p115
      %p117 = scmp.ne.s32.totalorder %s106, %s109
      %p118 = scmp.eq.s32.totalorder %s21, 3
      %p119 = por %p117, %p118
      %p120 = scmp.ne.s32.totalorder %s109, %s110
      %p121 = scmp.eq.s32.totalorder %s21, 0
      %p122 = por %p120, %p121
      %p123 = scmp.ne.s32.totalorder %s109, %s110
      %p124 = scmp.eq.s32.totalorder %s22, 3
      %p125 = por %p123, %p124
      %p127 = scmp.ne.s32.totalorder %s110, %s126
      %p128 = scmp.eq.s32.totalorder %s22, 0
      %p129 = por %p127, %p128
      %s130 = ssub.s32 %s24, %s31
      %p131 = scmp.eq.s32.totalorder %s130, 0
      %s133 = sadd.s32 %s132, 1
      %s134 = scalar_select %p131, %s132, %s133
      %p137 = pneg %p131
      %p138 = scmp.eq.s32.totalorder %s16, 3
      %p139 = por %p137, %p138
      %p140 = scmp.ne.s32.totalorder %s132, %s135
      %p141 = scmp.eq.s32.totalorder %s16, 0
      %p142 = por %p140, %p141
      %p143 = scmp.ne.s32.totalorder %s132, %s135
      %p144 = scmp.eq.s32.totalorder %s21, 3
      %p145 = por %p143, %p144
      %p146 = scmp.ne.s32.totalorder %s135, %s136
      %p147 = scmp.eq.s32.totalorder %s21, 0
      %p148 = por %p146, %p147
      %p149 = scmp.ne.s32.totalorder %s135, %s136
      %p150 = scmp.eq.s32.totalorder %s22, 3
      %p151 = por %p149, %p150
      %p153 = scmp.ne.s32.totalorder %s136, %s152
      %p154 = scmp.eq.s32.totalorder %s22, 0
      %p155 = por %p153, %p154
      %s156 = ssub.s32 %s24, %s31
      %p157 = scmp.eq.s32.totalorder %s156, 0
      %s159 = sadd.s32 %s158, 1
      %s160 = scalar_select %p157, %s158, %s159
      %p163 = pneg %p157
      %p164 = scmp.eq.s32.totalorder %s16, 3
      %p165 = por %p163, %p164
      %p166 = scmp.ne.s32.totalorder %s158, %s161
      %p167 = scmp.eq.s32.totalorder %s16, 0
      %p168 = por %p166, %p167
      %p169 = scmp.ne.s32.totalorder %s158, %s161
      %p170 = scmp.eq.s32.totalorder %s21, 3
      %p171 = por %p169, %p170
      %p172 = scmp.ne.s32.totalorder %s161, %s162
      %p173 = scmp.eq.s32.totalorder %s21, 0
      %p174 = por %p172, %p173
      %p175 = scmp.ne.s32.totalorder %s161, %s162
      %p176 = scmp.eq.s32.totalorder %s22, 3
      %p177 = por %p175, %p176
      %p179 = scmp.ne.s32.totalorder %s162, %s178
      %p180 = scmp.eq.s32.totalorder %s22, 0
      %p181 = por %p179, %p180
      %s183 = sadd.s32 %s182, 1
      %p186 = scmp.eq.s32.totalorder %s16, 3
      %p187 = scmp.ne.s32.totalorder %s182, %s184
      %p188 = scmp.eq.s32.totalorder %s16, 0
      %p189 = por %p187, %p188
      %p190 = scmp.ne.s32.totalorder %s182, %s184
      %p191 = scmp.eq.s32.totalorder %s21, 3
      %p192 = por %p190, %p191
      %p193 = scmp.ne.s32.totalorder %s184, %s185
      %p194 = scmp.eq.s32.totalorder %s21, 0
      %p195 = por %p193, %p194
      %p196 = scmp.ne.s32.totalorder %s184, %s185
      %p197 = scmp.eq.s32.totalorder %s22, 3
      %p198 = por %p196, %p197
      %p200 = scmp.ne.s32.totalorder %s185, %s199
      %p201 = scmp.eq.s32.totalorder %s22, 0
      %p202 = por %p200, %p201
      %s203 = ssub.s32 %s23, %s35
      %p204 = scmp.eq.s32.totalorder %s203, 0
      %s206 = sadd.s32 %s205, 1
      %s207 = scalar_select %p204, %s205, %s206
      %p210 = pneg %p204
      %p211 = scmp.eq.s32.totalorder %s16, 3
      %p212 = por %p210, %p211
      %p213 = scmp.ne.s32.totalorder %s205, %s208
      %p214 = scmp.eq.s32.totalorder %s16, 0
      %p215 = por %p213, %p214
      %p216 = scmp.ne.s32.totalorder %s205, %s208
      %p217 = scmp.eq.s32.totalorder %s21, 3
      %p218 = por %p216, %p217
      %p219 = scmp.ne.s32.totalorder %s208, %s209
      %p220 = scmp.eq.s32.totalorder %s21, 0
      %p221 = por %p219, %p220
      %p222 = scmp.ne.s32.totalorder %s208, %s209
      %p223 = scmp.eq.s32.totalorder %s22, 3
      %p224 = por %p222, %p223
      %p226 = scmp.ne.s32.totalorder %s209, %s225
      %p227 = scmp.eq.s32.totalorder %s22, 0
      %p228 = por %p226, %p227
      %p229 = scmp.le.s32.totalorder 1, %s16
      %p230 = scmp.lt.s32.totalorder %s16, 5
      %p231 = pnand %p229, %p230
      %p232 = pneg %p231
      // Predicated region
      $region9: #{vit_binary_classifier_forward.11} parent=5 // pred_check
        _
      $region10: #{vit_binary_classifier_forward.11} parent=5 // pred_check_branch
        %234 = sbr.rel (%p231) target = $region12
      $region11: #{vit_binary_classifier_forward.11} parent=5 // pred_region
        %s235 = ssub.s32 %s16, 1
        // Predicated region
        $region13: #{vit_binary_classifier_forward.11} parent=11 // pred_check
          %p236 = pneg %p54
        $region14: #{vit_binary_classifier_forward.11} parent=11 // pred_check_branch
          %238 = sbr.rel (%p236) target = $region16
        $region15: #{vit_binary_classifier_forward.11} parent=11 // pred_region
          %s239 = smul.u32 2, %s25
          %p240 = scmp.lt.s32.totalorder %s239, 1
          %s241 = scalar_select %p240, %s239, 1
          %s242 = smul.addr %s241, 2
          %s243 = smul.addr %s242, 4
          %s244 = scalar_lea.vmem %s0, %s243
          %s245 = smul.u32 2, %s25
        $region16: #{vit_binary_classifier_forward.11} parent=11 // pred_fallthru
          _
        // Predicated region
        $region17: #{vit_binary_classifier_forward.11} parent=11 // pred_check
          %p246 = pneg %p75
        $region18: #{vit_binary_classifier_forward.11} parent=11 // pred_check_branch
          %248 = sbr.rel (%p246) target = $region20
        $region19: #{vit_binary_classifier_forward.11} parent=11 // pred_region
          _
        $region20: #{vit_binary_classifier_forward.11} parent=11 // pred_fallthru
          _
        // Predicated region
        $region21: #{vit_binary_classifier_forward.11} parent=11 // pred_check
          %p249 = pneg %p96
        $region22: #{vit_binary_classifier_forward.11} parent=11 // pred_check_branch
          %251 = sbr.rel (%p249) target = $region24
        $region23: #{vit_binary_classifier_forward.11} parent=11 // pred_region
          _
        $region24: #{vit_binary_classifier_forward.11} parent=11 // pred_fallthru
          _
        // Predicated region
        $region25: #{vit_binary_classifier_forward.11} parent=11 // pred_check
          %p252 = pneg %p195
        $region26: #{vit_binary_classifier_forward.11} parent=11 // pred_check_branch
          %254 = sbr.rel (%p252) target = $region28
        $region27: #{vit_binary_classifier_forward.11} parent=11 // pred_region
          _
        $region28: #{vit_binary_classifier_forward.11} parent=11 // pred_fallthru
          _
      $region12: #{vit_binary_classifier_forward.11} parent=5 // pred_fallthru
        _
      %p255 = scmp.lt.s32.totalorder %s16, 4
      // Predicated region
      $region29: #{vit_binary_classifier_forward.11} parent=5 // pred_check
        %p256 = pneg %p255
      $region30: #{vit_binary_classifier_forward.11} parent=5 // pred_check_branch
        %258 = sbr.rel (%p256) target = $region32
      $region31: #{vit_binary_classifier_forward.11} parent=5 // pred_region
        // Predicated region
        $region33: #{vit_binary_classifier_forward.11} parent=31 // pred_check
          %p259 = pneg %p116
        $region34: #{vit_binary_classifier_forward.11} parent=31 // pred_check_branch
          %261 = sbr.rel (%p259) target = $region36
        $region35: #{vit_binary_classifier_forward.11} parent=31 // pred_region
          %s262 = sand.u32 %s106, 1
          %s263 = sand.u32 %s106, 1
          %s264 = smul.addr %s263, 256
          %s265 = scalar_lea.vmem [#allocation4], %s264
          %s266 = smul.u32 2, %s24
          %s267 = smul.addr %s266, 4
          %s268 = scalar_lea.vmem %s3, %s267
          // Predicated region
          $region37: #{vit_binary_classifier_forward.11} parent=35 // pred_check
            _
          $region38: #{vit_binary_classifier_forward.11} parent=35 // pred_check_branch
            %270 = sbr.rel (0) target = $region40
          $region39: #{vit_binary_classifier_forward.11} parent=35 // pred_region
            // Predicated region
            $region41: #{vit_binary_classifier_forward.11} parent=39 // pred_check
              _
            $region42: #{vit_binary_classifier_forward.11} parent=39 // pred_check_branch
              %272 = sbr.rel (0) target = $region44
            $region43: #{vit_binary_classifier_forward.11} parent=39 // pred_region
              // Predicated region
              $region56: #{vit_binary_classifier_forward.11} parent=43 // pred_check
                _
              $region57: #{vit_binary_classifier_forward.11} parent=43 // pred_check_branch
                %350 = sbr.rel (0) target = $region59
              $region58: #{vit_binary_classifier_forward.11} parent=43 // pred_region
                loop: start=0, step=1, limit=1
                $region60: #{vit_binary_classifier_forward.11} parent=58 // loop_pre_header
                  _
                $region61: #{vit_binary_classifier_forward.11} parent=58 // loop_header
                  %s352 = sphi 0, %s356
                  %p353 = scmp.ge.s32.totalorder %s352, 1
                  %s357 = sphi %s268, %s268
                  %s358 = sphi %s265, %s265
                $region62: #{vit_binary_classifier_forward.11} parent=58 // loop_header_branch
                  %355 = sbr.rel (%p353) target = $region66
                $region63: #{vit_binary_classifier_forward.11} parent=58 // loop_body
                  %v359 = vld [vmem:[%s357] sm:$0xff]
                  %360 = vst [vmem:[%s358] sm:$0xff] %v359
                  %v361 = vld [vmem:[%s357 + $0x20] sm:$0xff]
                  %362 = vst [vmem:[%s358 + $0x8] sm:$0xff] %v361
                  %v363 = vld [vmem:[%s357 + $0x40] sm:$0xff]
                  %364 = vst [vmem:[%s358 + $0x10] sm:$0xff] %v363
                  %v365 = vld [vmem:[%s357 + $0x60] sm:$0xff]
                  %366 = vst [vmem:[%s358 + $0x18] sm:$0xff] %v365
                  %v367 = vld [vmem:[%s357 + $0x80] sm:$0xff]
                  %368 = vst [vmem:[%s358 + $0x20] sm:$0xff] %v367
                  %v369 = vld [vmem:[%s357 + $0xa0] sm:$0xff]
                  %370 = vst [vmem:[%s358 + $0x28] sm:$0xff] %v369
                  %v371 = vld [vmem:[%s357 + $0xc0] sm:$0xff]
                  %372 = vst [vmem:[%s358 + $0x30] sm:$0xff] %v371
                  %v373 = vld [vmem:[%s357 + $0xe0] sm:$0xff]
                  %374 = vst [vmem:[%s358 + $0x38] sm:$0xff] %v373
                  %v375 = vld [vmem:[%s357 + $0x100] sm:$0xff]
                  %376 = vst [vmem:[%s358 + $0x40] sm:$0xff] %v375
                  %v377 = vld [vmem:[%s357 + $0x120] sm:$0xff]
                  %378 = vst [vmem:[%s358 + $0x48] sm:$0xff] %v377
                  %v379 = vld [vmem:[%s357 + $0x140] sm:$0xff]
                  %380 = vst [vmem:[%s358 + $0x50] sm:$0xff] %v379
                  %v381 = vld [vmem:[%s357 + $0x160] sm:$0xff]
                  %382 = vst [vmem:[%s358 + $0x58] sm:$0xff] %v381
                  %v383 = vld [vmem:[%s357 + $0x180] sm:$0xff]
                  %384 = vst [vmem:[%s358 + $0x60] sm:$0xff] %v383
                  %v385 = vld [vmem:[%s357 + $0x1a0] sm:$0xff]
                  %386 = vst [vmem:[%s358 + $0x68] sm:$0xff] %v385
                  %v387 = vld [vmem:[%s357 + $0x1c0] sm:$0xff]
                  %388 = vst [vmem:[%s358 + $0x70] sm:$0xff] %v387
                  %v389 = vld [vmem:[%s357 + $0x1e0] sm:$0xff]
                  %390 = vst [vmem:[%s358 + $0x78] sm:$0xff] %v389
                  %v391 = vld [vmem:[%s357 + $0x200] sm:$0xff]
                  %392 = vst [vmem:[%s358 + $0x80] sm:$0xff] %v391
                  %v393 = vld [vmem:[%s357 + $0x220] sm:$0xff]
                  %394 = vst [vmem:[%s358 + $0x88] sm:$0xff] %v393
                  %v395 = vld [vmem:[%s357 + $0x240] sm:$0xff]
                  %396 = vst [vmem:[%s358 + $0x90] sm:$0xff] %v395
                  %v397 = vld [vmem:[%s357 + $0x260] sm:$0xff]
                  %398 = vst [vmem:[%s358 + $0x98] sm:$0xff] %v397
                  %v399 = vld [vmem:[%s357 + $0x280] sm:$0xff]
                  %400 = vst [vmem:[%s358 + $0xa0] sm:$0xff] %v399
                  %v401 = vld [vmem:[%s357 + $0x2a0] sm:$0xff]
                  %402 = vst [vmem:[%s358 + $0xa8] sm:$0xff] %v401
                  %v403 = vld [vmem:[%s357 + $0x2c0] sm:$0xff]
                  %404 = vst [vmem:[%s358 + $0xb0] sm:$0xff] %v403
                  %v405 = vld [vmem:[%s357 + $0x2e0] sm:$0xff]
                  %406 = vst [vmem:[%s358 + $0xb8] sm:$0xff] %v405
                  %v407 = vld [vmem:[%s357 + $0x300] sm:$0xff]
                  %408 = vst [vmem:[%s358 + $0xc0] sm:$0xff] %v407
                  %v409 = vld [vmem:[%s357 + $0x320] sm:$0xff]
                  %410 = vst [vmem:[%s358 + $0xc8] sm:$0xff] %v409
                  %v411 = vld [vmem:[%s357 + $0x340] sm:$0xff]
                  %412 = vst [vmem:[%s358 + $0xd0] sm:$0xff] %v411
                  %v413 = vld [vmem:[%s357 + $0x360] sm:$0xff]
                  %414 = vst [vmem:[%s358 + $0xd8] sm:$0xff] %v413
                  %v415 = vld [vmem:[%s357 + $0x380] sm:$0xff]
                  %416 = vst [vmem:[%s358 + $0xe0] sm:$0xff] %v415
                  %v417 = vld [vmem:[%s357 + $0x3a0] sm:$0xff]
                  %418 = vst [vmem:[%s358 + $0xe8] sm:$0xff] %v417
                  %v419 = vld [vmem:[%s357 + $0x3c0] sm:$0xff]
                  %420 = vst [vmem:[%s358 + $0xf0] sm:$0xff] %v419
                  %v421 = vld [vmem:[%s357 + $0x3e0] sm:$0xff]
                  %422 = vst [vmem:[%s358 + $0xf8] sm:$0xff] %v421
                $region64: #{vit_binary_classifier_forward.11} parent=58 // loop_footer
                  %s356 = sadd.s32 1, %s352
                $region65: #{vit_binary_classifier_forward.11} parent=58 // loop_footer_branch
                  %351 = sbr.rel target = $region61
                $region66: #{vit_binary_classifier_forward.11} parent=58 // loop_exit
                  _
              $region59: #{vit_binary_classifier_forward.11} parent=43 // pred_fallthru
                _
              // Predicated region
              $region67: #{vit_binary_classifier_forward.11} parent=43 // pred_check
                _
              $region68: #{vit_binary_classifier_forward.11} parent=43 // pred_check_branch
                %424 = sbr.rel target = $region70
              $region69: #{vit_binary_classifier_forward.11} parent=43 // pred_region
                _
              $region70: #{vit_binary_classifier_forward.11} parent=43 // pred_fallthru
                _
            $region44: #{vit_binary_classifier_forward.11} parent=39 // pred_fallthru
              _
            // Predicated region
            $region45: #{vit_binary_classifier_forward.11} parent=39 // pred_check
              _
            $region46: #{vit_binary_classifier_forward.11} parent=39 // pred_check_branch
              %274 = sbr.rel target = $region48
            $region47: #{vit_binary_classifier_forward.11} parent=39 // pred_region
              %s276 = ssub.s32 256, 1
              loop: start=0, step=1, limit=1
              $region49: #{vit_binary_classifier_forward.11} parent=47 // loop_pre_header
                _
              $region50: #{vit_binary_classifier_forward.11} parent=47 // loop_header
                %s278 = sphi 0, %s282
                %p279 = scmp.ge.s32.totalorder %s278, 1
                %s283 = sphi %s268, %s268
                %s284 = sphi %s265, %s265
              $region51: #{vit_binary_classifier_forward.11} parent=47 // loop_header_branch
                %281 = sbr.rel (%p279) target = $region55
              $region52: #{vit_binary_classifier_forward.11} parent=47 // loop_body
                %v285 = vld [vmem:[%s283] sm:%s276]
                %286 = vst [vmem:[%s284] sm:%s276] %v285
                %v287 = vld [vmem:[%s283 + $0x20] sm:%s276]
                %288 = vst [vmem:[%s284 + $0x8] sm:%s276] %v287
                %v289 = vld [vmem:[%s283 + $0x40] sm:%s276]
                %290 = vst [vmem:[%s284 + $0x10] sm:%s276] %v289
                %v291 = vld [vmem:[%s283 + $0x60] sm:%s276]
                %292 = vst [vmem:[%s284 + $0x18] sm:%s276] %v291
                %v293 = vld [vmem:[%s283 + $0x80] sm:%s276]
                %294 = vst [vmem:[%s284 + $0x20] sm:%s276] %v293
                %v295 = vld [vmem:[%s283 + $0xa0] sm:%s276]
                %296 = vst [vmem:[%s284 + $0x28] sm:%s276] %v295
                %v297 = vld [vmem:[%s283 + $0xc0] sm:%s276]
                %298 = vst [vmem:[%s284 + $0x30] sm:%s276] %v297
                %v299 = vld [vmem:[%s283 + $0xe0] sm:%s276]
                %300 = vst [vmem:[%s284 + $0x38] sm:%s276] %v299
                %v301 = vld [vmem:[%s283 + $0x100] sm:%s276]
                %302 = vst [vmem:[%s284 + $0x40] sm:%s276] %v301
                %v303 = vld [vmem:[%s283 + $0x120] sm:%s276]
                %304 = vst [vmem:[%s284 + $0x48] sm:%s276] %v303
                %v305 = vld [vmem:[%s283 + $0x140] sm:%s276]
                %306 = vst [vmem:[%s284 + $0x50] sm:%s276] %v305
                %v307 = vld [vmem:[%s283 + $0x160] sm:%s276]
                %308 = vst [vmem:[%s284 + $0x58] sm:%s276] %v307
                %v309 = vld [vmem:[%s283 + $0x180] sm:%s276]
                %310 = vst [vmem:[%s284 + $0x60] sm:%s276] %v309
                %v311 = vld [vmem:[%s283 + $0x1a0] sm:%s276]
                %312 = vst [vmem:[%s284 + $0x68] sm:%s276] %v311
                %v313 = vld [vmem:[%s283 + $0x1c0] sm:%s276]
                %314 = vst [vmem:[%s284 + $0x70] sm:%s276] %v313
                %v315 = vld [vmem:[%s283 + $0x1e0] sm:%s276]
                %316 = vst [vmem:[%s284 + $0x78] sm:%s276] %v315
                %v317 = vld [vmem:[%s283 + $0x200] sm:%s276]
                %318 = vst [vmem:[%s284 + $0x80] sm:%s276] %v317
                %v319 = vld [vmem:[%s283 + $0x220] sm:%s276]
                %320 = vst [vmem:[%s284 + $0x88] sm:%s276] %v319
                %v321 = vld [vmem:[%s283 + $0x240] sm:%s276]
                %322 = vst [vmem:[%s284 + $0x90] sm:%s276] %v321
                %v323 = vld [vmem:[%s283 + $0x260] sm:%s276]
                %324 = vst [vmem:[%s284 + $0x98] sm:%s276] %v323
                %v325 = vld [vmem:[%s283 + $0x280] sm:%s276]
                %326 = vst [vmem:[%s284 + $0xa0] sm:%s276] %v325
                %v327 = vld [vmem:[%s283 + $0x2a0] sm:%s276]
                %328 = vst [vmem:[%s284 + $0xa8] sm:%s276] %v327
                %v329 = vld [vmem:[%s283 + $0x2c0] sm:%s276]
                %330 = vst [vmem:[%s284 + $0xb0] sm:%s276] %v329
                %v331 = vld [vmem:[%s283 + $0x2e0] sm:%s276]
                %332 = vst [vmem:[%s284 + $0xb8] sm:%s276] %v331
                %v333 = vld [vmem:[%s283 + $0x300] sm:%s276]
                %334 = vst [vmem:[%s284 + $0xc0] sm:%s276] %v333
                %v335 = vld [vmem:[%s283 + $0x320] sm:%s276]
                %336 = vst [vmem:[%s284 + $0xc8] sm:%s276] %v335
                %v337 = vld [vmem:[%s283 + $0x340] sm:%s276]
                %338 = vst [vmem:[%s284 + $0xd0] sm:%s276] %v337
                %v339 = vld [vmem:[%s283 + $0x360] sm:%s276]
                %340 = vst [vmem:[%s284 + $0xd8] sm:%s276] %v339
                %v341 = vld [vmem:[%s283 + $0x380] sm:%s276]
                %342 = vst [vmem:[%s284 + $0xe0] sm:%s276] %v341
                %v343 = vld [vmem:[%s283 + $0x3a0] sm:%s276]
                %344 = vst [vmem:[%s284 + $0xe8] sm:%s276] %v343
                %v345 = vld [vmem:[%s283 + $0x3c0] sm:%s276]
                %346 = vst [vmem:[%s284 + $0xf0] sm:%s276] %v345
                %v347 = vld [vmem:[%s283 + $0x3e0] sm:%s276]
                %348 = vst [vmem:[%s284 + $0xf8] sm:%s276] %v347
              $region53: #{vit_binary_classifier_forward.11} parent=47 // loop_footer
                %s282 = sadd.s32 1, %s278
              $region54: #{vit_binary_classifier_forward.11} parent=47 // loop_footer_branch
                %277 = sbr.rel target = $region50
              $region55: #{vit_binary_classifier_forward.11} parent=47 // loop_exit
                _
            $region48: #{vit_binary_classifier_forward.11} parent=39 // pred_fallthru
              _
          $region40: #{vit_binary_classifier_forward.11} parent=35 // pred_fallthru
            _
          %425 = vnop
        $region36: #{vit_binary_classifier_forward.11} parent=31 // pred_fallthru
          _
        // Predicated region
        $region71: #{vit_binary_classifier_forward.11} parent=31 // pred_check
          %p426 = pneg %p142
        $region72: #{vit_binary_classifier_forward.11} parent=31 // pred_check_branch
          %428 = sbr.rel (%p426) target = $region74
        $region73: #{vit_binary_classifier_forward.11} parent=31 // pred_region
          %s429 = smul.u32 2, %s24
          %p430 = scmp.lt.s32.totalorder %s429, 7
          %s431 = scalar_select %p430, %s429, 7
          %s432 = scalar_lea.vmem %s4, %s431
          %s433 = smul.u32 2, %s24
        $region74: #{vit_binary_classifier_forward.11} parent=31 // pred_fallthru
          _
        // Predicated region
        $region75: #{vit_binary_classifier_forward.11} parent=31 // pred_check
          %p434 = pneg %p168
        $region76: #{vit_binary_classifier_forward.11} parent=31 // pred_check_branch
          %436 = sbr.rel (%p434) target = $region78
        $region77: #{vit_binary_classifier_forward.11} parent=31 // pred_region
          %s437 = sand.u32 %s158, 1
          %s438 = scalar_lea.sflag [#allocation6], %s437
          %s439 = sand.u32 %s158, 1
          %s440 = smul.addr %s439, 256
          %s441 = scalar_lea.vmem [#allocation5], %s440
          %s442 = smul.u32 32, %s24
          %444 = vsyncadd %s438, 0
          %s445 = smul.addr %s442, 2
          %s446 = smul.addr %s445, 4
          %s447 = scalar_lea.hbm %s5, %s446
          %s448 = sshll.u32 %s447, 4
          %s449 = int_to_ptr.hbm [resolvable:$true] %s448
          %s450 = sshll.u32 %s441, 4
          %s451 = int_to_ptr.vmem [resolvable:$true] %s450
          %456 = dma.hbm_to_vmem [thread:$0]  %s449, 4096, %s451, %s438, 128, 128, 8
        $region78: #{vit_binary_classifier_forward.11} parent=31 // pred_fallthru
          _
      $region32: #{vit_binary_classifier_forward.11} parent=5 // pred_fallthru
        _
      %p457 = scmp.le.s32.totalorder 1, %s16
      %p458 = scmp.lt.s32.totalorder %s16, 5
      %p459 = pnand %p457, %p458
      %p460 = pneg %p459
      // Predicated region
      $region79: #{vit_binary_classifier_forward.11} parent=5 // pred_check
        _
      $region80: #{vit_binary_classifier_forward.11} parent=5 // pred_check_branch
        %462 = sbr.rel (%p459) target = $region82
      $region81: #{vit_binary_classifier_forward.11} parent=5 // pred_region
        %s463 = ssub.s32 %s16, 1
        %s464 = sand.u32 %s109, 1
        %s465 = sand.u32 %s109, 1
        %s466 = smul.addr %s465, 256
        %s467 = scalar_lea.vmem [#allocation4], %s466
        // Predicated region
        $region83: #{vit_binary_classifier_forward.11} parent=81 // pred_check
          %p468 = pneg %p122
        $region84: #{vit_binary_classifier_forward.11} parent=81 // pred_check_branch
          %470 = sbr.rel (%p468) target = $region86
        $region85: #{vit_binary_classifier_forward.11} parent=81 // pred_region
          _
        $region86: #{vit_binary_classifier_forward.11} parent=81 // pred_fallthru
          _
        %s471 = sand.u32 %s161, 1
        %s472 = scalar_lea.sflag [#allocation6], %s471
        %s473 = sand.u32 %s161, 1
        %s474 = smul.addr %s473, 256
        %s475 = scalar_lea.vmem [#allocation5], %s474
        // Predicated region
        $region87: #{vit_binary_classifier_forward.11} parent=81 // pred_check
          %p476 = pneg %p174
        $region88: #{vit_binary_classifier_forward.11} parent=81 // pred_check_branch
          %478 = sbr.rel (%p476) target = $region90
        $region89: #{vit_binary_classifier_forward.11} parent=81 // pred_region
          %480 = dma.done %s472, 4096
        $region90: #{vit_binary_classifier_forward.11} parent=81 // pred_fallthru
          _
        %s481 = smul.u32 2, %s25
        %p482 = scmp.lt.s32.totalorder %s481, 1
        %s483 = scalar_select %p482, %s481, 1
        %s484 = smul.addr %s483, 2
        %s485 = smul.addr %s484, 4
        %s486 = scalar_lea.vmem %s0, %s485
        %p487 = pneg %p54
        %p488 = pneg %p51
        %p489 = pneg %p75
        %p490 = pneg %p72
        %p491 = pneg %p96
        %p492 = pneg %p93
        %s493 = sand.u32 %s109, 1
        %s494 = sand.u32 %s109, 1
        %s495 = smul.addr %s494, 256
        %s496 = scalar_lea.vmem [#allocation4], %s495
        %p497 = pneg %p122
        %p498 = pneg %p119
        %s499 = smul.u32 2, %s26
        %p500 = scmp.lt.s32.totalorder %s499, 7
        %s501 = scalar_select %p500, %s499, 7
        %s502 = scalar_lea.vmem %s4, %s501
        %p503 = pneg %p148
        %p504 = pneg %p145
        %s505 = sand.u32 %s161, 1
        %s506 = scalar_lea.sflag [#allocation6], %s505
        %s507 = sand.u32 %s161, 1
        %s508 = smul.addr %s507, 256
        %s509 = scalar_lea.vmem [#allocation5], %s508
        %p510 = pneg %p174
        %p511 = pneg %p171
        %p512 = pneg %p195
        %p513 = pneg %p192
        %p514 = pneg %p221
        %p515 = pneg %p218
        %s516 = smul.u32 2, %s25
        %p517 = scmp.lt.s32.totalorder %s516, 1
        %s518 = scalar_select %p517, %s516, 1
        %s519 = smul.addr %s518, 2
        %s520 = smul.addr %s519, 4
        %s521 = scalar_lea.vmem %s7, %s520
        %s522 = smul.u32 2, %s25
        %p523 = scmp.lt.s32.totalorder %s522, 1
        %s524 = scalar_select %p523, %s522, 1
        %s525 = smul.addr %s524, 2
        %s526 = smul.addr %s525, 4
        %s527 = scalar_lea.vmem %s0, %s526
        %s528 = smul.u32 2, %s25
        %s529 = smul.u32 2, %s26
        %s530 = smul.u32 2, %s26
        %p531 = scmp.lt.s32.totalorder %s530, 7
        %s532 = scalar_select %p531, %s530, 7
        %s533 = scalar_lea.vmem %s4, %s532
        %s534 = smul.u32 2, %s26
        %s535 = smul.u32 32, %s26
        %s536 = smul.u32 2, %s25
        %p537 = scmp.lt.s32.totalorder %s536, 1
        %s538 = scalar_select %p537, %s536, 1
        %s539 = smul.addr %s538, 2
        %s540 = smul.addr %s539, 4
        %s541 = scalar_lea.vmem %s7, %s540
        %s542 = smul.u32 2, %s25
        %p543 = scmp.eq.s32.totalorder %s26, 0
        // Predicated region
        $region91: #{vit_binary_classifier_forward.11} parent=81 // pred_check
          %p544 = pneg %p543
        $region92: #{vit_binary_classifier_forward.11} parent=81 // pred_check_branch
          %546 = sbr.rel (%p544) target = $region94
        $region93: #{vit_binary_classifier_forward.11} parent=81 // pred_region
          %v547 = vld [vmem:[%s527] sm:$0xff]
          %v548 = vld [vmem:[%s527 + $0x8] sm:$0xff]
          %v549 = vunpack.c.l.bf16 %v547
          %v550 = vunpack.c.h.bf16 %v547
          %v551 = vunpack.c.l.bf16 %v548
          %v552 = vunpack.c.h.bf16 %v548
          %v553 = vadd.f32 %v549, %v550
          %554 = vadd.xlane.f32.xlu0 %v553
          %v555 = vpop.xlane.xlu0 %554
          %v556 = vadd.f32 %v551, %v552
          %557 = vadd.xlane.f32.xlu0 %v556
          %v558 = vpop.xlane.xlu0 %557
          %v559 = vrcp.pop 256.0
          %v560 = vmul.f32 256.0, %v559
          %v561 = vsub.f32 1.0, %v560
          %v562 = vmul.f32 %v559, %v561
          %v563 = vadd.f32 %v559, %v562
          %vm564 = vweird.f32 %v559
          %v565 = vsel %vm564, %v559, %v563
          %v566 = vmul.f32 %v555, %v565
          %v567 = vmul.f32 %v558, %v565
          %v568 = vsub.f32 %v549, %v566
          %v569 = vsub.f32 %v550, %v566
          %v570 = vsub.f32 %v551, %v567
          %v571 = vsub.f32 %v552, %v567
          %v572 = vmul.f32 %v568, %v568
          %v573 = vmul.f32 %v569, %v569
          %v574 = vmul.f32 %v570, %v570
          %v575 = vmul.f32 %v571, %v571
          %v576 = vadd.f32 %v572, %v573
          %577 = vadd.xlane.f32.xlu0 %v576
          %v578 = vpop.xlane.xlu0 %577
          %v579 = vadd.f32 %v574, %v575
          %580 = vadd.xlane.f32.xlu0 %v579
          %v581 = vpop.xlane.xlu0 %580
          %v582 = vmul.f32 %v578, %v565
          %v583 = vmul.f32 %v581, %v565
          %v584 = vadd.f32 %v582, 1e-06
          %v585 = vadd.f32 %v583, 1e-06
          %v586 = vrsqrt.pop %v584
          %v587 = vmul.f32 %v586, %v584
          %v588 = vmul.f32 %v587, %v586
          %v589 = vmul.f32 0.5, %v588
          %v590 = vsub.f32 1.5, %v589
          %v591 = vmul.f32 %v586, %v590
          %vm592 = vweird.f32 %v584
          %vm593 = vweird.f32 %v586
          %vm594 = vmor %vm592, %vm593
          %v595 = vsel %vm594, %v586, %v591
          %v596 = vrsqrt.pop %v585
          %v597 = vmul.f32 %v596, %v585
          %v598 = vmul.f32 %v597, %v596
          %v599 = vmul.f32 0.5, %v598
          %v600 = vsub.f32 1.5, %v599
          %v601 = vmul.f32 %v596, %v600
          %vm602 = vweird.f32 %v585
          %vm603 = vweird.f32 %v596
          %vm604 = vmor %vm602, %vm603
          %v605 = vsel %vm604, %v596, %v601
          %v606 = vmul.f32 %v568, %v595
          %v607 = vmul.f32 %v569, %v595
          %v608 = vmul.f32 %v570, %v605
          %v609 = vmul.f32 %v571, %v605
          %v610 = vld [vmem:[%s1] sm:$0x3]
          %v612 = vperm.slane %v610, 0
          %v613 = vperm.slane %v610, 1
          %v616 = vmul.f32 %v606, %v612
          %v617 = vmul.f32 %v607, %v613
          %v618 = vmul.f32 %v608, %v612
          %v619 = vmul.f32 %v609, %v613
          %v620 = vld [vmem:[%s2] sm:$0x3]
          %v622 = vperm.slane %v620, 0
          %v623 = vperm.slane %v620, 1
          %v626 = vadd.f32 %v616, %v622
          %v627 = vadd.f32 %v617, %v623
          %v628 = vadd.f32 %v618, %v622
          %v629 = vadd.f32 %v619, %v623
          %v630 = vpack.c.bf16 %v627, %v626
          %v631 = vpack.c.bf16 %v629, %v628
          %632 = vst [vmem:[#allocation2] sm:$0xff] %v630
          %633 = vst [vmem:[#allocation2 + $0x8] sm:$0xff] %v631
          %634 = vst [vmem:[#allocation3] sm:$0xff] 0.0
          %635 = vst [vmem:[#allocation3 + $0x8] sm:$0xff] 0.0
          %636 = vst [vmem:[#allocation3 + $0x10] sm:$0xff] 0.0
          %637 = vst [vmem:[#allocation3 + $0x18] sm:$0xff] 0.0
        $region94: #{vit_binary_classifier_forward.11} parent=81 // pred_fallthru
          _
        %v638 = vld [vmem:[#allocation2] sm:$0xff]
        %v639 = vld [vmem:[#allocation2 + $0x8] sm:$0xff]
        %v640 = vld [vmem:[%s467] sm:$0xff]
        %v641 = vld [vmem:[%s467 + $0x8] sm:$0xff]
        %v642 = vld [vmem:[%s467 + $0x10] sm:$0xff]
        %v643 = vld [vmem:[%s467 + $0x18] sm:$0xff]
        %v644 = vld [vmem:[%s467 + $0x20] sm:$0xff]
        %v645 = vld [vmem:[%s467 + $0x28] sm:$0xff]
        %v646 = vld [vmem:[%s467 + $0x30] sm:$0xff]
        %v647 = vld [vmem:[%s467 + $0x38] sm:$0xff]
        %v648 = vld [vmem:[%s467 + $0x40] sm:$0xff]
        %v649 = vld [vmem:[%s467 + $0x48] sm:$0xff]
        %v650 = vld [vmem:[%s467 + $0x50] sm:$0xff]
        %v651 = vld [vmem:[%s467 + $0x58] sm:$0xff]
        %v652 = vld [vmem:[%s467 + $0x60] sm:$0xff]
        %v653 = vld [vmem:[%s467 + $0x68] sm:$0xff]
        %v654 = vld [vmem:[%s467 + $0x70] sm:$0xff]
        %v655 = vld [vmem:[%s467 + $0x78] sm:$0xff]
        %v656 = vld [vmem:[%s467 + $0x80] sm:$0xff]
        %v657 = vld [vmem:[%s467 + $0x88] sm:$0xff]
        %v658 = vld [vmem:[%s467 + $0x90] sm:$0xff]
        %v659 = vld [vmem:[%s467 + $0x98] sm:$0xff]
        %v660 = vld [vmem:[%s467 + $0xa0] sm:$0xff]
        %v661 = vld [vmem:[%s467 + $0xa8] sm:$0xff]
        %v662 = vld [vmem:[%s467 + $0xb0] sm:$0xff]
        %v663 = vld [vmem:[%s467 + $0xb8] sm:$0xff]
        %v664 = vld [vmem:[%s467 + $0xc0] sm:$0xff]
        %v665 = vld [vmem:[%s467 + $0xc8] sm:$0xff]
        %v666 = vld [vmem:[%s467 + $0xd0] sm:$0xff]
        %v667 = vld [vmem:[%s467 + $0xd8] sm:$0xff]
        %v668 = vld [vmem:[%s467 + $0xe0] sm:$0xff]
        %v669 = vld [vmem:[%s467 + $0xe8] sm:$0xff]
        %v670 = vld [vmem:[%s467 + $0xf0] sm:$0xff]
        %v671 = vld [vmem:[%s467 + $0xf8] sm:$0xff]
        %v672 = vld [vmem:[%s533] sm:$0x3]
        %v674 = vperm.slane %v672, 0
        %v675 = vperm.slane %v672, 1
        %v680 = vunpack.c.l.b16 %v638
        %v681 = vunpack.c.h.b16 %v638
        %v682 = vunpack.c.l.b16 %v639
        %v683 = vunpack.c.h.b16 %v639
        %v684 = vpack.c.b16 %v682, %v680
        %v685 = vpack.c.b16 %v683, %v681
        %v720 = vunpack.c.l.b16 %v640
        %v721 = vunpack.c.h.b16 %v640
        %v722 = vunpack.c.l.b16 %v641
        %v723 = vunpack.c.h.b16 %v641
        %v724 = vunpack.c.l.b16 %v642
        %v725 = vunpack.c.h.b16 %v642
        %v726 = vunpack.c.l.b16 %v643
        %v727 = vunpack.c.h.b16 %v643
        %v728 = vunpack.c.l.b16 %v644
        %v729 = vunpack.c.h.b16 %v644
        %v730 = vunpack.c.l.b16 %v645
        %v731 = vunpack.c.h.b16 %v645
        %v732 = vunpack.c.l.b16 %v646
        %v733 = vunpack.c.h.b16 %v646
        %v734 = vunpack.c.l.b16 %v647
        %v735 = vunpack.c.h.b16 %v647
        %v736 = vunpack.c.l.b16 %v648
        %v737 = vunpack.c.h.b16 %v648
        %v738 = vunpack.c.l.b16 %v649
        %v739 = vunpack.c.h.b16 %v649
        %v740 = vunpack.c.l.b16 %v650
        %v741 = vunpack.c.h.b16 %v650
        %v742 = vunpack.c.l.b16 %v651
        %v743 = vunpack.c.h.b16 %v651
        %v744 = vunpack.c.l.b16 %v652
        %v745 = vunpack.c.h.b16 %v652
        %v746 = vunpack.c.l.b16 %v653
        %v747 = vunpack.c.h.b16 %v653
        %v748 = vunpack.c.l.b16 %v654
        %v749 = vunpack.c.h.b16 %v654
        %v750 = vunpack.c.l.b16 %v655
        %v751 = vunpack.c.h.b16 %v655
        %v752 = vunpack.c.l.b16 %v656
        %v753 = vunpack.c.h.b16 %v656
        %v754 = vunpack.c.l.b16 %v657
        %v755 = vunpack.c.h.b16 %v657
        %v756 = vunpack.c.l.b16 %v658
        %v757 = vunpack.c.h.b16 %v658
        %v758 = vunpack.c.l.b16 %v659
        %v759 = vunpack.c.h.b16 %v659
        %v760 = vunpack.c.l.b16 %v660
        %v761 = vunpack.c.h.b16 %v660
        %v762 = vunpack.c.l.b16 %v661
        %v763 = vunpack.c.h.b16 %v661
        %v764 = vunpack.c.l.b16 %v662
        %v765 = vunpack.c.h.b16 %v662
        %v766 = vunpack.c.l.b16 %v663
        %v767 = vunpack.c.h.b16 %v663
        %v768 = vunpack.c.l.b16 %v664
        %v769 = vunpack.c.h.b16 %v664
        %v770 = vunpack.c.l.b16 %v665
        %v771 = vunpack.c.h.b16 %v665
        %v772 = vunpack.c.l.b16 %v666
        %v773 = vunpack.c.h.b16 %v666
        %v774 = vunpack.c.l.b16 %v667
        %v775 = vunpack.c.h.b16 %v667
        %v776 = vunpack.c.l.b16 %v668
        %v777 = vunpack.c.h.b16 %v668
        %v778 = vunpack.c.l.b16 %v669
        %v779 = vunpack.c.h.b16 %v669
        %v780 = vunpack.c.l.b16 %v670
        %v781 = vunpack.c.h.b16 %v670
        %v782 = vunpack.c.l.b16 %v671
        %v783 = vunpack.c.h.b16 %v671
        %v784 = vpack.c.b16 %v722, %v720
        %v785 = vpack.c.b16 %v723, %v721
        %v786 = vpack.c.b16 %v726, %v724
        %v787 = vpack.c.b16 %v727, %v725
        %v788 = vpack.c.b16 %v730, %v728
        %v789 = vpack.c.b16 %v731, %v729
        %v790 = vpack.c.b16 %v734, %v732
        %v791 = vpack.c.b16 %v735, %v733
        %v792 = vpack.c.b16 %v738, %v736
        %v793 = vpack.c.b16 %v739, %v737
        %v794 = vpack.c.b16 %v742, %v740
        %v795 = vpack.c.b16 %v743, %v741
        %v796 = vpack.c.b16 %v746, %v744
        %v797 = vpack.c.b16 %v747, %v745
        %v798 = vpack.c.b16 %v750, %v748
        %v799 = vpack.c.b16 %v751, %v749
        %v800 = vpack.c.b16 %v754, %v752
        %v801 = vpack.c.b16 %v755, %v753
        %v802 = vpack.c.b16 %v758, %v756
        %v803 = vpack.c.b16 %v759, %v757
        %v804 = vpack.c.b16 %v762, %v760
        %v805 = vpack.c.b16 %v763, %v761
        %v806 = vpack.c.b16 %v766, %v764
        %v807 = vpack.c.b16 %v767, %v765
        %v808 = vpack.c.b16 %v770, %v768
        %v809 = vpack.c.b16 %v771, %v769
        %v810 = vpack.c.b16 %v774, %v772
        %v811 = vpack.c.b16 %v775, %v773
        %v812 = vpack.c.b16 %v778, %v776
        %v813 = vpack.c.b16 %v779, %v777
        %v814 = vpack.c.b16 %v782, %v780
        %v815 = vpack.c.b16 %v783, %v781
        %848 = vmatpush.bf16.msra.mxu0 %v798
        %849 = vmatpush.bf16.msra.mxu0 %v796
        %850 = vmatpush.bf16.msra.mxu0 %v794
        %851 = vmatpush.bf16.msra.mxu0 %v792
        %852 = vmatpush.bf16.msra.mxu0 %v790
        %853 = vmatpush.bf16.msra.mxu0 %v788
        %854 = vmatpush.bf16.msra.mxu0 %v786
        %855 = vmatpush.bf16.msra.mxu0 %v784
        %856 = vmatmul.bf16.gmra.mxu0 %v684
        %v857 = vpop.f32.mrf.mxu0
        %v858 = vadd.f32 %v674, %v857
        %v859 = vpop.f32.mrf.mxu0
        %v860 = vadd.f32 %v674, %v859
        %861 = vdwg.mxu0
        %862 = vmatpush.bf16.msra.mxu0 %v814
        %863 = vmatpush.bf16.msra.mxu0 %v812
        %864 = vmatpush.bf16.msra.mxu0 %v810
        %865 = vmatpush.bf16.msra.mxu0 %v808
        %866 = vmatpush.bf16.msra.mxu0 %v806
        %867 = vmatpush.bf16.msra.mxu0 %v804
        %868 = vmatpush.bf16.msra.mxu0 %v802
        %869 = vmatpush.bf16.msra.mxu0 %v800
        %870 = vmatmul.bf16.gmra.mxu0 %v685
        %v871 = vpop.f32.mrf.mxu0
        %v872 = vadd.f32 %v858, %v871
        %v873 = vpop.f32.mrf.mxu0
        %v874 = vadd.f32 %v860, %v873
        %875 = vdwg.mxu0
        %876 = vmatpush.bf16.msra.mxu0 %v799
        %877 = vmatpush.bf16.msra.mxu0 %v797
        %878 = vmatpush.bf16.msra.mxu0 %v795
        %879 = vmatpush.bf16.msra.mxu0 %v793
        %880 = vmatpush.bf16.msra.mxu0 %v791
        %881 = vmatpush.bf16.msra.mxu0 %v789
        %882 = vmatpush.bf16.msra.mxu0 %v787
        %883 = vmatpush.bf16.msra.mxu0 %v785
        %884 = vmatmul.bf16.gmra.mxu0 %v684
        %v885 = vpop.f32.mrf.mxu0
        %v886 = vadd.f32 %v675, %v885
        %v887 = vpop.f32.mrf.mxu0
        %v888 = vadd.f32 %v675, %v887
        %889 = vdwg.mxu0
        %890 = vmatpush.bf16.msra.mxu0 %v815
        %891 = vmatpush.bf16.msra.mxu0 %v813
        %892 = vmatpush.bf16.msra.mxu0 %v811
        %893 = vmatpush.bf16.msra.mxu0 %v809
        %894 = vmatpush.bf16.msra.mxu0 %v807
        %895 = vmatpush.bf16.msra.mxu0 %v805
        %896 = vmatpush.bf16.msra.mxu0 %v803
        %897 = vmatpush.bf16.msra.mxu0 %v801
        %898 = vmatmul.bf16.gmra.mxu0 %v685
        %v899 = vpop.f32.mrf.mxu0
        %v900 = vadd.f32 %v886, %v899
        %v901 = vpop.f32.mrf.mxu0
        %v902 = vadd.f32 %v888, %v901
        %903 = vdwg.mxu0
        %v904 = vmul.f32 %v872, 0.5
        %v905 = vmul.f32 %v900, 0.5
        %v906 = vmul.f32 %v874, 0.5
        %v907 = vmul.f32 %v902, 0.5
        %v908 = vmul.f32 %v872, 0.70710677
        %v909 = vmul.f32 %v900, 0.70710677
        %v910 = vmul.f32 %v874, 0.70710677
        %v911 = vmul.f32 %v902, 0.70710677
        %v912 = vmul.f32 %v908, %v908
        %v913 = vmin.f32 16.0, %v912
        %v914 = vmul.f32 %v913, 2.1237322e-06
        %v915 = vadd.f32 %v914, 0.00028619796
        %v916 = vmul.f32 %v913, %v915
        %v917 = vadd.f32 %v916, 0.0036580483
        %v918 = vmul.f32 %v913, %v917
        %v919 = vadd.f32 %v918, 0.05243302
        %v920 = vmul.f32 %v913, %v919
        %v921 = vadd.f32 %v920, 0.18741608
        %v922 = vmul.f32 %v913, %v921
        %v923 = vadd.f32 %v922, 1.1283791
        %v924 = vmul.f32 %v908, %v923
        %v925 = vmul.f32 %v913, 3.8918573e-05
        %v926 = vadd.f32 %v925, 0.001143296
        %v927 = vmul.f32 %v913, %v926
        %v928 = vadd.f32 %v927, 0.014752088
        %v929 = vmul.f32 %v913, %v928
        %v930 = vadd.f32 %v929, 0.112945676
        %v931 = vmul.f32 %v913, %v930
        %v932 = vadd.f32 %v931, 0.4994258
        %v933 = vmul.f32 %v913, %v932
        %v934 = vadd.f32 %v933, 1.0
        %v935 = vrcp.pop %v934
        %v936 = vmul.f32 %v934, %v935
        %v937 = vsub.f32 1.0, %v936
        %v938 = vmul.f32 %v935, %v937
        %v939 = vadd.f32 %v935, %v938
        %vm940 = vweird.f32 %v934
        %vm941 = vweird.f32 %v935
        %vm942 = vmor %vm940, %vm941
        %v943 = vsel %vm942, %v935, %v939
        %v944 = vand.u32 2147483647, %v934
        %vm945 = vcmp.eq.f32.partialorder %v944, 8.507059e+37
        %v946 = vand.u32 %v934, 2147483648
        %v947 = vor.u32 1.1754944e-38, %v946
        %v948 = vsel %vm945, %v947, %v943
        %v949 = vmul.f32 %v924, %v948
        %v950 = vmin.f32 %v949, 1.0
        %v951 = vmax.f32 %v950, -1.0
        %v952 = vmul.f32 %v909, %v909
        %v953 = vmin.f32 16.0, %v952
        %v954 = vmul.f32 %v953, 2.1237322e-06
        %v955 = vadd.f32 %v954, 0.00028619796
        %v956 = vmul.f32 %v953, %v955
        %v957 = vadd.f32 %v956, 0.0036580483
        %v958 = vmul.f32 %v953, %v957
        %v959 = vadd.f32 %v958, 0.05243302
        %v960 = vmul.f32 %v953, %v959
        %v961 = vadd.f32 %v960, 0.18741608
        %v962 = vmul.f32 %v953, %v961
        %v963 = vadd.f32 %v962, 1.1283791
        %v964 = vmul.f32 %v909, %v963
        %v965 = vmul.f32 %v953, 3.8918573e-05
        %v966 = vadd.f32 %v965, 0.001143296
        %v967 = vmul.f32 %v953, %v966
        %v968 = vadd.f32 %v967, 0.014752088
        %v969 = vmul.f32 %v953, %v968
        %v970 = vadd.f32 %v969, 0.112945676
        %v971 = vmul.f32 %v953, %v970
        %v972 = vadd.f32 %v971, 0.4994258
        %v973 = vmul.f32 %v953, %v972
        %v974 = vadd.f32 %v973, 1.0
        %v975 = vrcp.pop %v974
        %v976 = vmul.f32 %v974, %v975
        %v977 = vsub.f32 1.0, %v976
        %v978 = vmul.f32 %v975, %v977
        %v979 = vadd.f32 %v975, %v978
        %vm980 = vweird.f32 %v974
        %vm981 = vweird.f32 %v975
        %vm982 = vmor %vm980, %vm981
        %v983 = vsel %vm982, %v975, %v979
        %v984 = vand.u32 2147483647, %v974
        %vm985 = vcmp.eq.f32.partialorder %v984, 8.507059e+37
        %v986 = vand.u32 %v974, 2147483648
        %v987 = vor.u32 1.1754944e-38, %v986
        %v988 = vsel %vm985, %v987, %v983
        %v989 = vmul.f32 %v964, %v988
        %v990 = vmin.f32 %v989, 1.0
        %v991 = vmax.f32 %v990, -1.0
        %v992 = vmul.f32 %v910, %v910
        %v993 = vmin.f32 16.0, %v992
        %v994 = vmul.f32 %v993, 2.1237322e-06
        %v995 = vadd.f32 %v994, 0.00028619796
        %v996 = vmul.f32 %v993, %v995
        %v997 = vadd.f32 %v996, 0.0036580483
        %v998 = vmul.f32 %v993, %v997
        %v999 = vadd.f32 %v998, 0.05243302
        %v1000 = vmul.f32 %v993, %v999
        %v1001 = vadd.f32 %v1000, 0.18741608
        %v1002 = vmul.f32 %v993, %v1001
        %v1003 = vadd.f32 %v1002, 1.1283791
        %v1004 = vmul.f32 %v910, %v1003
        %v1005 = vmul.f32 %v993, 3.8918573e-05
        %v1006 = vadd.f32 %v1005, 0.001143296
        %v1007 = vmul.f32 %v993, %v1006
        %v1008 = vadd.f32 %v1007, 0.014752088
        %v1009 = vmul.f32 %v993, %v1008
        %v1010 = vadd.f32 %v1009, 0.112945676
        %v1011 = vmul.f32 %v993, %v1010
        %v1012 = vadd.f32 %v1011, 0.4994258
        %v1013 = vmul.f32 %v993, %v1012
        %v1014 = vadd.f32 %v1013, 1.0
        %v1015 = vrcp.pop %v1014
        %v1016 = vmul.f32 %v1014, %v1015
        %v1017 = vsub.f32 1.0, %v1016
        %v1018 = vmul.f32 %v1015, %v1017
        %v1019 = vadd.f32 %v1015, %v1018
        %vm1020 = vweird.f32 %v1014
        %vm1021 = vweird.f32 %v1015
        %vm1022 = vmor %vm1020, %vm1021
        %v1023 = vsel %vm1022, %v1015, %v1019
        %v1024 = vand.u32 2147483647, %v1014
        %vm1025 = vcmp.eq.f32.partialorder %v1024, 8.507059e+37
        %v1026 = vand.u32 %v1014, 2147483648
        %v1027 = vor.u32 1.1754944e-38, %v1026
        %v1028 = vsel %vm1025, %v1027, %v1023
        %v1029 = vmul.f32 %v1004, %v1028
        %v1030 = vmin.f32 %v1029, 1.0
        %v1031 = vmax.f32 %v1030, -1.0
        %v1032 = vmul.f32 %v911, %v911
        %v1033 = vmin.f32 16.0, %v1032
        %v1034 = vmul.f32 %v1033, 2.1237322e-06
        %v1035 = vadd.f32 %v1034, 0.00028619796
        %v1036 = vmul.f32 %v1033, %v1035
        %v1037 = vadd.f32 %v1036, 0.0036580483
        %v1038 = vmul.f32 %v1033, %v1037
        %v1039 = vadd.f32 %v1038, 0.05243302
        %v1040 = vmul.f32 %v1033, %v1039
        %v1041 = vadd.f32 %v1040, 0.18741608
        %v1042 = vmul.f32 %v1033, %v1041
        %v1043 = vadd.f32 %v1042, 1.1283791
        %v1044 = vmul.f32 %v911, %v1043
        %v1045 = vmul.f32 %v1033, 3.8918573e-05
        %v1046 = vadd.f32 %v1045, 0.001143296
        %v1047 = vmul.f32 %v1033, %v1046
        %v1048 = vadd.f32 %v1047, 0.014752088
        %v1049 = vmul.f32 %v1033, %v1048
        %v1050 = vadd.f32 %v1049, 0.112945676
        %v1051 = vmul.f32 %v1033, %v1050
        %v1052 = vadd.f32 %v1051, 0.4994258
        %v1053 = vmul.f32 %v1033, %v1052
        %v1054 = vadd.f32 %v1053, 1.0
        %v1055 = vrcp.pop %v1054
        %v1056 = vmul.f32 %v1054, %v1055
        %v1057 = vsub.f32 1.0, %v1056
        %v1058 = vmul.f32 %v1055, %v1057
        %v1059 = vadd.f32 %v1055, %v1058
        %vm1060 = vweird.f32 %v1054
        %vm1061 = vweird.f32 %v1055
        %vm1062 = vmor %vm1060, %vm1061
        %v1063 = vsel %vm1062, %v1055, %v1059
        %v1064 = vand.u32 2147483647, %v1054
        %vm1065 = vcmp.eq.f32.partialorder %v1064, 8.507059e+37
        %v1066 = vand.u32 %v1054, 2147483648
        %v1067 = vor.u32 1.1754944e-38, %v1066
        %v1068 = vsel %vm1065, %v1067, %v1063
        %v1069 = vmul.f32 %v1044, %v1068
        %v1070 = vmin.f32 %v1069, 1.0
        %v1071 = vmax.f32 %v1070, -1.0
        %v1072 = vadd.f32 %v951, 1.0
        %v1073 = vadd.f32 %v991, 1.0
        %v1074 = vadd.f32 %v1031, 1.0
        %v1075 = vadd.f32 %v1071, 1.0
        %v1076 = vmul.f32 %v904, %v1072
        %v1077 = vmul.f32 %v905, %v1073
        %v1078 = vmul.f32 %v906, %v1074
        %v1079 = vmul.f32 %v907, %v1075
        %v1080 = vld [vmem:[#allocation3] sm:$0xff]
        %v1081 = vld [vmem:[#allocation3 + $0x8] sm:$0xff]
        %v1082 = vld [vmem:[#allocation3 + $0x10] sm:$0xff]
        %v1083 = vld [vmem:[#allocation3 + $0x18] sm:$0xff]
        %v1084 = vpack.c.bf16 %v1078, %v1076
        %v1085 = vpack.c.bf16 %v1079, %v1077
        %v1086 = vld [vmem:[%s475] sm:$0xff]
        %v1087 = vld [vmem:[%s475 + $0x8] sm:$0xff]
        %v1088 = vld [vmem:[%s475 + $0x10] sm:$0xff]
        %v1089 = vld [vmem:[%s475 + $0x18] sm:$0xff]
        %v1090 = vld [vmem:[%s475 + $0x20] sm:$0xff]
        %v1091 = vld [vmem:[%s475 + $0x28] sm:$0xff]
        %v1092 = vld [vmem:[%s475 + $0x30] sm:$0xff]
        %v1093 = vld [vmem:[%s475 + $0x38] sm:$0xff]
        %v1094 = vld [vmem:[%s475 + $0x40] sm:$0xff]
        %v1095 = vld [vmem:[%s475 + $0x48] sm:$0xff]
        %v1096 = vld [vmem:[%s475 + $0x50] sm:$0xff]
        %v1097 = vld [vmem:[%s475 + $0x58] sm:$0xff]
        %v1098 = vld [vmem:[%s475 + $0x60] sm:$0xff]
        %v1099 = vld [vmem:[%s475 + $0x68] sm:$0xff]
        %v1100 = vld [vmem:[%s475 + $0x70] sm:$0xff]
        %v1101 = vld [vmem:[%s475 + $0x78] sm:$0xff]
        %v1102 = vld [vmem:[%s475 + $0x80] sm:$0xff]
        %v1103 = vld [vmem:[%s475 + $0x88] sm:$0xff]
        %v1104 = vld [vmem:[%s475 + $0x90] sm:$0xff]
        %v1105 = vld [vmem:[%s475 + $0x98] sm:$0xff]
        %v1106 = vld [vmem:[%s475 + $0xa0] sm:$0xff]
        %v1107 = vld [vmem:[%s475 + $0xa8] sm:$0xff]
        %v1108 = vld [vmem:[%s475 + $0xb0] sm:$0xff]
        %v1109 = vld [vmem:[%s475 + $0xb8] sm:$0xff]
        %v1110 = vld [vmem:[%s475 + $0xc0] sm:$0xff]
        %v1111 = vld [vmem:[%s475 + $0xc8] sm:$0xff]
        %v1112 = vld [vmem:[%s475 + $0xd0] sm:$0xff]
        %v1113 = vld [vmem:[%s475 + $0xd8] sm:$0xff]
        %v1114 = vld [vmem:[%s475 + $0xe0] sm:$0xff]
        %v1115 = vld [vmem:[%s475 + $0xe8] sm:$0xff]
        %v1116 = vld [vmem:[%s475 + $0xf0] sm:$0xff]
        %v1117 = vld [vmem:[%s475 + $0xf8] sm:$0xff]
        %v1150 = vunpack.c.l.b16 %v1086
        %v1151 = vunpack.c.h.b16 %v1086
        %v1152 = vunpack.c.l.b16 %v1087
        %v1153 = vunpack.c.h.b16 %v1087
        %v1154 = vunpack.c.l.b16 %v1088
        %v1155 = vunpack.c.h.b16 %v1088
        %v1156 = vunpack.c.l.b16 %v1089
        %v1157 = vunpack.c.h.b16 %v1089
        %v1158 = vunpack.c.l.b16 %v1090
        %v1159 = vunpack.c.h.b16 %v1090
        %v1160 = vunpack.c.l.b16 %v1091
        %v1161 = vunpack.c.h.b16 %v1091
        %v1162 = vunpack.c.l.b16 %v1092
        %v1163 = vunpack.c.h.b16 %v1092
        %v1164 = vunpack.c.l.b16 %v1093
        %v1165 = vunpack.c.h.b16 %v1093
        %v1166 = vunpack.c.l.b16 %v1094
        %v1167 = vunpack.c.h.b16 %v1094
        %v1168 = vunpack.c.l.b16 %v1095
        %v1169 = vunpack.c.h.b16 %v1095
        %v1170 = vunpack.c.l.b16 %v1096
        %v1171 = vunpack.c.h.b16 %v1096
        %v1172 = vunpack.c.l.b16 %v1097
        %v1173 = vunpack.c.h.b16 %v1097
        %v1174 = vunpack.c.l.b16 %v1098
        %v1175 = vunpack.c.h.b16 %v1098
        %v1176 = vunpack.c.l.b16 %v1099
        %v1177 = vunpack.c.h.b16 %v1099
        %v1178 = vunpack.c.l.b16 %v1100
        %v1179 = vunpack.c.h.b16 %v1100
        %v1180 = vunpack.c.l.b16 %v1101
        %v1181 = vunpack.c.h.b16 %v1101
        %v1182 = vunpack.c.l.b16 %v1102
        %v1183 = vunpack.c.h.b16 %v1102
        %v1184 = vunpack.c.l.b16 %v1103
        %v1185 = vunpack.c.h.b16 %v1103
        %v1186 = vunpack.c.l.b16 %v1104
        %v1187 = vunpack.c.h.b16 %v1104
        %v1188 = vunpack.c.l.b16 %v1105
        %v1189 = vunpack.c.h.b16 %v1105
        %v1190 = vunpack.c.l.b16 %v1106
        %v1191 = vunpack.c.h.b16 %v1106
        %v1192 = vunpack.c.l.b16 %v1107
        %v1193 = vunpack.c.h.b16 %v1107
        %v1194 = vunpack.c.l.b16 %v1108
        %v1195 = vunpack.c.h.b16 %v1108
        %v1196 = vunpack.c.l.b16 %v1109
        %v1197 = vunpack.c.h.b16 %v1109
        %v1198 = vunpack.c.l.b16 %v1110
        %v1199 = vunpack.c.h.b16 %v1110
        %v1200 = vunpack.c.l.b16 %v1111
        %v1201 = vunpack.c.h.b16 %v1111
        %v1202 = vunpack.c.l.b16 %v1112
        %v1203 = vunpack.c.h.b16 %v1112
        %v1204 = vunpack.c.l.b16 %v1113
        %v1205 = vunpack.c.h.b16 %v1113
        %v1206 = vunpack.c.l.b16 %v1114
        %v1207 = vunpack.c.h.b16 %v1114
        %v1208 = vunpack.c.l.b16 %v1115
        %v1209 = vunpack.c.h.b16 %v1115
        %v1210 = vunpack.c.l.b16 %v1116
        %v1211 = vunpack.c.h.b16 %v1116
        %v1212 = vunpack.c.l.b16 %v1117
        %v1213 = vunpack.c.h.b16 %v1117
        %v1214 = vpack.c.b16 %v1152, %v1150
        %v1215 = vpack.c.b16 %v1153, %v1151
        %v1216 = vpack.c.b16 %v1156, %v1154
        %v1217 = vpack.c.b16 %v1157, %v1155
        %v1218 = vpack.c.b16 %v1160, %v1158
        %v1219 = vpack.c.b16 %v1161, %v1159
        %v1220 = vpack.c.b16 %v1164, %v1162
        %v1221 = vpack.c.b16 %v1165, %v1163
        %v1222 = vpack.c.b16 %v1168, %v1166
        %v1223 = vpack.c.b16 %v1169, %v1167
        %v1224 = vpack.c.b16 %v1172, %v1170
        %v1225 = vpack.c.b16 %v1173, %v1171
        %v1226 = vpack.c.b16 %v1176, %v1174
        %v1227 = vpack.c.b16 %v1177, %v1175
        %v1228 = vpack.c.b16 %v1180, %v1178
        %v1229 = vpack.c.b16 %v1181, %v1179
        %v1230 = vpack.c.b16 %v1184, %v1182
        %v1231 = vpack.c.b16 %v1185, %v1183
        %v1232 = vpack.c.b16 %v1188, %v1186
        %v1233 = vpack.c.b16 %v1189, %v1187
        %v1234 = vpack.c.b16 %v1192, %v1190
        %v1235 = vpack.c.b16 %v1193, %v1191
        %v1236 = vpack.c.b16 %v1196, %v1194
        %v1237 = vpack.c.b16 %v1197, %v1195
        %v1238 = vpack.c.b16 %v1200, %v1198
        %v1239 = vpack.c.b16 %v1201, %v1199
        %v1240 = vpack.c.b16 %v1204, %v1202
        %v1241 = vpack.c.b16 %v1205, %v1203
        %v1242 = vpack.c.b16 %v1208, %v1206
        %v1243 = vpack.c.b16 %v1209, %v1207
        %v1244 = vpack.c.b16 %v1212, %v1210
        %v1245 = vpack.c.b16 %v1213, %v1211
        %1278 = vmatpush.bf16.msra.mxu0 %v1228
        %1279 = vmatpush.bf16.msra.mxu0 %v1226
        %1280 = vmatpush.bf16.msra.mxu0 %v1224
        %1281 = vmatpush.bf16.msra.mxu0 %v1222
        %1282 = vmatpush.bf16.msra.mxu0 %v1220
        %1283 = vmatpush.bf16.msra.mxu0 %v1218
        %1284 = vmatpush.bf16.msra.mxu0 %v1216
        %1285 = vmatpush.bf16.msra.mxu0 %v1214
        %1286 = vmatmul.bf16.gmra.mxu0 %v1084
        %v1287 = vpop.f32.mrf.mxu0
        %v1288 = vadd.f32 0.0, %v1287
        %v1289 = vpop.f32.mrf.mxu0
        %v1290 = vadd.f32 0.0, %v1289
        %1291 = vdwg.mxu0
        %1292 = vmatpush.bf16.msra.mxu0 %v1244
        %1293 = vmatpush.bf16.msra.mxu0 %v1242
        %1294 = vmatpush.bf16.msra.mxu0 %v1240
        %1295 = vmatpush.bf16.msra.mxu0 %v1238
        %1296 = vmatpush.bf16.msra.mxu0 %v1236
        %1297 = vmatpush.bf16.msra.mxu0 %v1234
        %1298 = vmatpush.bf16.msra.mxu0 %v1232
        %1299 = vmatpush.bf16.msra.mxu0 %v1230
        %1300 = vmatmul.bf16.gmra.mxu0 %v1085
        %v1301 = vpop.f32.mrf.mxu0
        %v1302 = vadd.f32 %v1288, %v1301
        %v1303 = vpop.f32.mrf.mxu0
        %v1304 = vadd.f32 %v1290, %v1303
        %1305 = vdwg.mxu0
        %1306 = vmatpush.bf16.msra.mxu0 %v1229
        %1307 = vmatpush.bf16.msra.mxu0 %v1227
        %1308 = vmatpush.bf16.msra.mxu0 %v1225
        %1309 = vmatpush.bf16.msra.mxu0 %v1223
        %1310 = vmatpush.bf16.msra.mxu0 %v1221
        %1311 = vmatpush.bf16.msra.mxu0 %v1219
        %1312 = vmatpush.bf16.msra.mxu0 %v1217
        %1313 = vmatpush.bf16.msra.mxu0 %v1215
        %1314 = vmatmul.bf16.gmra.mxu0 %v1084
        %v1315 = vpop.f32.mrf.mxu0
        %v1316 = vadd.f32 0.0, %v1315
        %v1317 = vpop.f32.mrf.mxu0
        %v1318 = vadd.f32 0.0, %v1317
        %1319 = vdwg.mxu0
        %1320 = vmatpush.bf16.msra.mxu0 %v1245
        %1321 = vmatpush.bf16.msra.mxu0 %v1243
        %1322 = vmatpush.bf16.msra.mxu0 %v1241
        %1323 = vmatpush.bf16.msra.mxu0 %v1239
        %1324 = vmatpush.bf16.msra.mxu0 %v1237
        %1325 = vmatpush.bf16.msra.mxu0 %v1235
        %1326 = vmatpush.bf16.msra.mxu0 %v1233
        %1327 = vmatpush.bf16.msra.mxu0 %v1231
        %1328 = vmatmul.bf16.gmra.mxu0 %v1085
        %v1329 = vpop.f32.mrf.mxu0
        %v1330 = vadd.f32 %v1316, %v1329
        %v1331 = vpop.f32.mrf.mxu0
        %v1332 = vadd.f32 %v1318, %v1331
        %1333 = vdwg.mxu0
        %v1334 = vadd.f32 %v1080, %v1302
        %v1335 = vadd.f32 %v1081, %v1330
        %v1336 = vadd.f32 %v1082, %v1304
        %v1337 = vadd.f32 %v1083, %v1332
        %1338 = vst [vmem:[#allocation3] sm:$0xff] %v1334
        %1339 = vst [vmem:[#allocation3 + $0x8] sm:$0xff] %v1335
        %1340 = vst [vmem:[#allocation3 + $0x10] sm:$0xff] %v1336
        %1341 = vst [vmem:[#allocation3 + $0x18] sm:$0xff] %v1337
        %p1342 = scmp.eq.s32.totalorder %s26, 3
        // Predicated region
        $region95: #{vit_binary_classifier_forward.11} parent=81 // pred_check
          %p1343 = pneg %p1342
        $region96: #{vit_binary_classifier_forward.11} parent=81 // pred_check_branch
          %1345 = sbr.rel (%p1343) target = $region98
        $region97: #{vit_binary_classifier_forward.11} parent=81 // pred_region
          %v1346 = vld [vmem:[#allocation3] sm:$0xff]
          %v1347 = vld [vmem:[#allocation3 + $0x8] sm:$0xff]
          %v1348 = vld [vmem:[#allocation3 + $0x10] sm:$0xff]
          %v1349 = vld [vmem:[#allocation3 + $0x18] sm:$0xff]
          %v1350 = vld [vmem:[%s6] sm:$0x3]
          %v1352 = vperm.slane %v1350, 0
          %v1353 = vperm.slane %v1350, 1
          %v1356 = vadd.f32 %v1346, %v1352
          %v1357 = vadd.f32 %v1347, %v1353
          %v1358 = vadd.f32 %v1348, %v1352
          %v1359 = vadd.f32 %v1349, %v1353
          %v1360 = vld [vmem:[%s527] sm:$0xff]
          %v1361 = vld [vmem:[%s527 + $0x8] sm:$0xff]
          %v1362 = vunpack.c.l.bf16 %v1360
          %v1363 = vunpack.c.h.bf16 %v1360
          %v1364 = vunpack.c.l.bf16 %v1361
          %v1365 = vunpack.c.h.bf16 %v1361
          %v1366 = vadd.f32 %v1356, %v1362
          %v1367 = vadd.f32 %v1357, %v1363
          %v1368 = vadd.f32 %v1358, %v1364
          %v1369 = vadd.f32 %v1359, %v1365
          %v1370 = vpack.c.bf16 %v1367, %v1366
          %v1371 = vpack.c.bf16 %v1369, %v1368
          %1372 = vst [vmem:[%s541] sm:$0xff] %v1370
          %1373 = vst [vmem:[%s541 + $0x8] sm:$0xff] %v1371
        $region98: #{vit_binary_classifier_forward.11} parent=81 // pred_fallthru
          _
        %s1374 = smul.u32 2, %s25
        %p1375 = scmp.lt.s32.totalorder %s1374, 1
        %s1376 = scalar_select %p1375, %s1374, 1
        %s1377 = smul.addr %s1376, 2
        %s1378 = smul.addr %s1377, 4
        %s1379 = scalar_lea.vmem %s7, %s1378
        // Predicated region
        $region99: #{vit_binary_classifier_forward.11} parent=81 // pred_check
          %p1380 = pneg %p218
        $region100: #{vit_binary_classifier_forward.11} parent=81 // pred_check_branch
          %1382 = sbr.rel (%p1380) target = $region102
        $region101: #{vit_binary_classifier_forward.11} parent=81 // pred_region
          %s1383 = smul.u32 2, %s25
        $region102: #{vit_binary_classifier_forward.11} parent=81 // pred_fallthru
          _
        // Predicated region
        $region103: #{vit_binary_classifier_forward.11} parent=81 // pred_check
          %p1384 = pneg %p218
        $region104: #{vit_binary_classifier_forward.11} parent=81 // pred_check_branch
          %1386 = sbr.rel (%p1384) target = $region106
        $region105: #{vit_binary_classifier_forward.11} parent=81 // pred_region
          %s1387 = smul.u32 2, %s25
          %p1388 = scmp.lt.s32.totalorder %s1387, 1
          %s1389 = scalar_select %p1388, %s1387, 1
          %s1390 = smul.addr %s1389, 2
          %s1391 = smul.addr %s1390, 4
          %s1392 = scalar_lea.vmem %s7, %s1391
        $region106: #{vit_binary_classifier_forward.11} parent=81 // pred_fallthru
          _
      $region82: #{vit_binary_classifier_forward.11} parent=5 // pred_fallthru
        _
      %p1393 = scmp.le.s32.totalorder 2, %s16
      // Predicated region
      $region107: #{vit_binary_classifier_forward.11} parent=5 // pred_check
        %p1394 = pneg %p1393
      $region108: #{vit_binary_classifier_forward.11} parent=5 // pred_check_branch
        %1396 = sbr.rel (%p1394) target = $region110
      $region109: #{vit_binary_classifier_forward.11} parent=5 // pred_region
        %s1397 = ssub.s32 %s16, 2
      $region110: #{vit_binary_classifier_forward.11} parent=5 // pred_fallthru
        _
    $region6: #{vit_binary_classifier_forward.11} parent=1 // loop_footer
      %s20 = sadd.s32 1, %s16
    $region7: #{vit_binary_classifier_forward.11} parent=1 // loop_footer_branch
      %15 = sbr.rel target = $region3
    $region8: #{vit_binary_classifier_forward.11} parent=1 // loop_exit
      _
    %1398 = vsyncpa [#allocation6], 1
    %s1399 = scalar_lea.sflag [#allocation6], 1
    %1400 = vsyncpa %s1399, 1

// kernel: vit_binary_classifier_forward.15
$region0: #{vit_binary_classifier_forward.15}
  #allocation0 [shape = 'u32[]', space=smem, size = 0x4, offset = 0x4, fixed_abs, tag = 'smem constant byte address 0x4 - core index']
  #allocation1 [shape = 'u32[72,128]{1,0:T(1,128)}', space=vmem, size = 0x9000, scoped, tag = 'internal scratch']
  #allocation2 [shape = 'f32[8,128]{1,0:T(8,128)}', space=vmem, size = 0x1000, scoped, tag = 'scratch operand']
  #allocation3 [shape = 'bf16[8,256]{1,0:T(8,128)(2,1)}', space=vmem, size = 0x1000, scoped, tag = 'scratch operand']
  %s0 = inlined_call_operand.vmem [shape: bf16[8,256], index: 0, kind: input, shape index: {}]
  %s1 = inlined_call_operand.vmem [shape: f32[1,256], index: 1, kind: input, shape index: {}]
  %s2 = inlined_call_operand.vmem [shape: f32[1,256], index: 2, kind: input, shape index: {}]
  %s3 = inlined_call_operand.vmem [shape: bf16[256,128], index: 3, kind: input, shape index: {}]
  %s4 = inlined_call_operand.vmem [shape: f32[1,128], index: 4, kind: input, shape index: {}]
  %s5 = inlined_call_operand.vmem [shape: f32[8,128], index: 5, kind: output, shape index: {}]
  %s6 = sld [smem:[#allocation0]]
  $region42: #{vit_binary_classifier_forward.15} parent=0
    _
  %s8 = ssub.s32 1, %s6
  %s9 = scalar_select 0, %s8, %s6
  // Predicated region
  $region2: #{vit_binary_classifier_forward.15} parent=0 // pred_check
    _
  $region3: #{vit_binary_classifier_forward.15} parent=0 // pred_check_branch
    %11 = sbr.rel (0) target = $region5
  $region4: #{vit_binary_classifier_forward.15} parent=0 // pred_region
    _
  $region5: #{vit_binary_classifier_forward.15} parent=0 // pred_fallthru
    _
  // Predicated region
  $region6: #{vit_binary_classifier_forward.15} parent=0 // pred_check
    _
  $region7: #{vit_binary_classifier_forward.15} parent=0 // pred_check_branch
    %13 = sbr.rel (0) target = $region9
  $region8: #{vit_binary_classifier_forward.15} parent=0 // pred_region
    _
  $region9: #{vit_binary_classifier_forward.15} parent=0 // pred_fallthru
    _
  // Predicated region
  $region10: #{vit_binary_classifier_forward.15} parent=0 // pred_check
    _
  $region11: #{vit_binary_classifier_forward.15} parent=0 // pred_check_branch
    %15 = sbr.rel (0) target = $region13
  $region12: #{vit_binary_classifier_forward.15} parent=0 // pred_region
    _
  $region13: #{vit_binary_classifier_forward.15} parent=0 // pred_fallthru
    _
  // Predicated region
  $region14: #{vit_binary_classifier_forward.15} parent=0 // pred_check
    _
  $region15: #{vit_binary_classifier_forward.15} parent=0 // pred_check_branch
    %17 = sbr.rel (0) target = $region17
  $region16: #{vit_binary_classifier_forward.15} parent=0 // pred_region
    _
  $region17: #{vit_binary_classifier_forward.15} parent=0 // pred_fallthru
    _
  // Predicated region
  $region18: #{vit_binary_classifier_forward.15} parent=0 // pred_check
    _
  $region19: #{vit_binary_classifier_forward.15} parent=0 // pred_check_branch
    %19 = sbr.rel (0) target = $region21
  $region20: #{vit_binary_classifier_forward.15} parent=0 // pred_region
    _
  $region21: #{vit_binary_classifier_forward.15} parent=0 // pred_fallthru
    _
  %p20 = scmp.eq.s32.totalorder 0, 0
  // Predicated region
  $region22: #{vit_binary_classifier_forward.15} parent=0 // pred_check
    %p21 = pneg %p20
  $region23: #{vit_binary_classifier_forward.15} parent=0 // pred_check_branch
    %23 = sbr.rel (%p21) target = $region25
  $region24: #{vit_binary_classifier_forward.15} parent=0 // pred_region
    %24 = vst [vmem:[#allocation2] sm:$0xff] 0.0
  $region25: #{vit_binary_classifier_forward.15} parent=0 // pred_fallthru
    _
  %p25 = scmp.eq.s32.totalorder 0, 0
  %p26 = pnand %p25, %p20
  %p27 = pneg %p26
  // Predicated region
  $region26: #{vit_binary_classifier_forward.15} parent=0 // pred_check
    _
  $region27: #{vit_binary_classifier_forward.15} parent=0 // pred_check_branch
    %29 = sbr.rel (%p26) target = $region29
  $region28: #{vit_binary_classifier_forward.15} parent=0 // pred_region
    %v30 = vld [vmem:[%s0] sm:$0xff]
    %v31 = vunpack.c.l.bf16 %v30
    %v32 = vunpack.c.h.bf16 %v30
    %v33 = vadd.f32 %v31, %v32
    %34 = vadd.xlane.f32.xlu0 %v33
    %v35 = vpop.xlane.xlu0 %34
    %v36 = vrcp.pop 256.0
    %v37 = vmul.f32 256.0, %v36
    %v38 = vsub.f32 1.0, %v37
    %v39 = vmul.f32 %v36, %v38
    %v40 = vadd.f32 %v36, %v39
    %vm41 = vweird.f32 %v36
    %v42 = vsel %vm41, %v36, %v40
    %v43 = vmul.f32 %v35, %v42
    %v44 = vsub.f32 %v31, %v43
    %v45 = vsub.f32 %v32, %v43
    %v46 = vmul.f32 %v44, %v44
    %v47 = vmul.f32 %v45, %v45
    %v48 = vadd.f32 %v46, %v47
    %49 = vadd.xlane.f32.xlu0 %v48
    %v50 = vpop.xlane.xlu0 %49
    %v51 = vmul.f32 %v50, %v42
    %v52 = vadd.f32 %v51, 1e-06
    %v53 = vrsqrt.pop %v52
    %v54 = vmul.f32 %v53, %v52
    %v55 = vmul.f32 %v54, %v53
    %v56 = vmul.f32 0.5, %v55
    %v57 = vsub.f32 1.5, %v56
    %v58 = vmul.f32 %v53, %v57
    %vm59 = vweird.f32 %v52
    %vm60 = vweird.f32 %v53
    %vm61 = vmor %vm59, %vm60
    %v62 = vsel %vm61, %v53, %v58
    %v63 = vmul.f32 %v44, %v62
    %v64 = vmul.f32 %v45, %v62
    %v65 = vld [vmem:[%s1] sm:$0x3]
    %v67 = vperm.slane %v65, 0
    %v68 = vperm.slane %v65, 1
    %v71 = vmul.f32 %v63, %v67
    %v72 = vmul.f32 %v64, %v68
    %v73 = vld [vmem:[%s2] sm:$0x3]
    %v75 = vperm.slane %v73, 0
    %v76 = vperm.slane %v73, 1
    %v79 = vadd.f32 %v71, %v75
    %v80 = vadd.f32 %v72, %v76
    %v81 = vpack.c.bf16 %v80, %v79
    %82 = vst [vmem:[#allocation3] sm:$0xff] %v81
  $region29: #{vit_binary_classifier_forward.15} parent=0 // pred_fallthru
    _
  %v83 = vld [vmem:[#allocation3] sm:$0xff]
  %v84 = vld [vmem:[#allocation2] sm:$0xff]
  %v85 = vld [vmem:[%s3] sm:$0xf]
  %v86 = vld [vmem:[%s3 + $0x4] sm:$0xf]
  %v87 = vld [vmem:[%s3 + $0x8] sm:$0xf]
  %v88 = vld [vmem:[%s3 + $0xc] sm:$0xf]
  %v89 = vld [vmem:[%s3 + $0x10] sm:$0xf]
  %v90 = vld [vmem:[%s3 + $0x14] sm:$0xf]
  %v91 = vld [vmem:[%s3 + $0x18] sm:$0xf]
  %v92 = vld [vmem:[%s3 + $0x1c] sm:$0xf]
  %v93 = vld [vmem:[%s3 + $0x20] sm:$0xf]
  %v94 = vld [vmem:[%s3 + $0x24] sm:$0xf]
  %v95 = vld [vmem:[%s3 + $0x28] sm:$0xf]
  %v96 = vld [vmem:[%s3 + $0x2c] sm:$0xf]
  %v97 = vld [vmem:[%s3 + $0x30] sm:$0xf]
  %v98 = vld [vmem:[%s3 + $0x34] sm:$0xf]
  %v99 = vld [vmem:[%s3 + $0x38] sm:$0xf]
  %v100 = vld [vmem:[%s3 + $0x3c] sm:$0xf]
  %v101 = vld [vmem:[%s3 + $0x40] sm:$0xf]
  %v102 = vld [vmem:[%s3 + $0x44] sm:$0xf]
  %v103 = vld [vmem:[%s3 + $0x48] sm:$0xf]
  %v104 = vld [vmem:[%s3 + $0x4c] sm:$0xf]
  %v105 = vld [vmem:[%s3 + $0x50] sm:$0xf]
  %v106 = vld [vmem:[%s3 + $0x54] sm:$0xf]
  %v107 = vld [vmem:[%s3 + $0x58] sm:$0xf]
  %v108 = vld [vmem:[%s3 + $0x5c] sm:$0xf]
  %v109 = vld [vmem:[%s3 + $0x60] sm:$0xf]
  %v110 = vld [vmem:[%s3 + $0x64] sm:$0xf]
  %v111 = vld [vmem:[%s3 + $0x68] sm:$0xf]
  %v112 = vld [vmem:[%s3 + $0x6c] sm:$0xf]
  %v113 = vld [vmem:[%s3 + $0x70] sm:$0xf]
  %v114 = vld [vmem:[%s3 + $0x74] sm:$0xf]
  %v115 = vld [vmem:[%s3 + $0x78] sm:$0xf]
  %v116 = vld [vmem:[%s3 + $0x7c] sm:$0xf]
  %v118 = vunpack.c.l.b16 %v83
  %v119 = vunpack.c.h.b16 %v83
  %v120 = vpack.c.b16 %v118, %v118
  %v121 = vpack.c.b16 %v119, %v119
  %v156 = vunpack.c.l.b16 %v85
  %v157 = vunpack.c.l.b16 %v86
  %v158 = vunpack.c.l.b16 %v87
  %v159 = vunpack.c.l.b16 %v88
  %v160 = vunpack.c.l.b16 %v89
  %v161 = vunpack.c.l.b16 %v90
  %v162 = vunpack.c.l.b16 %v91
  %v163 = vunpack.c.l.b16 %v92
  %v164 = vunpack.c.l.b16 %v93
  %v165 = vunpack.c.l.b16 %v94
  %v166 = vunpack.c.l.b16 %v95
  %v167 = vunpack.c.l.b16 %v96
  %v168 = vunpack.c.l.b16 %v97
  %v169 = vunpack.c.l.b16 %v98
  %v170 = vunpack.c.l.b16 %v99
  %v171 = vunpack.c.l.b16 %v100
  %v172 = vunpack.c.l.b16 %v101
  %v173 = vunpack.c.l.b16 %v102
  %v174 = vunpack.c.l.b16 %v103
  %v175 = vunpack.c.l.b16 %v104
  %v176 = vunpack.c.l.b16 %v105
  %v177 = vunpack.c.l.b16 %v106
  %v178 = vunpack.c.l.b16 %v107
  %v179 = vunpack.c.l.b16 %v108
  %v180 = vunpack.c.l.b16 %v109
  %v181 = vunpack.c.l.b16 %v110
  %v182 = vunpack.c.l.b16 %v111
  %v183 = vunpack.c.l.b16 %v112
  %v184 = vunpack.c.l.b16 %v113
  %v185 = vunpack.c.l.b16 %v114
  %v186 = vunpack.c.l.b16 %v115
  %v187 = vunpack.c.l.b16 %v116
  %v188 = vpack.c.b16 %v157, %v156
  %v189 = vpack.c.b16 %v159, %v158
  %v190 = vpack.c.b16 %v161, %v160
  %v191 = vpack.c.b16 %v163, %v162
  %v192 = vpack.c.b16 %v165, %v164
  %v193 = vpack.c.b16 %v167, %v166
  %v194 = vpack.c.b16 %v169, %v168
  %v195 = vpack.c.b16 %v171, %v170
  %v196 = vpack.c.b16 %v173, %v172
  %v197 = vpack.c.b16 %v175, %v174
  %v198 = vpack.c.b16 %v177, %v176
  %v199 = vpack.c.b16 %v179, %v178
  %v200 = vpack.c.b16 %v181, %v180
  %v201 = vpack.c.b16 %v183, %v182
  %v202 = vpack.c.b16 %v185, %v184
  %v203 = vpack.c.b16 %v187, %v186
  %220 = vmatpush.bf16.msra.mxu0 %v195
  %221 = vmatpush.bf16.msra.mxu0 %v194
  %222 = vmatpush.bf16.msra.mxu0 %v193
  %223 = vmatpush.bf16.msra.mxu0 %v192
  %224 = vmatpush.bf16.msra.mxu0 %v191
  %225 = vmatpush.bf16.msra.mxu0 %v190
  %226 = vmatpush.bf16.msra.mxu0 %v189
  %227 = vmatpush.bf16.msra.mxu0 %v188
  %228 = vmatmul.bf16.gmra.mxu0 %v120
  %v229 = vpop.f32.mrf.mxu0
  %v230 = vadd.f32 0.0, %v229
  %v231 = vpop.f32.mrf.mxu0
  %232 = vdwg.mxu0
  %233 = vmatpush.bf16.msra.mxu0 %v203
  %234 = vmatpush.bf16.msra.mxu0 %v202
  %235 = vmatpush.bf16.msra.mxu0 %v201
  %236 = vmatpush.bf16.msra.mxu0 %v200
  %237 = vmatpush.bf16.msra.mxu0 %v199
  %238 = vmatpush.bf16.msra.mxu0 %v198
  %239 = vmatpush.bf16.msra.mxu0 %v197
  %240 = vmatpush.bf16.msra.mxu0 %v196
  %241 = vmatmul.bf16.gmra.mxu0 %v121
  %v242 = vpop.f32.mrf.mxu0
  %v243 = vadd.f32 %v230, %v242
  %v244 = vpop.f32.mrf.mxu0
  %245 = vdwg.mxu0
  %v246 = vadd.f32 %v84, %v243
  %247 = vst [vmem:[#allocation2] sm:$0xff] %v246
  // Predicated region
  $region30: #{vit_binary_classifier_forward.15} parent=0 // pred_check
    %p248 = pneg %p20
  $region31: #{vit_binary_classifier_forward.15} parent=0 // pred_check_branch
    %250 = sbr.rel (%p248) target = $region33
  $region32: #{vit_binary_classifier_forward.15} parent=0 // pred_region
    %v251 = vld [vmem:[#allocation2] sm:$0xff]
    %v252 = vld [vmem:[%s4] sm:$0x1]
    %v254 = vperm.slane %v252, 0
    %v256 = vadd.f32 %v251, %v254
    %v257 = vxor.u32 %v256, 2147483648
    %v258 = vmul.f32 %v257, 1.442695
    %v259 = vpow.pop %v258
    %v260 = vadd.f32 %v259, 1.0
    %v261 = vrcp.pop %v260
    %v262 = vmul.f32 %v260, %v261
    %v263 = vsub.f32 1.0, %v262
    %v264 = vmul.f32 %v261, %v263
    %v265 = vadd.f32 %v261, %v264
    %vm266 = vweird.f32 %v260
    %vm267 = vweird.f32 %v261
    %vm268 = vmor %vm266, %vm267
    %v269 = vsel %vm268, %v261, %v265
    %v270 = vand.u32 2147483647, %v260
    %vm271 = vcmp.eq.f32.partialorder %v270, 8.507059e+37
    %v272 = vand.u32 %v260, 2147483648
    %v273 = vor.u32 1.1754944e-38, %v272
    %v274 = vsel %vm271, %v273, %v269
    %v275 = vmul.f32 1.0, %v274
    %276 = vst [vmem:[%s5] sm:$0xff] %v275
  $region33: #{vit_binary_classifier_forward.15} parent=0 // pred_fallthru
    _
  // Predicated region
  $region34: #{vit_binary_classifier_forward.15} parent=0 // pred_check
    _
  $region35: #{vit_binary_classifier_forward.15} parent=0 // pred_check_branch
    %278 = sbr.rel (0) target = $region37
  $region36: #{vit_binary_classifier_forward.15} parent=0 // pred_region
    _
  $region37: #{vit_binary_classifier_forward.15} parent=0 // pred_fallthru
    _
  // Predicated region
  $region38: #{vit_binary_classifier_forward.15} parent=0 // pred_check
    _
  $region39: #{vit_binary_classifier_forward.15} parent=0 // pred_check_branch
    %280 = sbr.rel (0) target = $region41
  $region40: #{vit_binary_classifier_forward.15} parent=0 // pred_region
    _
  $region41: #{vit_binary_classifier_forward.15} parent=0 // pred_fallthru
    _

// kernel: vit_binary_classifier_forward.14
$region0: #{vit_binary_classifier_forward.14}
  #allocation0 [shape = 'u32[]', space=smem, size = 0x4, offset = 0x4, fixed_abs, tag = 'smem constant byte address 0x4 - core index']
  #allocation1 [shape = 'u32[72,128]{1,0:T(1,128)}', space=vmem, size = 0x9000, scoped, tag = 'internal scratch']
  #allocation2 [shape = 'bf16[16,256]{1,0:T(8,128)(2,1)}', space=vmem, size = 0x2000, scoped, tag = 'scratch operand']
  #allocation3 [shape = 'f32[16,256]{1,0:T(8,128)}', space=vmem, size = 0x4000, scoped, tag = 'scratch operand']
  %s0 = inlined_call_operand.vmem [shape: bf16[16,256], index: 0, kind: input, shape index: {}]
  %s1 = inlined_call_operand.vmem [shape: f32[1,256], index: 1, kind: input, shape index: {}]
  %s2 = inlined_call_operand.vmem [shape: f32[1,256], index: 2, kind: input, shape index: {}]
  %s3 = inlined_call_operand.hbm [shape: bf16[256,1024], index: 3, kind: input, shape index: {}]
  %s4 = inlined_call_operand.vmem [shape: f32[1,1024], index: 4, kind: input, shape index: {}]
  %s5 = inlined_call_operand.hbm [shape: bf16[1024,256], index: 5, kind: input, shape index: {}]
  %s6 = inlined_call_operand.vmem [shape: f32[1,256], index: 6, kind: input, shape index: {}]
  %s7 = inlined_call_operand.vmem [shape: bf16[16,256], index: 7, kind: output, shape index: {}]
  %s8 = sld [smem:[#allocation0]]
  $region77: #{vit_binary_classifier_forward.14} parent=0
    _
  %s10 = ssub.s32 1, %s8
  %s11 = scalar_select 0, %s10, %s8
  $region1: #{vit_binary_classifier_forward.14} parent=0
    #allocation4 [shape = 'u8[262144]{0}', space=vmem, size = 0x40000, scoped, tag = 'input window, operand 3']
    #allocation5 [shape = 's32[2]{0}', space=sflag, size = 0x8, scoped, tag = 'scoped memory for vit_binary_classifier_forward.14']
    #allocation6 [shape = 'u8[262144]{0}', space=vmem, size = 0x40000, scoped, tag = 'input window, operand 5']
    #allocation7 [shape = 's32[2]{0}', space=sflag, size = 0x8, scoped, tag = 'scoped memory for vit_binary_classifier_forward.14']
    %12 = vsyncpa [#allocation5], 0
    %s13 = scalar_lea.sflag [#allocation5], 1
    %14 = vsyncpa %s13, 0
    %15 = vsyncpa [#allocation7], 0
    %s16 = scalar_lea.sflag [#allocation7], 1
    %17 = vsyncpa %s16, 0
    loop: start=0, step=1, limit=6
    $region2: #{vit_binary_classifier_forward.14} parent=1 // loop_pre_header
      _
    $region3: #{vit_binary_classifier_forward.14} parent=1 // loop_header
      %s19 = sphi 0, %s23
      %p20 = scmp.ge.s32.totalorder %s19, 6
      %s26 = sphi 0, %s38
      %s27 = sphi 0, %s34
      %s28 = sphi 0, %s26
      %s29 = sphi 0, %s27
      %s30 = sphi 0, %s28
      %s31 = sphi 0, %s29
      %s41 = sphi 0, %s43
      %s44 = sphi 0, %s41
      %s45 = sphi 0, %s44
      %s61 = sphi 0, %s45
      %s65 = sphi 0, %s65
      %s67 = sphi 0, %s65
      %s68 = sphi 0, %s67
      %s82 = sphi 0, %s68
      %s86 = sphi 0, %s86
      %s88 = sphi 0, %s86
      %s89 = sphi 0, %s88
      %s103 = sphi 0, %s89
      %s109 = sphi 0, %s111
      %s112 = sphi 0, %s109
      %s113 = sphi 0, %s112
      %s129 = sphi 0, %s113
      %s135 = sphi 0, %s137
      %s138 = sphi 0, %s135
      %s139 = sphi 0, %s138
      %s155 = sphi 0, %s139
      %s161 = sphi 0, %s163
      %s164 = sphi 0, %s161
      %s165 = sphi 0, %s164
      %s181 = sphi 0, %s165
      %s185 = sphi 0, %s185
      %s187 = sphi 0, %s185
      %s188 = sphi 0, %s187
      %s202 = sphi 0, %s188
      %s208 = sphi 0, %s210
      %s211 = sphi 0, %s208
      %s212 = sphi 0, %s211
      %s228 = sphi 0, %s212
    $region4: #{vit_binary_classifier_forward.14} parent=1 // loop_header_branch
      %22 = sbr.rel (%p20) target = $region8
    $region5: #{vit_binary_classifier_forward.14} parent=1 // loop_body
      %s24 = ssub.s32 %s19, 1
      %s25 = ssub.s32 %s19, 2
      %s32 = sadd.s32 1, %s27
      %p33 = scmp.ge.s32.totalorder %s32, 4
      %s34 = scalar_select %p33, 0, %s32
      %s35 = sadd.s32 1, %s26
      %s36 = scalar_select %p33, %s35, %s26
      %p37 = scmp.ge.s32.totalorder %s36, 1
      %s38 = scalar_select %p37, 0, %s36
      %s39 = ssub.s32 %s26, %s38
      %p40 = scmp.eq.s32.totalorder %s39, 0
      %s42 = sadd.s32 %s41, 1
      %s43 = scalar_select %p40, %s41, %s42
      %p46 = pneg %p40
      %p47 = scmp.eq.s32.totalorder %s19, 3
      %p48 = por %p46, %p47
      %p49 = scmp.ne.s32.totalorder %s41, %s44
      %p50 = scmp.eq.s32.totalorder %s19, 0
      %p51 = por %p49, %p50
      %p52 = scmp.ne.s32.totalorder %s41, %s44
      %p53 = scmp.eq.s32.totalorder %s24, 3
      %p54 = por %p52, %p53
      %p55 = scmp.ne.s32.totalorder %s44, %s45
      %p56 = scmp.eq.s32.totalorder %s24, 0
      %p57 = por %p55, %p56
      %p58 = scmp.ne.s32.totalorder %s44, %s45
      %p59 = scmp.eq.s32.totalorder %s25, 3
      %p60 = por %p58, %p59
      %p62 = scmp.ne.s32.totalorder %s45, %s61
      %p63 = scmp.eq.s32.totalorder %s25, 0
      %p64 = por %p62, %p63
      %s66 = sadd.s32 %s65, 1
      %p69 = scmp.eq.s32.totalorder %s19, 3
      %p70 = scmp.ne.s32.totalorder %s65, %s67
      %p71 = scmp.eq.s32.totalorder %s19, 0
      %p72 = por %p70, %p71
      %p73 = scmp.ne.s32.totalorder %s65, %s67
      %p74 = scmp.eq.s32.totalorder %s24, 3
      %p75 = por %p73, %p74
      %p76 = scmp.ne.s32.totalorder %s67, %s68
      %p77 = scmp.eq.s32.totalorder %s24, 0
      %p78 = por %p76, %p77
      %p79 = scmp.ne.s32.totalorder %s67, %s68
      %p80 = scmp.eq.s32.totalorder %s25, 3
      %p81 = por %p79, %p80
      %p83 = scmp.ne.s32.totalorder %s68, %s82
      %p84 = scmp.eq.s32.totalorder %s25, 0
      %p85 = por %p83, %p84
      %s87 = sadd.s32 %s86, 1
      %p90 = scmp.eq.s32.totalorder %s19, 3
      %p91 = scmp.ne.s32.totalorder %s86, %s88
      %p92 = scmp.eq.s32.totalorder %s19, 0
      %p93 = por %p91, %p92
      %p94 = scmp.ne.s32.totalorder %s86, %s88
      %p95 = scmp.eq.s32.totalorder %s24, 3
      %p96 = por %p94, %p95
      %p97 = scmp.ne.s32.totalorder %s88, %s89
      %p98 = scmp.eq.s32.totalorder %s24, 0
      %p99 = por %p97, %p98
      %p100 = scmp.ne.s32.totalorder %s88, %s89
      %p101 = scmp.eq.s32.totalorder %s25, 3
      %p102 = por %p100, %p101
      %p104 = scmp.ne.s32.totalorder %s89, %s103
      %p105 = scmp.eq.s32.totalorder %s25, 0
      %p106 = por %p104, %p105
      %s107 = ssub.s32 %s27, %s34
      %p108 = scmp.eq.s32.totalorder %s107, 0
      %s110 = sadd.s32 %s109, 1
      %s111 = scalar_select %p108, %s109, %s110
      %p114 = pneg %p108
      %p115 = scmp.eq.s32.totalorder %s19, 3
      %p116 = por %p114, %p115
      %p117 = scmp.ne.s32.totalorder %s109, %s112
      %p118 = scmp.eq.s32.totalorder %s19, 0
      %p119 = por %p117, %p118
      %p120 = scmp.ne.s32.totalorder %s109, %s112
      %p121 = scmp.eq.s32.totalorder %s24, 3
      %p122 = por %p120, %p121
      %p123 = scmp.ne.s32.totalorder %s112, %s113
      %p124 = scmp.eq.s32.totalorder %s24, 0
      %p125 = por %p123, %p124
      %p126 = scmp.ne.s32.totalorder %s112, %s113
      %p127 = scmp.eq.s32.totalorder %s25, 3
      %p128 = por %p126, %p127
      %p130 = scmp.ne.s32.totalorder %s113, %s129
      %p131 = scmp.eq.s32.totalorder %s25, 0
      %p132 = por %p130, %p131
      %s133 = ssub.s32 %s27, %s34
      %p134 = scmp.eq.s32.totalorder %s133, 0
      %s136 = sadd.s32 %s135, 1
      %s137 = scalar_select %p134, %s135, %s136
      %p140 = pneg %p134
      %p141 = scmp.eq.s32.totalorder %s19, 3
      %p142 = por %p140, %p141
      %p143 = scmp.ne.s32.totalorder %s135, %s138
      %p144 = scmp.eq.s32.totalorder %s19, 0
      %p145 = por %p143, %p144
      %p146 = scmp.ne.s32.totalorder %s135, %s138
      %p147 = scmp.eq.s32.totalorder %s24, 3
      %p148 = por %p146, %p147
      %p149 = scmp.ne.s32.totalorder %s138, %s139
      %p150 = scmp.eq.s32.totalorder %s24, 0
      %p151 = por %p149, %p150
      %p152 = scmp.ne.s32.totalorder %s138, %s139
      %p153 = scmp.eq.s32.totalorder %s25, 3
      %p154 = por %p152, %p153
      %p156 = scmp.ne.s32.totalorder %s139, %s155
      %p157 = scmp.eq.s32.totalorder %s25, 0
      %p158 = por %p156, %p157
      %s159 = ssub.s32 %s27, %s34
      %p160 = scmp.eq.s32.totalorder %s159, 0
      %s162 = sadd.s32 %s161, 1
      %s163 = scalar_select %p160, %s161, %s162
      %p166 = pneg %p160
      %p167 = scmp.eq.s32.totalorder %s19, 3
      %p168 = por %p166, %p167
      %p169 = scmp.ne.s32.totalorder %s161, %s164
      %p170 = scmp.eq.s32.totalorder %s19, 0
      %p171 = por %p169, %p170
      %p172 = scmp.ne.s32.totalorder %s161, %s164
      %p173 = scmp.eq.s32.totalorder %s24, 3
      %p174 = por %p172, %p173
      %p175 = scmp.ne.s32.totalorder %s164, %s165
      %p176 = scmp.eq.s32.totalorder %s24, 0
      %p177 = por %p175, %p176
      %p178 = scmp.ne.s32.totalorder %s164, %s165
      %p179 = scmp.eq.s32.totalorder %s25, 3
      %p180 = por %p178, %p179
      %p182 = scmp.ne.s32.totalorder %s165, %s181
      %p183 = scmp.eq.s32.totalorder %s25, 0
      %p184 = por %p182, %p183
      %s186 = sadd.s32 %s185, 1
      %p189 = scmp.eq.s32.totalorder %s19, 3
      %p190 = scmp.ne.s32.totalorder %s185, %s187
      %p191 = scmp.eq.s32.totalorder %s19, 0
      %p192 = por %p190, %p191
      %p193 = scmp.ne.s32.totalorder %s185, %s187
      %p194 = scmp.eq.s32.totalorder %s24, 3
      %p195 = por %p193, %p194
      %p196 = scmp.ne.s32.totalorder %s187, %s188
      %p197 = scmp.eq.s32.totalorder %s24, 0
      %p198 = por %p196, %p197
      %p199 = scmp.ne.s32.totalorder %s187, %s188
      %p200 = scmp.eq.s32.totalorder %s25, 3
      %p201 = por %p199, %p200
      %p203 = scmp.ne.s32.totalorder %s188, %s202
      %p204 = scmp.eq.s32.totalorder %s25, 0
      %p205 = por %p203, %p204
      %s206 = ssub.s32 %s26, %s38
      %p207 = scmp.eq.s32.totalorder %s206, 0
      %s209 = sadd.s32 %s208, 1
      %s210 = scalar_select %p207, %s208, %s209
      %p213 = pneg %p207
      %p214 = scmp.eq.s32.totalorder %s19, 3
      %p215 = por %p213, %p214
      %p216 = scmp.ne.s32.totalorder %s208, %s211
      %p217 = scmp.eq.s32.totalorder %s19, 0
      %p218 = por %p216, %p217
      %p219 = scmp.ne.s32.totalorder %s208, %s211
      %p220 = scmp.eq.s32.totalorder %s24, 3
      %p221 = por %p219, %p220
      %p222 = scmp.ne.s32.totalorder %s211, %s212
      %p223 = scmp.eq.s32.totalorder %s24, 0
      %p224 = por %p222, %p223
      %p225 = scmp.ne.s32.totalorder %s211, %s212
      %p226 = scmp.eq.s32.totalorder %s25, 3
      %p227 = por %p225, %p226
      %p229 = scmp.ne.s32.totalorder %s212, %s228
      %p230 = scmp.eq.s32.totalorder %s25, 0
      %p231 = por %p229, %p230
      %p232 = scmp.le.s32.totalorder 1, %s19
      %p233 = scmp.lt.s32.totalorder %s19, 5
      %p234 = pnand %p232, %p233
      %p235 = pneg %p234
      // Predicated region
      $region9: #{vit_binary_classifier_forward.14} parent=5 // pred_check
        _
      $region10: #{vit_binary_classifier_forward.14} parent=5 // pred_check_branch
        %237 = sbr.rel (%p234) target = $region12
      $region11: #{vit_binary_classifier_forward.14} parent=5 // pred_region
        %s238 = ssub.s32 %s19, 1
        // Predicated region
        $region13: #{vit_binary_classifier_forward.14} parent=11 // pred_check
          %p239 = pneg %p57
        $region14: #{vit_binary_classifier_forward.14} parent=11 // pred_check_branch
          %241 = sbr.rel (%p239) target = $region16
        $region15: #{vit_binary_classifier_forward.14} parent=11 // pred_region
          %s242 = smul.u32 2, %s28
          %p243 = scmp.lt.s32.totalorder %s242, 1
          %s244 = scalar_select %p243, %s242, 1
          %s245 = smul.addr %s244, 2
          %s246 = smul.addr %s245, 4
          %s247 = scalar_lea.vmem %s0, %s246
          %s248 = smul.u32 2, %s28
        $region16: #{vit_binary_classifier_forward.14} parent=11 // pred_fallthru
          _
        // Predicated region
        $region17: #{vit_binary_classifier_forward.14} parent=11 // pred_check
          %p249 = pneg %p78
        $region18: #{vit_binary_classifier_forward.14} parent=11 // pred_check_branch
          %251 = sbr.rel (%p249) target = $region20
        $region19: #{vit_binary_classifier_forward.14} parent=11 // pred_region
          _
        $region20: #{vit_binary_classifier_forward.14} parent=11 // pred_fallthru
          _
        // Predicated region
        $region21: #{vit_binary_classifier_forward.14} parent=11 // pred_check
          %p252 = pneg %p99
        $region22: #{vit_binary_classifier_forward.14} parent=11 // pred_check_branch
          %254 = sbr.rel (%p252) target = $region24
        $region23: #{vit_binary_classifier_forward.14} parent=11 // pred_region
          _
        $region24: #{vit_binary_classifier_forward.14} parent=11 // pred_fallthru
          _
        // Predicated region
        $region25: #{vit_binary_classifier_forward.14} parent=11 // pred_check
          %p255 = pneg %p198
        $region26: #{vit_binary_classifier_forward.14} parent=11 // pred_check_branch
          %257 = sbr.rel (%p255) target = $region28
        $region27: #{vit_binary_classifier_forward.14} parent=11 // pred_region
          _
        $region28: #{vit_binary_classifier_forward.14} parent=11 // pred_fallthru
          _
      $region12: #{vit_binary_classifier_forward.14} parent=5 // pred_fallthru
        _
      %p258 = scmp.lt.s32.totalorder %s19, 4
      // Predicated region
      $region29: #{vit_binary_classifier_forward.14} parent=5 // pred_check
        %p259 = pneg %p258
      $region30: #{vit_binary_classifier_forward.14} parent=5 // pred_check_branch
        %261 = sbr.rel (%p259) target = $region32
      $region31: #{vit_binary_classifier_forward.14} parent=5 // pred_region
        // Predicated region
        $region33: #{vit_binary_classifier_forward.14} parent=31 // pred_check
          %p262 = pneg %p119
        $region34: #{vit_binary_classifier_forward.14} parent=31 // pred_check_branch
          %264 = sbr.rel (%p262) target = $region36
        $region35: #{vit_binary_classifier_forward.14} parent=31 // pred_region
          %s265 = sand.u32 %s109, 1
          %s266 = scalar_lea.sflag [#allocation5], %s265
          %s267 = sand.u32 %s109, 1
          %s268 = smul.addr %s267, 256
          %s269 = scalar_lea.vmem [#allocation4], %s268
          %s270 = smul.u32 2, %s27
          %272 = vsyncadd %s266, 0
          %s273 = smul.addr %s270, 4
          %s274 = scalar_lea.hbm %s3, %s273
          %s275 = sshll.u32 %s274, 4
          %s276 = int_to_ptr.hbm [resolvable:$true] %s275
          %s277 = sshll.u32 %s269, 4
          %s278 = int_to_ptr.vmem [resolvable:$true] %s277
          %283 = dma.hbm_to_vmem [thread:$0]  %s276, 4096, %s278, %s266, 512, 128, 8
        $region36: #{vit_binary_classifier_forward.14} parent=31 // pred_fallthru
          _
        // Predicated region
        $region37: #{vit_binary_classifier_forward.14} parent=31 // pred_check
          %p284 = pneg %p145
        $region38: #{vit_binary_classifier_forward.14} parent=31 // pred_check_branch
          %286 = sbr.rel (%p284) target = $region40
        $region39: #{vit_binary_classifier_forward.14} parent=31 // pred_region
          %s287 = smul.u32 2, %s27
          %p288 = scmp.lt.s32.totalorder %s287, 7
          %s289 = scalar_select %p288, %s287, 7
          %s290 = scalar_lea.vmem %s4, %s289
          %s291 = smul.u32 2, %s27
        $region40: #{vit_binary_classifier_forward.14} parent=31 // pred_fallthru
          _
        // Predicated region
        $region41: #{vit_binary_classifier_forward.14} parent=31 // pred_check
          %p292 = pneg %p171
        $region42: #{vit_binary_classifier_forward.14} parent=31 // pred_check_branch
          %294 = sbr.rel (%p292) target = $region44
        $region43: #{vit_binary_classifier_forward.14} parent=31 // pred_region
          %s295 = sand.u32 %s161, 1
          %s296 = scalar_lea.sflag [#allocation7], %s295
          %s297 = sand.u32 %s161, 1
          %s298 = smul.addr %s297, 256
          %s299 = scalar_lea.vmem [#allocation6], %s298
          %s300 = smul.u32 32, %s27
          %302 = vsyncadd %s296, 0
          %s303 = smul.addr %s300, 2
          %s304 = smul.addr %s303, 4
          %s305 = scalar_lea.hbm %s5, %s304
          %s306 = sshll.u32 %s305, 4
          %s307 = int_to_ptr.hbm [resolvable:$true] %s306
          %s308 = sshll.u32 %s299, 4
          %s309 = int_to_ptr.vmem [resolvable:$true] %s308
          %314 = dma.hbm_to_vmem [thread:$0]  %s307, 4096, %s309, %s296, 128, 128, 8
        $region44: #{vit_binary_classifier_forward.14} parent=31 // pred_fallthru
          _
      $region32: #{vit_binary_classifier_forward.14} parent=5 // pred_fallthru
        _
      %p315 = scmp.le.s32.totalorder 1, %s19
      %p316 = scmp.lt.s32.totalorder %s19, 5
      %p317 = pnand %p315, %p316
      %p318 = pneg %p317
      // Predicated region
      $region45: #{vit_binary_classifier_forward.14} parent=5 // pred_check
        _
      $region46: #{vit_binary_classifier_forward.14} parent=5 // pred_check_branch
        %320 = sbr.rel (%p317) target = $region48
      $region47: #{vit_binary_classifier_forward.14} parent=5 // pred_region
        %s321 = ssub.s32 %s19, 1
        %s322 = sand.u32 %s112, 1
        %s323 = scalar_lea.sflag [#allocation5], %s322
        %s324 = sand.u32 %s112, 1
        %s325 = smul.addr %s324, 256
        %s326 = scalar_lea.vmem [#allocation4], %s325
        // Predicated region
        $region49: #{vit_binary_classifier_forward.14} parent=47 // pred_check
          %p327 = pneg %p125
        $region50: #{vit_binary_classifier_forward.14} parent=47 // pred_check_branch
          %329 = sbr.rel (%p327) target = $region52
        $region51: #{vit_binary_classifier_forward.14} parent=47 // pred_region
          %331 = dma.done %s323, 4096
        $region52: #{vit_binary_classifier_forward.14} parent=47 // pred_fallthru
          _
        %s332 = sand.u32 %s164, 1
        %s333 = scalar_lea.sflag [#allocation7], %s332
        %s334 = sand.u32 %s164, 1
        %s335 = smul.addr %s334, 256
        %s336 = scalar_lea.vmem [#allocation6], %s335
        // Predicated region
        $region53: #{vit_binary_classifier_forward.14} parent=47 // pred_check
          %p337 = pneg %p177
        $region54: #{vit_binary_classifier_forward.14} parent=47 // pred_check_branch
          %339 = sbr.rel (%p337) target = $region56
        $region55: #{vit_binary_classifier_forward.14} parent=47 // pred_region
          %341 = dma.done %s333, 4096
        $region56: #{vit_binary_classifier_forward.14} parent=47 // pred_fallthru
          _
        %s342 = smul.u32 2, %s28
        %p343 = scmp.lt.s32.totalorder %s342, 1
        %s344 = scalar_select %p343, %s342, 1
        %s345 = smul.addr %s344, 2
        %s346 = smul.addr %s345, 4
        %s347 = scalar_lea.vmem %s0, %s346
        %p348 = pneg %p57
        %p349 = pneg %p54
        %p350 = pneg %p78
        %p351 = pneg %p75
        %p352 = pneg %p99
        %p353 = pneg %p96
        %s354 = sand.u32 %s112, 1
        %s355 = scalar_lea.sflag [#allocation5], %s354
        %s356 = sand.u32 %s112, 1
        %s357 = smul.addr %s356, 256
        %s358 = scalar_lea.vmem [#allocation4], %s357
        %p359 = pneg %p125
        %p360 = pneg %p122
        %s361 = smul.u32 2, %s29
        %p362 = scmp.lt.s32.totalorder %s361, 7
        %s363 = scalar_select %p362, %s361, 7
        %s364 = scalar_lea.vmem %s4, %s363
        %p365 = pneg %p151
        %p366 = pneg %p148
        %s367 = sand.u32 %s164, 1
        %s368 = scalar_lea.sflag [#allocation7], %s367
        %s369 = sand.u32 %s164, 1
        %s370 = smul.addr %s369, 256
        %s371 = scalar_lea.vmem [#allocation6], %s370
        %p372 = pneg %p177
        %p373 = pneg %p174
        %p374 = pneg %p198
        %p375 = pneg %p195
        %p376 = pneg %p224
        %p377 = pneg %p221
        %s378 = smul.u32 2, %s28
        %p379 = scmp.lt.s32.totalorder %s378, 1
        %s380 = scalar_select %p379, %s378, 1
        %s381 = smul.addr %s380, 2
        %s382 = smul.addr %s381, 4
        %s383 = scalar_lea.vmem %s7, %s382
        %s384 = smul.u32 2, %s28
        %p385 = scmp.lt.s32.totalorder %s384, 1
        %s386 = scalar_select %p385, %s384, 1
        %s387 = smul.addr %s386, 2
        %s388 = smul.addr %s387, 4
        %s389 = scalar_lea.vmem %s0, %s388
        %s390 = smul.u32 2, %s28
        %s391 = smul.u32 2, %s29
        %s392 = smul.u32 2, %s29
        %p393 = scmp.lt.s32.totalorder %s392, 7
        %s394 = scalar_select %p393, %s392, 7
        %s395 = scalar_lea.vmem %s4, %s394
        %s396 = smul.u32 2, %s29
        %s397 = smul.u32 32, %s29
        %s398 = smul.u32 2, %s28
        %p399 = scmp.lt.s32.totalorder %s398, 1
        %s400 = scalar_select %p399, %s398, 1
        %s401 = smul.addr %s400, 2
        %s402 = smul.addr %s401, 4
        %s403 = scalar_lea.vmem %s7, %s402
        %s404 = smul.u32 2, %s28
        %p405 = scmp.eq.s32.totalorder %s29, 0
        // Predicated region
        $region57: #{vit_binary_classifier_forward.14} parent=47 // pred_check
          %p406 = pneg %p405
        $region58: #{vit_binary_classifier_forward.14} parent=47 // pred_check_branch
          %408 = sbr.rel (%p406) target = $region60
        $region59: #{vit_binary_classifier_forward.14} parent=47 // pred_region
          %v409 = vld [vmem:[%s389] sm:$0xff]
          %v410 = vld [vmem:[%s389 + $0x8] sm:$0xff]
          %v411 = vunpack.c.l.bf16 %v409
          %v412 = vunpack.c.h.bf16 %v409
          %v413 = vunpack.c.l.bf16 %v410
          %v414 = vunpack.c.h.bf16 %v410
          %v415 = vadd.f32 %v411, %v412
          %416 = vadd.xlane.f32.xlu0 %v415
          %v417 = vpop.xlane.xlu0 %416
          %v418 = vadd.f32 %v413, %v414
          %419 = vadd.xlane.f32.xlu0 %v418
          %v420 = vpop.xlane.xlu0 %419
          %v421 = vrcp.pop 256.0
          %v422 = vmul.f32 256.0, %v421
          %v423 = vsub.f32 1.0, %v422
          %v424 = vmul.f32 %v421, %v423
          %v425 = vadd.f32 %v421, %v424
          %vm426 = vweird.f32 %v421
          %v427 = vsel %vm426, %v421, %v425
          %v428 = vmul.f32 %v417, %v427
          %v429 = vmul.f32 %v420, %v427
          %v430 = vsub.f32 %v411, %v428
          %v431 = vsub.f32 %v412, %v428
          %v432 = vsub.f32 %v413, %v429
          %v433 = vsub.f32 %v414, %v429
          %v434 = vmul.f32 %v430, %v430
          %v435 = vmul.f32 %v431, %v431
          %v436 = vmul.f32 %v432, %v432
          %v437 = vmul.f32 %v433, %v433
          %v438 = vadd.f32 %v434, %v435
          %439 = vadd.xlane.f32.xlu0 %v438
          %v440 = vpop.xlane.xlu0 %439
          %v441 = vadd.f32 %v436, %v437
          %442 = vadd.xlane.f32.xlu0 %v441
          %v443 = vpop.xlane.xlu0 %442
          %v444 = vmul.f32 %v440, %v427
          %v445 = vmul.f32 %v443, %v427
          %v446 = vadd.f32 %v444, 1e-06
          %v447 = vadd.f32 %v445, 1e-06
          %v448 = vrsqrt.pop %v446
          %v449 = vmul.f32 %v448, %v446
          %v450 = vmul.f32 %v449, %v448
          %v451 = vmul.f32 0.5, %v450
          %v452 = vsub.f32 1.5, %v451
          %v453 = vmul.f32 %v448, %v452
          %vm454 = vweird.f32 %v446
          %vm455 = vweird.f32 %v448
          %vm456 = vmor %vm454, %vm455
          %v457 = vsel %vm456, %v448, %v453
          %v458 = vrsqrt.pop %v447
          %v459 = vmul.f32 %v458, %v447
          %v460 = vmul.f32 %v459, %v458
          %v461 = vmul.f32 0.5, %v460
          %v462 = vsub.f32 1.5, %v461
          %v463 = vmul.f32 %v458, %v462
          %vm464 = vweird.f32 %v447
          %vm465 = vweird.f32 %v458
          %vm466 = vmor %vm464, %vm465
          %v467 = vsel %vm466, %v458, %v463
          %v468 = vmul.f32 %v430, %v457
          %v469 = vmul.f32 %v431, %v457
          %v470 = vmul.f32 %v432, %v467
          %v471 = vmul.f32 %v433, %v467
          %v472 = vld [vmem:[%s1] sm:$0x3]
          %v474 = vperm.slane %v472, 0
          %v475 = vperm.slane %v472, 1
          %v478 = vmul.f32 %v468, %v474
          %v479 = vmul.f32 %v469, %v475
          %v480 = vmul.f32 %v470, %v474
          %v481 = vmul.f32 %v471, %v475
          %v482 = vld [vmem:[%s2] sm:$0x3]
          %v484 = vperm.slane %v482, 0
          %v485 = vperm.slane %v482, 1
          %v488 = vadd.f32 %v478, %v484
          %v489 = vadd.f32 %v479, %v485
          %v490 = vadd.f32 %v480, %v484
          %v491 = vadd.f32 %v481, %v485
          %v492 = vpack.c.bf16 %v489, %v488
          %v493 = vpack.c.bf16 %v491, %v490
          %494 = vst [vmem:[#allocation2] sm:$0xff] %v492
          %495 = vst [vmem:[#allocation2 + $0x8] sm:$0xff] %v493
          %496 = vst [vmem:[#allocation3] sm:$0xff] 0.0
          %497 = vst [vmem:[#allocation3 + $0x8] sm:$0xff] 0.0
          %498 = vst [vmem:[#allocation3 + $0x10] sm:$0xff] 0.0
          %499 = vst [vmem:[#allocation3 + $0x18] sm:$0xff] 0.0
        $region60: #{vit_binary_classifier_forward.14} parent=47 // pred_fallthru
          _
        %v500 = vld [vmem:[#allocation2] sm:$0xff]
        %v501 = vld [vmem:[#allocation2 + $0x8] sm:$0xff]
        %v502 = vld [vmem:[%s326] sm:$0xff]
        %v503 = vld [vmem:[%s326 + $0x8] sm:$0xff]
        %v504 = vld [vmem:[%s326 + $0x10] sm:$0xff]
        %v505 = vld [vmem:[%s326 + $0x18] sm:$0xff]
        %v506 = vld [vmem:[%s326 + $0x20] sm:$0xff]
        %v507 = vld [vmem:[%s326 + $0x28] sm:$0xff]
        %v508 = vld [vmem:[%s326 + $0x30] sm:$0xff]
        %v509 = vld [vmem:[%s326 + $0x38] sm:$0xff]
        %v510 = vld [vmem:[%s326 + $0x40] sm:$0xff]
        %v511 = vld [vmem:[%s326 + $0x48] sm:$0xff]
        %v512 = vld [vmem:[%s326 + $0x50] sm:$0xff]
        %v513 = vld [vmem:[%s326 + $0x58] sm:$0xff]
        %v514 = vld [vmem:[%s326 + $0x60] sm:$0xff]
        %v515 = vld [vmem:[%s326 + $0x68] sm:$0xff]
        %v516 = vld [vmem:[%s326 + $0x70] sm:$0xff]
        %v517 = vld [vmem:[%s326 + $0x78] sm:$0xff]
        %v518 = vld [vmem:[%s326 + $0x80] sm:$0xff]
        %v519 = vld [vmem:[%s326 + $0x88] sm:$0xff]
        %v520 = vld [vmem:[%s326 + $0x90] sm:$0xff]
        %v521 = vld [vmem:[%s326 + $0x98] sm:$0xff]
        %v522 = vld [vmem:[%s326 + $0xa0] sm:$0xff]
        %v523 = vld [vmem:[%s326 + $0xa8] sm:$0xff]
        %v524 = vld [vmem:[%s326 + $0xb0] sm:$0xff]
        %v525 = vld [vmem:[%s326 + $0xb8] sm:$0xff]
        %v526 = vld [vmem:[%s326 + $0xc0] sm:$0xff]
        %v527 = vld [vmem:[%s326 + $0xc8] sm:$0xff]
        %v528 = vld [vmem:[%s326 + $0xd0] sm:$0xff]
        %v529 = vld [vmem:[%s326 + $0xd8] sm:$0xff]
        %v530 = vld [vmem:[%s326 + $0xe0] sm:$0xff]
        %v531 = vld [vmem:[%s326 + $0xe8] sm:$0xff]
        %v532 = vld [vmem:[%s326 + $0xf0] sm:$0xff]
        %v533 = vld [vmem:[%s326 + $0xf8] sm:$0xff]
        %v534 = vld [vmem:[%s395] sm:$0x3]
        %v536 = vperm.slane %v534, 0
        %v537 = vperm.slane %v534, 1
        %v542 = vunpack.c.l.b16 %v500
        %v543 = vunpack.c.h.b16 %v500
        %v544 = vunpack.c.l.b16 %v501
        %v545 = vunpack.c.h.b16 %v501
        %v546 = vpack.c.b16 %v544, %v542
        %v547 = vpack.c.b16 %v545, %v543
        %v582 = vunpack.c.l.b16 %v502
        %v583 = vunpack.c.h.b16 %v502
        %v584 = vunpack.c.l.b16 %v503
        %v585 = vunpack.c.h.b16 %v503
        %v586 = vunpack.c.l.b16 %v504
        %v587 = vunpack.c.h.b16 %v504
        %v588 = vunpack.c.l.b16 %v505
        %v589 = vunpack.c.h.b16 %v505
        %v590 = vunpack.c.l.b16 %v506
        %v591 = vunpack.c.h.b16 %v506
        %v592 = vunpack.c.l.b16 %v507
        %v593 = vunpack.c.h.b16 %v507
        %v594 = vunpack.c.l.b16 %v508
        %v595 = vunpack.c.h.b16 %v508
        %v596 = vunpack.c.l.b16 %v509
        %v597 = vunpack.c.h.b16 %v509
        %v598 = vunpack.c.l.b16 %v510
        %v599 = vunpack.c.h.b16 %v510
        %v600 = vunpack.c.l.b16 %v511
        %v601 = vunpack.c.h.b16 %v511
        %v602 = vunpack.c.l.b16 %v512
        %v603 = vunpack.c.h.b16 %v512
        %v604 = vunpack.c.l.b16 %v513
        %v605 = vunpack.c.h.b16 %v513
        %v606 = vunpack.c.l.b16 %v514
        %v607 = vunpack.c.h.b16 %v514
        %v608 = vunpack.c.l.b16 %v515
        %v609 = vunpack.c.h.b16 %v515
        %v610 = vunpack.c.l.b16 %v516
        %v611 = vunpack.c.h.b16 %v516
        %v612 = vunpack.c.l.b16 %v517
        %v613 = vunpack.c.h.b16 %v517
        %v614 = vunpack.c.l.b16 %v518
        %v615 = vunpack.c.h.b16 %v518
        %v616 = vunpack.c.l.b16 %v519
        %v617 = vunpack.c.h.b16 %v519
        %v618 = vunpack.c.l.b16 %v520
        %v619 = vunpack.c.h.b16 %v520
        %v620 = vunpack.c.l.b16 %v521
        %v621 = vunpack.c.h.b16 %v521
        %v622 = vunpack.c.l.b16 %v522
        %v623 = vunpack.c.h.b16 %v522
        %v624 = vunpack.c.l.b16 %v523
        %v625 = vunpack.c.h.b16 %v523
        %v626 = vunpack.c.l.b16 %v524
        %v627 = vunpack.c.h.b16 %v524
        %v628 = vunpack.c.l.b16 %v525
        %v629 = vunpack.c.h.b16 %v525
        %v630 = vunpack.c.l.b16 %v526
        %v631 = vunpack.c.h.b16 %v526
        %v632 = vunpack.c.l.b16 %v527
        %v633 = vunpack.c.h.b16 %v527
        %v634 = vunpack.c.l.b16 %v528
        %v635 = vunpack.c.h.b16 %v528
        %v636 = vunpack.c.l.b16 %v529
        %v637 = vunpack.c.h.b16 %v529
        %v638 = vunpack.c.l.b16 %v530
        %v639 = vunpack.c.h.b16 %v530
        %v640 = vunpack.c.l.b16 %v531
        %v641 = vunpack.c.h.b16 %v531
        %v642 = vunpack.c.l.b16 %v532
        %v643 = vunpack.c.h.b16 %v532
        %v644 = vunpack.c.l.b16 %v533
        %v645 = vunpack.c.h.b16 %v533
        %v646 = vpack.c.b16 %v584, %v582
        %v647 = vpack.c.b16 %v585, %v583
        %v648 = vpack.c.b16 %v588, %v586
        %v649 = vpack.c.b16 %v589, %v587
        %v650 = vpack.c.b16 %v592, %v590
        %v651 = vpack.c.b16 %v593, %v591
        %v652 = vpack.c.b16 %v596, %v594
        %v653 = vpack.c.b16 %v597, %v595
        %v654 = vpack.c.b16 %v600, %v598
        %v655 = vpack.c.b16 %v601, %v599
        %v656 = vpack.c.b16 %v604, %v602
        %v657 = vpack.c.b16 %v605, %v603
        %v658 = vpack.c.b16 %v608, %v606
        %v659 = vpack.c.b16 %v609, %v607
        %v660 = vpack.c.b16 %v612, %v610
        %v661 = vpack.c.b16 %v613, %v611
        %v662 = vpack.c.b16 %v616, %v614
        %v663 = vpack.c.b16 %v617, %v615
        %v664 = vpack.c.b16 %v620, %v618
        %v665 = vpack.c.b16 %v621, %v619
        %v666 = vpack.c.b16 %v624, %v622
        %v667 = vpack.c.b16 %v625, %v623
        %v668 = vpack.c.b16 %v628, %v626
        %v669 = vpack.c.b16 %v629, %v627
        %v670 = vpack.c.b16 %v632, %v630
        %v671 = vpack.c.b16 %v633, %v631
        %v672 = vpack.c.b16 %v636, %v634
        %v673 = vpack.c.b16 %v637, %v635
        %v674 = vpack.c.b16 %v640, %v638
        %v675 = vpack.c.b16 %v641, %v639
        %v676 = vpack.c.b16 %v644, %v642
        %v677 = vpack.c.b16 %v645, %v643
        %710 = vmatpush.bf16.msra.mxu0 %v660
        %711 = vmatpush.bf16.msra.mxu0 %v658
        %712 = vmatpush.bf16.msra.mxu0 %v656
        %713 = vmatpush.bf16.msra.mxu0 %v654
        %714 = vmatpush.bf16.msra.mxu0 %v652
        %715 = vmatpush.bf16.msra.mxu0 %v650
        %716 = vmatpush.bf16.msra.mxu0 %v648
        %717 = vmatpush.bf16.msra.mxu0 %v646
        %718 = vmatmul.bf16.gmra.mxu0 %v546
        %v719 = vpop.f32.mrf.mxu0
        %v720 = vadd.f32 %v536, %v719
        %v721 = vpop.f32.mrf.mxu0
        %v722 = vadd.f32 %v536, %v721
        %723 = vdwg.mxu0
        %724 = vmatpush.bf16.msra.mxu0 %v676
        %725 = vmatpush.bf16.msra.mxu0 %v674
        %726 = vmatpush.bf16.msra.mxu0 %v672
        %727 = vmatpush.bf16.msra.mxu0 %v670
        %728 = vmatpush.bf16.msra.mxu0 %v668
        %729 = vmatpush.bf16.msra.mxu0 %v666
        %730 = vmatpush.bf16.msra.mxu0 %v664
        %731 = vmatpush.bf16.msra.mxu0 %v662
        %732 = vmatmul.bf16.gmra.mxu0 %v547
        %v733 = vpop.f32.mrf.mxu0
        %v734 = vadd.f32 %v720, %v733
        %v735 = vpop.f32.mrf.mxu0
        %v736 = vadd.f32 %v722, %v735
        %737 = vdwg.mxu0
        %738 = vmatpush.bf16.msra.mxu0 %v661
        %739 = vmatpush.bf16.msra.mxu0 %v659
        %740 = vmatpush.bf16.msra.mxu0 %v657
        %741 = vmatpush.bf16.msra.mxu0 %v655
        %742 = vmatpush.bf16.msra.mxu0 %v653
        %743 = vmatpush.bf16.msra.mxu0 %v651
        %744 = vmatpush.bf16.msra.mxu0 %v649
        %745 = vmatpush.bf16.msra.mxu0 %v647
        %746 = vmatmul.bf16.gmra.mxu0 %v546
        %v747 = vpop.f32.mrf.mxu0
        %v748 = vadd.f32 %v537, %v747
        %v749 = vpop.f32.mrf.mxu0
        %v750 = vadd.f32 %v537, %v749
        %751 = vdwg.mxu0
        %752 = vmatpush.bf16.msra.mxu0 %v677
        %753 = vmatpush.bf16.msra.mxu0 %v675
        %754 = vmatpush.bf16.msra.mxu0 %v673
        %755 = vmatpush.bf16.msra.mxu0 %v671
        %756 = vmatpush.bf16.msra.mxu0 %v669
        %757 = vmatpush.bf16.msra.mxu0 %v667
        %758 = vmatpush.bf16.msra.mxu0 %v665
        %759 = vmatpush.bf16.msra.mxu0 %v663
        %760 = vmatmul.bf16.gmra.mxu0 %v547
        %v761 = vpop.f32.mrf.mxu0
        %v762 = vadd.f32 %v748, %v761
        %v763 = vpop.f32.mrf.mxu0
        %v764 = vadd.f32 %v750, %v763
        %765 = vdwg.mxu0
        %v766 = vmul.f32 %v734, 0.5
        %v767 = vmul.f32 %v762, 0.5
        %v768 = vmul.f32 %v736, 0.5
        %v769 = vmul.f32 %v764, 0.5
        %v770 = vmul.f32 %v734, 0.70710677
        %v771 = vmul.f32 %v762, 0.70710677
        %v772 = vmul.f32 %v736, 0.70710677
        %v773 = vmul.f32 %v764, 0.70710677
        %v774 = vmul.f32 %v770, %v770
        %v775 = vmin.f32 16.0, %v774
        %v776 = vmul.f32 %v775, 2.1237322e-06
        %v777 = vadd.f32 %v776, 0.00028619796
        %v778 = vmul.f32 %v775, %v777
        %v779 = vadd.f32 %v778, 0.0036580483
        %v780 = vmul.f32 %v775, %v779
        %v781 = vadd.f32 %v780, 0.05243302
        %v782 = vmul.f32 %v775, %v781
        %v783 = vadd.f32 %v782, 0.18741608
        %v784 = vmul.f32 %v775, %v783
        %v785 = vadd.f32 %v784, 1.1283791
        %v786 = vmul.f32 %v770, %v785
        %v787 = vmul.f32 %v775, 3.8918573e-05
        %v788 = vadd.f32 %v787, 0.001143296
        %v789 = vmul.f32 %v775, %v788
        %v790 = vadd.f32 %v789, 0.014752088
        %v791 = vmul.f32 %v775, %v790
        %v792 = vadd.f32 %v791, 0.112945676
        %v793 = vmul.f32 %v775, %v792
        %v794 = vadd.f32 %v793, 0.4994258
        %v795 = vmul.f32 %v775, %v794
        %v796 = vadd.f32 %v795, 1.0
        %v797 = vrcp.pop %v796
        %v798 = vmul.f32 %v796, %v797
        %v799 = vsub.f32 1.0, %v798
        %v800 = vmul.f32 %v797, %v799
        %v801 = vadd.f32 %v797, %v800
        %vm802 = vweird.f32 %v796
        %vm803 = vweird.f32 %v797
        %vm804 = vmor %vm802, %vm803
        %v805 = vsel %vm804, %v797, %v801
        %v806 = vand.u32 2147483647, %v796
        %vm807 = vcmp.eq.f32.partialorder %v806, 8.507059e+37
        %v808 = vand.u32 %v796, 2147483648
        %v809 = vor.u32 1.1754944e-38, %v808
        %v810 = vsel %vm807, %v809, %v805
        %v811 = vmul.f32 %v786, %v810
        %v812 = vmin.f32 %v811, 1.0
        %v813 = vmax.f32 %v812, -1.0
        %v814 = vmul.f32 %v771, %v771
        %v815 = vmin.f32 16.0, %v814
        %v816 = vmul.f32 %v815, 2.1237322e-06
        %v817 = vadd.f32 %v816, 0.00028619796
        %v818 = vmul.f32 %v815, %v817
        %v819 = vadd.f32 %v818, 0.0036580483
        %v820 = vmul.f32 %v815, %v819
        %v821 = vadd.f32 %v820, 0.05243302
        %v822 = vmul.f32 %v815, %v821
        %v823 = vadd.f32 %v822, 0.18741608
        %v824 = vmul.f32 %v815, %v823
        %v825 = vadd.f32 %v824, 1.1283791
        %v826 = vmul.f32 %v771, %v825
        %v827 = vmul.f32 %v815, 3.8918573e-05
        %v828 = vadd.f32 %v827, 0.001143296
        %v829 = vmul.f32 %v815, %v828
        %v830 = vadd.f32 %v829, 0.014752088
        %v831 = vmul.f32 %v815, %v830
        %v832 = vadd.f32 %v831, 0.112945676
        %v833 = vmul.f32 %v815, %v832
        %v834 = vadd.f32 %v833, 0.4994258
        %v835 = vmul.f32 %v815, %v834
        %v836 = vadd.f32 %v835, 1.0
        %v837 = vrcp.pop %v836
        %v838 = vmul.f32 %v836, %v837
        %v839 = vsub.f32 1.0, %v838
        %v840 = vmul.f32 %v837, %v839
        %v841 = vadd.f32 %v837, %v840
        %vm842 = vweird.f32 %v836
        %vm843 = vweird.f32 %v837
        %vm844 = vmor %vm842, %vm843
        %v845 = vsel %vm844, %v837, %v841
        %v846 = vand.u32 2147483647, %v836
        %vm847 = vcmp.eq.f32.partialorder %v846, 8.507059e+37
        %v848 = vand.u32 %v836, 2147483648
        %v849 = vor.u32 1.1754944e-38, %v848
        %v850 = vsel %vm847, %v849, %v845
        %v851 = vmul.f32 %v826, %v850
        %v852 = vmin.f32 %v851, 1.0
        %v853 = vmax.f32 %v852, -1.0
        %v854 = vmul.f32 %v772, %v772
        %v855 = vmin.f32 16.0, %v854
        %v856 = vmul.f32 %v855, 2.1237322e-06
        %v857 = vadd.f32 %v856, 0.00028619796
        %v858 = vmul.f32 %v855, %v857
        %v859 = vadd.f32 %v858, 0.0036580483
        %v860 = vmul.f32 %v855, %v859
        %v861 = vadd.f32 %v860, 0.05243302
        %v862 = vmul.f32 %v855, %v861
        %v863 = vadd.f32 %v862, 0.18741608
        %v864 = vmul.f32 %v855, %v863
        %v865 = vadd.f32 %v864, 1.1283791
        %v866 = vmul.f32 %v772, %v865
        %v867 = vmul.f32 %v855, 3.8918573e-05
        %v868 = vadd.f32 %v867, 0.001143296
        %v869 = vmul.f32 %v855, %v868
        %v870 = vadd.f32 %v869, 0.014752088
        %v871 = vmul.f32 %v855, %v870
        %v872 = vadd.f32 %v871, 0.112945676
        %v873 = vmul.f32 %v855, %v872
        %v874 = vadd.f32 %v873, 0.4994258
        %v875 = vmul.f32 %v855, %v874
        %v876 = vadd.f32 %v875, 1.0
        %v877 = vrcp.pop %v876
        %v878 = vmul.f32 %v876, %v877
        %v879 = vsub.f32 1.0, %v878
        %v880 = vmul.f32 %v877, %v879
        %v881 = vadd.f32 %v877, %v880
        %vm882 = vweird.f32 %v876
        %vm883 = vweird.f32 %v877
        %vm884 = vmor %vm882, %vm883
        %v885 = vsel %vm884, %v877, %v881
        %v886 = vand.u32 2147483647, %v876
        %vm887 = vcmp.eq.f32.partialorder %v886, 8.507059e+37
        %v888 = vand.u32 %v876, 2147483648
        %v889 = vor.u32 1.1754944e-38, %v888
        %v890 = vsel %vm887, %v889, %v885
        %v891 = vmul.f32 %v866, %v890
        %v892 = vmin.f32 %v891, 1.0
        %v893 = vmax.f32 %v892, -1.0
        %v894 = vmul.f32 %v773, %v773
        %v895 = vmin.f32 16.0, %v894
        %v896 = vmul.f32 %v895, 2.1237322e-06
        %v897 = vadd.f32 %v896, 0.00028619796
        %v898 = vmul.f32 %v895, %v897
        %v899 = vadd.f32 %v898, 0.0036580483
        %v900 = vmul.f32 %v895, %v899
        %v901 = vadd.f32 %v900, 0.05243302
        %v902 = vmul.f32 %v895, %v901
        %v903 = vadd.f32 %v902, 0.18741608
        %v904 = vmul.f32 %v895, %v903
        %v905 = vadd.f32 %v904, 1.1283791
        %v906 = vmul.f32 %v773, %v905
        %v907 = vmul.f32 %v895, 3.8918573e-05
        %v908 = vadd.f32 %v907, 0.001143296
        %v909 = vmul.f32 %v895, %v908
        %v910 = vadd.f32 %v909, 0.014752088
        %v911 = vmul.f32 %v895, %v910
        %v912 = vadd.f32 %v911, 0.112945676
        %v913 = vmul.f32 %v895, %v912
        %v914 = vadd.f32 %v913, 0.4994258
        %v915 = vmul.f32 %v895, %v914
        %v916 = vadd.f32 %v915, 1.0
        %v917 = vrcp.pop %v916
        %v918 = vmul.f32 %v916, %v917
        %v919 = vsub.f32 1.0, %v918
        %v920 = vmul.f32 %v917, %v919
        %v921 = vadd.f32 %v917, %v920
        %vm922 = vweird.f32 %v916
        %vm923 = vweird.f32 %v917
        %vm924 = vmor %vm922, %vm923
        %v925 = vsel %vm924, %v917, %v921
        %v926 = vand.u32 2147483647, %v916
        %vm927 = vcmp.eq.f32.partialorder %v926, 8.507059e+37
        %v928 = vand.u32 %v916, 2147483648
        %v929 = vor.u32 1.1754944e-38, %v928
        %v930 = vsel %vm927, %v929, %v925
        %v931 = vmul.f32 %v906, %v930
        %v932 = vmin.f32 %v931, 1.0
        %v933 = vmax.f32 %v932, -1.0
        %v934 = vadd.f32 %v813, 1.0
        %v935 = vadd.f32 %v853, 1.0
        %v936 = vadd.f32 %v893, 1.0
        %v937 = vadd.f32 %v933, 1.0
        %v938 = vmul.f32 %v766, %v934
        %v939 = vmul.f32 %v767, %v935
        %v940 = vmul.f32 %v768, %v936
        %v941 = vmul.f32 %v769, %v937
        %v942 = vld [vmem:[#allocation3] sm:$0xff]
        %v943 = vld [vmem:[#allocation3 + $0x8] sm:$0xff]
        %v944 = vld [vmem:[#allocation3 + $0x10] sm:$0xff]
        %v945 = vld [vmem:[#allocation3 + $0x18] sm:$0xff]
        %v946 = vpack.c.bf16 %v940, %v938
        %v947 = vpack.c.bf16 %v941, %v939
        %v948 = vld [vmem:[%s336] sm:$0xff]
        %v949 = vld [vmem:[%s336 + $0x8] sm:$0xff]
        %v950 = vld [vmem:[%s336 + $0x10] sm:$0xff]
        %v951 = vld [vmem:[%s336 + $0x18] sm:$0xff]
        %v952 = vld [vmem:[%s336 + $0x20] sm:$0xff]
        %v953 = vld [vmem:[%s336 + $0x28] sm:$0xff]
        %v954 = vld [vmem:[%s336 + $0x30] sm:$0xff]
        %v955 = vld [vmem:[%s336 + $0x38] sm:$0xff]
        %v956 = vld [vmem:[%s336 + $0x40] sm:$0xff]
        %v957 = vld [vmem:[%s336 + $0x48] sm:$0xff]
        %v958 = vld [vmem:[%s336 + $0x50] sm:$0xff]
        %v959 = vld [vmem:[%s336 + $0x58] sm:$0xff]
        %v960 = vld [vmem:[%s336 + $0x60] sm:$0xff]
        %v961 = vld [vmem:[%s336 + $0x68] sm:$0xff]
        %v962 = vld [vmem:[%s336 + $0x70] sm:$0xff]
        %v963 = vld [vmem:[%s336 + $0x78] sm:$0xff]
        %v964 = vld [vmem:[%s336 + $0x80] sm:$0xff]
        %v965 = vld [vmem:[%s336 + $0x88] sm:$0xff]
        %v966 = vld [vmem:[%s336 + $0x90] sm:$0xff]
        %v967 = vld [vmem:[%s336 + $0x98] sm:$0xff]
        %v968 = vld [vmem:[%s336 + $0xa0] sm:$0xff]
        %v969 = vld [vmem:[%s336 + $0xa8] sm:$0xff]
        %v970 = vld [vmem:[%s336 + $0xb0] sm:$0xff]
        %v971 = vld [vmem:[%s336 + $0xb8] sm:$0xff]
        %v972 = vld [vmem:[%s336 + $0xc0] sm:$0xff]
        %v973 = vld [vmem:[%s336 + $0xc8] sm:$0xff]
        %v974 = vld [vmem:[%s336 + $0xd0] sm:$0xff]
        %v975 = vld [vmem:[%s336 + $0xd8] sm:$0xff]
        %v976 = vld [vmem:[%s336 + $0xe0] sm:$0xff]
        %v977 = vld [vmem:[%s336 + $0xe8] sm:$0xff]
        %v978 = vld [vmem:[%s336 + $0xf0] sm:$0xff]
        %v979 = vld [vmem:[%s336 + $0xf8] sm:$0xff]
        %v1012 = vunpack.c.l.b16 %v948
        %v1013 = vunpack.c.h.b16 %v948
        %v1014 = vunpack.c.l.b16 %v949
        %v1015 = vunpack.c.h.b16 %v949
        %v1016 = vunpack.c.l.b16 %v950
        %v1017 = vunpack.c.h.b16 %v950
        %v1018 = vunpack.c.l.b16 %v951
        %v1019 = vunpack.c.h.b16 %v951
        %v1020 = vunpack.c.l.b16 %v952
        %v1021 = vunpack.c.h.b16 %v952
        %v1022 = vunpack.c.l.b16 %v953
        %v1023 = vunpack.c.h.b16 %v953
        %v1024 = vunpack.c.l.b16 %v954
        %v1025 = vunpack.c.h.b16 %v954
        %v1026 = vunpack.c.l.b16 %v955
        %v1027 = vunpack.c.h.b16 %v955
        %v1028 = vunpack.c.l.b16 %v956
        %v1029 = vunpack.c.h.b16 %v956
        %v1030 = vunpack.c.l.b16 %v957
        %v1031 = vunpack.c.h.b16 %v957
        %v1032 = vunpack.c.l.b16 %v958
        %v1033 = vunpack.c.h.b16 %v958
        %v1034 = vunpack.c.l.b16 %v959
        %v1035 = vunpack.c.h.b16 %v959
        %v1036 = vunpack.c.l.b16 %v960
        %v1037 = vunpack.c.h.b16 %v960
        %v1038 = vunpack.c.l.b16 %v961
        %v1039 = vunpack.c.h.b16 %v961
        %v1040 = vunpack.c.l.b16 %v962
        %v1041 = vunpack.c.h.b16 %v962
        %v1042 = vunpack.c.l.b16 %v963
        %v1043 = vunpack.c.h.b16 %v963
        %v1044 = vunpack.c.l.b16 %v964
        %v1045 = vunpack.c.h.b16 %v964
        %v1046 = vunpack.c.l.b16 %v965
        %v1047 = vunpack.c.h.b16 %v965
        %v1048 = vunpack.c.l.b16 %v966
        %v1049 = vunpack.c.h.b16 %v966
        %v1050 = vunpack.c.l.b16 %v967
        %v1051 = vunpack.c.h.b16 %v967
        %v1052 = vunpack.c.l.b16 %v968
        %v1053 = vunpack.c.h.b16 %v968
        %v1054 = vunpack.c.l.b16 %v969
        %v1055 = vunpack.c.h.b16 %v969
        %v1056 = vunpack.c.l.b16 %v970
        %v1057 = vunpack.c.h.b16 %v970
        %v1058 = vunpack.c.l.b16 %v971
        %v1059 = vunpack.c.h.b16 %v971
        %v1060 = vunpack.c.l.b16 %v972
        %v1061 = vunpack.c.h.b16 %v972
        %v1062 = vunpack.c.l.b16 %v973
        %v1063 = vunpack.c.h.b16 %v973
        %v1064 = vunpack.c.l.b16 %v974
        %v1065 = vunpack.c.h.b16 %v974
        %v1066 = vunpack.c.l.b16 %v975
        %v1067 = vunpack.c.h.b16 %v975
        %v1068 = vunpack.c.l.b16 %v976
        %v1069 = vunpack.c.h.b16 %v976
        %v1070 = vunpack.c.l.b16 %v977
        %v1071 = vunpack.c.h.b16 %v977
        %v1072 = vunpack.c.l.b16 %v978
        %v1073 = vunpack.c.h.b16 %v978
        %v1074 = vunpack.c.l.b16 %v979
        %v1075 = vunpack.c.h.b16 %v979
        %v1076 = vpack.c.b16 %v1014, %v1012
        %v1077 = vpack.c.b16 %v1015, %v1013
        %v1078 = vpack.c.b16 %v1018, %v1016
        %v1079 = vpack.c.b16 %v1019, %v1017
        %v1080 = vpack.c.b16 %v1022, %v1020
        %v1081 = vpack.c.b16 %v1023, %v1021
        %v1082 = vpack.c.b16 %v1026, %v1024
        %v1083 = vpack.c.b16 %v1027, %v1025
        %v1084 = vpack.c.b16 %v1030, %v1028
        %v1085 = vpack.c.b16 %v1031, %v1029
        %v1086 = vpack.c.b16 %v1034, %v1032
        %v1087 = vpack.c.b16 %v1035, %v1033
        %v1088 = vpack.c.b16 %v1038, %v1036
        %v1089 = vpack.c.b16 %v1039, %v1037
        %v1090 = vpack.c.b16 %v1042, %v1040
        %v1091 = vpack.c.b16 %v1043, %v1041
        %v1092 = vpack.c.b16 %v1046, %v1044
        %v1093 = vpack.c.b16 %v1047, %v1045
        %v1094 = vpack.c.b16 %v1050, %v1048
        %v1095 = vpack.c.b16 %v1051, %v1049
        %v1096 = vpack.c.b16 %v1054, %v1052
        %v1097 = vpack.c.b16 %v1055, %v1053
        %v1098 = vpack.c.b16 %v1058, %v1056
        %v1099 = vpack.c.b16 %v1059, %v1057
        %v1100 = vpack.c.b16 %v1062, %v1060
        %v1101 = vpack.c.b16 %v1063, %v1061
        %v1102 = vpack.c.b16 %v1066, %v1064
        %v1103 = vpack.c.b16 %v1067, %v1065
        %v1104 = vpack.c.b16 %v1070, %v1068
        %v1105 = vpack.c.b16 %v1071, %v1069
        %v1106 = vpack.c.b16 %v1074, %v1072
        %v1107 = vpack.c.b16 %v1075, %v1073
        %1140 = vmatpush.bf16.msra.mxu0 %v1090
        %1141 = vmatpush.bf16.msra.mxu0 %v1088
        %1142 = vmatpush.bf16.msra.mxu0 %v1086
        %1143 = vmatpush.bf16.msra.mxu0 %v1084
        %1144 = vmatpush.bf16.msra.mxu0 %v1082
        %1145 = vmatpush.bf16.msra.mxu0 %v1080
        %1146 = vmatpush.bf16.msra.mxu0 %v1078
        %1147 = vmatpush.bf16.msra.mxu0 %v1076
        %1148 = vmatmul.bf16.gmra.mxu0 %v946
        %v1149 = vpop.f32.mrf.mxu0
        %v1150 = vadd.f32 0.0, %v1149
        %v1151 = vpop.f32.mrf.mxu0
        %v1152 = vadd.f32 0.0, %v1151
        %1153 = vdwg.mxu0
        %1154 = vmatpush.bf16.msra.mxu0 %v1106
        %1155 = vmatpush.bf16.msra.mxu0 %v1104
        %1156 = vmatpush.bf16.msra.mxu0 %v1102
        %1157 = vmatpush.bf16.msra.mxu0 %v1100
        %1158 = vmatpush.bf16.msra.mxu0 %v1098
        %1159 = vmatpush.bf16.msra.mxu0 %v1096
        %1160 = vmatpush.bf16.msra.mxu0 %v1094
        %1161 = vmatpush.bf16.msra.mxu0 %v1092
        %1162 = vmatmul.bf16.gmra.mxu0 %v947
        %v1163 = vpop.f32.mrf.mxu0
        %v1164 = vadd.f32 %v1150, %v1163
        %v1165 = vpop.f32.mrf.mxu0
        %v1166 = vadd.f32 %v1152, %v1165
        %1167 = vdwg.mxu0
        %1168 = vmatpush.bf16.msra.mxu0 %v1091
        %1169 = vmatpush.bf16.msra.mxu0 %v1089
        %1170 = vmatpush.bf16.msra.mxu0 %v1087
        %1171 = vmatpush.bf16.msra.mxu0 %v1085
        %1172 = vmatpush.bf16.msra.mxu0 %v1083
        %1173 = vmatpush.bf16.msra.mxu0 %v1081
        %1174 = vmatpush.bf16.msra.mxu0 %v1079
        %1175 = vmatpush.bf16.msra.mxu0 %v1077
        %1176 = vmatmul.bf16.gmra.mxu0 %v946
        %v1177 = vpop.f32.mrf.mxu0
        %v1178 = vadd.f32 0.0, %v1177
        %v1179 = vpop.f32.mrf.mxu0
        %v1180 = vadd.f32 0.0, %v1179
        %1181 = vdwg.mxu0
        %1182 = vmatpush.bf16.msra.mxu0 %v1107
        %1183 = vmatpush.bf16.msra.mxu0 %v1105
        %1184 = vmatpush.bf16.msra.mxu0 %v1103
        %1185 = vmatpush.bf16.msra.mxu0 %v1101
        %1186 = vmatpush.bf16.msra.mxu0 %v1099
        %1187 = vmatpush.bf16.msra.mxu0 %v1097
        %1188 = vmatpush.bf16.msra.mxu0 %v1095
        %1189 = vmatpush.bf16.msra.mxu0 %v1093
        %1190 = vmatmul.bf16.gmra.mxu0 %v947
        %v1191 = vpop.f32.mrf.mxu0
        %v1192 = vadd.f32 %v1178, %v1191
        %v1193 = vpop.f32.mrf.mxu0
        %v1194 = vadd.f32 %v1180, %v1193
        %1195 = vdwg.mxu0
        %v1196 = vadd.f32 %v942, %v1164
        %v1197 = vadd.f32 %v943, %v1192
        %v1198 = vadd.f32 %v944, %v1166
        %v1199 = vadd.f32 %v945, %v1194
        %1200 = vst [vmem:[#allocation3] sm:$0xff] %v1196
        %1201 = vst [vmem:[#allocation3 + $0x8] sm:$0xff] %v1197
        %1202 = vst [vmem:[#allocation3 + $0x10] sm:$0xff] %v1198
        %1203 = vst [vmem:[#allocation3 + $0x18] sm:$0xff] %v1199
        %p1204 = scmp.eq.s32.totalorder %s29, 3
        // Predicated region
        $region61: #{vit_binary_classifier_forward.14} parent=47 // pred_check
          %p1205 = pneg %p1204
        $region62: #{vit_binary_classifier_forward.14} parent=47 // pred_check_branch
          %1207 = sbr.rel (%p1205) target = $region64
        $region63: #{vit_binary_classifier_forward.14} parent=47 // pred_region
          %v1208 = vld [vmem:[#allocation3] sm:$0xff]
          %v1209 = vld [vmem:[#allocation3 + $0x8] sm:$0xff]
          %v1210 = vld [vmem:[#allocation3 + $0x10] sm:$0xff]
          %v1211 = vld [vmem:[#allocation3 + $0x18] sm:$0xff]
          %v1212 = vld [vmem:[%s6] sm:$0x3]
          %v1214 = vperm.slane %v1212, 0
          %v1215 = vperm.slane %v1212, 1
          %v1218 = vadd.f32 %v1208, %v1214
          %v1219 = vadd.f32 %v1209, %v1215
          %v1220 = vadd.f32 %v1210, %v1214
          %v1221 = vadd.f32 %v1211, %v1215
          %v1222 = vld [vmem:[%s389] sm:$0xff]
          %v1223 = vld [vmem:[%s389 + $0x8] sm:$0xff]
          %v1224 = vunpack.c.l.bf16 %v1222
          %v1225 = vunpack.c.h.bf16 %v1222
          %v1226 = vunpack.c.l.bf16 %v1223
          %v1227 = vunpack.c.h.bf16 %v1223
          %v1228 = vadd.f32 %v1218, %v1224
          %v1229 = vadd.f32 %v1219, %v1225
          %v1230 = vadd.f32 %v1220, %v1226
          %v1231 = vadd.f32 %v1221, %v1227
          %v1232 = vpack.c.bf16 %v1229, %v1228
          %v1233 = vpack.c.bf16 %v1231, %v1230
          %1234 = vst [vmem:[%s403] sm:$0xff] %v1232
          %1235 = vst [vmem:[%s403 + $0x8] sm:$0xff] %v1233
        $region64: #{vit_binary_classifier_forward.14} parent=47 // pred_fallthru
          _
        %s1236 = smul.u32 2, %s28
        %p1237 = scmp.lt.s32.totalorder %s1236, 1
        %s1238 = scalar_select %p1237, %s1236, 1
        %s1239 = smul.addr %s1238, 2
        %s1240 = smul.addr %s1239, 4
        %s1241 = scalar_lea.vmem %s7, %s1240
        // Predicated region
        $region65: #{vit_binary_classifier_forward.14} parent=47 // pred_check
          %p1242 = pneg %p221
        $region66: #{vit_binary_classifier_forward.14} parent=47 // pred_check_branch
          %1244 = sbr.rel (%p1242) target = $region68
        $region67: #{vit_binary_classifier_forward.14} parent=47 // pred_region
          %s1245 = smul.u32 2, %s28
        $region68: #{vit_binary_classifier_forward.14} parent=47 // pred_fallthru
          _
        // Predicated region
        $region69: #{vit_binary_classifier_forward.14} parent=47 // pred_check
          %p1246 = pneg %p221
        $region70: #{vit_binary_classifier_forward.14} parent=47 // pred_check_branch
          %1248 = sbr.rel (%p1246) target = $region72
        $region71: #{vit_binary_classifier_forward.14} parent=47 // pred_region
          %s1249 = smul.u32 2, %s28
          %p1250 = scmp.lt.s32.totalorder %s1249, 1
          %s1251 = scalar_select %p1250, %s1249, 1
          %s1252 = smul.addr %s1251, 2
          %s1253 = smul.addr %s1252, 4
          %s1254 = scalar_lea.vmem %s7, %s1253
        $region72: #{vit_binary_classifier_forward.14} parent=47 // pred_fallthru
          _
      $region48: #{vit_binary_classifier_forward.14} parent=5 // pred_fallthru
        _
      %p1255 = scmp.le.s32.totalorder 2, %s19
      // Predicated region
      $region73: #{vit_binary_classifier_forward.14} parent=5 // pred_check
        %p1256 = pneg %p1255
      $region74: #{vit_binary_classifier_forward.14} parent=5 // pred_check_branch
        %1258 = sbr.rel (%p1256) target = $region76
      $region75: #{vit_binary_classifier_forward.14} parent=5 // pred_region
        %s1259 = ssub.s32 %s19, 2
      $region76: #{vit_binary_classifier_forward.14} parent=5 // pred_fallthru
        _
    $region6: #{vit_binary_classifier_forward.14} parent=1 // loop_footer
      %s23 = sadd.s32 1, %s19
    $region7: #{vit_binary_classifier_forward.14} parent=1 // loop_footer_branch
      %18 = sbr.rel target = $region3
    $region8: #{vit_binary_classifier_forward.14} parent=1 // loop_exit
      _
    %1260 = vsyncpa [#allocation5], 1
    %s1261 = scalar_lea.sflag [#allocation5], 1
    %1262 = vsyncpa %s1261, 1
    %1263 = vsyncpa [#allocation7], 1
    %s1264 = scalar_lea.sflag [#allocation7], 1
    %1265 = vsyncpa %s1264, 1

</llo_original>
